<compile_context>
chip_gen: v5e
topology: v5e:2x2
jax: 0.10.0
libtpu: 0.0.40
codegen_flags: <defaults>
</compile_context>

<pallas_src>
import functools

import jax
import jax.numpy as jnp
from jax import lax
from jax.experimental import pallas as pl
from jax.experimental.pallas import tpu as pltpu


_VMEM_LIMIT = 48 * 1024 * 1024  # safe on v5e/v6e (128 MiB) and v7x (64 MiB)


# ------------------------------ Pallas kernels --------------------------------

def _channel_stats_kernel(x_ref, st_ref):
    # x_ref: (1, TH, W, C) row tile; st_ref: (1, 2, C) accumulator over row tiles.
    r = pl.program_id(1)
    th, w, c = x_ref.shape[1], x_ref.shape[2], x_ref.shape[3]
    x = x_ref[0].astype(jnp.float32).reshape(th * w, c)
    s = jnp.concatenate(
        [jnp.sum(x, axis=0, keepdims=True),
         jnp.sum(x * x, axis=0, keepdims=True)], axis=0)        # (2, C)

    @pl.when(r == 0)
    def _():
        st_ref[...] = jnp.zeros_like(st_ref)

    st_ref[0] += s


def _activated_slab(top_ref, mid_ref, bot_ref, ab_ref, r, last_r):
    """Build the (TH+2, W+2, C) zero-padded, GN+SiLU-activated input slab (bf16)."""
    ab = ab_ref[0]                                              # (2, C) f32
    a, b = ab[0], ab[1]

    def act(v):
        y = v.astype(jnp.float32) * a + b                       # fused GroupNorm apply
        return (y * jax.nn.sigmoid(y)).astype(jnp.bfloat16)     # fused SiLU -> bf16

    # Halo rows become conv zero-padding at the image top / bottom.
    top = act(top_ref[0])                                       # (1, W, C)
    top = jnp.where(r == 0, jnp.zeros_like(top), top)
    bot = act(bot_ref[0])                                       # (1, W, C)
    bot = jnp.where(r == last_r, jnp.zeros_like(bot), bot)
    mid = act(mid_ref[0])                                       # (TH, W, C)

    y = jnp.concatenate([top, mid, bot], axis=0)                # (TH+2, W, C)
    zcol = jnp.zeros((y.shape[0], 1, y.shape[2]), jnp.bfloat16)
    return jnp.concatenate([zcol, y, zcol], axis=1)             # (TH+2, W+2, C)


def _conv3x3_taps(slab_b, w_ref, th, w):
    """9 shifted taps x (TH*W, Cin) @ (Cin, Cout) matmuls, f32 accumulation."""
    cin = slab_b.shape[2]
    cout = w_ref.shape[2]
    acc = jnp.zeros((th * w, cout), jnp.float32)
    for ky in range(3):
        for kx in range(3):
            tap = slab_b[ky:ky + th, kx:kx + w, :].reshape(th * w, cin)
            acc = acc + jnp.dot(tap, w_ref[ky * 3 + kx],
                                preferred_element_type=jnp.float32)
    return acc


def _conv1_kernel(top_ref, mid_ref, bot_ref, ab_ref, w_ref, bias_ref,
                  h_ref, st_ref):
    # Fused: silu(norm1(x)) -> 3x3 conv + bias ; epilogue: norm2 channel stats.
    r = pl.program_id(1)
    last_r = pl.num_programs(1) - 1
    th, w = mid_ref.shape[1], mid_ref.shape[2]

    slab = _activated_slab(top_ref, mid_ref, bot_ref, ab_ref, r, last_r)
    h = _conv3x3_taps(slab, w_ref, th, w) + bias_ref[0]          # (TH*W, Cout) f32
    h_b = h.astype(h_ref.dtype)                                  # bf16 intermediate
    h_ref[0] = h_b.reshape(th, w, -1)

    # norm2 stats from the *stored* values (self-consistent with conv2's input).
    hs = h_b.astype(jnp.float32)
    s = jnp.concatenate(
        [jnp.sum(hs, axis=0, keepdims=True),
         jnp.sum(hs * hs, axis=0, keepdims=True)], axis=0)       # (2, Cout)

    @pl.when(r == 0)
    def _():
        st_ref[...] = jnp.zeros_like(st_ref)

    st_ref[0] += s


def _conv2_res_kernel(top_ref, mid_ref, bot_ref, ab_ref, w_ref, bias_ref,
                      xres_ref, wn_ref, bn_ref, o_ref):
    # Fused: silu(norm2(h)) -> 3x3 conv + bias + nin_shortcut(x) + residual add.
    r = pl.program_id(1)
    last_r = pl.num_programs(1) - 1
    th, w = mid_ref.shape[1], mid_ref.shape[2]

    slab = _activated_slab(top_ref, mid_ref, bot_ref, ab_ref, r, last_r)
    out = _conv3x3_taps(slab, w_ref, th, w) + bias_ref[0]        # (TH*W, Cout) f32

    cin = xres_ref.shape[3]
    xres = xres_ref[0].reshape(th * w, cin)
    res = jnp.dot(xres.astype(jnp.bfloat16), wn_ref[...],
                  preferred_element_type=jnp.float32) + bn_ref[0]
    out = out + res
    o_ref[0] = out.reshape(th, w, -1).astype(o_ref.dtype)


def _conv2_res_identity_kernel(top_ref, mid_ref, bot_ref, ab_ref, w_ref,
                               bias_ref, xres_ref, o_ref):
    # Same as above but with an identity shortcut (in_channels == out_channels).
    r = pl.program_id(1)
    last_r = pl.num_programs(1) - 1
    th, w = mid_ref.shape[1], mid_ref.shape[2]

    slab = _activated_slab(top_ref, mid_ref, bot_ref, ab_ref, r, last_r)
    out = _conv3x3_taps(slab, w_ref, th, w) + bias_ref[0]
    out = out + xres_ref[0].astype(jnp.float32).reshape(th * w, -1)
    o_ref[0] = out.reshape(th, w, -1).astype(o_ref.dtype)


# ------------------------------ Pallas wrappers --------------------------------

def _channel_stats(x, th):
    """Per-(batch, channel) sum / sumsq over H*W (tiled single-pass reduction)."""
    n, h, w, c = x.shape
    hr = h // th
    return pl.pallas_call(
        _channel_stats_kernel,
        out_shape=jax.ShapeDtypeStruct((n, 2, c), jnp.float32),
        grid=(n, hr),
        in_specs=[pl.BlockSpec((1, th, w, c), lambda i, r: (i, r, 0, 0))],
        out_specs=pl.BlockSpec((1, 2, c), lambda i, r: (i, 0, 0)),
        compiler_params=pltpu.CompilerParams(
            dimension_semantics=("parallel", "arbitrary"),
            vmem_limit_bytes=_VMEM_LIMIT),
    )(x)


def _group_affine(stats, gamma, beta, num_groups, eps, hw):
    """Tiny plain-JAX glue: fold group stats + gamma/beta into per-channel
    scale/shift packed as one (N, 2, C) array (single DMA in the conv kernels)."""
    n, _, c = stats.shape
    cg = c // num_groups
    gsum = stats[:, 0].reshape(n, num_groups, cg).sum(-1)        # (N, G)
    gsq = stats[:, 1].reshape(n, num_groups, cg).sum(-1)
    cnt = float(hw * cg)
    mean = gsum / cnt
    var = gsq / cnt - mean * mean                                # biased (unbiased=False)
    inv = lax.rsqrt(var + eps)
    inv = jnp.repeat(inv, cg, axis=1)                            # (N, C)
    mean = jnp.repeat(mean, cg, axis=1)
    scale = inv * gamma[None, :].astype(jnp.float32)
    shift = beta[None, :].astype(jnp.float32) - mean * scale
    return jnp.stack([scale, shift], axis=1).astype(jnp.float32)  # (N, 2, C)


def _conv1_stage(x, ab1, w1_taps, b1, th):
    n, h, w, cin = x.shape
    cout = w1_taps.shape[2]
    hr = h // th

    top_spec = pl.BlockSpec((1, 1, w, cin),
                            lambda i, r: (i, jnp.maximum(r * th - 1, 0), 0, 0))
    mid_spec = pl.BlockSpec((1, th, w, cin), lambda i, r: (i, r, 0, 0))
    bot_spec = pl.BlockSpec((1, 1, w, cin),
                            lambda i, r: (i, jnp.minimum(r * th + th, h - 1), 0, 0))
    ab_spec = pl.BlockSpec((1, 2, cin), lambda i, r: (i, 0, 0))
    w_spec = pl.BlockSpec((9, cin, cout), lambda i, r: (0, 0, 0))
    bias_spec = pl.BlockSpec((1, cout), lambda i, r: (0, 0))

    return pl.pallas_call(
        _conv1_kernel,
        out_shape=(jax.ShapeDtypeStruct((n, h, w, cout), jnp.bfloat16),
                   jax.ShapeDtypeStruct((n, 2, cout), jnp.float32)),
        grid=(n, hr),
        in_specs=[top_spec, mid_spec, bot_spec, ab_spec, w_spec, bias_spec],
        out_specs=(pl.BlockSpec((1, th, w, cout), lambda i, r: (i, r, 0, 0)),
                   pl.BlockSpec((1, 2, cout), lambda i, r: (i, 0, 0))),
        compiler_params=pltpu.CompilerParams(
            dimension_semantics=("parallel", "arbitrary"),
            vmem_limit_bytes=_VMEM_LIMIT),
    )(x, x, x, ab1, w1_taps, b1)


def _conv2_stage(h1, ab2, w2_taps, b2, x, wn, bn, th):
    n, h, w, cout = h1.shape
    cin = x.shape[3]
    hr = h // th

    top_spec = pl.BlockSpec((1, 1, w, cout),
                            lambda i, r: (i, jnp.maximum(r * th - 1, 0), 0, 0))
    mid_spec = pl.BlockSpec((1, th, w, cout), lambda i, r: (i, r, 0, 0))
    bot_spec = pl.BlockSpec((1, 1, w, cout),
                            lambda i, r: (i, jnp.minimum(r * th + th, h - 1), 0, 0))
    ab_spec = pl.BlockSpec((1, 2, cout), lambda i, r: (i, 0, 0))
    w_spec = pl.BlockSpec((9, cout, cout), lambda i, r: (0, 0, 0))
    bias_spec = pl.BlockSpec((1, cout), lambda i, r: (0, 0))
    xres_spec = pl.BlockSpec((1, th, w, cin), lambda i, r: (i, r, 0, 0))
    out_spec = pl.BlockSpec((1, th, w, cout), lambda i, r: (i, r, 0, 0))
    cparams = pltpu.CompilerParams(
        dimension_semantics=("parallel", "parallel"),
        vmem_limit_bytes=_VMEM_LIMIT)
    out_shape = jax.ShapeDtypeStruct((n, h, w, cout), jnp.float32)

    if wn is not None:
        wn_spec = pl.BlockSpec((cin, cout), lambda i, r: (0, 0))
        bn_spec = pl.BlockSpec((1, cout), lambda i, r: (0, 0))
        return pl.pallas_call(
            _conv2_res_kernel, out_shape=out_shape, grid=(n, hr),
            in_specs=[top_spec, mid_spec, bot_spec, ab_spec,
                      w_spec, bias_spec, xres_spec, wn_spec, bn_spec],
            out_specs=out_spec, compiler_params=cparams,
        )(h1, h1, h1, ab2, w2_taps, b2, x, wn, bn)

    return pl.pallas_call(
        _conv2_res_identity_kernel, out_shape=out_shape, grid=(n, hr),
        in_specs=[top_spec, mid_spec, bot_spec, ab_spec,
                  w_spec, bias_spec, xres_spec],
        out_specs=out_spec, compiler_params=cparams,
    )(h1, h1, h1, ab2, w2_taps, b2, x)


def _pick_tile_h(h, target):
    t = min(target, h)
    while h % t:
        t -= 1
    return t


def maisi_resblock_forward(x_nchw, params, *, norm_num_groups, norm_eps, tile_h=16):
    """Forward pass of MaisiResBlock.  x: (N, Cin, H, W) f32 -> (N, Cout, H, W) f32."""
    n, cin, h, w = x_nchw.shape
    cout = params["conv1_w"].shape[0]
    th = _pick_tile_h(h, tile_h)
    hw = h * w

    x = jnp.transpose(x_nchw.astype(jnp.float32), (0, 2, 3, 1))      # NHWC

    # norm1 statistics (Pallas reduction) + fold into per-channel scale/shift.
    stats1 = _channel_stats(x, th)
    ab1 = _group_affine(stats1, params["norm1_g"], params["norm1_b"],
                        norm_num_groups, norm_eps, hw)

    # Fused: silu(norm1(x)) -> conv1 (+bias); epilogue accumulates norm2 stats.
    w1 = jnp.transpose(params["conv1_w"], (2, 3, 1, 0)).reshape(9, cin, cout)
    h1, stats2 = _conv1_stage(
        x, ab1, w1.astype(jnp.bfloat16),
        params["conv1_b"].reshape(1, cout).astype(jnp.float32), th)

    ab2 = _group_affine(stats2, params["norm2_g"], params["norm2_b"],
                        norm_num_groups, norm_eps, hw)

    # Fused: silu(norm2(h1)) -> conv2 (+bias) + nin_shortcut(x) + residual add.
    w2 = jnp.transpose(params["conv2_w"], (2, 3, 1, 0)).reshape(9, cout, cout)
    if cin != cout:
        wn = params["nin_w"].reshape(cout, cin).T.astype(jnp.bfloat16)
        bn = params["nin_b"].reshape(1, cout).astype(jnp.float32)
    else:
        wn, bn = None, None
    out = _conv2_stage(h1, ab2, w2.astype(jnp.bfloat16),
                       params["conv2_b"].reshape(1, cout).astype(jnp.float32),
                       x, wn, bn, th)
    return jnp.transpose(out, (0, 3, 1, 2))                         # back to NCHW


# ------------------------------ pure-JAX reference ------------------------------

def _ref_group_norm(x, gamma, beta, groups, eps):
    n, c, h, w = x.shape
    xg = x.reshape(n, groups, -1)
    mean = xg.mean(-1, keepdims=True)
    var = ((xg - mean) ** 2).mean(-1, keepdims=True)
    xn = ((xg - mean) / jnp.sqrt(var + eps)).reshape(n, c, h, w)
    return xn * gamma.reshape(1, c, 1, 1) + beta.reshape(1, c, 1, 1)


def _ref_conv(x, wgt, b, padding):
    y = lax.conv_general_dilated(x, wgt, (1, 1), [(padding, padding)] * 2,
                                 dimension_numbers=("NCHW", "OIHW", "NCHW"))
    return y + b.reshape(1, -1, 1, 1)


def _ref_forward(x, params, groups, eps):
    h = jax.nn.silu(_ref_group_norm(x, params["norm1_g"], params["norm1_b"], groups, eps))
    h = _ref_conv(h, params["conv1_w"], params["conv1_b"], 1)
    h = jax.nn.silu(_ref_group_norm(h, params["norm2_g"], params["norm2_b"], groups, eps))
    h = _ref_conv(h, params["conv2_w"], params["conv2_b"], 1)
    if x.shape[1] != h.shape[1]:
        x = _ref_conv(x, params["nin_w"], params["nin_b"], 0)
    return x + h


def _make_params(key, cin, cout):
    ks = jax.random.split(key, 10)
    p = {
        "norm1_g": 1.0 + 0.1 * jax.random.normal(ks[0], (cin,), jnp.float32),
        "norm1_b": 0.1 * jax.random.normal(ks[1], (cin,), jnp.float32),
        "conv1_w": 0.1 * jax.random.normal(ks[2], (cout, cin, 3, 3), jnp.float32),
        "conv1_b": 0.1 * jax.random.normal(ks[3], (cout,), jnp.float32),
        "norm2_g": 1.0 + 0.1 * jax.random.normal(ks[4], (cout,), jnp.float32),
        "norm2_b": 0.1 * jax.random.normal(ks[5], (cout,), jnp.float32),
        "conv2_w": 0.1 * jax.random.normal(ks[6], (cout, cout, 3, 3), jnp.float32),
        "conv2_b": 0.1 * jax.random.normal(ks[7], (cout,), jnp.float32),
    }
    if cin != cout:
        p["nin_w"] = 0.1 * jax.random.normal(ks[8], (cout, cin, 1, 1), jnp.float32)
        p["nin_b"] = 0.1 * jax.random.normal(ks[9], (cout,), jnp.float32)
    return p


# ------------------------------------ main --------------------------------------

if __name__ == "__main__":
    GROUPS = 4
    EPS = 1e-5
    key = jax.random.PRNGKey(0)
    k_case1, k_case2, kx1, kx2 = jax.random.split(key, 4)

    fwd = jax.jit(functools.partial(maisi_resblock_forward,
                                    norm_num_groups=GROUPS, norm_eps=EPS))

    # Case 1: cin != cout (exercises the fused 1x1 nin_shortcut path).
    N, CIN, COUT, H, W = 2, 8, 16, 16, 16
    params1 = _make_params(k_case1, CIN, COUT)
    x1 = jax.random.normal(kx1, (N, CIN, H, W), jnp.float32)
    out1 = jax.block_until_ready(fwd(x1, params1))
    ref1 = jax.block_until_ready(_ref_forward(x1, params1, GROUPS, EPS))
    assert out1.shape == (N, COUT, H, W), out1.shape
    err1 = float(jnp.max(jnp.abs(out1 - ref1)))
    # bf16 MXU operands + bf16 conv1 intermediate (f32 accumulation) => relaxed tol.
    assert jnp.allclose(out1, ref1, atol=5e-2, rtol=5e-2), err1

    # Case 2: cin == cout (exercises the identity-shortcut kernel).
    N2, C2, H2, W2 = 1, 16, 16, 16
    params2 = _make_params(k_case2, C2, C2)
    x2 = jax.random.normal(kx2, (N2, C2, H2, W2), jnp.float32)
    out2 = jax.block_until_ready(fwd(x2, params2))
    ref2 = jax.block_until_ready(_ref_forward(x2, params2, GROUPS, EPS))
    assert out2.shape == (N2, C2, H2, W2), out2.shape
    err2 = float(jnp.max(jnp.abs(out2 - ref2)))
    assert jnp.allclose(out2, ref2, atol=5e-2, rtol=5e-2), err2

    print("KERNEL_OK")
</pallas_src>

<mosaic_0001>
module attributes {stable_mosaic.version = 11 : i64} {
  func.func @_channel_stats_kernel(%arg0: i32, %arg1: i32, %arg2: memref<1x16x16x8xf32, #tpu.memory_space<vmem>>, %arg3: memref<1x2x8xf32, #tpu.memory_space<vmem>>) attributes {dimension_semantics = [#tpu.dimension_semantics<parallel>, #tpu.dimension_semantics<arbitrary>], iteration_bounds = array<i64: 2, 1>, scalar_prefetch = 0 : i64, scratch_operands = 0 : i64, tpu.core_type = #tpu.core_type<tc>, window_params = [{transform_indices = @transform_0, window_bounds = array<i64: 1, 16, 16, 8>}, {transform_indices = @transform_1, window_bounds = array<i64: 1, 2, 8>}]} {
    %c0 = arith.constant 0 : index
    %c0_0 = arith.constant 0 : index
    %c0_1 = arith.constant 0 : index
    %c0_2 = arith.constant 0 : index
    %0 = vector.load %arg2[%c0, %c0_0, %c0_1, %c0_2] : memref<1x16x16x8xf32, #tpu.memory_space<vmem>>, vector<1x16x16x8xf32>
    %1 = vector.shape_cast %0 : vector<1x16x16x8xf32> to vector<16x16x8xf32>
    %2 = vector.shape_cast %1 : vector<16x16x8xf32> to vector<256x8xf32>
    %cst = arith.constant dense<0.000000e+00> : vector<8xf32>
    %3 = vector.multi_reduction <add>, %2, %cst [0] : vector<256x8xf32> to vector<8xf32>
    %4 = vector.shape_cast %3 : vector<8xf32> to vector<1x8xf32>
    %5 = arith.mulf %2, %2 : vector<256x8xf32>
    %cst_3 = arith.constant dense<0.000000e+00> : vector<8xf32>
    %6 = vector.multi_reduction <add>, %5, %cst_3 [0] : vector<256x8xf32> to vector<8xf32>
    %7 = vector.shape_cast %6 : vector<8xf32> to vector<1x8xf32>
    %8 = tpu.concatenate %4, %7 in 0 : vector<1x8xf32>, vector<1x8xf32> -> vector<2x8xf32>
    %c0_i32 = arith.constant 0 : i32
    %9 = arith.cmpi eq, %arg1, %c0_i32 : i32
    %10 = arith.extui %9 : i1 to i32
    %c0_i32_4 = arith.constant 0 : i32
    %11 = arith.cmpi ne, %10, %c0_i32_4 : i32
    scf.if %11 {
      %cst_11 = arith.constant 0.000000e+00 : f32
      %18 = vector.broadcast %cst_11 : f32 to vector<1x2x8xf32>
      %c0_12 = arith.constant 0 : index
      %c0_13 = arith.constant 0 : index
      %c0_14 = arith.constant 0 : index
      %19 = vector.load %arg3[%c0_12, %c0_13, %c0_14] : memref<1x2x8xf32, #tpu.memory_space<vmem>>, vector<1x2x8xf32>
      tpu.vector_store %arg3[%c0_12, %c0_13, %c0_14], %18 {strides = array<i32>} : memref<1x2x8xf32, #tpu.memory_space<vmem>>, vector<1x2x8xf32>,
    } else {
    }
    %c0_5 = arith.constant 0 : index
    %c0_6 = arith.constant 0 : index
    %c0_7 = arith.constant 0 : index
    %12 = vector.load %arg3[%c0_5, %c0_6, %c0_7] : memref<1x2x8xf32, #tpu.memory_space<vmem>>, vector<1x2x8xf32>
    %13 = vector.shape_cast %12 : vector<1x2x8xf32> to vector<2x8xf32>
    %14 = arith.addf %13, %8 : vector<2x8xf32>
    %c0_8 = arith.constant 0 : index
    %c0_9 = arith.constant 0 : index
    %c0_10 = arith.constant 0 : index
    %15 = vector.load %arg3[%c0_8, %c0_9, %c0_10] : memref<1x2x8xf32, #tpu.memory_space<vmem>>, vector<1x2x8xf32>
    %16 = vector.shape_cast %15 : vector<1x2x8xf32> to vector<2x8xf32>
    %17 = vector.shape_cast %14 : vector<2x8xf32> to vector<1x2x8xf32>
    tpu.vector_store %arg3[%c0_8, %c0_9, %c0_10], %17 {strides = array<i32>} : memref<1x2x8xf32, #tpu.memory_space<vmem>>, vector<1x2x8xf32>,
    return
  }
  func.func @transform_0(%arg0: i32, %arg1: i32) -> (i32, i32, i32, i32) {
    %c0_i32 = arith.constant 0 : i32
    %c0_i32_0 = arith.constant 0 : i32
    %c0_i32_1 = arith.constant 0 : i32
    return %arg0, %arg1, %c0_i32, %c0_i32_0 : i32, i32, i32, i32
  }
  func.func @transform_1(%arg0: i32, %arg1: i32) -> (i32, i32, i32) {
    %c0_i32 = arith.constant 0 : i32
    %c0_i32_0 = arith.constant 0 : i32
    %c0_i32_1 = arith.constant 0 : i32
    return %arg0, %c0_i32, %c0_i32_0 : i32, i32, i32
  }
}

module attributes {stable_mosaic.version = 11 : i64} {
  func.func @_conv1_kernel(%arg0: i32, %arg1: i32, %arg2: memref<1x1x16x8xf32, #tpu.memory_space<vmem>>, %arg3: memref<1x16x16x8xf32, #tpu.memory_space<vmem>>, %arg4: memref<1x1x16x8xf32, #tpu.memory_space<vmem>>, %arg5: memref<1x2x8xf32, #tpu.memory_space<vmem>>, %arg6: memref<9x8x16xbf16, #tpu.memory_space<vmem>>, %arg7: memref<1x16xf32, #tpu.memory_space<vmem>>, %arg8: memref<1x16x16x16xbf16, #tpu.memory_space<vmem>>, %arg9: memref<1x2x16xf32, #tpu.memory_space<vmem>>) attributes {dimension_semantics = [#tpu.dimension_semantics<parallel>, #tpu.dimension_semantics<arbitrary>], iteration_bounds = array<i64: 2, 1>, scalar_prefetch = 0 : i64, scratch_operands = 0 : i64, tpu.core_type = #tpu.core_type<tc>, window_params = [{transform_indices = @transform_0, window_bounds = array<i64: 1, 1, 16, 8>}, {transform_indices = @transform_1, window_bounds = array<i64: 1, 16, 16, 8>}, {transform_indices = @transform_2, window_bounds = array<i64: 1, 1, 16, 8>}, {transform_indices = @transform_3, window_bounds = array<i64: 1, 2, 8>}, {pipeline_mode = #tpu.pipeline_mode<synchronous>, transform_indices = @transform_4, window_bounds = array<i64: 9, 8, 16>}, {pipeline_mode = #tpu.pipeline_mode<synchronous>, transform_indices = @transform_5, window_bounds = array<i64: 1, 16>}, {transform_indices = @transform_6, window_bounds = array<i64: 1, 16, 16, 16>}, {transform_indices = @transform_7, window_bounds = array<i64: 1, 2, 16>}]} {
    %c0 = arith.constant 0 : index
    %c0_0 = arith.constant 0 : index
    %c0_1 = arith.constant 0 : index
    %0 = vector.load %arg5[%c0, %c0_0, %c0_1] : memref<1x2x8xf32, #tpu.memory_space<vmem>>, vector<1x2x8xf32>
    %1 = vector.shape_cast %0 : vector<1x2x8xf32> to vector<2x8xf32>
    %2 = vector.extract_strided_slice %1 {offsets = [0, 0], sizes = [1, 8], strides = [1, 1]} : vector<2x8xf32> to vector<1x8xf32>
    %3 = vector.shape_cast %2 : vector<1x8xf32> to vector<8xf32>
    %4 = vector.extract_strided_slice %1 {offsets = [1, 0], sizes = [1, 8], strides = [1, 1]} : vector<2x8xf32> to vector<1x8xf32>
    %5 = vector.shape_cast %4 : vector<1x8xf32> to vector<8xf32>
    %c0_2 = arith.constant 0 : index
    %c0_3 = arith.constant 0 : index
    %c0_4 = arith.constant 0 : index
    %c0_5 = arith.constant 0 : index
    %6 = vector.load %arg2[%c0_2, %c0_3, %c0_4, %c0_5] : memref<1x1x16x8xf32, #tpu.memory_space<vmem>>, vector<1x1x16x8xf32>
    %7 = vector.shape_cast %6 : vector<1x1x16x8xf32> to vector<1x16x8xf32>
    %8 = vector.shape_cast %3 : vector<8xf32> to vector<1x1x8xf32>
    %9 = vector.broadcast %8 : vector<1x1x8xf32> to vector<1x16x8xf32>
    %10 = arith.mulf %7, %9 : vector<1x16x8xf32>
    %11 = vector.shape_cast %5 : vector<8xf32> to vector<1x1x8xf32>
    %12 = vector.broadcast %11 : vector<1x1x8xf32> to vector<1x16x8xf32>
    %13 = arith.addf %10, %12 : vector<1x16x8xf32>
    %14 = arith.negf %13 : vector<1x16x8xf32>
    %15 = math.exp %14 : vector<1x16x8xf32>
    %cst = arith.constant 1.000000e+00 : f32
    %16 = vector.broadcast %cst : f32 to vector<1x16x8xf32>
    %17 = arith.addf %16, %15 : vector<1x16x8xf32>
    %18 = arith.divf %16, %17 : vector<1x16x8xf32>
    %19 = arith.mulf %13, %18 : vector<1x16x8xf32>
    %20 = arith.truncf %19 : vector<1x16x8xf32> to vector<1x16x8xbf16>
    %c0_i32 = arith.constant 0 : i32
    %21 = arith.cmpi eq, %arg1, %c0_i32 : i32
    %cst_6 = arith.constant 0.000000e+00 : bf16
    %22 = vector.broadcast %cst_6 : bf16 to vector<1x16x8xbf16>
    %23 = arith.select %21, %22, %20 : vector<1x16x8xbf16>
    %c0_7 = arith.constant 0 : index
    %c0_8 = arith.constant 0 : index
    %c0_9 = arith.constant 0 : index
    %c0_10 = arith.constant 0 : index
    %24 = vector.load %arg4[%c0_7, %c0_8, %c0_9, %c0_10] : memref<1x1x16x8xf32, #tpu.memory_space<vmem>>, vector<1x1x16x8xf32>
    %25 = vector.shape_cast %24 : vector<1x1x16x8xf32> to vector<1x16x8xf32>
    %26 = vector.shape_cast %3 : vector<8xf32> to vector<1x1x8xf32>
    %27 = vector.broadcast %26 : vector<1x1x8xf32> to vector<1x16x8xf32>
    %28 = arith.mulf %25, %27 : vector<1x16x8xf32>
    %29 = vector.shape_cast %5 : vector<8xf32> to vector<1x1x8xf32>
    %30 = vector.broadcast %29 : vector<1x1x8xf32> to vector<1x16x8xf32>
    %31 = arith.addf %28, %30 : vector<1x16x8xf32>
    %32 = arith.negf %31 : vector<1x16x8xf32>
    %33 = math.exp %32 : vector<1x16x8xf32>
    %cst_11 = arith.constant 1.000000e+00 : f32
    %34 = vector.broadcast %cst_11 : f32 to vector<1x16x8xf32>
    %35 = arith.addf %34, %33 : vector<1x16x8xf32>
    %36 = arith.divf %34, %35 : vector<1x16x8xf32>
    %37 = arith.mulf %31, %36 : vector<1x16x8xf32>
    %38 = arith.truncf %37 : vector<1x16x8xf32> to vector<1x16x8xbf16>
    %c0_i32_12 = arith.constant 0 : i32
    %39 = arith.cmpi eq, %arg1, %c0_i32_12 : i32
    %cst_13 = arith.constant 0.000000e+00 : bf16
    %40 = vector.broadcast %cst_13 : bf16 to vector<1x16x8xbf16>
    %41 = arith.select %39, %40, %38 : vector<1x16x8xbf16>
    %c0_14 = arith.constant 0 : index
    %c0_15 = arith.constant 0 : index
    %c0_16 = arith.constant 0 : index
    %c0_17 = arith.constant 0 : index
    %42 = vector.load %arg3[%c0_14, %c0_15, %c0_16, %c0_17] : memref<1x16x16x8xf32, #tpu.memory_space<vmem>>, vector<1x16x16x8xf32>
    %43 = vector.shape_cast %42 : vector<1x16x16x8xf32> to vector<16x16x8xf32>
    %44 = vector.shape_cast %3 : vector<8xf32> to vector<1x1x8xf32>
    %45 = vector.broadcast %44 : vector<1x1x8xf32> to vector<16x16x8xf32>
    %46 = arith.mulf %43, %45 : vector<16x16x8xf32>
    %47 = vector.shape_cast %5 : vector<8xf32> to vector<1x1x8xf32>
    %48 = vector.broadcast %47 : vector<1x1x8xf32> to vector<16x16x8xf32>
    %49 = arith.addf %46, %48 : vector<16x16x8xf32>
    %50 = arith.negf %49 : vector<16x16x8xf32>
    %51 = math.exp %50 : vector<16x16x8xf32>
    %cst_18 = arith.constant 1.000000e+00 : f32
    %52 = vector.broadcast %cst_18 : f32 to vector<16x16x8xf32>
    %53 = arith.addf %52, %51 : vector<16x16x8xf32>
    %54 = arith.divf %52, %53 : vector<16x16x8xf32>
    %55 = arith.mulf %49, %54 : vector<16x16x8xf32>
    %56 = arith.truncf %55 : vector<16x16x8xf32> to vector<16x16x8xbf16>
    %57 = tpu.concatenate %23, %56, %41 in 0 : vector<1x16x8xbf16>, vector<16x16x8xbf16>, vector<1x16x8xbf16> -> vector<18x16x8xbf16>
    %cst_19 = arith.constant 0.000000e+00 : bf16
    %58 = vector.broadcast %cst_19 : bf16 to vector<18x1x8xbf16>
    %59 = tpu.concatenate %58, %57, %58 in 1 : vector<18x1x8xbf16>, vector<18x16x8xbf16>, vector<18x1x8xbf16> -> vector<18x18x8xbf16>
    %cst_20 = arith.constant 0.000000e+00 : f32
    %60 = vector.broadcast %cst_20 : f32 to vector<256x16xf32>
    %61 = vector.extract_strided_slice %59 {offsets = [0, 0, 0], sizes = [16, 16, 8], strides = [1, 1, 1]} : vector<18x18x8xbf16> to vector<16x16x8xbf16>
    %62 = vector.shape_cast %61 : vector<16x16x8xbf16> to vector<256x8xbf16>
    %c0_21 = arith.constant 0 : index
    %c0_22 = arith.constant 0 : index
    %c0_23 = arith.constant 0 : index
    %63 = vector.load %arg6[%c0_21, %c0_22, %c0_23] : memref<9x8x16xbf16, #tpu.memory_space<vmem>>, vector<1x8x16xbf16>
    %64 = vector.shape_cast %63 : vector<1x8x16xbf16> to vector<8x16xbf16>
    %cst_24 = arith.constant dense<0.000000e+00> : vector<256x16xf32>
    %65 = tpu.matmul %62, %64, %cst_24 {dimension_numbers = #tpu.dot_dimension_numbers<[1], [0], [0], [1], [0, 0, 1, 1], [], []>} : vector<256x8xbf16>, vector<8x16xbf16>, vector<256x16xf32> -> vector<256x16xf32>
    %66 = arith.addf %60, %65 : vector<256x16xf32>
    %67 = vector.extract_strided_slice %59 {offsets = [0, 1, 0], sizes = [16, 16, 8], strides = [1, 1, 1]} : vector<18x18x8xbf16> to vector<16x16x8xbf16>
    %68 = vector.shape_cast %67 : vector<16x16x8xbf16> to vector<256x8xbf16>
    %c1 = arith.constant 1 : index
    %c0_25 = arith.constant 0 : index
    %c0_26 = arith.constant 0 : index
    %69 = vector.load %arg6[%c1, %c0_25, %c0_26] : memref<9x8x16xbf16, #tpu.memory_space<vmem>>, vector<1x8x16xbf16>
    %70 = vector.shape_cast %69 : vector<1x8x16xbf16> to vector<8x16xbf16>
    %cst_27 = arith.constant dense<0.000000e+00> : vector<256x16xf32>
    %71 = tpu.matmul %68, %70, %cst_27 {dimension_numbers = #tpu.dot_dimension_numbers<[1], [0], [0], [1], [0, 0, 1, 1], [], []>} : vector<256x8xbf16>, vector<8x16xbf16>, vector<256x16xf32> -> vector<256x16xf32>
    %72 = arith.addf %66, %71 : vector<256x16xf32>
    %73 = vector.extract_strided_slice %59 {offsets = [0, 2, 0], sizes = [16, 16, 8], strides = [1, 1, 1]} : vector<18x18x8xbf16> to vector<16x16x8xbf16>
    %74 = vector.shape_cast %73 : vector<16x16x8xbf16> to vector<256x8xbf16>
    %c2 = arith.constant 2 : index
    %c0_28 = arith.constant 0 : index
    %c0_29 = arith.constant 0 : index
    %75 = vector.load %arg6[%c2, %c0_28, %c0_29] : memref<9x8x16xbf16, #tpu.memory_space<vmem>>, vector<1x8x16xbf16>
    %76 = vector.shape_cast %75 : vector<1x8x16xbf16> to vector<8x16xbf16>
    %cst_30 = arith.constant dense<0.000000e+00> : vector<256x16xf32>
    %77 = tpu.matmul %74, %76, %cst_30 {dimension_numbers = #tpu.dot_dimension_numbers<[1], [0], [0], [1], [0, 0, 1, 1], [], []>} : vector<256x8xbf16>, vector<8x16xbf16>, vector<256x16xf32> -> vector<256x16xf32>
    %78 = arith.addf %72, %77 : vector<256x16xf32>
    %79 = vector.extract_strided_slice %59 {offsets = [1, 0, 0], sizes = [16, 16, 8], strides = [1, 1, 1]} : vector<18x18x8xbf16> to vector<16x16x8xbf16>
    %80 = vector.shape_cast %79 : vector<16x16x8xbf16> to vector<256x8xbf16>
    %c3 = arith.constant 3 : index
    %c0_31 = arith.constant 0 : index
    %c0_32 = arith.constant 0 : index
    %81 = vector.load %arg6[%c3, %c0_31, %c0_32] : memref<9x8x16xbf16, #tpu.memory_space<vmem>>, vector<1x8x16xbf16>
    %82 = vector.shape_cast %81 : vector<1x8x16xbf16> to vector<8x16xbf16>
    %cst_33 = arith.constant dense<0.000000e+00> : vector<256x16xf32>
    %83 = tpu.matmul %80, %82, %cst_33 {dimension_numbers = #tpu.dot_dimension_numbers<[1], [0], [0], [1], [0, 0, 1, 1], [], []>} : vector<256x8xbf16>, vector<8x16xbf16>, vector<256x16xf32> -> vector<256x16xf32>
    %84 = arith.addf %78, %83 : vector<256x16xf32>
    %85 = vector.extract_strided_slice %59 {offsets = [1, 1, 0], sizes = [16, 16, 8], strides = [1, 1, 1]} : vector<18x18x8xbf16> to vector<16x16x8xbf16>
    %86 = vector.shape_cast %85 : vector<16x16x8xbf16> to vector<256x8xbf16>
    %c4 = arith.constant 4 : index
    %c0_34 = arith.constant 0 : index
    %c0_35 = arith.constant 0 : index
    %87 = vector.load %arg6[%c4, %c0_34, %c0_35] : memref<9x8x16xbf16, #tpu.memory_space<vmem>>, vector<1x8x16xbf16>
    %88 = vector.shape_cast %87 : vector<1x8x16xbf16> to vector<8x16xbf16>
    %cst_36 = arith.constant dense<0.000000e+00> : vector<256x16xf32>
    %89 = tpu.matmul %86, %88, %cst_36 {dimension_numbers = #tpu.dot_dimension_numbers<[1], [0], [0], [1], [0, 0, 1, 1], [], []>} : vector<256x8xbf16>, vector<8x16xbf16>, vector<256x16xf32> -> vector<256x16xf32>
    %90 = arith.addf %84, %89 : vector<256x16xf32>
    %91 = vector.extract_strided_slice %59 {offsets = [1, 2, 0], sizes = [16, 16, 8], strides = [1, 1, 1]} : vector<18x18x8xbf16> to vector<16x16x8xbf16>
    %92 = vector.shape_cast %91 : vector<16x16x8xbf16> to vector<256x8xbf16>
    %c5 = arith.constant 5 : index
    %c0_37 = arith.constant 0 : index
    %c0_38 = arith.constant 0 : index
    %93 = vector.load %arg6[%c5, %c0_37, %c0_38] : memref<9x8x16xbf16, #tpu.memory_space<vmem>>, vector<1x8x16xbf16>
    %94 = vector.shape_cast %93 : vector<1x8x16xbf16> to vector<8x16xbf16>
    %cst_39 = arith.constant dense<0.000000e+00> : vector<256x16xf32>
    %95 = tpu.matmul %92, %94, %cst_39 {dimension_numbers = #tpu.dot_dimension_numbers<[1], [0], [0], [1], [0, 0, 1, 1], [], []>} : vector<256x8xbf16>, vector<8x16xbf16>, vector<256x16xf32> -> vector<256x16xf32>
    %96 = arith.addf %90, %95 : vector<256x16xf32>
    %97 = vector.extract_strided_slice %59 {offsets = [2, 0, 0], sizes = [16, 16, 8], strides = [1, 1, 1]} : vector<18x18x8xbf16> to vector<16x16x8xbf16>
    %98 = vector.shape_cast %97 : vector<16x16x8xbf16> to vector<256x8xbf16>
    %c6 = arith.constant 6 : index
    %c0_40 = arith.constant 0 : index
    %c0_41 = arith.constant 0 : index
    %99 = vector.load %arg6[%c6, %c0_40, %c0_41] : memref<9x8x16xbf16, #tpu.memory_space<vmem>>, vector<1x8x16xbf16>
    %100 = vector.shape_cast %99 : vector<1x8x16xbf16> to vector<8x16xbf16>
    %cst_42 = arith.constant dense<0.000000e+00> : vector<256x16xf32>
    %101 = tpu.matmul %98, %100, %cst_42 {dimension_numbers = #tpu.dot_dimension_numbers<[1], [0], [0], [1], [0, 0, 1, 1], [], []>} : vector<256x8xbf16>, vector<8x16xbf16>, vector<256x16xf32> -> vector<256x16xf32>
    %102 = arith.addf %96, %101 : vector<256x16xf32>
    %103 = vector.extract_strided_slice %59 {offsets = [2, 1, 0], sizes = [16, 16, 8], strides = [1, 1, 1]} : vector<18x18x8xbf16> to vector<16x16x8xbf16>
    %104 = vector.shape_cast %103 : vector<16x16x8xbf16> to vector<256x8xbf16>
    %c7 = arith.constant 7 : index
    %c0_43 = arith.constant 0 : index
    %c0_44 = arith.constant 0 : index
    %105 = vector.load %arg6[%c7, %c0_43, %c0_44] : memref<9x8x16xbf16, #tpu.memory_space<vmem>>, vector<1x8x16xbf16>
    %106 = vector.shape_cast %105 : vector<1x8x16xbf16> to vector<8x16xbf16>
    %cst_45 = arith.constant dense<0.000000e+00> : vector<256x16xf32>
    %107 = tpu.matmul %104, %106, %cst_45 {dimension_numbers = #tpu.dot_dimension_numbers<[1], [0], [0], [1], [0, 0, 1, 1], [], []>} : vector<256x8xbf16>, vector<8x16xbf16>, vector<256x16xf32> -> vector<256x16xf32>
    %108 = arith.addf %102, %107 : vector<256x16xf32>
    %109 = vector.extract_strided_slice %59 {offsets = [2, 2, 0], sizes = [16, 16, 8], strides = [1, 1, 1]} : vector<18x18x8xbf16> to vector<16x16x8xbf16>
    %110 = vector.shape_cast %109 : vector<16x16x8xbf16> to vector<256x8xbf16>
    %c8 = arith.constant 8 : index
    %c0_46 = arith.constant 0 : index
    %c0_47 = arith.constant 0 : index
    %111 = vector.load %arg6[%c8, %c0_46, %c0_47] : memref<9x8x16xbf16, #tpu.memory_space<vmem>>, vector<1x8x16xbf16>
    %112 = vector.shape_cast %111 : vector<1x8x16xbf16> to vector<8x16xbf16>
    %cst_48 = arith.constant dense<0.000000e+00> : vector<256x16xf32>
    %113 = tpu.matmul %110, %112, %cst_48 {dimension_numbers = #tpu.dot_dimension_numbers<[1], [0], [0], [1], [0, 0, 1, 1], [], []>} : vector<256x8xbf16>, vector<8x16xbf16>, vector<256x16xf32> -> vector<256x16xf32>
    %114 = arith.addf %108, %113 : vector<256x16xf32>
    %c0_49 = arith.constant 0 : index
    %c0_50 = arith.constant 0 : index
    %115 = vector.load %arg7[%c0_49, %c0_50] : memref<1x16xf32, #tpu.memory_space<vmem>>, vector<1x16xf32>
    %116 = vector.shape_cast %115 : vector<1x16xf32> to vector<16xf32>
    %117 = vector.shape_cast %116 : vector<16xf32> to vector<1x16xf32>
    %118 = vector.broadcast %117 : vector<1x16xf32> to vector<256x16xf32>
    %119 = arith.addf %114, %118 : vector<256x16xf32>
    %120 = arith.truncf %119 : vector<256x16xf32> to vector<256x16xbf16>
    %121 = vector.shape_cast %120 : vector<256x16xbf16> to vector<16x16x16xbf16>
    %c0_51 = arith.constant 0 : index
    %c0_52 = arith.constant 0 : index
    %c0_53 = arith.constant 0 : index
    %c0_54 = arith.constant 0 : index
    %122 = vector.load %arg8[%c0_51, %c0_52, %c0_53, %c0_54] : memref<1x16x16x16xbf16, #tpu.memory_space<vmem>>, vector<1x16x16x16xbf16>
    %123 = vector.shape_cast %122 : vector<1x16x16x16xbf16> to vector<16x16x16xbf16>
    %124 = vector.shape_cast %121 : vector<16x16x16xbf16> to vector<1x16x16x16xbf16>
    tpu.vector_store %arg8[%c0_51, %c0_52, %c0_53, %c0_54], %124 {strides = array<i32>} : memref<1x16x16x16xbf16, #tpu.memory_space<vmem>>, vector<1x16x16x16xbf16>,
    %125 = arith.extf %120 : vector<256x16xbf16> to vector<256x16xf32>
    %cst_55 = arith.constant dense<0.000000e+00> : vector<16xf32>
    %126 = vector.multi_reduction <add>, %125, %cst_55 [0] : vector<256x16xf32> to vector<16xf32>
    %127 = vector.shape_cast %126 : vector<16xf32> to vector<1x16xf32>
    %128 = arith.mulf %125, %125 : vector<256x16xf32>
    %cst_56 = arith.constant dense<0.000000e+00> : vector<16xf32>
    %129 = vector.multi_reduction <add>, %128, %cst_56 [0] : vector<256x16xf32> to vector<16xf32>
    %130 = vector.shape_cast %129 : vector<16xf32> to vector<1x16xf32>
    %131 = tpu.concatenate %127, %130 in 0 : vector<1x16xf32>, vector<1x16xf32> -> vector<2x16xf32>
    %c0_i32_57 = arith.constant 0 : i32
    %132 = arith.cmpi eq, %arg1, %c0_i32_57 : i32
    %133 = arith.extui %132 : i1 to i32
    %c0_i32_58 = arith.constant 0 : i32
    %134 = arith.cmpi ne, %133, %c0_i32_58 : i32
    scf.if %134 {
      %cst_65 = arith.constant 0.000000e+00 : f32
      %141 = vector.broadcast %cst_65 : f32 to vector<1x2x16xf32>
      %c0_66 = arith.constant 0 : index
      %c0_67 = arith.constant 0 : index
      %c0_68 = arith.constant 0 : index
      %142 = vector.load %arg9[%c0_66, %c0_67, %c0_68] : memref<1x2x16xf32, #tpu.memory_space<vmem>>, vector<1x2x16xf32>
      tpu.vector_store %arg9[%c0_66, %c0_67, %c0_68], %141 {strides = array<i32>} : memref<1x2x16xf32, #tpu.memory_space<vmem>>, vector<1x2x16xf32>,
    } else {
    }
    %c0_59 = arith.constant 0 : index
    %c0_60 = arith.constant 0 : index
    %c0_61 = arith.constant 0 : index
    %135 = vector.load %arg9[%c0_59, %c0_60, %c0_61] : memref<1x2x16xf32, #tpu.memory_space<vmem>>, vector<1x2x16xf32>
    %136 = vector.shape_cast %135 : vector<1x2x16xf32> to vector<2x16xf32>
    %137 = arith.addf %136, %131 : vector<2x16xf32>
    %c0_62 = arith.constant 0 : index
    %c0_63 = arith.constant 0 : index
    %c0_64 = arith.constant 0 : index
    %138 = vector.load %arg9[%c0_62, %c0_63, %c0_64] : memref<1x2x16xf32, #tpu.memory_space<vmem>>, vector<1x2x16xf32>
    %139 = vector.shape_cast %138 : vector<1x2x16xf32> to vector<2x16xf32>
    %140 = vector.shape_cast %137 : vector<2x16xf32> to vector<1x2x16xf32>
    tpu.vector_store %arg9[%c0_62, %c0_63, %c0_64], %140 {strides = array<i32>} : memref<1x2x16xf32, #tpu.memory_space<vmem>>, vector<1x2x16xf32>,
    return
  }
  func.func @transform_0(%arg0: i32, %arg1: i32) -> (i32, i32, i32, i32) {
    %c16_i32 = arith.constant 16 : i32
    %0 = arith.muli %arg1, %c16_i32 : i32
    %c1_i32 = arith.constant 1 : i32
    %1 = arith.subi %0, %c1_i32 : i32
    %c0_i32 = arith.constant 0 : i32
    %2 = arith.maxsi %1, %c0_i32 : i32
    %c0_i32_0 = arith.constant 0 : i32
    %c0_i32_1 = arith.constant 0 : i32
    %c0_i32_2 = arith.constant 0 : i32
    return %arg0, %2, %c0_i32_0, %c0_i32_1 : i32, i32, i32, i32
  }
  func.func @transform_1(%arg0: i32, %arg1: i32) -> (i32, i32, i32, i32) {
    %c0_i32 = arith.constant 0 : i32
    %c0_i32_0 = arith.constant 0 : i32
    %c0_i32_1 = arith.constant 0 : i32
    return %arg0, %arg1, %c0_i32, %c0_i32_0 : i32, i32, i32, i32
  }
  func.func @transform_2(%arg0: i32, %arg1: i32) -> (i32, i32, i32, i32) {
    %c16_i32 = arith.constant 16 : i32
    %0 = arith.muli %arg1, %c16_i32 : i32
    %c16_i32_0 = arith.constant 16 : i32
    %1 = arith.addi %0, %c16_i32_0 : i32
    %c15_i32 = arith.constant 15 : i32
    %2 = arith.minsi %1, %c15_i32 : i32
    %c0_i32 = arith.constant 0 : i32
    %c0_i32_1 = arith.constant 0 : i32
    %c0_i32_2 = arith.constant 0 : i32
    return %arg0, %2, %c0_i32, %c0_i32_1 : i32, i32, i32, i32
  }
  func.func @transform_3(%arg0: i32, %arg1: i32) -> (i32, i32, i32) {
    %c0_i32 = arith.constant 0 : i32
    %c0_i32_0 = arith.constant 0 : i32
    %c0_i32_1 = arith.constant 0 : i32
    return %arg0, %c0_i32, %c0_i32_0 : i32, i32, i32
  }
  func.func @transform_4(%arg0: i32, %arg1: i32) -> (i32, i32, i32) {
    %c0_i32 = arith.constant 0 : i32
    %c0_i32_0 = arith.constant 0 : i32
    %c0_i32_1 = arith.constant 0 : i32
    %c0_i32_2 = arith.constant 0 : i32
    return %c0_i32, %c0_i32_0, %c0_i32_1 : i32, i32, i32
  }
  func.func @transform_5(%arg0: i32, %arg1: i32) -> (i32, i32) {
    %c0_i32 = arith.constant 0 : i32
    %c0_i32_0 = arith.constant 0 : i32
    %c0_i32_1 = arith.constant 0 : i32
    return %c0_i32, %c0_i32_0 : i32, i32
  }
  func.func @transform_6(%arg0: i32, %arg1: i32) -> (i32, i32, i32, i32) {
    %c0_i32 = arith.constant 0 : i32
    %c0_i32_0 = arith.constant 0 : i32
    %c0_i32_1 = arith.constant 0 : i32
    return %arg0, %arg1, %c0_i32, %c0_i32_0 : i32, i32, i32, i32
  }
  func.func @transform_7(%arg0: i32, %arg1: i32) -> (i32, i32, i32) {
    %c0_i32 = arith.constant 0 : i32
    %c0_i32_0 = arith.constant 0 : i32
    %c0_i32_1 = arith.constant 0 : i32
    return %arg0, %c0_i32, %c0_i32_0 : i32, i32, i32
  }
}

module attributes {stable_mosaic.version = 11 : i64} {
  func.func @_conv2_res_kernel(%arg0: i32, %arg1: i32, %arg2: memref<1x1x16x16xbf16, #tpu.memory_space<vmem>>, %arg3: memref<1x16x16x16xbf16, #tpu.memory_space<vmem>>, %arg4: memref<1x1x16x16xbf16, #tpu.memory_space<vmem>>, %arg5: memref<1x2x16xf32, #tpu.memory_space<vmem>>, %arg6: memref<9x16x16xbf16, #tpu.memory_space<vmem>>, %arg7: memref<1x16xf32, #tpu.memory_space<vmem>>, %arg8: memref<1x16x16x8xf32, #tpu.memory_space<vmem>>, %arg9: memref<8x16xbf16, #tpu.memory_space<vmem>>, %arg10: memref<1x16xf32, #tpu.memory_space<vmem>>, %arg11: memref<1x16x16x16xf32, #tpu.memory_space<vmem>>) attributes {dimension_semantics = [#tpu.dimension_semantics<parallel>, #tpu.dimension_semantics<parallel>], iteration_bounds = array<i64: 2, 1>, scalar_prefetch = 0 : i64, scratch_operands = 0 : i64, tpu.core_type = #tpu.core_type<tc>, window_params = [{transform_indices = @transform_0, window_bounds = array<i64: 1, 1, 16, 16>}, {transform_indices = @transform_1, window_bounds = array<i64: 1, 16, 16, 16>}, {transform_indices = @transform_2, window_bounds = array<i64: 1, 1, 16, 16>}, {transform_indices = @transform_3, window_bounds = array<i64: 1, 2, 16>}, {pipeline_mode = #tpu.pipeline_mode<synchronous>, transform_indices = @transform_4, window_bounds = array<i64: 9, 16, 16>}, {pipeline_mode = #tpu.pipeline_mode<synchronous>, transform_indices = @transform_5, window_bounds = array<i64: 1, 16>}, {transform_indices = @transform_6, window_bounds = array<i64: 1, 16, 16, 8>}, {pipeline_mode = #tpu.pipeline_mode<synchronous>, transform_indices = @transform_7, window_bounds = array<i64: 8, 16>}, {pipeline_mode = #tpu.pipeline_mode<synchronous>, transform_indices = @transform_8, window_bounds = array<i64: 1, 16>}, {transform_indices = @transform_9, window_bounds = array<i64: 1, 16, 16, 16>}]} {
    %c0 = arith.constant 0 : index
    %c0_0 = arith.constant 0 : index
    %c0_1 = arith.constant 0 : index
    %0 = vector.load %arg5[%c0, %c0_0, %c0_1] : memref<1x2x16xf32, #tpu.memory_space<vmem>>, vector<1x2x16xf32>
    %1 = vector.shape_cast %0 : vector<1x2x16xf32> to vector<2x16xf32>
    %2 = vector.extract_strided_slice %1 {offsets = [0, 0], sizes = [1, 16], strides = [1, 1]} : vector<2x16xf32> to vector<1x16xf32>
    %3 = vector.shape_cast %2 : vector<1x16xf32> to vector<16xf32>
    %4 = vector.extract_strided_slice %1 {offsets = [1, 0], sizes = [1, 16], strides = [1, 1]} : vector<2x16xf32> to vector<1x16xf32>
    %5 = vector.shape_cast %4 : vector<1x16xf32> to vector<16xf32>
    %c0_2 = arith.constant 0 : index
    %c0_3 = arith.constant 0 : index
    %c0_4 = arith.constant 0 : index
    %c0_5 = arith.constant 0 : index
    %6 = vector.load %arg2[%c0_2, %c0_3, %c0_4, %c0_5] : memref<1x1x16x16xbf16, #tpu.memory_space<vmem>>, vector<1x1x16x16xbf16>
    %7 = vector.shape_cast %6 : vector<1x1x16x16xbf16> to vector<1x16x16xbf16>
    %8 = arith.extf %7 : vector<1x16x16xbf16> to vector<1x16x16xf32>
    %9 = vector.shape_cast %3 : vector<16xf32> to vector<1x1x16xf32>
    %10 = vector.broadcast %9 : vector<1x1x16xf32> to vector<1x16x16xf32>
    %11 = arith.mulf %8, %10 : vector<1x16x16xf32>
    %12 = vector.shape_cast %5 : vector<16xf32> to vector<1x1x16xf32>
    %13 = vector.broadcast %12 : vector<1x1x16xf32> to vector<1x16x16xf32>
    %14 = arith.addf %11, %13 : vector<1x16x16xf32>
    %15 = arith.negf %14 : vector<1x16x16xf32>
    %16 = math.exp %15 : vector<1x16x16xf32>
    %cst = arith.constant 1.000000e+00 : f32
    %17 = vector.broadcast %cst : f32 to vector<1x16x16xf32>
    %18 = arith.addf %17, %16 : vector<1x16x16xf32>
    %19 = arith.divf %17, %18 : vector<1x16x16xf32>
    %20 = arith.mulf %14, %19 : vector<1x16x16xf32>
    %21 = arith.truncf %20 : vector<1x16x16xf32> to vector<1x16x16xbf16>
    %c0_i32 = arith.constant 0 : i32
    %22 = arith.cmpi eq, %arg1, %c0_i32 : i32
    %cst_6 = arith.constant 0.000000e+00 : bf16
    %23 = vector.broadcast %cst_6 : bf16 to vector<1x16x16xbf16>
    %24 = arith.select %22, %23, %21 : vector<1x16x16xbf16>
    %c0_7 = arith.constant 0 : index
    %c0_8 = arith.constant 0 : index
    %c0_9 = arith.constant 0 : index
    %c0_10 = arith.constant 0 : index
    %25 = vector.load %arg4[%c0_7, %c0_8, %c0_9, %c0_10] : memref<1x1x16x16xbf16, #tpu.memory_space<vmem>>, vector<1x1x16x16xbf16>
    %26 = vector.shape_cast %25 : vector<1x1x16x16xbf16> to vector<1x16x16xbf16>
    %27 = arith.extf %26 : vector<1x16x16xbf16> to vector<1x16x16xf32>
    %28 = vector.shape_cast %3 : vector<16xf32> to vector<1x1x16xf32>
    %29 = vector.broadcast %28 : vector<1x1x16xf32> to vector<1x16x16xf32>
    %30 = arith.mulf %27, %29 : vector<1x16x16xf32>
    %31 = vector.shape_cast %5 : vector<16xf32> to vector<1x1x16xf32>
    %32 = vector.broadcast %31 : vector<1x1x16xf32> to vector<1x16x16xf32>
    %33 = arith.addf %30, %32 : vector<1x16x16xf32>
    %34 = arith.negf %33 : vector<1x16x16xf32>
    %35 = math.exp %34 : vector<1x16x16xf32>
    %cst_11 = arith.constant 1.000000e+00 : f32
    %36 = vector.broadcast %cst_11 : f32 to vector<1x16x16xf32>
    %37 = arith.addf %36, %35 : vector<1x16x16xf32>
    %38 = arith.divf %36, %37 : vector<1x16x16xf32>
    %39 = arith.mulf %33, %38 : vector<1x16x16xf32>
    %40 = arith.truncf %39 : vector<1x16x16xf32> to vector<1x16x16xbf16>
    %c0_i32_12 = arith.constant 0 : i32
    %41 = arith.cmpi eq, %arg1, %c0_i32_12 : i32
    %cst_13 = arith.constant 0.000000e+00 : bf16
    %42 = vector.broadcast %cst_13 : bf16 to vector<1x16x16xbf16>
    %43 = arith.select %41, %42, %40 : vector<1x16x16xbf16>
    %c0_14 = arith.constant 0 : index
    %c0_15 = arith.constant 0 : index
    %c0_16 = arith.constant 0 : index
    %c0_17 = arith.constant 0 : index
    %44 = vector.load %arg3[%c0_14, %c0_15, %c0_16, %c0_17] : memref<1x16x16x16xbf16, #tpu.memory_space<vmem>>, vector<1x16x16x16xbf16>
    %45 = vector.shape_cast %44 : vector<1x16x16x16xbf16> to vector<16x16x16xbf16>
    %46 = arith.extf %45 : vector<16x16x16xbf16> to vector<16x16x16xf32>
    %47 = vector.shape_cast %3 : vector<16xf32> to vector<1x1x16xf32>
    %48 = vector.broadcast %47 : vector<1x1x16xf32> to vector<16x16x16xf32>
    %49 = arith.mulf %46, %48 : vector<16x16x16xf32>
    %50 = vector.shape_cast %5 : vector<16xf32> to vector<1x1x16xf32>
    %51 = vector.broadcast %50 : vector<1x1x16xf32> to vector<16x16x16xf32>
    %52 = arith.addf %49, %51 : vector<16x16x16xf32>
    %53 = arith.negf %52 : vector<16x16x16xf32>
    %54 = math.exp %53 : vector<16x16x16xf32>
    %cst_18 = arith.constant 1.000000e+00 : f32
    %55 = vector.broadcast %cst_18 : f32 to vector<16x16x16xf32>
    %56 = arith.addf %55, %54 : vector<16x16x16xf32>
    %57 = arith.divf %55, %56 : vector<16x16x16xf32>
    %58 = arith.mulf %52, %57 : vector<16x16x16xf32>
    %59 = arith.truncf %58 : vector<16x16x16xf32> to vector<16x16x16xbf16>
    %60 = tpu.concatenate %24, %59, %43 in 0 : vector<1x16x16xbf16>, vector<16x16x16xbf16>, vector<1x16x16xbf16> -> vector<18x16x16xbf16>
    %cst_19 = arith.constant 0.000000e+00 : bf16
    %61 = vector.broadcast %cst_19 : bf16 to vector<18x1x16xbf16>
    %62 = tpu.concatenate %61, %60, %61 in 1 : vector<18x1x16xbf16>, vector<18x16x16xbf16>, vector<18x1x16xbf16> -> vector<18x18x16xbf16>
    %cst_20 = arith.constant 0.000000e+00 : f32
    %63 = vector.broadcast %cst_20 : f32 to vector<256x16xf32>
    %64 = vector.extract_strided_slice %62 {offsets = [0, 0, 0], sizes = [16, 16, 16], strides = [1, 1, 1]} : vector<18x18x16xbf16> to vector<16x16x16xbf16>
    %65 = vector.shape_cast %64 : vector<16x16x16xbf16> to vector<256x16xbf16>
    %c0_21 = arith.constant 0 : index
    %c0_22 = arith.constant 0 : index
    %c0_23 = arith.constant 0 : index
    %66 = vector.load %arg6[%c0_21, %c0_22, %c0_23] : memref<9x16x16xbf16, #tpu.memory_space<vmem>>, vector<1x16x16xbf16>
    %67 = vector.shape_cast %66 : vector<1x16x16xbf16> to vector<16x16xbf16>
    %cst_24 = arith.constant dense<0.000000e+00> : vector<256x16xf32>
    %68 = tpu.matmul %65, %67, %cst_24 {dimension_numbers = #tpu.dot_dimension_numbers<[1], [0], [0], [1], [0, 0, 1, 1], [], []>} : vector<256x16xbf16>, vector<16x16xbf16>, vector<256x16xf32> -> vector<256x16xf32>
    %69 = arith.addf %63, %68 : vector<256x16xf32>
    %70 = vector.extract_strided_slice %62 {offsets = [0, 1, 0], sizes = [16, 16, 16], strides = [1, 1, 1]} : vector<18x18x16xbf16> to vector<16x16x16xbf16>
    %71 = vector.shape_cast %70 : vector<16x16x16xbf16> to vector<256x16xbf16>
    %c1 = arith.constant 1 : index
    %c0_25 = arith.constant 0 : index
    %c0_26 = arith.constant 0 : index
    %72 = vector.load %arg6[%c1, %c0_25, %c0_26] : memref<9x16x16xbf16, #tpu.memory_space<vmem>>, vector<1x16x16xbf16>
    %73 = vector.shape_cast %72 : vector<1x16x16xbf16> to vector<16x16xbf16>
    %cst_27 = arith.constant dense<0.000000e+00> : vector<256x16xf32>
    %74 = tpu.matmul %71, %73, %cst_27 {dimension_numbers = #tpu.dot_dimension_numbers<[1], [0], [0], [1], [0, 0, 1, 1], [], []>} : vector<256x16xbf16>, vector<16x16xbf16>, vector<256x16xf32> -> vector<256x16xf32>
    %75 = arith.addf %69, %74 : vector<256x16xf32>
    %76 = vector.extract_strided_slice %62 {offsets = [0, 2, 0], sizes = [16, 16, 16], strides = [1, 1, 1]} : vector<18x18x16xbf16> to vector<16x16x16xbf16>
    %77 = vector.shape_cast %76 : vector<16x16x16xbf16> to vector<256x16xbf16>
    %c2 = arith.constant 2 : index
    %c0_28 = arith.constant 0 : index
    %c0_29 = arith.constant 0 : index
    %78 = vector.load %arg6[%c2, %c0_28, %c0_29] : memref<9x16x16xbf16, #tpu.memory_space<vmem>>, vector<1x16x16xbf16>
    %79 = vector.shape_cast %78 : vector<1x16x16xbf16> to vector<16x16xbf16>
    %cst_30 = arith.constant dense<0.000000e+00> : vector<256x16xf32>
    %80 = tpu.matmul %77, %79, %cst_30 {dimension_numbers = #tpu.dot_dimension_numbers<[1], [0], [0], [1], [0, 0, 1, 1], [], []>} : vector<256x16xbf16>, vector<16x16xbf16>, vector<256x16xf32> -> vector<256x16xf32>
    %81 = arith.addf %75, %80 : vector<256x16xf32>
    %82 = vector.extract_strided_slice %62 {offsets = [1, 0, 0], sizes = [16, 16, 16], strides = [1, 1, 1]} : vector<18x18x16xbf16> to vector<16x16x16xbf16>
    %83 = vector.shape_cast %82 : vector<16x16x16xbf16> to vector<256x16xbf16>
    %c3 = arith.constant 3 : index
    %c0_31 = arith.constant 0 : index
    %c0_32 = arith.constant 0 : index
    %84 = vector.load %arg6[%c3, %c0_31, %c0_32] : memref<9x16x16xbf16, #tpu.memory_space<vmem>>, vector<1x16x16xbf16>
    %85 = vector.shape_cast %84 : vector<1x16x16xbf16> to vector<16x16xbf16>
    %cst_33 = arith.constant dense<0.000000e+00> : vector<256x16xf32>
    %86 = tpu.matmul %83, %85, %cst_33 {dimension_numbers = #tpu.dot_dimension_numbers<[1], [0], [0], [1], [0, 0, 1, 1], [], []>} : vector<256x16xbf16>, vector<16x16xbf16>, vector<256x16xf32> -> vector<256x16xf32>
    %87 = arith.addf %81, %86 : vector<256x16xf32>
    %88 = vector.extract_strided_slice %62 {offsets = [1, 1, 0], sizes = [16, 16, 16], strides = [1, 1, 1]} : vector<18x18x16xbf16> to vector<16x16x16xbf16>
    %89 = vector.shape_cast %88 : vector<16x16x16xbf16> to vector<256x16xbf16>
    %c4 = arith.constant 4 : index
    %c0_34 = arith.constant 0 : index
    %c0_35 = arith.constant 0 : index
    %90 = vector.load %arg6[%c4, %c0_34, %c0_35] : memref<9x16x16xbf16, #tpu.memory_space<vmem>>, vector<1x16x16xbf16>
    %91 = vector.shape_cast %90 : vector<1x16x16xbf16> to vector<16x16xbf16>
    %cst_36 = arith.constant dense<0.000000e+00> : vector<256x16xf32>
    %92 = tpu.matmul %89, %91, %cst_36 {dimension_numbers = #tpu.dot_dimension_numbers<[1], [0], [0], [1], [0, 0, 1, 1], [], []>} : vector<256x16xbf16>, vector<16x16xbf16>, vector<256x16xf32> -> vector<256x16xf32>
    %93 = arith.addf %87, %92 : vector<256x16xf32>
    %94 = vector.extract_strided_slice %62 {offsets = [1, 2, 0], sizes = [16, 16, 16], strides = [1, 1, 1]} : vector<18x18x16xbf16> to vector<16x16x16xbf16>
    %95 = vector.shape_cast %94 : vector<16x16x16xbf16> to vector<256x16xbf16>
    %c5 = arith.constant 5 : index
    %c0_37 = arith.constant 0 : index
    %c0_38 = arith.constant 0 : index
    %96 = vector.load %arg6[%c5, %c0_37, %c0_38] : memref<9x16x16xbf16, #tpu.memory_space<vmem>>, vector<1x16x16xbf16>
    %97 = vector.shape_cast %96 : vector<1x16x16xbf16> to vector<16x16xbf16>
    %cst_39 = arith.constant dense<0.000000e+00> : vector<256x16xf32>
    %98 = tpu.matmul %95, %97, %cst_39 {dimension_numbers = #tpu.dot_dimension_numbers<[1], [0], [0], [1], [0, 0, 1, 1], [], []>} : vector<256x16xbf16>, vector<16x16xbf16>, vector<256x16xf32> -> vector<256x16xf32>
    %99 = arith.addf %93, %98 : vector<256x16xf32>
    %100 = vector.extract_strided_slice %62 {offsets = [2, 0, 0], sizes = [16, 16, 16], strides = [1, 1, 1]} : vector<18x18x16xbf16> to vector<16x16x16xbf16>
    %101 = vector.shape_cast %100 : vector<16x16x16xbf16> to vector<256x16xbf16>
    %c6 = arith.constant 6 : index
    %c0_40 = arith.constant 0 : index
    %c0_41 = arith.constant 0 : index
    %102 = vector.load %arg6[%c6, %c0_40, %c0_41] : memref<9x16x16xbf16, #tpu.memory_space<vmem>>, vector<1x16x16xbf16>
    %103 = vector.shape_cast %102 : vector<1x16x16xbf16> to vector<16x16xbf16>
    %cst_42 = arith.constant dense<0.000000e+00> : vector<256x16xf32>
    %104 = tpu.matmul %101, %103, %cst_42 {dimension_numbers = #tpu.dot_dimension_numbers<[1], [0], [0], [1], [0, 0, 1, 1], [], []>} : vector<256x16xbf16>, vector<16x16xbf16>, vector<256x16xf32> -> vector<256x16xf32>
    %105 = arith.addf %99, %104 : vector<256x16xf32>
    %106 = vector.extract_strided_slice %62 {offsets = [2, 1, 0], sizes = [16, 16, 16], strides = [1, 1, 1]} : vector<18x18x16xbf16> to vector<16x16x16xbf16>
    %107 = vector.shape_cast %106 : vector<16x16x16xbf16> to vector<256x16xbf16>
    %c7 = arith.constant 7 : index
    %c0_43 = arith.constant 0 : index
    %c0_44 = arith.constant 0 : index
    %108 = vector.load %arg6[%c7, %c0_43, %c0_44] : memref<9x16x16xbf16, #tpu.memory_space<vmem>>, vector<1x16x16xbf16>
    %109 = vector.shape_cast %108 : vector<1x16x16xbf16> to vector<16x16xbf16>
    %cst_45 = arith.constant dense<0.000000e+00> : vector<256x16xf32>
    %110 = tpu.matmul %107, %109, %cst_45 {dimension_numbers = #tpu.dot_dimension_numbers<[1], [0], [0], [1], [0, 0, 1, 1], [], []>} : vector<256x16xbf16>, vector<16x16xbf16>, vector<256x16xf32> -> vector<256x16xf32>
    %111 = arith.addf %105, %110 : vector<256x16xf32>
    %112 = vector.extract_strided_slice %62 {offsets = [2, 2, 0], sizes = [16, 16, 16], strides = [1, 1, 1]} : vector<18x18x16xbf16> to vector<16x16x16xbf16>
    %113 = vector.shape_cast %112 : vector<16x16x16xbf16> to vector<256x16xbf16>
    %c8 = arith.constant 8 : index
    %c0_46 = arith.constant 0 : index
    %c0_47 = arith.constant 0 : index
    %114 = vector.load %arg6[%c8, %c0_46, %c0_47] : memref<9x16x16xbf16, #tpu.memory_space<vmem>>, vector<1x16x16xbf16>
    %115 = vector.shape_cast %114 : vector<1x16x16xbf16> to vector<16x16xbf16>
    %cst_48 = arith.constant dense<0.000000e+00> : vector<256x16xf32>
    %116 = tpu.matmul %113, %115, %cst_48 {dimension_numbers = #tpu.dot_dimension_numbers<[1], [0], [0], [1], [0, 0, 1, 1], [], []>} : vector<256x16xbf16>, vector<16x16xbf16>, vector<256x16xf32> -> vector<256x16xf32>
    %117 = arith.addf %111, %116 : vector<256x16xf32>
    %c0_49 = arith.constant 0 : index
    %c0_50 = arith.constant 0 : index
    %118 = vector.load %arg7[%c0_49, %c0_50] : memref<1x16xf32, #tpu.memory_space<vmem>>, vector<1x16xf32>
    %119 = vector.shape_cast %118 : vector<1x16xf32> to vector<16xf32>
    %120 = vector.shape_cast %119 : vector<16xf32> to vector<1x16xf32>
    %121 = vector.broadcast %120 : vector<1x16xf32> to vector<256x16xf32>
    %122 = arith.addf %117, %121 : vector<256x16xf32>
    %c0_51 = arith.constant 0 : index
    %c0_52 = arith.constant 0 : index
    %c0_53 = arith.constant 0 : index
    %c0_54 = arith.constant 0 : index
    %123 = vector.load %arg8[%c0_51, %c0_52, %c0_53, %c0_54] : memref<1x16x16x8xf32, #tpu.memory_space<vmem>>, vector<1x16x16x8xf32>
    %124 = vector.shape_cast %123 : vector<1x16x16x8xf32> to vector<16x16x8xf32>
    %125 = vector.shape_cast %124 : vector<16x16x8xf32> to vector<256x8xf32>
    %126 = arith.truncf %125 : vector<256x8xf32> to vector<256x8xbf16>
    %c0_55 = arith.constant 0 : index
    %c0_56 = arith.constant 0 : index
    %127 = vector.load %arg9[%c0_55, %c0_56] : memref<8x16xbf16, #tpu.memory_space<vmem>>, vector<8x16xbf16>
    %cst_57 = arith.constant dense<0.000000e+00> : vector<256x16xf32>
    %128 = tpu.matmul %126, %127, %cst_57 {dimension_numbers = #tpu.dot_dimension_numbers<[1], [0], [0], [1], [0, 0, 1, 1], [], []>} : vector<256x8xbf16>, vector<8x16xbf16>, vector<256x16xf32> -> vector<256x16xf32>
    %c0_58 = arith.constant 0 : index
    %c0_59 = arith.constant 0 : index
    %129 = vector.load %arg10[%c0_58, %c0_59] : memref<1x16xf32, #tpu.memory_space<vmem>>, vector<1x16xf32>
    %130 = vector.shape_cast %129 : vector<1x16xf32> to vector<16xf32>
    %131 = vector.shape_cast %130 : vector<16xf32> to vector<1x16xf32>
    %132 = vector.broadcast %131 : vector<1x16xf32> to vector<256x16xf32>
    %133 = arith.addf %128, %132 : vector<256x16xf32>
    %134 = arith.addf %122, %133 : vector<256x16xf32>
    %135 = vector.shape_cast %134 : vector<256x16xf32> to vector<16x16x16xf32>
    %c0_60 = arith.constant 0 : index
    %c0_61 = arith.constant 0 : index
    %c0_62 = arith.constant 0 : index
    %c0_63 = arith.constant 0 : index
    %136 = vector.load %arg11[%c0_60, %c0_61, %c0_62, %c0_63] : memref<1x16x16x16xf32, #tpu.memory_space<vmem>>, vector<1x16x16x16xf32>
    %137 = vector.shape_cast %136 : vector<1x16x16x16xf32> to vector<16x16x16xf32>
    %138 = vector.shape_cast %135 : vector<16x16x16xf32> to vector<1x16x16x16xf32>
    tpu.vector_store %arg11[%c0_60, %c0_61, %c0_62, %c0_63], %138 {strides = array<i32>} : memref<1x16x16x16xf32, #tpu.memory_space<vmem>>, vector<1x16x16x16xf32>,
    return
  }
  func.func @transform_0(%arg0: i32, %arg1: i32) -> (i32, i32, i32, i32) {
    %c16_i32 = arith.constant 16 : i32
    %0 = arith.muli %arg1, %c16_i32 : i32
    %c1_i32 = arith.constant 1 : i32
    %1 = arith.subi %0, %c1_i32 : i32
    %c0_i32 = arith.constant 0 : i32
    %2 = arith.maxsi %1, %c0_i32 : i32
    %c0_i32_0 = arith.constant 0 : i32
    %c0_i32_1 = arith.constant 0 : i32
    %c0_i32_2 = arith.constant 0 : i32
    return %arg0, %2, %c0_i32_0, %c0_i32_1 : i32, i32, i32, i32
  }
  func.func @transform_1(%arg0: i32, %arg1: i32) -> (i32, i32, i32, i32) {
    %c0_i32 = arith.constant 0 : i32
    %c0_i32_0 = arith.constant 0 : i32
    %c0_i32_1 = arith.constant 0 : i32
    return %arg0, %arg1, %c0_i32, %c0_i32_0 : i32, i32, i32, i32
  }
  func.func @transform_2(%arg0: i32, %arg1: i32) -> (i32, i32, i32, i32) {
    %c16_i32 = arith.constant 16 : i32
    %0 = arith.muli %arg1, %c16_i32 : i32
    %c16_i32_0 = arith.constant 16 : i32
    %1 = arith.addi %0, %c16_i32_0 : i32
    %c15_i32 = arith.constant 15 : i32
    %2 = arith.minsi %1, %c15_i32 : i32
    %c0_i32 = arith.constant 0 : i32
    %c0_i32_1 = arith.constant 0 : i32
    %c0_i32_2 = arith.constant 0 : i32
    return %arg0, %2, %c0_i32, %c0_i32_1 : i32, i32, i32, i32
  }
  func.func @transform_3(%arg0: i32, %arg1: i32) -> (i32, i32, i32) {
    %c0_i32 = arith.constant 0 : i32
    %c0_i32_0 = arith.constant 0 : i32
    %c0_i32_1 = arith.constant 0 : i32
    return %arg0, %c0_i32, %c0_i32_0 : i32, i32, i32
  }
  func.func @transform_4(%arg0: i32, %arg1: i32) -> (i32, i32, i32) {
    %c0_i32 = arith.constant 0 : i32
    %c0_i32_0 = arith.constant 0 : i32
    %c0_i32_1 = arith.constant 0 : i32
    %c0_i32_2 = arith.constant 0 : i32
    return %c0_i32, %c0_i32_0, %c0_i32_1 : i32, i32, i32
  }
  func.func @transform_5(%arg0: i32, %arg1: i32) -> (i32, i32) {
    %c0_i32 = arith.constant 0 : i32
    %c0_i32_0 = arith.constant 0 : i32
    %c0_i32_1 = arith.constant 0 : i32
    return %c0_i32, %c0_i32_0 : i32, i32
  }
  func.func @transform_6(%arg0: i32, %arg1: i32) -> (i32, i32, i32, i32) {
    %c0_i32 = arith.constant 0 : i32
    %c0_i32_0 = arith.constant 0 : i32
    %c0_i32_1 = arith.constant 0 : i32
    return %arg0, %arg1, %c0_i32, %c0_i32_0 : i32, i32, i32, i32
  }
  func.func @transform_7(%arg0: i32, %arg1: i32) -> (i32, i32) {
    %c0_i32 = arith.constant 0 : i32
    %c0_i32_0 = arith.constant 0 : i32
    %c0_i32_1 = arith.constant 0 : i32
    return %c0_i32, %c0_i32_0 : i32, i32
  }
  func.func @transform_8(%arg0: i32, %arg1: i32) -> (i32, i32) {
    %c0_i32 = arith.constant 0 : i32
    %c0_i32_0 = arith.constant 0 : i32
    %c0_i32_1 = arith.constant 0 : i32
    return %c0_i32, %c0_i32_0 : i32, i32
  }
  func.func @transform_9(%arg0: i32, %arg1: i32) -> (i32, i32, i32, i32) {
    %c0_i32 = arith.constant 0 : i32
    %c0_i32_0 = arith.constant 0 : i32
    %c0_i32_1 = arith.constant 0 : i32
    return %arg0, %arg1, %c0_i32, %c0_i32_0 : i32, i32, i32, i32
  }
}

</mosaic_0001>

<llo_original>
// kernel: squeeze.5
$region0: #{squeeze.5}
  %s0 = inlined_call_operand.vmem [shape: f32[2,8], index: 0, kind: input, shape index: {}]
  %s1 = inlined_call_operand.vmem [shape: f32[2,4,2], index: 1, kind: output, shape index: {}]
  $region1: #{squeeze.5} parent=0
    #allocation0 [shape = 'u8[8192]{0}', space=vmem, size = 0x2000, scoped, tag = 'scoped mem for output reshape']
    #allocation1 [shape = 'u8[4096]{0}', space=vmem, size = 0x1000, scoped, tag = 'scoped mem for input reshape']
    %s3 = ssub.s32 4, 1
    %v4 = vld [vmem:[%s0] sm:%s3]
    %5 = vst [vmem:[#allocation1] sm:%s3] %v4
    %v6 = vld [vmem:[#allocation1] sm:$0x3]
    %vm7 = vcmask 15360
    %8 = vst.msk [vmem:[#allocation0] ss:$8 sm:$0x3] %vm7, %v6
    %v9 = vld [vmem:[#allocation1] sm:$0x3]
    %10 = vrot.lane.b32.xlu0 %v9, 126
    %v11 = vpop.permute.xlu0 %10
    %vm12 = vcmask 15360
    %s13 = scalar_lea.vmem [#allocation0], 1
    %14 = vst.msk [vmem:[%s13] ss:$8 sm:$0x3] %vm12, %v11
    %v15 = vld [vmem:[#allocation1] sm:$0x3]
    %16 = vrot.lane.b32.xlu0 %v15, 124
    %v17 = vpop.permute.xlu0 %16
    %vm18 = vcmask 15360
    %s19 = scalar_lea.vmem [#allocation0], 2
    %20 = vst.msk [vmem:[%s19] ss:$8 sm:$0x3] %vm18, %v17
    %v21 = vld [vmem:[#allocation1] sm:$0x3]
    %22 = vrot.lane.b32.xlu0 %v21, 122
    %v23 = vpop.permute.xlu0 %22
    %vm24 = vcmask 15360
    %s25 = scalar_lea.vmem [#allocation0], 3
    %26 = vst.msk [vmem:[%s25] ss:$8 sm:$0x3] %vm24, %v23
    %s28 = ssub.s32 16, 1
    %v29 = vld [vmem:[#allocation0] sm:%s28]
    %s31 = ssub.s32 16, 1
    %32 = vst [vmem:[%s1] sm:%s31] %v29
    %s33 = scalar_lea.vmem [#allocation0], 8
    %v34 = vld [vmem:[%s33] sm:%s28]
    %s36 = ssub.s32 16, 1
    %s37 = scalar_lea.vmem %s1, 4
    %38 = vst [vmem:[%s37] sm:%s36] %v34

// kernel: squeeze.7
$region0: #{squeeze.7}
  %s0 = inlined_call_operand.vmem [shape: f32[2,16], index: 0, kind: input, shape index: {}]
  %s1 = inlined_call_operand.vmem [shape: f32[2,4,4], index: 1, kind: output, shape index: {}]
  $region1: #{squeeze.7} parent=0
    #allocation0 [shape = 'u8[8192]{0}', space=vmem, size = 0x2000, scoped, tag = 'scoped mem for output reshape']
    #allocation1 [shape = 'u8[4096]{0}', space=vmem, size = 0x1000, scoped, tag = 'scoped mem for input reshape']
    %s3 = ssub.s32 4, 1
    %v4 = vld [vmem:[%s0] sm:%s3]
    %5 = vst [vmem:[#allocation1] sm:%s3] %v4
    %v6 = vld [vmem:[#allocation1] sm:$0x3]
    %vm7 = vcmask 31744
    %8 = vst.msk [vmem:[#allocation0] ss:$8 sm:$0x3] %vm7, %v6
    %v9 = vld [vmem:[#allocation1] sm:$0x3]
    %10 = vrot.lane.b32.xlu0 %v9, 124
    %v11 = vpop.permute.xlu0 %10
    %vm12 = vcmask 31744
    %s13 = scalar_lea.vmem [#allocation0], 1
    %14 = vst.msk [vmem:[%s13] ss:$8 sm:$0x3] %vm12, %v11
    %v15 = vld [vmem:[#allocation1] sm:$0x3]
    %16 = vrot.lane.b32.xlu0 %v15, 120
    %v17 = vpop.permute.xlu0 %16
    %vm18 = vcmask 31744
    %s19 = scalar_lea.vmem [#allocation0], 2
    %20 = vst.msk [vmem:[%s19] ss:$8 sm:$0x3] %vm18, %v17
    %v21 = vld [vmem:[#allocation1] sm:$0x3]
    %22 = vrot.lane.b32.xlu0 %v21, 116
    %v23 = vpop.permute.xlu0 %22
    %vm24 = vcmask 31744
    %s25 = scalar_lea.vmem [#allocation0], 3
    %26 = vst.msk [vmem:[%s25] ss:$8 sm:$0x3] %vm24, %v23
    %s28 = ssub.s32 16, 1
    %v29 = vld [vmem:[#allocation0] sm:%s28]
    %s31 = ssub.s32 16, 1
    %32 = vst [vmem:[%s1] sm:%s31] %v29
    %s33 = scalar_lea.vmem [#allocation0], 8
    %v34 = vld [vmem:[%s33] sm:%s28]
    %s36 = ssub.s32 16, 1
    %s37 = scalar_lea.vmem %s1, 4
    %38 = vst [vmem:[%s37] sm:%s36] %v34

// kernel: maisi_resblock_forward.3
$region0: #{maisi_resblock_forward.3}
  #allocation0 [shape = 'u32[]', space=smem, size = 0x4, offset = 0x4, fixed_abs, tag = 'smem constant byte address 0x4 - core index']
  #allocation1 [shape = 'u32[72,128]{1,0:T(1,128)}', space=vmem, size = 0x9000, scoped, tag = 'internal scratch']
  %s0 = inlined_call_operand.vmem [shape: f32[2,16,16,8], index: 0, kind: input, shape index: {}]
  %s1 = inlined_call_operand.vmem [shape: f32[2,2,8], index: 1, kind: output, shape index: {}]
  %s2 = sld [smem:[#allocation0]]
  $region41: #{maisi_resblock_forward.3} parent=0
    _
  %s4 = ssub.s32 1, %s2
  %s5 = scalar_select 0, %s4, %s2
  loop: start=0, step=1, limit=4
  $region2: #{maisi_resblock_forward.3} parent=0 // loop_pre_header
    _
  $region3: #{maisi_resblock_forward.3} parent=0 // loop_header
    %s7 = sphi 0, %s11
    %p8 = scmp.ge.s32.totalorder %s7, 4
    %s14 = sphi 0, %s26
    %s15 = sphi 0, %s22
    %s16 = sphi 0, %s14
    %s17 = sphi 0, %s15
    %s18 = sphi 0, %s16
    %s19 = sphi 0, %s17
    %s31 = sphi 0, %s33
    %s34 = sphi 0, %s31
    %s35 = sphi 0, %s34
    %s51 = sphi 0, %s35
    %s57 = sphi 0, %s59
    %s60 = sphi 0, %s57
    %s61 = sphi 0, %s60
    %s77 = sphi 0, %s61
  $region4: #{maisi_resblock_forward.3} parent=0 // loop_header_branch
    %10 = sbr.rel (%p8) target = $region8
  $region5: #{maisi_resblock_forward.3} parent=0 // loop_body
    %s12 = ssub.s32 %s7, 1
    %s13 = ssub.s32 %s7, 2
    %s20 = sadd.s32 1, %s15
    %p21 = scmp.ge.s32.totalorder %s20, 1
    %s22 = scalar_select %p21, 0, %s20
    %s23 = sadd.s32 1, %s14
    %s24 = scalar_select %p21, %s23, %s14
    %p25 = scmp.ge.s32.totalorder %s24, 2
    %s26 = scalar_select %p25, 0, %s24
    %s27 = ssub.s32 %s14, %s26
    %s28 = ssub.s32 %s15, %s22
    %s29 = sor.u32 %s27, %s28
    %p30 = scmp.eq.s32.totalorder %s29, 0
    %s32 = sadd.s32 %s31, 1
    %s33 = scalar_select %p30, %s31, %s32
    %p36 = pneg %p30
    %p37 = scmp.eq.s32.totalorder %s7, 1
    %p38 = por %p36, %p37
    %p39 = scmp.ne.s32.totalorder %s31, %s34
    %p40 = scmp.eq.s32.totalorder %s7, 0
    %p41 = por %p39, %p40
    %p42 = scmp.ne.s32.totalorder %s31, %s34
    %p43 = scmp.eq.s32.totalorder %s12, 1
    %p44 = por %p42, %p43
    %p45 = scmp.ne.s32.totalorder %s34, %s35
    %p46 = scmp.eq.s32.totalorder %s12, 0
    %p47 = por %p45, %p46
    %p48 = scmp.ne.s32.totalorder %s34, %s35
    %p49 = scmp.eq.s32.totalorder %s13, 1
    %p50 = por %p48, %p49
    %p52 = scmp.ne.s32.totalorder %s35, %s51
    %p53 = scmp.eq.s32.totalorder %s13, 0
    %p54 = por %p52, %p53
    %s55 = ssub.s32 %s14, %s26
    %p56 = scmp.eq.s32.totalorder %s55, 0
    %s58 = sadd.s32 %s57, 1
    %s59 = scalar_select %p56, %s57, %s58
    %p62 = pneg %p56
    %p63 = scmp.eq.s32.totalorder %s7, 1
    %p64 = por %p62, %p63
    %p65 = scmp.ne.s32.totalorder %s57, %s60
    %p66 = scmp.eq.s32.totalorder %s7, 0
    %p67 = por %p65, %p66
    %p68 = scmp.ne.s32.totalorder %s57, %s60
    %p69 = scmp.eq.s32.totalorder %s12, 1
    %p70 = por %p68, %p69
    %p71 = scmp.ne.s32.totalorder %s60, %s61
    %p72 = scmp.eq.s32.totalorder %s12, 0
    %p73 = por %p71, %p72
    %p74 = scmp.ne.s32.totalorder %s60, %s61
    %p75 = scmp.eq.s32.totalorder %s13, 1
    %p76 = por %p74, %p75
    %p78 = scmp.ne.s32.totalorder %s61, %s77
    %p79 = scmp.eq.s32.totalorder %s13, 0
    %p80 = por %p78, %p79
    %p81 = scmp.le.s32.totalorder 1, %s7
    %p82 = scmp.lt.s32.totalorder %s7, 3
    %p83 = pnand %p81, %p82
    %p84 = pneg %p83
    // Predicated region
    $region9: #{maisi_resblock_forward.3} parent=5 // pred_check
      _
    $region10: #{maisi_resblock_forward.3} parent=5 // pred_check_branch
      %86 = sbr.rel (%p83) target = $region12
    $region11: #{maisi_resblock_forward.3} parent=5 // pred_region
      %s87 = ssub.s32 %s7, 1
    $region12: #{maisi_resblock_forward.3} parent=5 // pred_fallthru
      _
    %p88 = scmp.lt.s32.totalorder %s7, 2
    // Predicated region
    $region13: #{maisi_resblock_forward.3} parent=5 // pred_check
      %p89 = pneg %p88
    $region14: #{maisi_resblock_forward.3} parent=5 // pred_check_branch
      %91 = sbr.rel (%p89) target = $region16
    $region15: #{maisi_resblock_forward.3} parent=5 // pred_region
      // Predicated region
      $region17: #{maisi_resblock_forward.3} parent=15 // pred_check
        %p92 = pneg %p41
      $region18: #{maisi_resblock_forward.3} parent=15 // pred_check_branch
        %94 = sbr.rel (%p92) target = $region20
      $region19: #{maisi_resblock_forward.3} parent=15 // pred_region
        %s95 = smul.u32 16, %s15
        %p96 = scmp.lt.s32.totalorder %s14, 1
        %s97 = scalar_select %p96, %s14, 1
        %p98 = scmp.lt.s32.totalorder %s95, 15
        %s99 = scalar_select %p98, %s95, 15
        %s100 = smul.addr %s99, 2
        %s101 = smul.addr %s97, 32
        %s102 = sadd.s32 %s100, %s101
        %s103 = smul.addr %s102, 8
        %s104 = scalar_lea.vmem %s0, %s103
        %s105 = smul.u32 16, %s15
      $region20: #{maisi_resblock_forward.3} parent=15 // pred_fallthru
        _
    $region16: #{maisi_resblock_forward.3} parent=5 // pred_fallthru
      _
    %p106 = scmp.le.s32.totalorder 1, %s7
    %p107 = scmp.lt.s32.totalorder %s7, 3
    %p108 = pnand %p106, %p107
    %p109 = pneg %p108
    // Predicated region
    $region21: #{maisi_resblock_forward.3} parent=5 // pred_check
      _
    $region22: #{maisi_resblock_forward.3} parent=5 // pred_check_branch
      %111 = sbr.rel (%p108) target = $region24
    $region23: #{maisi_resblock_forward.3} parent=5 // pred_region
      %s112 = ssub.s32 %s7, 1
      %s113 = smul.u32 16, %s17
      %p114 = scmp.lt.s32.totalorder %s16, 1
      %s115 = scalar_select %p114, %s16, 1
      %p116 = scmp.lt.s32.totalorder %s113, 15
      %s117 = scalar_select %p116, %s113, 15
      %s118 = smul.addr %s117, 2
      %s119 = smul.addr %s115, 32
      %s120 = sadd.s32 %s118, %s119
      %s121 = smul.addr %s120, 8
      %s122 = scalar_lea.vmem %s0, %s121
      %p123 = pneg %p47
      %p124 = pneg %p44
      %p125 = pneg %p73
      %p126 = pneg %p70
      %p127 = scmp.lt.s32.totalorder %s16, 1
      %s128 = scalar_select %p127, %s16, 1
      %s129 = smul.addr %s128, 2
      %s130 = scalar_lea.vmem %s1, %s129
      %s131 = smul.u32 16, %s17
      %p132 = scmp.lt.s32.totalorder %s16, 1
      %s133 = scalar_select %p132, %s16, 1
      %p134 = scmp.lt.s32.totalorder %s131, 15
      %s135 = scalar_select %p134, %s131, 15
      %s136 = smul.addr %s135, 2
      %s137 = smul.addr %s133, 32
      %s138 = sadd.s32 %s136, %s137
      %s139 = smul.addr %s138, 8
      %s140 = scalar_lea.vmem %s0, %s139
      %s141 = smul.u32 16, %s17
      %p142 = scmp.lt.s32.totalorder %s16, 1
      %s143 = scalar_select %p142, %s16, 1
      %s144 = smul.addr %s143, 2
      %s145 = scalar_lea.vmem %s1, %s144
      %v146 = vld [vmem:[%s140] sm:$0xff]
      %v147 = vld [vmem:[%s140 + $0x8] sm:$0xff]
      %v148 = vld [vmem:[%s140 + $0x10] sm:$0xff]
      %v149 = vld [vmem:[%s140 + $0x18] sm:$0xff]
      %v150 = vld [vmem:[%s140 + $0x20] sm:$0xff]
      %v151 = vld [vmem:[%s140 + $0x28] sm:$0xff]
      %v152 = vld [vmem:[%s140 + $0x30] sm:$0xff]
      %v153 = vld [vmem:[%s140 + $0x38] sm:$0xff]
      %v154 = vld [vmem:[%s140 + $0x40] sm:$0xff]
      %v155 = vld [vmem:[%s140 + $0x48] sm:$0xff]
      %v156 = vld [vmem:[%s140 + $0x50] sm:$0xff]
      %v157 = vld [vmem:[%s140 + $0x58] sm:$0xff]
      %v158 = vld [vmem:[%s140 + $0x60] sm:$0xff]
      %v159 = vld [vmem:[%s140 + $0x68] sm:$0xff]
      %v160 = vld [vmem:[%s140 + $0x70] sm:$0xff]
      %v161 = vld [vmem:[%s140 + $0x78] sm:$0xff]
      %v162 = vld [vmem:[%s140 + $0x80] sm:$0xff]
      %v163 = vld [vmem:[%s140 + $0x88] sm:$0xff]
      %v164 = vld [vmem:[%s140 + $0x90] sm:$0xff]
      %v165 = vld [vmem:[%s140 + $0x98] sm:$0xff]
      %v166 = vld [vmem:[%s140 + $0xa0] sm:$0xff]
      %v167 = vld [vmem:[%s140 + $0xa8] sm:$0xff]
      %v168 = vld [vmem:[%s140 + $0xb0] sm:$0xff]
      %v169 = vld [vmem:[%s140 + $0xb8] sm:$0xff]
      %v170 = vld [vmem:[%s140 + $0xc0] sm:$0xff]
      %v171 = vld [vmem:[%s140 + $0xc8] sm:$0xff]
      %v172 = vld [vmem:[%s140 + $0xd0] sm:$0xff]
      %v173 = vld [vmem:[%s140 + $0xd8] sm:$0xff]
      %v174 = vld [vmem:[%s140 + $0xe0] sm:$0xff]
      %v175 = vld [vmem:[%s140 + $0xe8] sm:$0xff]
      %v176 = vld [vmem:[%s140 + $0xf0] sm:$0xff]
      %v177 = vld [vmem:[%s140 + $0xf8] sm:$0xff]
      %vm178 = vcmask 64512
      %v179 = vsel %vm178, %v146, 0.0
      %v180 = vsel %vm178, %v147, 0.0
      %v181 = vadd.f32 %v179, %v180
      %v182 = vsel %vm178, %v148, 0.0
      %v183 = vadd.f32 %v181, %v182
      %v184 = vsel %vm178, %v149, 0.0
      %v185 = vadd.f32 %v183, %v184
      %v186 = vsel %vm178, %v150, 0.0
      %v187 = vadd.f32 %v185, %v186
      %v188 = vsel %vm178, %v151, 0.0
      %v189 = vadd.f32 %v187, %v188
      %v190 = vsel %vm178, %v152, 0.0
      %v191 = vadd.f32 %v189, %v190
      %v192 = vsel %vm178, %v153, 0.0
      %v193 = vadd.f32 %v191, %v192
      %v194 = vsel %vm178, %v154, 0.0
      %v195 = vadd.f32 %v193, %v194
      %v196 = vsel %vm178, %v155, 0.0
      %v197 = vadd.f32 %v195, %v196
      %v198 = vsel %vm178, %v156, 0.0
      %v199 = vadd.f32 %v197, %v198
      %v200 = vsel %vm178, %v157, 0.0
      %v201 = vadd.f32 %v199, %v200
      %v202 = vsel %vm178, %v158, 0.0
      %v203 = vadd.f32 %v201, %v202
      %v204 = vsel %vm178, %v159, 0.0
      %v205 = vadd.f32 %v203, %v204
      %v206 = vsel %vm178, %v160, 0.0
      %v207 = vadd.f32 %v205, %v206
      %v208 = vsel %vm178, %v161, 0.0
      %v209 = vadd.f32 %v207, %v208
      %v210 = vsel %vm178, %v162, 0.0
      %v211 = vadd.f32 %v209, %v210
      %v212 = vsel %vm178, %v163, 0.0
      %v213 = vadd.f32 %v211, %v212
      %v214 = vsel %vm178, %v164, 0.0
      %v215 = vadd.f32 %v213, %v214
      %v216 = vsel %vm178, %v165, 0.0
      %v217 = vadd.f32 %v215, %v216
      %v218 = vsel %vm178, %v166, 0.0
      %v219 = vadd.f32 %v217, %v218
      %v220 = vsel %vm178, %v167, 0.0
      %v221 = vadd.f32 %v219, %v220
      %v222 = vsel %vm178, %v168, 0.0
      %v223 = vadd.f32 %v221, %v222
      %v224 = vsel %vm178, %v169, 0.0
      %v225 = vadd.f32 %v223, %v224
      %v226 = vsel %vm178, %v170, 0.0
      %v227 = vadd.f32 %v225, %v226
      %v228 = vsel %vm178, %v171, 0.0
      %v229 = vadd.f32 %v227, %v228
      %v230 = vsel %vm178, %v172, 0.0
      %v231 = vadd.f32 %v229, %v230
      %v232 = vsel %vm178, %v173, 0.0
      %v233 = vadd.f32 %v231, %v232
      %v234 = vsel %vm178, %v174, 0.0
      %v235 = vadd.f32 %v233, %v234
      %v236 = vsel %vm178, %v175, 0.0
      %v237 = vadd.f32 %v235, %v236
      %v238 = vsel %vm178, %v176, 0.0
      %v239 = vadd.f32 %v237, %v238
      %v240 = vsel %vm178, %v177, 0.0
      %v241 = vadd.f32 %v239, %v240
      %v242 = vrot.slane %v241, 4
      %v243 = vadd.f32 %v241, %v242
      %v244 = vrot.slane %v243, 2
      %v245 = vadd.f32 %v243, %v244
      %v246 = vrot.slane %v245, 1
      %v247 = vadd.f32 %v245, %v246
      %v248 = vmul.f32 %v146, %v146
      %v249 = vmul.f32 %v147, %v147
      %v250 = vmul.f32 %v148, %v148
      %v251 = vmul.f32 %v149, %v149
      %v252 = vmul.f32 %v150, %v150
      %v253 = vmul.f32 %v151, %v151
      %v254 = vmul.f32 %v152, %v152
      %v255 = vmul.f32 %v153, %v153
      %v256 = vmul.f32 %v154, %v154
      %v257 = vmul.f32 %v155, %v155
      %v258 = vmul.f32 %v156, %v156
      %v259 = vmul.f32 %v157, %v157
      %v260 = vmul.f32 %v158, %v158
      %v261 = vmul.f32 %v159, %v159
      %v262 = vmul.f32 %v160, %v160
      %v263 = vmul.f32 %v161, %v161
      %v264 = vmul.f32 %v162, %v162
      %v265 = vmul.f32 %v163, %v163
      %v266 = vmul.f32 %v164, %v164
      %v267 = vmul.f32 %v165, %v165
      %v268 = vmul.f32 %v166, %v166
      %v269 = vmul.f32 %v167, %v167
      %v270 = vmul.f32 %v168, %v168
      %v271 = vmul.f32 %v169, %v169
      %v272 = vmul.f32 %v170, %v170
      %v273 = vmul.f32 %v171, %v171
      %v274 = vmul.f32 %v172, %v172
      %v275 = vmul.f32 %v173, %v173
      %v276 = vmul.f32 %v174, %v174
      %v277 = vmul.f32 %v175, %v175
      %v278 = vmul.f32 %v176, %v176
      %v279 = vmul.f32 %v177, %v177
      %v280 = vsel %vm178, %v248, 0.0
      %v281 = vsel %vm178, %v249, 0.0
      %v282 = vadd.f32 %v280, %v281
      %v283 = vsel %vm178, %v250, 0.0
      %v284 = vadd.f32 %v282, %v283
      %v285 = vsel %vm178, %v251, 0.0
      %v286 = vadd.f32 %v284, %v285
      %v287 = vsel %vm178, %v252, 0.0
      %v288 = vadd.f32 %v286, %v287
      %v289 = vsel %vm178, %v253, 0.0
      %v290 = vadd.f32 %v288, %v289
      %v291 = vsel %vm178, %v254, 0.0
      %v292 = vadd.f32 %v290, %v291
      %v293 = vsel %vm178, %v255, 0.0
      %v294 = vadd.f32 %v292, %v293
      %v295 = vsel %vm178, %v256, 0.0
      %v296 = vadd.f32 %v294, %v295
      %v297 = vsel %vm178, %v257, 0.0
      %v298 = vadd.f32 %v296, %v297
      %v299 = vsel %vm178, %v258, 0.0
      %v300 = vadd.f32 %v298, %v299
      %v301 = vsel %vm178, %v259, 0.0
      %v302 = vadd.f32 %v300, %v301
      %v303 = vsel %vm178, %v260, 0.0
      %v304 = vadd.f32 %v302, %v303
      %v305 = vsel %vm178, %v261, 0.0
      %v306 = vadd.f32 %v304, %v305
      %v307 = vsel %vm178, %v262, 0.0
      %v308 = vadd.f32 %v306, %v307
      %v309 = vsel %vm178, %v263, 0.0
      %v310 = vadd.f32 %v308, %v309
      %v311 = vsel %vm178, %v264, 0.0
      %v312 = vadd.f32 %v310, %v311
      %v313 = vsel %vm178, %v265, 0.0
      %v314 = vadd.f32 %v312, %v313
      %v315 = vsel %vm178, %v266, 0.0
      %v316 = vadd.f32 %v314, %v315
      %v317 = vsel %vm178, %v267, 0.0
      %v318 = vadd.f32 %v316, %v317
      %v319 = vsel %vm178, %v268, 0.0
      %v320 = vadd.f32 %v318, %v319
      %v321 = vsel %vm178, %v269, 0.0
      %v322 = vadd.f32 %v320, %v321
      %v323 = vsel %vm178, %v270, 0.0
      %v324 = vadd.f32 %v322, %v323
      %v325 = vsel %vm178, %v271, 0.0
      %v326 = vadd.f32 %v324, %v325
      %v327 = vsel %vm178, %v272, 0.0
      %v328 = vadd.f32 %v326, %v327
      %v329 = vsel %vm178, %v273, 0.0
      %v330 = vadd.f32 %v328, %v329
      %v331 = vsel %vm178, %v274, 0.0
      %v332 = vadd.f32 %v330, %v331
      %v333 = vsel %vm178, %v275, 0.0
      %v334 = vadd.f32 %v332, %v333
      %v335 = vsel %vm178, %v276, 0.0
      %v336 = vadd.f32 %v334, %v335
      %v337 = vsel %vm178, %v277, 0.0
      %v338 = vadd.f32 %v336, %v337
      %v339 = vsel %vm178, %v278, 0.0
      %v340 = vadd.f32 %v338, %v339
      %v341 = vsel %vm178, %v279, 0.0
      %v342 = vadd.f32 %v340, %v341
      %v343 = vrot.slane %v342, 4
      %v344 = vadd.f32 %v342, %v343
      %v345 = vrot.slane %v344, 2
      %v346 = vadd.f32 %v344, %v345
      %v347 = vrot.slane %v346, 1
      %v348 = vadd.f32 %v346, %v347
      %vm349 = vcmask 1040384
      %v350 = vsel %vm349, %v247, %v348
      %p351 = scmp.eq.s32.totalorder %s17, 0
      // Predicated region
      $region25: #{maisi_resblock_forward.3} parent=23 // pred_check
        %p352 = pneg %p351
      $region26: #{maisi_resblock_forward.3} parent=23 // pred_check_branch
        %354 = sbr.rel (%p352) target = $region28
      $region27: #{maisi_resblock_forward.3} parent=23 // pred_region
        %vm355 = vcmask 58368
        %356 = vst.msk [vmem:[%s145] sm:$0x3] %vm355, 0.0
      $region28: #{maisi_resblock_forward.3} parent=23 // pred_fallthru
        _
      %v357 = vld [vmem:[%s145] sm:$0x3]
      %v358 = vadd.f32 %v357, %v350
      %vm359 = vcmask 58368
      %360 = vst.msk [vmem:[%s145] sm:$0x3] %vm359, %v358
      %p361 = scmp.lt.s32.totalorder %s16, 1
      %s362 = scalar_select %p361, %s16, 1
      %s363 = smul.addr %s362, 2
      %s364 = scalar_lea.vmem %s1, %s363
      // Predicated region
      $region29: #{maisi_resblock_forward.3} parent=23 // pred_check
        %p365 = pneg %p70
      $region30: #{maisi_resblock_forward.3} parent=23 // pred_check_branch
        %367 = sbr.rel (%p365) target = $region32
      $region31: #{maisi_resblock_forward.3} parent=23 // pred_region
        _
      $region32: #{maisi_resblock_forward.3} parent=23 // pred_fallthru
        _
    $region24: #{maisi_resblock_forward.3} parent=5 // pred_fallthru
      _
    %p368 = scmp.le.s32.totalorder 2, %s7
    // Predicated region
    $region33: #{maisi_resblock_forward.3} parent=5 // pred_check
      %p369 = pneg %p368
    $region34: #{maisi_resblock_forward.3} parent=5 // pred_check_branch
      %371 = sbr.rel (%p369) target = $region36
    $region35: #{maisi_resblock_forward.3} parent=5 // pred_region
      %s372 = ssub.s32 %s7, 2
      // Predicated region
      $region37: #{maisi_resblock_forward.3} parent=35 // pred_check
        %p373 = pneg %p76
      $region38: #{maisi_resblock_forward.3} parent=35 // pred_check_branch
        %375 = sbr.rel (%p373) target = $region40
      $region39: #{maisi_resblock_forward.3} parent=35 // pred_region
        %p376 = scmp.lt.s32.totalorder %s18, 1
        %s377 = scalar_select %p376, %s18, 1
        %s378 = smul.addr %s377, 2
        %s379 = scalar_lea.vmem %s1, %s378
      $region40: #{maisi_resblock_forward.3} parent=35 // pred_fallthru
        _
    $region36: #{maisi_resblock_forward.3} parent=5 // pred_fallthru
      _
  $region6: #{maisi_resblock_forward.3} parent=0 // loop_footer
    %s11 = sadd.s32 1, %s7
  $region7: #{maisi_resblock_forward.3} parent=0 // loop_footer_branch
    %6 = sbr.rel target = $region3
  $region8: #{maisi_resblock_forward.3} parent=0 // loop_exit
    _

// kernel: maisi_resblock_forward.4
$region0: #{maisi_resblock_forward.4}
  #allocation0 [shape = 'u32[]', space=smem, size = 0x4, offset = 0x4, fixed_abs, tag = 'smem constant byte address 0x4 - core index']
  #allocation1 [shape = 'u32[72,128]{1,0:T(1,128)}', space=vmem, size = 0x9000, scoped, tag = 'internal scratch']
  %s0 = inlined_call_operand.vmem [shape: f32[2,16,16,8], index: 0, kind: input, shape index: {}, may-alias: {0,1,2}]
  %s1 = inlined_call_operand.vmem [shape: f32[2,16,16,8], index: 1, kind: input, shape index: {}, may-alias: {0,1,2}]
  %s2 = inlined_call_operand.vmem [shape: f32[2,16,16,8], index: 2, kind: input, shape index: {}, may-alias: {0,1,2}]
  %s3 = inlined_call_operand.vmem [shape: f32[2,2,8], index: 3, kind: input, shape index: {}]
  %s4 = inlined_call_operand.vmem [shape: bf16[9,8,16], index: 4, kind: input, shape index: {}]
  %s5 = inlined_call_operand.vmem [shape: f32[1,16], index: 5, kind: input, shape index: {}]
  %s6 = inlined_call_operand.vmem [shape: bf16[2,16,16,16], index: 6, kind: output, shape index: {0}]
  %s7 = inlined_call_operand.vmem [shape: f32[2,2,16], index: 7, kind: output, shape index: {1}]
  %8 = xla_tuple %s6, %s7
  %s9 = sld [smem:[#allocation0]]
  $region69: #{maisi_resblock_forward.4} parent=0
    _
  %s11 = ssub.s32 1, %s9
  %s12 = scalar_select 0, %s11, %s9
  loop: start=0, step=1, limit=4
  $region2: #{maisi_resblock_forward.4} parent=0 // loop_pre_header
    _
  $region3: #{maisi_resblock_forward.4} parent=0 // loop_header
    %s14 = sphi 0, %s18
    %p15 = scmp.ge.s32.totalorder %s14, 4
    %s21 = sphi 0, %s33
    %s22 = sphi 0, %s29
    %s23 = sphi 0, %s21
    %s24 = sphi 0, %s22
    %s25 = sphi 0, %s23
    %s26 = sphi 0, %s24
    %s46 = sphi 0, %s48
    %s49 = sphi 0, %s46
    %s50 = sphi 0, %s49
    %s66 = sphi 0, %s50
    %s74 = sphi 0, %s76
    %s77 = sphi 0, %s74
    %s78 = sphi 0, %s77
    %s94 = sphi 0, %s78
    %s110 = sphi 0, %s112
    %s113 = sphi 0, %s110
    %s114 = sphi 0, %s113
    %s130 = sphi 0, %s114
    %s136 = sphi 0, %s138
    %s139 = sphi 0, %s136
    %s140 = sphi 0, %s139
    %s156 = sphi 0, %s140
    %s160 = sphi 0, %s160
    %s162 = sphi 0, %s160
    %s163 = sphi 0, %s162
    %s177 = sphi 0, %s163
    %s181 = sphi 0, %s181
    %s183 = sphi 0, %s181
    %s184 = sphi 0, %s183
    %s198 = sphi 0, %s184
    %s206 = sphi 0, %s208
    %s209 = sphi 0, %s206
    %s210 = sphi 0, %s209
    %s226 = sphi 0, %s210
    %s232 = sphi 0, %s234
    %s235 = sphi 0, %s232
    %s236 = sphi 0, %s235
    %s252 = sphi 0, %s236
  $region4: #{maisi_resblock_forward.4} parent=0 // loop_header_branch
    %17 = sbr.rel (%p15) target = $region8
  $region5: #{maisi_resblock_forward.4} parent=0 // loop_body
    %s19 = ssub.s32 %s14, 1
    %s20 = ssub.s32 %s14, 2
    %s27 = sadd.s32 1, %s22
    %p28 = scmp.ge.s32.totalorder %s27, 1
    %s29 = scalar_select %p28, 0, %s27
    %s30 = sadd.s32 1, %s21
    %s31 = scalar_select %p28, %s30, %s21
    %p32 = scmp.ge.s32.totalorder %s31, 2
    %s33 = scalar_select %p32, 0, %s31
    %s34 = smul.u32 %s22, 16
    %s35 = ssub.s32 %s34, 1
    %p36 = scmp.gt.s32.totalorder %s35, 0
    %s37 = scalar_select %p36, %s35, 0
    %s38 = smul.u32 %s29, 16
    %s39 = ssub.s32 %s38, 1
    %p40 = scmp.gt.s32.totalorder %s39, 0
    %s41 = scalar_select %p40, %s39, 0
    %s42 = ssub.s32 %s21, %s33
    %s43 = ssub.s32 %s37, %s41
    %s44 = sor.u32 %s42, %s43
    %p45 = scmp.eq.s32.totalorder %s44, 0
    %s47 = sadd.s32 %s46, 1
    %s48 = scalar_select %p45, %s46, %s47
    %p51 = pneg %p45
    %p52 = scmp.eq.s32.totalorder %s14, 1
    %p53 = por %p51, %p52
    %p54 = scmp.ne.s32.totalorder %s46, %s49
    %p55 = scmp.eq.s32.totalorder %s14, 0
    %p56 = por %p54, %p55
    %p57 = scmp.ne.s32.totalorder %s46, %s49
    %p58 = scmp.eq.s32.totalorder %s19, 1
    %p59 = por %p57, %p58
    %p60 = scmp.ne.s32.totalorder %s49, %s50
    %p61 = scmp.eq.s32.totalorder %s19, 0
    %p62 = por %p60, %p61
    %p63 = scmp.ne.s32.totalorder %s49, %s50
    %p64 = scmp.eq.s32.totalorder %s20, 1
    %p65 = por %p63, %p64
    %p67 = scmp.ne.s32.totalorder %s50, %s66
    %p68 = scmp.eq.s32.totalorder %s20, 0
    %p69 = por %p67, %p68
    %s70 = ssub.s32 %s21, %s33
    %s71 = ssub.s32 %s22, %s29
    %s72 = sor.u32 %s70, %s71
    %p73 = scmp.eq.s32.totalorder %s72, 0
    %s75 = sadd.s32 %s74, 1
    %s76 = scalar_select %p73, %s74, %s75
    %p79 = pneg %p73
    %p80 = scmp.eq.s32.totalorder %s14, 1
    %p81 = por %p79, %p80
    %p82 = scmp.ne.s32.totalorder %s74, %s77
    %p83 = scmp.eq.s32.totalorder %s14, 0
    %p84 = por %p82, %p83
    %p85 = scmp.ne.s32.totalorder %s74, %s77
    %p86 = scmp.eq.s32.totalorder %s19, 1
    %p87 = por %p85, %p86
    %p88 = scmp.ne.s32.totalorder %s77, %s78
    %p89 = scmp.eq.s32.totalorder %s19, 0
    %p90 = por %p88, %p89
    %p91 = scmp.ne.s32.totalorder %s77, %s78
    %p92 = scmp.eq.s32.totalorder %s20, 1
    %p93 = por %p91, %p92
    %p95 = scmp.ne.s32.totalorder %s78, %s94
    %p96 = scmp.eq.s32.totalorder %s20, 0
    %p97 = por %p95, %p96
    %s98 = smul.u32 %s22, 16
    %s99 = sadd.s32 %s98, 16
    %p100 = scmp.lt.s32.totalorder %s99, 15
    %s101 = scalar_select %p100, %s99, 15
    %s102 = smul.u32 %s29, 16
    %s103 = sadd.s32 %s102, 16
    %p104 = scmp.lt.s32.totalorder %s103, 15
    %s105 = scalar_select %p104, %s103, 15
    %s106 = ssub.s32 %s21, %s33
    %s107 = ssub.s32 %s101, %s105
    %s108 = sor.u32 %s106, %s107
    %p109 = scmp.eq.s32.totalorder %s108, 0
    %s111 = sadd.s32 %s110, 1
    %s112 = scalar_select %p109, %s110, %s111
    %p115 = pneg %p109
    %p116 = scmp.eq.s32.totalorder %s14, 1
    %p117 = por %p115, %p116
    %p118 = scmp.ne.s32.totalorder %s110, %s113
    %p119 = scmp.eq.s32.totalorder %s14, 0
    %p120 = por %p118, %p119
    %p121 = scmp.ne.s32.totalorder %s110, %s113
    %p122 = scmp.eq.s32.totalorder %s19, 1
    %p123 = por %p121, %p122
    %p124 = scmp.ne.s32.totalorder %s113, %s114
    %p125 = scmp.eq.s32.totalorder %s19, 0
    %p126 = por %p124, %p125
    %p127 = scmp.ne.s32.totalorder %s113, %s114
    %p128 = scmp.eq.s32.totalorder %s20, 1
    %p129 = por %p127, %p128
    %p131 = scmp.ne.s32.totalorder %s114, %s130
    %p132 = scmp.eq.s32.totalorder %s20, 0
    %p133 = por %p131, %p132
    %s134 = ssub.s32 %s21, %s33
    %p135 = scmp.eq.s32.totalorder %s134, 0
    %s137 = sadd.s32 %s136, 1
    %s138 = scalar_select %p135, %s136, %s137
    %p141 = pneg %p135
    %p142 = scmp.eq.s32.totalorder %s14, 1
    %p143 = por %p141, %p142
    %p144 = scmp.ne.s32.totalorder %s136, %s139
    %p145 = scmp.eq.s32.totalorder %s14, 0
    %p146 = por %p144, %p145
    %p147 = scmp.ne.s32.totalorder %s136, %s139
    %p148 = scmp.eq.s32.totalorder %s19, 1
    %p149 = por %p147, %p148
    %p150 = scmp.ne.s32.totalorder %s139, %s140
    %p151 = scmp.eq.s32.totalorder %s19, 0
    %p152 = por %p150, %p151
    %p153 = scmp.ne.s32.totalorder %s139, %s140
    %p154 = scmp.eq.s32.totalorder %s20, 1
    %p155 = por %p153, %p154
    %p157 = scmp.ne.s32.totalorder %s140, %s156
    %p158 = scmp.eq.s32.totalorder %s20, 0
    %p159 = por %p157, %p158
    %s161 = sadd.s32 %s160, 1
    %p164 = scmp.eq.s32.totalorder %s14, 1
    %p165 = scmp.ne.s32.totalorder %s160, %s162
    %p166 = scmp.eq.s32.totalorder %s14, 0
    %p167 = por %p165, %p166
    %p168 = scmp.ne.s32.totalorder %s160, %s162
    %p169 = scmp.eq.s32.totalorder %s19, 1
    %p170 = por %p168, %p169
    %p171 = scmp.ne.s32.totalorder %s162, %s163
    %p172 = scmp.eq.s32.totalorder %s19, 0
    %p173 = por %p171, %p172
    %p174 = scmp.ne.s32.totalorder %s162, %s163
    %p175 = scmp.eq.s32.totalorder %s20, 1
    %p176 = por %p174, %p175
    %p178 = scmp.ne.s32.totalorder %s163, %s177
    %p179 = scmp.eq.s32.totalorder %s20, 0
    %p180 = por %p178, %p179
    %s182 = sadd.s32 %s181, 1
    %p185 = scmp.eq.s32.totalorder %s14, 1
    %p186 = scmp.ne.s32.totalorder %s181, %s183
    %p187 = scmp.eq.s32.totalorder %s14, 0
    %p188 = por %p186, %p187
    %p189 = scmp.ne.s32.totalorder %s181, %s183
    %p190 = scmp.eq.s32.totalorder %s19, 1
    %p191 = por %p189, %p190
    %p192 = scmp.ne.s32.totalorder %s183, %s184
    %p193 = scmp.eq.s32.totalorder %s19, 0
    %p194 = por %p192, %p193
    %p195 = scmp.ne.s32.totalorder %s183, %s184
    %p196 = scmp.eq.s32.totalorder %s20, 1
    %p197 = por %p195, %p196
    %p199 = scmp.ne.s32.totalorder %s184, %s198
    %p200 = scmp.eq.s32.totalorder %s20, 0
    %p201 = por %p199, %p200
    %s202 = ssub.s32 %s21, %s33
    %s203 = ssub.s32 %s22, %s29
    %s204 = sor.u32 %s202, %s203
    %p205 = scmp.eq.s32.totalorder %s204, 0
    %s207 = sadd.s32 %s206, 1
    %s208 = scalar_select %p205, %s206, %s207
    %p211 = pneg %p205
    %p212 = scmp.eq.s32.totalorder %s14, 1
    %p213 = por %p211, %p212
    %p214 = scmp.ne.s32.totalorder %s206, %s209
    %p215 = scmp.eq.s32.totalorder %s14, 0
    %p216 = por %p214, %p215
    %p217 = scmp.ne.s32.totalorder %s206, %s209
    %p218 = scmp.eq.s32.totalorder %s19, 1
    %p219 = por %p217, %p218
    %p220 = scmp.ne.s32.totalorder %s209, %s210
    %p221 = scmp.eq.s32.totalorder %s19, 0
    %p222 = por %p220, %p221
    %p223 = scmp.ne.s32.totalorder %s209, %s210
    %p224 = scmp.eq.s32.totalorder %s20, 1
    %p225 = por %p223, %p224
    %p227 = scmp.ne.s32.totalorder %s210, %s226
    %p228 = scmp.eq.s32.totalorder %s20, 0
    %p229 = por %p227, %p228
    %s230 = ssub.s32 %s21, %s33
    %p231 = scmp.eq.s32.totalorder %s230, 0
    %s233 = sadd.s32 %s232, 1
    %s234 = scalar_select %p231, %s232, %s233
    %p237 = pneg %p231
    %p238 = scmp.eq.s32.totalorder %s14, 1
    %p239 = por %p237, %p238
    %p240 = scmp.ne.s32.totalorder %s232, %s235
    %p241 = scmp.eq.s32.totalorder %s14, 0
    %p242 = por %p240, %p241
    %p243 = scmp.ne.s32.totalorder %s232, %s235
    %p244 = scmp.eq.s32.totalorder %s19, 1
    %p245 = por %p243, %p244
    %p246 = scmp.ne.s32.totalorder %s235, %s236
    %p247 = scmp.eq.s32.totalorder %s19, 0
    %p248 = por %p246, %p247
    %p249 = scmp.ne.s32.totalorder %s235, %s236
    %p250 = scmp.eq.s32.totalorder %s20, 1
    %p251 = por %p249, %p250
    %p253 = scmp.ne.s32.totalorder %s236, %s252
    %p254 = scmp.eq.s32.totalorder %s20, 0
    %p255 = por %p253, %p254
    %p256 = scmp.le.s32.totalorder 1, %s14
    %p257 = scmp.lt.s32.totalorder %s14, 3
    %p258 = pnand %p256, %p257
    %p259 = pneg %p258
    // Predicated region
    $region9: #{maisi_resblock_forward.4} parent=5 // pred_check
      _
    $region10: #{maisi_resblock_forward.4} parent=5 // pred_check_branch
      %261 = sbr.rel (%p258) target = $region12
    $region11: #{maisi_resblock_forward.4} parent=5 // pred_region
      %s262 = ssub.s32 %s14, 1
      // Predicated region
      $region13: #{maisi_resblock_forward.4} parent=11 // pred_check
        %p263 = pneg %p173
      $region14: #{maisi_resblock_forward.4} parent=11 // pred_check_branch
        %265 = sbr.rel (%p263) target = $region16
      $region15: #{maisi_resblock_forward.4} parent=11 // pred_region
        _
      $region16: #{maisi_resblock_forward.4} parent=11 // pred_fallthru
        _
      // Predicated region
      $region17: #{maisi_resblock_forward.4} parent=11 // pred_check
        %p266 = pneg %p194
      $region18: #{maisi_resblock_forward.4} parent=11 // pred_check_branch
        %268 = sbr.rel (%p266) target = $region20
      $region19: #{maisi_resblock_forward.4} parent=11 // pred_region
        _
      $region20: #{maisi_resblock_forward.4} parent=11 // pred_fallthru
        _
    $region12: #{maisi_resblock_forward.4} parent=5 // pred_fallthru
      _
    %p269 = scmp.lt.s32.totalorder %s14, 2
    // Predicated region
    $region21: #{maisi_resblock_forward.4} parent=5 // pred_check
      %p270 = pneg %p269
    $region22: #{maisi_resblock_forward.4} parent=5 // pred_check_branch
      %272 = sbr.rel (%p270) target = $region24
    $region23: #{maisi_resblock_forward.4} parent=5 // pred_region
      // Predicated region
      $region25: #{maisi_resblock_forward.4} parent=23 // pred_check
        %p273 = pneg %p56
      $region26: #{maisi_resblock_forward.4} parent=23 // pred_check_branch
        %275 = sbr.rel (%p273) target = $region28
      $region27: #{maisi_resblock_forward.4} parent=23 // pred_region
        %s276 = smul.u32 %s22, 16
        %s277 = ssub.s32 %s276, 1
        %p278 = scmp.gt.s32.totalorder %s277, 0
        %s279 = scalar_select %p278, %s277, 0
        %p280 = scmp.lt.s32.totalorder %s21, 1
        %s281 = scalar_select %p280, %s21, 1
        %p282 = scmp.lt.s32.totalorder %s279, 15
        %s283 = scalar_select %p282, %s279, 15
        %s284 = smul.addr %s283, 2
        %s285 = smul.addr %s281, 32
        %s286 = sadd.s32 %s284, %s285
        %s287 = smul.addr %s286, 8
        %s288 = scalar_lea.vmem %s0, %s287
        %s289 = smul.u32 %s22, 16
        %s290 = ssub.s32 %s289, 1
        %p291 = scmp.gt.s32.totalorder %s290, 0
        %s292 = scalar_select %p291, %s290, 0
      $region28: #{maisi_resblock_forward.4} parent=23 // pred_fallthru
        _
      // Predicated region
      $region29: #{maisi_resblock_forward.4} parent=23 // pred_check
        %p293 = pneg %p84
      $region30: #{maisi_resblock_forward.4} parent=23 // pred_check_branch
        %295 = sbr.rel (%p293) target = $region32
      $region31: #{maisi_resblock_forward.4} parent=23 // pred_region
        %s296 = smul.u32 16, %s22
        %p297 = scmp.lt.s32.totalorder %s21, 1
        %s298 = scalar_select %p297, %s21, 1
        %p299 = scmp.lt.s32.totalorder %s296, 15
        %s300 = scalar_select %p299, %s296, 15
        %s301 = smul.addr %s300, 2
        %s302 = smul.addr %s298, 32
        %s303 = sadd.s32 %s301, %s302
        %s304 = smul.addr %s303, 8
        %s305 = scalar_lea.vmem %s1, %s304
        %s306 = smul.u32 16, %s22
      $region32: #{maisi_resblock_forward.4} parent=23 // pred_fallthru
        _
      // Predicated region
      $region33: #{maisi_resblock_forward.4} parent=23 // pred_check
        %p307 = pneg %p120
      $region34: #{maisi_resblock_forward.4} parent=23 // pred_check_branch
        %309 = sbr.rel (%p307) target = $region36
      $region35: #{maisi_resblock_forward.4} parent=23 // pred_region
        %s310 = smul.u32 %s22, 16
        %s311 = sadd.s32 %s310, 16
        %p312 = scmp.lt.s32.totalorder %s311, 15
        %s313 = scalar_select %p312, %s311, 15
        %p314 = scmp.lt.s32.totalorder %s21, 1
        %s315 = scalar_select %p314, %s21, 1
        %p316 = scmp.lt.s32.totalorder %s313, 15
        %s317 = scalar_select %p316, %s313, 15
        %s318 = smul.addr %s317, 2
        %s319 = smul.addr %s315, 32
        %s320 = sadd.s32 %s318, %s319
        %s321 = smul.addr %s320, 8
        %s322 = scalar_lea.vmem %s2, %s321
        %s323 = smul.u32 %s22, 16
        %s324 = sadd.s32 %s323, 16
        %p325 = scmp.lt.s32.totalorder %s324, 15
        %s326 = scalar_select %p325, %s324, 15
      $region36: #{maisi_resblock_forward.4} parent=23 // pred_fallthru
        _
      // Predicated region
      $region37: #{maisi_resblock_forward.4} parent=23 // pred_check
        %p327 = pneg %p146
      $region38: #{maisi_resblock_forward.4} parent=23 // pred_check_branch
        %329 = sbr.rel (%p327) target = $region40
      $region39: #{maisi_resblock_forward.4} parent=23 // pred_region
        %p330 = scmp.lt.s32.totalorder %s21, 1
        %s331 = scalar_select %p330, %s21, 1
        %s332 = smul.addr %s331, 2
        %s333 = scalar_lea.vmem %s3, %s332
      $region40: #{maisi_resblock_forward.4} parent=23 // pred_fallthru
        _
    $region24: #{maisi_resblock_forward.4} parent=5 // pred_fallthru
      _
    %p334 = scmp.le.s32.totalorder 1, %s14
    %p335 = scmp.lt.s32.totalorder %s14, 3
    %p336 = pnand %p334, %p335
    %p337 = pneg %p336
    // Predicated region
    $region41: #{maisi_resblock_forward.4} parent=5 // pred_check
      _
    $region42: #{maisi_resblock_forward.4} parent=5 // pred_check_branch
      %339 = sbr.rel (%p336) target = $region44
    $region43: #{maisi_resblock_forward.4} parent=5 // pred_region
      %s340 = ssub.s32 %s14, 1
      %s341 = smul.u32 %s24, 16
      %s342 = ssub.s32 %s341, 1
      %p343 = scmp.gt.s32.totalorder %s342, 0
      %s344 = scalar_select %p343, %s342, 0
      %p345 = scmp.lt.s32.totalorder %s23, 1
      %s346 = scalar_select %p345, %s23, 1
      %p347 = scmp.lt.s32.totalorder %s344, 15
      %s348 = scalar_select %p347, %s344, 15
      %s349 = smul.addr %s348, 2
      %s350 = smul.addr %s346, 32
      %s351 = sadd.s32 %s349, %s350
      %s352 = smul.addr %s351, 8
      %s353 = scalar_lea.vmem %s0, %s352
      %p354 = pneg %p62
      %p355 = pneg %p59
      %s356 = smul.u32 16, %s24
      %p357 = scmp.lt.s32.totalorder %s23, 1
      %s358 = scalar_select %p357, %s23, 1
      %p359 = scmp.lt.s32.totalorder %s356, 15
      %s360 = scalar_select %p359, %s356, 15
      %s361 = smul.addr %s360, 2
      %s362 = smul.addr %s358, 32
      %s363 = sadd.s32 %s361, %s362
      %s364 = smul.addr %s363, 8
      %s365 = scalar_lea.vmem %s1, %s364
      %p366 = pneg %p90
      %p367 = pneg %p87
      %s368 = smul.u32 %s24, 16
      %s369 = sadd.s32 %s368, 16
      %p370 = scmp.lt.s32.totalorder %s369, 15
      %s371 = scalar_select %p370, %s369, 15
      %p372 = scmp.lt.s32.totalorder %s23, 1
      %s373 = scalar_select %p372, %s23, 1
      %p374 = scmp.lt.s32.totalorder %s371, 15
      %s375 = scalar_select %p374, %s371, 15
      %s376 = smul.addr %s375, 2
      %s377 = smul.addr %s373, 32
      %s378 = sadd.s32 %s376, %s377
      %s379 = smul.addr %s378, 8
      %s380 = scalar_lea.vmem %s2, %s379
      %p381 = pneg %p126
      %p382 = pneg %p123
      %p383 = scmp.lt.s32.totalorder %s23, 1
      %s384 = scalar_select %p383, %s23, 1
      %s385 = smul.addr %s384, 2
      %s386 = scalar_lea.vmem %s3, %s385
      %p387 = pneg %p152
      %p388 = pneg %p149
      %p389 = pneg %p173
      %p390 = pneg %p170
      %p391 = pneg %p194
      %p392 = pneg %p191
      %p393 = pneg %p222
      %p394 = pneg %p219
      %s395 = smul.u32 16, %s24
      %p396 = scmp.lt.s32.totalorder %s23, 1
      %s397 = scalar_select %p396, %s23, 1
      %p398 = scmp.lt.s32.totalorder %s395, 15
      %s399 = scalar_select %p398, %s395, 15
      %s400 = smul.addr %s399, 2
      %s401 = smul.addr %s397, 32
      %s402 = sadd.s32 %s400, %s401
      %s403 = smul.addr %s402, 4
      %s404 = scalar_lea.vmem %s6, %s403
      %p405 = pneg %p248
      %p406 = pneg %p245
      %p407 = scmp.lt.s32.totalorder %s23, 1
      %s408 = scalar_select %p407, %s23, 1
      %s409 = smul.addr %s408, 2
      %s410 = scalar_lea.vmem %s7, %s409
      %s411 = smul.u32 %s24, 16
      %s412 = ssub.s32 %s411, 1
      %p413 = scmp.gt.s32.totalorder %s412, 0
      %s414 = scalar_select %p413, %s412, 0
      %p415 = scmp.lt.s32.totalorder %s23, 1
      %s416 = scalar_select %p415, %s23, 1
      %p417 = scmp.lt.s32.totalorder %s414, 15
      %s418 = scalar_select %p417, %s414, 15
      %s419 = smul.addr %s418, 2
      %s420 = smul.addr %s416, 32
      %s421 = sadd.s32 %s419, %s420
      %s422 = smul.addr %s421, 8
      %s423 = scalar_lea.vmem %s0, %s422
      %s424 = smul.u32 %s24, 16
      %s425 = ssub.s32 %s424, 1
      %p426 = scmp.gt.s32.totalorder %s425, 0
      %s427 = scalar_select %p426, %s425, 0
      %s428 = smul.u32 16, %s24
      %p429 = scmp.lt.s32.totalorder %s23, 1
      %s430 = scalar_select %p429, %s23, 1
      %p431 = scmp.lt.s32.totalorder %s428, 15
      %s432 = scalar_select %p431, %s428, 15
      %s433 = smul.addr %s432, 2
      %s434 = smul.addr %s430, 32
      %s435 = sadd.s32 %s433, %s434
      %s436 = smul.addr %s435, 8
      %s437 = scalar_lea.vmem %s1, %s436
      %s438 = smul.u32 16, %s24
      %s439 = smul.u32 %s24, 16
      %s440 = sadd.s32 %s439, 16
      %p441 = scmp.lt.s32.totalorder %s440, 15
      %s442 = scalar_select %p441, %s440, 15
      %p443 = scmp.lt.s32.totalorder %s23, 1
      %s444 = scalar_select %p443, %s23, 1
      %p445 = scmp.lt.s32.totalorder %s442, 15
      %s446 = scalar_select %p445, %s442, 15
      %s447 = smul.addr %s446, 2
      %s448 = smul.addr %s444, 32
      %s449 = sadd.s32 %s447, %s448
      %s450 = smul.addr %s449, 8
      %s451 = scalar_lea.vmem %s2, %s450
      %s452 = smul.u32 %s24, 16
      %s453 = sadd.s32 %s452, 16
      %p454 = scmp.lt.s32.totalorder %s453, 15
      %s455 = scalar_select %p454, %s453, 15
      %p456 = scmp.lt.s32.totalorder %s23, 1
      %s457 = scalar_select %p456, %s23, 1
      %s458 = smul.addr %s457, 2
      %s459 = scalar_lea.vmem %s3, %s458
      %s460 = smul.u32 16, %s24
      %p461 = scmp.lt.s32.totalorder %s23, 1
      %s462 = scalar_select %p461, %s23, 1
      %p463 = scmp.lt.s32.totalorder %s460, 15
      %s464 = scalar_select %p463, %s460, 15
      %s465 = smul.addr %s464, 2
      %s466 = smul.addr %s462, 32
      %s467 = sadd.s32 %s465, %s466
      %s468 = smul.addr %s467, 4
      %s469 = scalar_lea.vmem %s6, %s468
      %s470 = smul.u32 16, %s24
      %p471 = scmp.lt.s32.totalorder %s23, 1
      %s472 = scalar_select %p471, %s23, 1
      %s473 = smul.addr %s472, 2
      %s474 = scalar_lea.vmem %s7, %s473
      %v476 = vld [vmem:[%s459] sm:$0x3]
      %v477 = vld [vmem:[%s423] sm:$0xff]
      %v478 = vld [vmem:[%s423 + $0x8] sm:$0xff]
      %v479 = vperm.slane %v476, 0
      %v480 = vmul.f32 %v477, %v479
      %v481 = vmul.f32 %v478, %v479
      %v482 = vperm.slane %v476, 1
      %v483 = vadd.f32 %v480, %v482
      %v484 = vadd.f32 %v481, %v482
      %v485 = vxor.u32 %v483, 2147483648
      %v486 = vxor.u32 %v484, 2147483648
      %v487 = vmul.f32 %v485, 1.442695
      %v488 = vpow.pop %v487
      %v489 = vmul.f32 %v486, 1.442695
      %v490 = vpow.pop %v489
      %v491 = vadd.f32 %v488, 1.0
      %v492 = vadd.f32 %v490, 1.0
      %v493 = vrcp.pop %v491
      %v494 = vmul.f32 %v491, %v493
      %v495 = vsub.f32 1.0, %v494
      %v496 = vmul.f32 %v493, %v495
      %v497 = vadd.f32 %v493, %v496
      %vm498 = vweird.f32 %v491
      %vm499 = vweird.f32 %v493
      %vm500 = vmor %vm498, %vm499
      %v501 = vsel %vm500, %v493, %v497
      %v502 = vand.u32 2147483647, %v491
      %vm503 = vcmp.eq.f32.partialorder %v502, 8.507059e+37
      %v504 = vand.u32 %v491, 2147483648
      %v505 = vor.u32 1.1754944e-38, %v504
      %v506 = vsel %vm503, %v505, %v501
      %v507 = vmul.f32 1.0, %v506
      %v508 = vrcp.pop %v492
      %v509 = vmul.f32 %v492, %v508
      %v510 = vsub.f32 1.0, %v509
      %v511 = vmul.f32 %v508, %v510
      %v512 = vadd.f32 %v508, %v511
      %vm513 = vweird.f32 %v492
      %vm514 = vweird.f32 %v508
      %vm515 = vmor %vm513, %vm514
      %v516 = vsel %vm515, %v508, %v512
      %v517 = vand.u32 2147483647, %v492
      %vm518 = vcmp.eq.f32.partialorder %v517, 8.507059e+37
      %v519 = vand.u32 %v492, 2147483648
      %v520 = vor.u32 1.1754944e-38, %v519
      %v521 = vsel %vm518, %v520, %v516
      %v522 = vmul.f32 1.0, %v521
      %v523 = vmul.f32 %v483, %v507
      %v524 = vmul.f32 %v484, %v522
      %v525 = vpack.c.bf16 %v523, %v523
      %v526 = vpack.c.bf16 %v524, %v524
      %p527 = scmp.eq.s32.totalorder %s24, 0
      %s528 = scalar_select %p527, 1, 0
      %v529 = vstv %s528
      %vm530 = vcmp.eq.s32.totalorder %v529, 1
      %v531 = vsel %vm530, 0, %v525
      %v532 = vsel %vm530, 0, %v526
      %v533 = vld [vmem:[%s451] sm:$0xff]
      %v534 = vld [vmem:[%s451 + $0x8] sm:$0xff]
      %v535 = vmul.f32 %v533, %v479
      %v536 = vmul.f32 %v534, %v479
      %v537 = vadd.f32 %v535, %v482
      %v538 = vadd.f32 %v536, %v482
      %v539 = vxor.u32 %v537, 2147483648
      %v540 = vxor.u32 %v538, 2147483648
      %v541 = vmul.f32 %v539, 1.442695
      %v542 = vpow.pop %v541
      %v543 = vmul.f32 %v540, 1.442695
      %v544 = vpow.pop %v543
      %v545 = vadd.f32 %v542, 1.0
      %v546 = vadd.f32 %v544, 1.0
      %v547 = vrcp.pop %v545
      %v548 = vmul.f32 %v545, %v547
      %v549 = vsub.f32 1.0, %v548
      %v550 = vmul.f32 %v547, %v549
      %v551 = vadd.f32 %v547, %v550
      %vm552 = vweird.f32 %v545
      %vm553 = vweird.f32 %v547
      %vm554 = vmor %vm552, %vm553
      %v555 = vsel %vm554, %v547, %v551
      %v556 = vand.u32 2147483647, %v545
      %vm557 = vcmp.eq.f32.partialorder %v556, 8.507059e+37
      %v558 = vand.u32 %v545, 2147483648
      %v559 = vor.u32 1.1754944e-38, %v558
      %v560 = vsel %vm557, %v559, %v555
      %v561 = vmul.f32 1.0, %v560
      %v562 = vrcp.pop %v546
      %v563 = vmul.f32 %v546, %v562
      %v564 = vsub.f32 1.0, %v563
      %v565 = vmul.f32 %v562, %v564
      %v566 = vadd.f32 %v562, %v565
      %vm567 = vweird.f32 %v546
      %vm568 = vweird.f32 %v562
      %vm569 = vmor %vm567, %vm568
      %v570 = vsel %vm569, %v562, %v566
      %v571 = vand.u32 2147483647, %v546
      %vm572 = vcmp.eq.f32.partialorder %v571, 8.507059e+37
      %v573 = vand.u32 %v546, 2147483648
      %v574 = vor.u32 1.1754944e-38, %v573
      %v575 = vsel %vm572, %v574, %v570
      %v576 = vmul.f32 1.0, %v575
      %v577 = vmul.f32 %v537, %v561
      %v578 = vmul.f32 %v538, %v576
      %v579 = vpack.c.bf16 %v577, %v577
      %v580 = vpack.c.bf16 %v578, %v578
      %v581 = vsel %vm530, 0, %v579
      %v582 = vsel %vm530, 0, %v580
      %v583 = vld [vmem:[%s437] sm:$0xff]
      %v584 = vld [vmem:[%s437 + $0x8] sm:$0xff]
      %v585 = vld [vmem:[%s437 + $0x10] sm:$0xff]
      %v586 = vld [vmem:[%s437 + $0x18] sm:$0xff]
      %v587 = vld [vmem:[%s437 + $0x20] sm:$0xff]
      %v588 = vld [vmem:[%s437 + $0x28] sm:$0xff]
      %v589 = vld [vmem:[%s437 + $0x30] sm:$0xff]
      %v590 = vld [vmem:[%s437 + $0x38] sm:$0xff]
      %v591 = vld [vmem:[%s437 + $0x40] sm:$0xff]
      %v592 = vld [vmem:[%s437 + $0x48] sm:$0xff]
      %v593 = vld [vmem:[%s437 + $0x50] sm:$0xff]
      %v594 = vld [vmem:[%s437 + $0x58] sm:$0xff]
      %v595 = vld [vmem:[%s437 + $0x60] sm:$0xff]
      %v596 = vld [vmem:[%s437 + $0x68] sm:$0xff]
      %v597 = vld [vmem:[%s437 + $0x70] sm:$0xff]
      %v598 = vld [vmem:[%s437 + $0x78] sm:$0xff]
      %v599 = vld [vmem:[%s437 + $0x80] sm:$0xff]
      %v600 = vld [vmem:[%s437 + $0x88] sm:$0xff]
      %v601 = vld [vmem:[%s437 + $0x90] sm:$0xff]
      %v602 = vld [vmem:[%s437 + $0x98] sm:$0xff]
      %v603 = vld [vmem:[%s437 + $0xa0] sm:$0xff]
      %v604 = vld [vmem:[%s437 + $0xa8] sm:$0xff]
      %v605 = vld [vmem:[%s437 + $0xb0] sm:$0xff]
      %v606 = vld [vmem:[%s437 + $0xb8] sm:$0xff]
      %v607 = vld [vmem:[%s437 + $0xc0] sm:$0xff]
      %v608 = vld [vmem:[%s437 + $0xc8] sm:$0xff]
      %v609 = vld [vmem:[%s437 + $0xd0] sm:$0xff]
      %v610 = vld [vmem:[%s437 + $0xd8] sm:$0xff]
      %v611 = vld [vmem:[%s437 + $0xe0] sm:$0xff]
      %v612 = vld [vmem:[%s437 + $0xe8] sm:$0xff]
      %v613 = vld [vmem:[%s437 + $0xf0] sm:$0xff]
      %v614 = vld [vmem:[%s437 + $0xf8] sm:$0xff]
      %v615 = vmul.f32 %v583, %v479
      %v616 = vmul.f32 %v584, %v479
      %v617 = vmul.f32 %v585, %v479
      %v618 = vmul.f32 %v586, %v479
      %v619 = vmul.f32 %v587, %v479
      %v620 = vmul.f32 %v588, %v479
      %v621 = vmul.f32 %v589, %v479
      %v622 = vmul.f32 %v590, %v479
      %v623 = vmul.f32 %v591, %v479
      %v624 = vmul.f32 %v592, %v479
      %v625 = vmul.f32 %v593, %v479
      %v626 = vmul.f32 %v594, %v479
      %v627 = vmul.f32 %v595, %v479
      %v628 = vmul.f32 %v596, %v479
      %v629 = vmul.f32 %v597, %v479
      %v630 = vmul.f32 %v598, %v479
      %v631 = vmul.f32 %v599, %v479
      %v632 = vmul.f32 %v600, %v479
      %v633 = vmul.f32 %v601, %v479
      %v634 = vmul.f32 %v602, %v479
      %v635 = vmul.f32 %v603, %v479
      %v636 = vmul.f32 %v604, %v479
      %v637 = vmul.f32 %v605, %v479
      %v638 = vmul.f32 %v606, %v479
      %v639 = vmul.f32 %v607, %v479
      %v640 = vmul.f32 %v608, %v479
      %v641 = vmul.f32 %v609, %v479
      %v642 = vmul.f32 %v610, %v479
      %v643 = vmul.f32 %v611, %v479
      %v644 = vmul.f32 %v612, %v479
      %v645 = vmul.f32 %v613, %v479
      %v646 = vmul.f32 %v614, %v479
      %v647 = vadd.f32 %v615, %v482
      %v648 = vadd.f32 %v616, %v482
      %v649 = vadd.f32 %v617, %v482
      %v650 = vadd.f32 %v618, %v482
      %v651 = vadd.f32 %v619, %v482
      %v652 = vadd.f32 %v620, %v482
      %v653 = vadd.f32 %v621, %v482
      %v654 = vadd.f32 %v622, %v482
      %v655 = vadd.f32 %v623, %v482
      %v656 = vadd.f32 %v624, %v482
      %v657 = vadd.f32 %v625, %v482
      %v658 = vadd.f32 %v626, %v482
      %v659 = vadd.f32 %v627, %v482
      %v660 = vadd.f32 %v628, %v482
      %v661 = vadd.f32 %v629, %v482
      %v662 = vadd.f32 %v630, %v482
      %v663 = vadd.f32 %v631, %v482
      %v664 = vadd.f32 %v632, %v482
      %v665 = vadd.f32 %v633, %v482
      %v666 = vadd.f32 %v634, %v482
      %v667 = vadd.f32 %v635, %v482
      %v668 = vadd.f32 %v636, %v482
      %v669 = vadd.f32 %v637, %v482
      %v670 = vadd.f32 %v638, %v482
      %v671 = vadd.f32 %v639, %v482
      %v672 = vadd.f32 %v640, %v482
      %v673 = vadd.f32 %v641, %v482
      %v674 = vadd.f32 %v642, %v482
      %v675 = vadd.f32 %v643, %v482
      %v676 = vadd.f32 %v644, %v482
      %v677 = vadd.f32 %v645, %v482
      %v678 = vadd.f32 %v646, %v482
      %v679 = vxor.u32 %v647, 2147483648
      %v680 = vxor.u32 %v648, 2147483648
      %v681 = vxor.u32 %v649, 2147483648
      %v682 = vxor.u32 %v650, 2147483648
      %v683 = vxor.u32 %v651, 2147483648
      %v684 = vxor.u32 %v652, 2147483648
      %v685 = vxor.u32 %v653, 2147483648
      %v686 = vxor.u32 %v654, 2147483648
      %v687 = vxor.u32 %v655, 2147483648
      %v688 = vxor.u32 %v656, 2147483648
      %v689 = vxor.u32 %v657, 2147483648
      %v690 = vxor.u32 %v658, 2147483648
      %v691 = vxor.u32 %v659, 2147483648
      %v692 = vxor.u32 %v660, 2147483648
      %v693 = vxor.u32 %v661, 2147483648
      %v694 = vxor.u32 %v662, 2147483648
      %v695 = vxor.u32 %v663, 2147483648
      %v696 = vxor.u32 %v664, 2147483648
      %v697 = vxor.u32 %v665, 2147483648
      %v698 = vxor.u32 %v666, 2147483648
      %v699 = vxor.u32 %v667, 2147483648
      %v700 = vxor.u32 %v668, 2147483648
      %v701 = vxor.u32 %v669, 2147483648
      %v702 = vxor.u32 %v670, 2147483648
      %v703 = vxor.u32 %v671, 2147483648
      %v704 = vxor.u32 %v672, 2147483648
      %v705 = vxor.u32 %v673, 2147483648
      %v706 = vxor.u32 %v674, 2147483648
      %v707 = vxor.u32 %v675, 2147483648
      %v708 = vxor.u32 %v676, 2147483648
      %v709 = vxor.u32 %v677, 2147483648
      %v710 = vxor.u32 %v678, 2147483648
      %v711 = vmul.f32 %v679, 1.442695
      %v712 = vpow.pop %v711
      %v713 = vmul.f32 %v680, 1.442695
      %v714 = vpow.pop %v713
      %v715 = vmul.f32 %v681, 1.442695
      %v716 = vpow.pop %v715
      %v717 = vmul.f32 %v682, 1.442695
      %v718 = vpow.pop %v717
      %v719 = vmul.f32 %v683, 1.442695
      %v720 = vpow.pop %v719
      %v721 = vmul.f32 %v684, 1.442695
      %v722 = vpow.pop %v721
      %v723 = vmul.f32 %v685, 1.442695
      %v724 = vpow.pop %v723
      %v725 = vmul.f32 %v686, 1.442695
      %v726 = vpow.pop %v725
      %v727 = vmul.f32 %v687, 1.442695
      %v728 = vpow.pop %v727
      %v729 = vmul.f32 %v688, 1.442695
      %v730 = vpow.pop %v729
      %v731 = vmul.f32 %v689, 1.442695
      %v732 = vpow.pop %v731
      %v733 = vmul.f32 %v690, 1.442695
      %v734 = vpow.pop %v733
      %v735 = vmul.f32 %v691, 1.442695
      %v736 = vpow.pop %v735
      %v737 = vmul.f32 %v692, 1.442695
      %v738 = vpow.pop %v737
      %v739 = vmul.f32 %v693, 1.442695
      %v740 = vpow.pop %v739
      %v741 = vmul.f32 %v694, 1.442695
      %v742 = vpow.pop %v741
      %v743 = vmul.f32 %v695, 1.442695
      %v744 = vpow.pop %v743
      %v745 = vmul.f32 %v696, 1.442695
      %v746 = vpow.pop %v745
      %v747 = vmul.f32 %v697, 1.442695
      %v748 = vpow.pop %v747
      %v749 = vmul.f32 %v698, 1.442695
      %v750 = vpow.pop %v749
      %v751 = vmul.f32 %v699, 1.442695
      %v752 = vpow.pop %v751
      %v753 = vmul.f32 %v700, 1.442695
      %v754 = vpow.pop %v753
      %v755 = vmul.f32 %v701, 1.442695
      %v756 = vpow.pop %v755
      %v757 = vmul.f32 %v702, 1.442695
      %v758 = vpow.pop %v757
      %v759 = vmul.f32 %v703, 1.442695
      %v760 = vpow.pop %v759
      %v761 = vmul.f32 %v704, 1.442695
      %v762 = vpow.pop %v761
      %v763 = vmul.f32 %v705, 1.442695
      %v764 = vpow.pop %v763
      %v765 = vmul.f32 %v706, 1.442695
      %v766 = vpow.pop %v765
      %v767 = vmul.f32 %v707, 1.442695
      %v768 = vpow.pop %v767
      %v769 = vmul.f32 %v708, 1.442695
      %v770 = vpow.pop %v769
      %v771 = vmul.f32 %v709, 1.442695
      %v772 = vpow.pop %v771
      %v773 = vmul.f32 %v710, 1.442695
      %v774 = vpow.pop %v773
      %v775 = vadd.f32 %v712, 1.0
      %v776 = vadd.f32 %v714, 1.0
      %v777 = vadd.f32 %v716, 1.0
      %v778 = vadd.f32 %v718, 1.0
      %v779 = vadd.f32 %v720, 1.0
      %v780 = vadd.f32 %v722, 1.0
      %v781 = vadd.f32 %v724, 1.0
      %v782 = vadd.f32 %v726, 1.0
      %v783 = vadd.f32 %v728, 1.0
      %v784 = vadd.f32 %v730, 1.0
      %v785 = vadd.f32 %v732, 1.0
      %v786 = vadd.f32 %v734, 1.0
      %v787 = vadd.f32 %v736, 1.0
      %v788 = vadd.f32 %v738, 1.0
      %v789 = vadd.f32 %v740, 1.0
      %v790 = vadd.f32 %v742, 1.0
      %v791 = vadd.f32 %v744, 1.0
      %v792 = vadd.f32 %v746, 1.0
      %v793 = vadd.f32 %v748, 1.0
      %v794 = vadd.f32 %v750, 1.0
      %v795 = vadd.f32 %v752, 1.0
      %v796 = vadd.f32 %v754, 1.0
      %v797 = vadd.f32 %v756, 1.0
      %v798 = vadd.f32 %v758, 1.0
      %v799 = vadd.f32 %v760, 1.0
      %v800 = vadd.f32 %v762, 1.0
      %v801 = vadd.f32 %v764, 1.0
      %v802 = vadd.f32 %v766, 1.0
      %v803 = vadd.f32 %v768, 1.0
      %v804 = vadd.f32 %v770, 1.0
      %v805 = vadd.f32 %v772, 1.0
      %v806 = vadd.f32 %v774, 1.0
      %v807 = vrcp.pop %v775
      %v808 = vmul.f32 %v775, %v807
      %v809 = vsub.f32 1.0, %v808
      %v810 = vmul.f32 %v807, %v809
      %v811 = vadd.f32 %v807, %v810
      %vm812 = vweird.f32 %v775
      %vm813 = vweird.f32 %v807
      %vm814 = vmor %vm812, %vm813
      %v815 = vsel %vm814, %v807, %v811
      %v816 = vand.u32 2147483647, %v775
      %vm817 = vcmp.eq.f32.partialorder %v816, 8.507059e+37
      %v818 = vand.u32 %v775, 2147483648
      %v819 = vor.u32 1.1754944e-38, %v818
      %v820 = vsel %vm817, %v819, %v815
      %v821 = vmul.f32 1.0, %v820
      %v822 = vrcp.pop %v776
      %v823 = vmul.f32 %v776, %v822
      %v824 = vsub.f32 1.0, %v823
      %v825 = vmul.f32 %v822, %v824
      %v826 = vadd.f32 %v822, %v825
      %vm827 = vweird.f32 %v776
      %vm828 = vweird.f32 %v822
      %vm829 = vmor %vm827, %vm828
      %v830 = vsel %vm829, %v822, %v826
      %v831 = vand.u32 2147483647, %v776
      %vm832 = vcmp.eq.f32.partialorder %v831, 8.507059e+37
      %v833 = vand.u32 %v776, 2147483648
      %v834 = vor.u32 1.1754944e-38, %v833
      %v835 = vsel %vm832, %v834, %v830
      %v836 = vmul.f32 1.0, %v835
      %v837 = vrcp.pop %v777
      %v838 = vmul.f32 %v777, %v837
      %v839 = vsub.f32 1.0, %v838
      %v840 = vmul.f32 %v837, %v839
      %v841 = vadd.f32 %v837, %v840
      %vm842 = vweird.f32 %v777
      %vm843 = vweird.f32 %v837
      %vm844 = vmor %vm842, %vm843
      %v845 = vsel %vm844, %v837, %v841
      %v846 = vand.u32 2147483647, %v777
      %vm847 = vcmp.eq.f32.partialorder %v846, 8.507059e+37
      %v848 = vand.u32 %v777, 2147483648
      %v849 = vor.u32 1.1754944e-38, %v848
      %v850 = vsel %vm847, %v849, %v845
      %v851 = vmul.f32 1.0, %v850
      %v852 = vrcp.pop %v778
      %v853 = vmul.f32 %v778, %v852
      %v854 = vsub.f32 1.0, %v853
      %v855 = vmul.f32 %v852, %v854
      %v856 = vadd.f32 %v852, %v855
      %vm857 = vweird.f32 %v778
      %vm858 = vweird.f32 %v852
      %vm859 = vmor %vm857, %vm858
      %v860 = vsel %vm859, %v852, %v856
      %v861 = vand.u32 2147483647, %v778
      %vm862 = vcmp.eq.f32.partialorder %v861, 8.507059e+37
      %v863 = vand.u32 %v778, 2147483648
      %v864 = vor.u32 1.1754944e-38, %v863
      %v865 = vsel %vm862, %v864, %v860
      %v866 = vmul.f32 1.0, %v865
      %v867 = vrcp.pop %v779
      %v868 = vmul.f32 %v779, %v867
      %v869 = vsub.f32 1.0, %v868
      %v870 = vmul.f32 %v867, %v869
      %v871 = vadd.f32 %v867, %v870
      %vm872 = vweird.f32 %v779
      %vm873 = vweird.f32 %v867
      %vm874 = vmor %vm872, %vm873
      %v875 = vsel %vm874, %v867, %v871
      %v876 = vand.u32 2147483647, %v779
      %vm877 = vcmp.eq.f32.partialorder %v876, 8.507059e+37
      %v878 = vand.u32 %v779, 2147483648
      %v879 = vor.u32 1.1754944e-38, %v878
      %v880 = vsel %vm877, %v879, %v875
      %v881 = vmul.f32 1.0, %v880
      %v882 = vrcp.pop %v780
      %v883 = vmul.f32 %v780, %v882
      %v884 = vsub.f32 1.0, %v883
      %v885 = vmul.f32 %v882, %v884
      %v886 = vadd.f32 %v882, %v885
      %vm887 = vweird.f32 %v780
      %vm888 = vweird.f32 %v882
      %vm889 = vmor %vm887, %vm888
      %v890 = vsel %vm889, %v882, %v886
      %v891 = vand.u32 2147483647, %v780
      %vm892 = vcmp.eq.f32.partialorder %v891, 8.507059e+37
      %v893 = vand.u32 %v780, 2147483648
      %v894 = vor.u32 1.1754944e-38, %v893
      %v895 = vsel %vm892, %v894, %v890
      %v896 = vmul.f32 1.0, %v895
      %v897 = vrcp.pop %v781
      %v898 = vmul.f32 %v781, %v897
      %v899 = vsub.f32 1.0, %v898
      %v900 = vmul.f32 %v897, %v899
      %v901 = vadd.f32 %v897, %v900
      %vm902 = vweird.f32 %v781
      %vm903 = vweird.f32 %v897
      %vm904 = vmor %vm902, %vm903
      %v905 = vsel %vm904, %v897, %v901
      %v906 = vand.u32 2147483647, %v781
      %vm907 = vcmp.eq.f32.partialorder %v906, 8.507059e+37
      %v908 = vand.u32 %v781, 2147483648
      %v909 = vor.u32 1.1754944e-38, %v908
      %v910 = vsel %vm907, %v909, %v905
      %v911 = vmul.f32 1.0, %v910
      %v912 = vrcp.pop %v782
      %v913 = vmul.f32 %v782, %v912
      %v914 = vsub.f32 1.0, %v913
      %v915 = vmul.f32 %v912, %v914
      %v916 = vadd.f32 %v912, %v915
      %vm917 = vweird.f32 %v782
      %vm918 = vweird.f32 %v912
      %vm919 = vmor %vm917, %vm918
      %v920 = vsel %vm919, %v912, %v916
      %v921 = vand.u32 2147483647, %v782
      %vm922 = vcmp.eq.f32.partialorder %v921, 8.507059e+37
      %v923 = vand.u32 %v782, 2147483648
      %v924 = vor.u32 1.1754944e-38, %v923
      %v925 = vsel %vm922, %v924, %v920
      %v926 = vmul.f32 1.0, %v925
      %v927 = vrcp.pop %v783
      %v928 = vmul.f32 %v783, %v927
      %v929 = vsub.f32 1.0, %v928
      %v930 = vmul.f32 %v927, %v929
      %v931 = vadd.f32 %v927, %v930
      %vm932 = vweird.f32 %v783
      %vm933 = vweird.f32 %v927
      %vm934 = vmor %vm932, %vm933
      %v935 = vsel %vm934, %v927, %v931
      %v936 = vand.u32 2147483647, %v783
      %vm937 = vcmp.eq.f32.partialorder %v936, 8.507059e+37
      %v938 = vand.u32 %v783, 2147483648
      %v939 = vor.u32 1.1754944e-38, %v938
      %v940 = vsel %vm937, %v939, %v935
      %v941 = vmul.f32 1.0, %v940
      %v942 = vrcp.pop %v784
      %v943 = vmul.f32 %v784, %v942
      %v944 = vsub.f32 1.0, %v943
      %v945 = vmul.f32 %v942, %v944
      %v946 = vadd.f32 %v942, %v945
      %vm947 = vweird.f32 %v784
      %vm948 = vweird.f32 %v942
      %vm949 = vmor %vm947, %vm948
      %v950 = vsel %vm949, %v942, %v946
      %v951 = vand.u32 2147483647, %v784
      %vm952 = vcmp.eq.f32.partialorder %v951, 8.507059e+37
      %v953 = vand.u32 %v784, 2147483648
      %v954 = vor.u32 1.1754944e-38, %v953
      %v955 = vsel %vm952, %v954, %v950
      %v956 = vmul.f32 1.0, %v955
      %v957 = vrcp.pop %v785
      %v958 = vmul.f32 %v785, %v957
      %v959 = vsub.f32 1.0, %v958
      %v960 = vmul.f32 %v957, %v959
      %v961 = vadd.f32 %v957, %v960
      %vm962 = vweird.f32 %v785
      %vm963 = vweird.f32 %v957
      %vm964 = vmor %vm962, %vm963
      %v965 = vsel %vm964, %v957, %v961
      %v966 = vand.u32 2147483647, %v785
      %vm967 = vcmp.eq.f32.partialorder %v966, 8.507059e+37
      %v968 = vand.u32 %v785, 2147483648
      %v969 = vor.u32 1.1754944e-38, %v968
      %v970 = vsel %vm967, %v969, %v965
      %v971 = vmul.f32 1.0, %v970
      %v972 = vrcp.pop %v786
      %v973 = vmul.f32 %v786, %v972
      %v974 = vsub.f32 1.0, %v973
      %v975 = vmul.f32 %v972, %v974
      %v976 = vadd.f32 %v972, %v975
      %vm977 = vweird.f32 %v786
      %vm978 = vweird.f32 %v972
      %vm979 = vmor %vm977, %vm978
      %v980 = vsel %vm979, %v972, %v976
      %v981 = vand.u32 2147483647, %v786
      %vm982 = vcmp.eq.f32.partialorder %v981, 8.507059e+37
      %v983 = vand.u32 %v786, 2147483648
      %v984 = vor.u32 1.1754944e-38, %v983
      %v985 = vsel %vm982, %v984, %v980
      %v986 = vmul.f32 1.0, %v985
      %v987 = vrcp.pop %v787
      %v988 = vmul.f32 %v787, %v987
      %v989 = vsub.f32 1.0, %v988
      %v990 = vmul.f32 %v987, %v989
      %v991 = vadd.f32 %v987, %v990
      %vm992 = vweird.f32 %v787
      %vm993 = vweird.f32 %v987
      %vm994 = vmor %vm992, %vm993
      %v995 = vsel %vm994, %v987, %v991
      %v996 = vand.u32 2147483647, %v787
      %vm997 = vcmp.eq.f32.partialorder %v996, 8.507059e+37
      %v998 = vand.u32 %v787, 2147483648
      %v999 = vor.u32 1.1754944e-38, %v998
      %v1000 = vsel %vm997, %v999, %v995
      %v1001 = vmul.f32 1.0, %v1000
      %v1002 = vrcp.pop %v788
      %v1003 = vmul.f32 %v788, %v1002
      %v1004 = vsub.f32 1.0, %v1003
      %v1005 = vmul.f32 %v1002, %v1004
      %v1006 = vadd.f32 %v1002, %v1005
      %vm1007 = vweird.f32 %v788
      %vm1008 = vweird.f32 %v1002
      %vm1009 = vmor %vm1007, %vm1008
      %v1010 = vsel %vm1009, %v1002, %v1006
      %v1011 = vand.u32 2147483647, %v788
      %vm1012 = vcmp.eq.f32.partialorder %v1011, 8.507059e+37
      %v1013 = vand.u32 %v788, 2147483648
      %v1014 = vor.u32 1.1754944e-38, %v1013
      %v1015 = vsel %vm1012, %v1014, %v1010
      %v1016 = vmul.f32 1.0, %v1015
      %v1017 = vrcp.pop %v789
      %v1018 = vmul.f32 %v789, %v1017
      %v1019 = vsub.f32 1.0, %v1018
      %v1020 = vmul.f32 %v1017, %v1019
      %v1021 = vadd.f32 %v1017, %v1020
      %vm1022 = vweird.f32 %v789
      %vm1023 = vweird.f32 %v1017
      %vm1024 = vmor %vm1022, %vm1023
      %v1025 = vsel %vm1024, %v1017, %v1021
      %v1026 = vand.u32 2147483647, %v789
      %vm1027 = vcmp.eq.f32.partialorder %v1026, 8.507059e+37
      %v1028 = vand.u32 %v789, 2147483648
      %v1029 = vor.u32 1.1754944e-38, %v1028
      %v1030 = vsel %vm1027, %v1029, %v1025
      %v1031 = vmul.f32 1.0, %v1030
      %v1032 = vrcp.pop %v790
      %v1033 = vmul.f32 %v790, %v1032
      %v1034 = vsub.f32 1.0, %v1033
      %v1035 = vmul.f32 %v1032, %v1034
      %v1036 = vadd.f32 %v1032, %v1035
      %vm1037 = vweird.f32 %v790
      %vm1038 = vweird.f32 %v1032
      %vm1039 = vmor %vm1037, %vm1038
      %v1040 = vsel %vm1039, %v1032, %v1036
      %v1041 = vand.u32 2147483647, %v790
      %vm1042 = vcmp.eq.f32.partialorder %v1041, 8.507059e+37
      %v1043 = vand.u32 %v790, 2147483648
      %v1044 = vor.u32 1.1754944e-38, %v1043
      %v1045 = vsel %vm1042, %v1044, %v1040
      %v1046 = vmul.f32 1.0, %v1045
      %v1047 = vrcp.pop %v791
      %v1048 = vmul.f32 %v791, %v1047
      %v1049 = vsub.f32 1.0, %v1048
      %v1050 = vmul.f32 %v1047, %v1049
      %v1051 = vadd.f32 %v1047, %v1050
      %vm1052 = vweird.f32 %v791
      %vm1053 = vweird.f32 %v1047
      %vm1054 = vmor %vm1052, %vm1053
      %v1055 = vsel %vm1054, %v1047, %v1051
      %v1056 = vand.u32 2147483647, %v791
      %vm1057 = vcmp.eq.f32.partialorder %v1056, 8.507059e+37
      %v1058 = vand.u32 %v791, 2147483648
      %v1059 = vor.u32 1.1754944e-38, %v1058
      %v1060 = vsel %vm1057, %v1059, %v1055
      %v1061 = vmul.f32 1.0, %v1060
      %v1062 = vrcp.pop %v792
      %v1063 = vmul.f32 %v792, %v1062
      %v1064 = vsub.f32 1.0, %v1063
      %v1065 = vmul.f32 %v1062, %v1064
      %v1066 = vadd.f32 %v1062, %v1065
      %vm1067 = vweird.f32 %v792
      %vm1068 = vweird.f32 %v1062
      %vm1069 = vmor %vm1067, %vm1068
      %v1070 = vsel %vm1069, %v1062, %v1066
      %v1071 = vand.u32 2147483647, %v792
      %vm1072 = vcmp.eq.f32.partialorder %v1071, 8.507059e+37
      %v1073 = vand.u32 %v792, 2147483648
      %v1074 = vor.u32 1.1754944e-38, %v1073
      %v1075 = vsel %vm1072, %v1074, %v1070
      %v1076 = vmul.f32 1.0, %v1075
      %v1077 = vrcp.pop %v793
      %v1078 = vmul.f32 %v793, %v1077
      %v1079 = vsub.f32 1.0, %v1078
      %v1080 = vmul.f32 %v1077, %v1079
      %v1081 = vadd.f32 %v1077, %v1080
      %vm1082 = vweird.f32 %v793
      %vm1083 = vweird.f32 %v1077
      %vm1084 = vmor %vm1082, %vm1083
      %v1085 = vsel %vm1084, %v1077, %v1081
      %v1086 = vand.u32 2147483647, %v793
      %vm1087 = vcmp.eq.f32.partialorder %v1086, 8.507059e+37
      %v1088 = vand.u32 %v793, 2147483648
      %v1089 = vor.u32 1.1754944e-38, %v1088
      %v1090 = vsel %vm1087, %v1089, %v1085
      %v1091 = vmul.f32 1.0, %v1090
      %v1092 = vrcp.pop %v794
      %v1093 = vmul.f32 %v794, %v1092
      %v1094 = vsub.f32 1.0, %v1093
      %v1095 = vmul.f32 %v1092, %v1094
      %v1096 = vadd.f32 %v1092, %v1095
      %vm1097 = vweird.f32 %v794
      %vm1098 = vweird.f32 %v1092
      %vm1099 = vmor %vm1097, %vm1098
      %v1100 = vsel %vm1099, %v1092, %v1096
      %v1101 = vand.u32 2147483647, %v794
      %vm1102 = vcmp.eq.f32.partialorder %v1101, 8.507059e+37
      %v1103 = vand.u32 %v794, 2147483648
      %v1104 = vor.u32 1.1754944e-38, %v1103
      %v1105 = vsel %vm1102, %v1104, %v1100
      %v1106 = vmul.f32 1.0, %v1105
      %v1107 = vrcp.pop %v795
      %v1108 = vmul.f32 %v795, %v1107
      %v1109 = vsub.f32 1.0, %v1108
      %v1110 = vmul.f32 %v1107, %v1109
      %v1111 = vadd.f32 %v1107, %v1110
      %vm1112 = vweird.f32 %v795
      %vm1113 = vweird.f32 %v1107
      %vm1114 = vmor %vm1112, %vm1113
      %v1115 = vsel %vm1114, %v1107, %v1111
      %v1116 = vand.u32 2147483647, %v795
      %vm1117 = vcmp.eq.f32.partialorder %v1116, 8.507059e+37
      %v1118 = vand.u32 %v795, 2147483648
      %v1119 = vor.u32 1.1754944e-38, %v1118
      %v1120 = vsel %vm1117, %v1119, %v1115
      %v1121 = vmul.f32 1.0, %v1120
      %v1122 = vrcp.pop %v796
      %v1123 = vmul.f32 %v796, %v1122
      %v1124 = vsub.f32 1.0, %v1123
      %v1125 = vmul.f32 %v1122, %v1124
      %v1126 = vadd.f32 %v1122, %v1125
      %vm1127 = vweird.f32 %v796
      %vm1128 = vweird.f32 %v1122
      %vm1129 = vmor %vm1127, %vm1128
      %v1130 = vsel %vm1129, %v1122, %v1126
      %v1131 = vand.u32 2147483647, %v796
      %vm1132 = vcmp.eq.f32.partialorder %v1131, 8.507059e+37
      %v1133 = vand.u32 %v796, 2147483648
      %v1134 = vor.u32 1.1754944e-38, %v1133
      %v1135 = vsel %vm1132, %v1134, %v1130
      %v1136 = vmul.f32 1.0, %v1135
      %v1137 = vrcp.pop %v797
      %v1138 = vmul.f32 %v797, %v1137
      %v1139 = vsub.f32 1.0, %v1138
      %v1140 = vmul.f32 %v1137, %v1139
      %v1141 = vadd.f32 %v1137, %v1140
      %vm1142 = vweird.f32 %v797
      %vm1143 = vweird.f32 %v1137
      %vm1144 = vmor %vm1142, %vm1143
      %v1145 = vsel %vm1144, %v1137, %v1141
      %v1146 = vand.u32 2147483647, %v797
      %vm1147 = vcmp.eq.f32.partialorder %v1146, 8.507059e+37
      %v1148 = vand.u32 %v797, 2147483648
      %v1149 = vor.u32 1.1754944e-38, %v1148
      %v1150 = vsel %vm1147, %v1149, %v1145
      %v1151 = vmul.f32 1.0, %v1150
      %v1152 = vrcp.pop %v798
      %v1153 = vmul.f32 %v798, %v1152
      %v1154 = vsub.f32 1.0, %v1153
      %v1155 = vmul.f32 %v1152, %v1154
      %v1156 = vadd.f32 %v1152, %v1155
      %vm1157 = vweird.f32 %v798
      %vm1158 = vweird.f32 %v1152
      %vm1159 = vmor %vm1157, %vm1158
      %v1160 = vsel %vm1159, %v1152, %v1156
      %v1161 = vand.u32 2147483647, %v798
      %vm1162 = vcmp.eq.f32.partialorder %v1161, 8.507059e+37
      %v1163 = vand.u32 %v798, 2147483648
      %v1164 = vor.u32 1.1754944e-38, %v1163
      %v1165 = vsel %vm1162, %v1164, %v1160
      %v1166 = vmul.f32 1.0, %v1165
      %v1167 = vrcp.pop %v799
      %v1168 = vmul.f32 %v799, %v1167
      %v1169 = vsub.f32 1.0, %v1168
      %v1170 = vmul.f32 %v1167, %v1169
      %v1171 = vadd.f32 %v1167, %v1170
      %vm1172 = vweird.f32 %v799
      %vm1173 = vweird.f32 %v1167
      %vm1174 = vmor %vm1172, %vm1173
      %v1175 = vsel %vm1174, %v1167, %v1171
      %v1176 = vand.u32 2147483647, %v799
      %vm1177 = vcmp.eq.f32.partialorder %v1176, 8.507059e+37
      %v1178 = vand.u32 %v799, 2147483648
      %v1179 = vor.u32 1.1754944e-38, %v1178
      %v1180 = vsel %vm1177, %v1179, %v1175
      %v1181 = vmul.f32 1.0, %v1180
      %v1182 = vrcp.pop %v800
      %v1183 = vmul.f32 %v800, %v1182
      %v1184 = vsub.f32 1.0, %v1183
      %v1185 = vmul.f32 %v1182, %v1184
      %v1186 = vadd.f32 %v1182, %v1185
      %vm1187 = vweird.f32 %v800
      %vm1188 = vweird.f32 %v1182
      %vm1189 = vmor %vm1187, %vm1188
      %v1190 = vsel %vm1189, %v1182, %v1186
      %v1191 = vand.u32 2147483647, %v800
      %vm1192 = vcmp.eq.f32.partialorder %v1191, 8.507059e+37
      %v1193 = vand.u32 %v800, 2147483648
      %v1194 = vor.u32 1.1754944e-38, %v1193
      %v1195 = vsel %vm1192, %v1194, %v1190
      %v1196 = vmul.f32 1.0, %v1195
      %v1197 = vrcp.pop %v801
      %v1198 = vmul.f32 %v801, %v1197
      %v1199 = vsub.f32 1.0, %v1198
      %v1200 = vmul.f32 %v1197, %v1199
      %v1201 = vadd.f32 %v1197, %v1200
      %vm1202 = vweird.f32 %v801
      %vm1203 = vweird.f32 %v1197
      %vm1204 = vmor %vm1202, %vm1203
      %v1205 = vsel %vm1204, %v1197, %v1201
      %v1206 = vand.u32 2147483647, %v801
      %vm1207 = vcmp.eq.f32.partialorder %v1206, 8.507059e+37
      %v1208 = vand.u32 %v801, 2147483648
      %v1209 = vor.u32 1.1754944e-38, %v1208
      %v1210 = vsel %vm1207, %v1209, %v1205
      %v1211 = vmul.f32 1.0, %v1210
      %v1212 = vrcp.pop %v802
      %v1213 = vmul.f32 %v802, %v1212
      %v1214 = vsub.f32 1.0, %v1213
      %v1215 = vmul.f32 %v1212, %v1214
      %v1216 = vadd.f32 %v1212, %v1215
      %vm1217 = vweird.f32 %v802
      %vm1218 = vweird.f32 %v1212
      %vm1219 = vmor %vm1217, %vm1218
      %v1220 = vsel %vm1219, %v1212, %v1216
      %v1221 = vand.u32 2147483647, %v802
      %vm1222 = vcmp.eq.f32.partialorder %v1221, 8.507059e+37
      %v1223 = vand.u32 %v802, 2147483648
      %v1224 = vor.u32 1.1754944e-38, %v1223
      %v1225 = vsel %vm1222, %v1224, %v1220
      %v1226 = vmul.f32 1.0, %v1225
      %v1227 = vrcp.pop %v803
      %v1228 = vmul.f32 %v803, %v1227
      %v1229 = vsub.f32 1.0, %v1228
      %v1230 = vmul.f32 %v1227, %v1229
      %v1231 = vadd.f32 %v1227, %v1230
      %vm1232 = vweird.f32 %v803
      %vm1233 = vweird.f32 %v1227
      %vm1234 = vmor %vm1232, %vm1233
      %v1235 = vsel %vm1234, %v1227, %v1231
      %v1236 = vand.u32 2147483647, %v803
      %vm1237 = vcmp.eq.f32.partialorder %v1236, 8.507059e+37
      %v1238 = vand.u32 %v803, 2147483648
      %v1239 = vor.u32 1.1754944e-38, %v1238
      %v1240 = vsel %vm1237, %v1239, %v1235
      %v1241 = vmul.f32 1.0, %v1240
      %v1242 = vrcp.pop %v804
      %v1243 = vmul.f32 %v804, %v1242
      %v1244 = vsub.f32 1.0, %v1243
      %v1245 = vmul.f32 %v1242, %v1244
      %v1246 = vadd.f32 %v1242, %v1245
      %vm1247 = vweird.f32 %v804
      %vm1248 = vweird.f32 %v1242
      %vm1249 = vmor %vm1247, %vm1248
      %v1250 = vsel %vm1249, %v1242, %v1246
      %v1251 = vand.u32 2147483647, %v804
      %vm1252 = vcmp.eq.f32.partialorder %v1251, 8.507059e+37
      %v1253 = vand.u32 %v804, 2147483648
      %v1254 = vor.u32 1.1754944e-38, %v1253
      %v1255 = vsel %vm1252, %v1254, %v1250
      %v1256 = vmul.f32 1.0, %v1255
      %v1257 = vrcp.pop %v805
      %v1258 = vmul.f32 %v805, %v1257
      %v1259 = vsub.f32 1.0, %v1258
      %v1260 = vmul.f32 %v1257, %v1259
      %v1261 = vadd.f32 %v1257, %v1260
      %vm1262 = vweird.f32 %v805
      %vm1263 = vweird.f32 %v1257
      %vm1264 = vmor %vm1262, %vm1263
      %v1265 = vsel %vm1264, %v1257, %v1261
      %v1266 = vand.u32 2147483647, %v805
      %vm1267 = vcmp.eq.f32.partialorder %v1266, 8.507059e+37
      %v1268 = vand.u32 %v805, 2147483648
      %v1269 = vor.u32 1.1754944e-38, %v1268
      %v1270 = vsel %vm1267, %v1269, %v1265
      %v1271 = vmul.f32 1.0, %v1270
      %v1272 = vrcp.pop %v806
      %v1273 = vmul.f32 %v806, %v1272
      %v1274 = vsub.f32 1.0, %v1273
      %v1275 = vmul.f32 %v1272, %v1274
      %v1276 = vadd.f32 %v1272, %v1275
      %vm1277 = vweird.f32 %v806
      %vm1278 = vweird.f32 %v1272
      %vm1279 = vmor %vm1277, %vm1278
      %v1280 = vsel %vm1279, %v1272, %v1276
      %v1281 = vand.u32 2147483647, %v806
      %vm1282 = vcmp.eq.f32.partialorder %v1281, 8.507059e+37
      %v1283 = vand.u32 %v806, 2147483648
      %v1284 = vor.u32 1.1754944e-38, %v1283
      %v1285 = vsel %vm1282, %v1284, %v1280
      %v1286 = vmul.f32 1.0, %v1285
      %v1287 = vmul.f32 %v647, %v821
      %v1288 = vmul.f32 %v648, %v836
      %v1289 = vmul.f32 %v649, %v851
      %v1290 = vmul.f32 %v650, %v866
      %v1291 = vmul.f32 %v651, %v881
      %v1292 = vmul.f32 %v652, %v896
      %v1293 = vmul.f32 %v653, %v911
      %v1294 = vmul.f32 %v654, %v926
      %v1295 = vmul.f32 %v655, %v941
      %v1296 = vmul.f32 %v656, %v956
      %v1297 = vmul.f32 %v657, %v971
      %v1298 = vmul.f32 %v658, %v986
      %v1299 = vmul.f32 %v659, %v1001
      %v1300 = vmul.f32 %v660, %v1016
      %v1301 = vmul.f32 %v661, %v1031
      %v1302 = vmul.f32 %v662, %v1046
      %v1303 = vmul.f32 %v663, %v1061
      %v1304 = vmul.f32 %v664, %v1076
      %v1305 = vmul.f32 %v665, %v1091
      %v1306 = vmul.f32 %v666, %v1106
      %v1307 = vmul.f32 %v667, %v1121
      %v1308 = vmul.f32 %v668, %v1136
      %v1309 = vmul.f32 %v669, %v1151
      %v1310 = vmul.f32 %v670, %v1166
      %v1311 = vmul.f32 %v671, %v1181
      %v1312 = vmul.f32 %v672, %v1196
      %v1313 = vmul.f32 %v673, %v1211
      %v1314 = vmul.f32 %v674, %v1226
      %v1315 = vmul.f32 %v675, %v1241
      %v1316 = vmul.f32 %v676, %v1256
      %v1317 = vmul.f32 %v677, %v1271
      %v1318 = vmul.f32 %v678, %v1286
      %v1319 = vpack.c.bf16 %v1287, %v1287
      %v1320 = vpack.c.bf16 %v1288, %v1288
      %v1321 = vpack.c.bf16 %v1289, %v1289
      %v1322 = vpack.c.bf16 %v1290, %v1290
      %v1323 = vpack.c.bf16 %v1291, %v1291
      %v1324 = vpack.c.bf16 %v1292, %v1292
      %v1325 = vpack.c.bf16 %v1293, %v1293
      %v1326 = vpack.c.bf16 %v1294, %v1294
      %v1327 = vpack.c.bf16 %v1295, %v1295
      %v1328 = vpack.c.bf16 %v1296, %v1296
      %v1329 = vpack.c.bf16 %v1297, %v1297
      %v1330 = vpack.c.bf16 %v1298, %v1298
      %v1331 = vpack.c.bf16 %v1299, %v1299
      %v1332 = vpack.c.bf16 %v1300, %v1300
      %v1333 = vpack.c.bf16 %v1301, %v1301
      %v1334 = vpack.c.bf16 %v1302, %v1302
      %v1335 = vpack.c.bf16 %v1303, %v1303
      %v1336 = vpack.c.bf16 %v1304, %v1304
      %v1337 = vpack.c.bf16 %v1305, %v1305
      %v1338 = vpack.c.bf16 %v1306, %v1306
      %v1339 = vpack.c.bf16 %v1307, %v1307
      %v1340 = vpack.c.bf16 %v1308, %v1308
      %v1341 = vpack.c.bf16 %v1309, %v1309
      %v1342 = vpack.c.bf16 %v1310, %v1310
      %v1343 = vpack.c.bf16 %v1311, %v1311
      %v1344 = vpack.c.bf16 %v1312, %v1312
      %v1345 = vpack.c.bf16 %v1313, %v1313
      %v1346 = vpack.c.bf16 %v1314, %v1314
      %v1347 = vpack.c.bf16 %v1315, %v1315
      %v1348 = vpack.c.bf16 %v1316, %v1316
      %v1349 = vpack.c.bf16 %v1317, %v1317
      %v1350 = vpack.c.bf16 %v1318, %v1318
      %v1387 = vunpack.c.l.b16 %v531
      %v1388 = vunpack.c.l.b16 %v532
      %v1389 = vunpack.c.l.b16 %v1319
      %v1390 = vunpack.c.l.b16 %v1320
      %v1391 = vunpack.c.l.b16 %v1321
      %v1392 = vunpack.c.l.b16 %v1322
      %v1393 = vunpack.c.l.b16 %v1323
      %v1394 = vunpack.c.l.b16 %v1324
      %v1395 = vunpack.c.l.b16 %v1325
      %v1396 = vunpack.c.l.b16 %v1326
      %v1397 = vunpack.c.l.b16 %v1327
      %v1398 = vunpack.c.l.b16 %v1328
      %v1399 = vunpack.c.l.b16 %v1329
      %v1400 = vunpack.c.l.b16 %v1330
      %v1401 = vunpack.c.l.b16 %v1331
      %v1402 = vunpack.c.l.b16 %v1332
      %v1403 = vunpack.c.l.b16 %v1333
      %v1404 = vunpack.c.l.b16 %v1334
      %v1405 = vunpack.c.l.b16 %v1335
      %v1406 = vunpack.c.l.b16 %v1336
      %v1407 = vunpack.c.l.b16 %v1337
      %v1408 = vunpack.c.l.b16 %v1338
      %v1409 = vunpack.c.l.b16 %v1339
      %v1410 = vunpack.c.l.b16 %v1340
      %v1411 = vunpack.c.l.b16 %v1341
      %v1412 = vunpack.c.l.b16 %v1342
      %v1413 = vunpack.c.l.b16 %v1343
      %v1414 = vunpack.c.l.b16 %v1344
      %v1415 = vunpack.c.l.b16 %v1345
      %v1416 = vunpack.c.l.b16 %v1346
      %v1417 = vunpack.c.l.b16 %v1347
      %v1418 = vunpack.c.l.b16 %v1348
      %v1419 = vunpack.c.l.b16 %v1349
      %v1420 = vunpack.c.l.b16 %v1350
      %v1421 = vunpack.c.l.b16 %v581
      %v1422 = vunpack.c.l.b16 %v582
      %v1423 = vpack.c.b16 %v1388, %v1387
      %v1424 = vpack.c.b16 %v1390, %v1389
      %v1425 = vpack.c.b16 %v1392, %v1391
      %v1426 = vpack.c.b16 %v1394, %v1393
      %v1427 = vpack.c.b16 %v1396, %v1395
      %v1428 = vpack.c.b16 %v1398, %v1397
      %v1429 = vpack.c.b16 %v1400, %v1399
      %v1430 = vpack.c.b16 %v1402, %v1401
      %v1431 = vpack.c.b16 %v1404, %v1403
      %v1432 = vpack.c.b16 %v1406, %v1405
      %v1433 = vpack.c.b16 %v1408, %v1407
      %v1434 = vpack.c.b16 %v1410, %v1409
      %v1435 = vpack.c.b16 %v1412, %v1411
      %v1436 = vpack.c.b16 %v1414, %v1413
      %v1437 = vpack.c.b16 %v1416, %v1415
      %v1438 = vpack.c.b16 %v1418, %v1417
      %v1439 = vpack.c.b16 %v1420, %v1419
      %v1440 = vpack.c.b16 %v1422, %v1421
      %v1442 = vshrl.u32 %v1423, 16
      %v1444 = vrot.slane %v1442, 7
      %v1445 = vshll.u32 %v1423, 16
      %v1447 = vor.u32 %v1444, %v1445
      %v1449 = vshrl.u32 %v1424, 16
      %v1451 = vrot.slane %v1449, 7
      %v1452 = vshll.u32 %v1424, 16
      %v1454 = vor.u32 %v1451, %v1452
      %v1456 = vshrl.u32 %v1425, 16
      %v1458 = vrot.slane %v1456, 7
      %v1459 = vshll.u32 %v1425, 16
      %v1461 = vor.u32 %v1458, %v1459
      %v1463 = vshrl.u32 %v1426, 16
      %v1465 = vrot.slane %v1463, 7
      %v1466 = vshll.u32 %v1426, 16
      %v1468 = vor.u32 %v1465, %v1466
      %v1470 = vshrl.u32 %v1427, 16
      %v1472 = vrot.slane %v1470, 7
      %v1473 = vshll.u32 %v1427, 16
      %v1475 = vor.u32 %v1472, %v1473
      %v1477 = vshrl.u32 %v1428, 16
      %v1479 = vrot.slane %v1477, 7
      %v1480 = vshll.u32 %v1428, 16
      %v1482 = vor.u32 %v1479, %v1480
      %v1484 = vshrl.u32 %v1429, 16
      %v1486 = vrot.slane %v1484, 7
      %v1487 = vshll.u32 %v1429, 16
      %v1489 = vor.u32 %v1486, %v1487
      %v1491 = vshrl.u32 %v1430, 16
      %v1493 = vrot.slane %v1491, 7
      %v1494 = vshll.u32 %v1430, 16
      %v1496 = vor.u32 %v1493, %v1494
      %v1498 = vshrl.u32 %v1431, 16
      %v1500 = vrot.slane %v1498, 7
      %v1501 = vshll.u32 %v1431, 16
      %v1503 = vor.u32 %v1500, %v1501
      %v1505 = vshrl.u32 %v1432, 16
      %v1507 = vrot.slane %v1505, 7
      %v1508 = vshll.u32 %v1432, 16
      %v1510 = vor.u32 %v1507, %v1508
      %v1512 = vshrl.u32 %v1433, 16
      %v1514 = vrot.slane %v1512, 7
      %v1515 = vshll.u32 %v1433, 16
      %v1517 = vor.u32 %v1514, %v1515
      %v1519 = vshrl.u32 %v1434, 16
      %v1521 = vrot.slane %v1519, 7
      %v1522 = vshll.u32 %v1434, 16
      %v1524 = vor.u32 %v1521, %v1522
      %v1526 = vshrl.u32 %v1435, 16
      %v1528 = vrot.slane %v1526, 7
      %v1529 = vshll.u32 %v1435, 16
      %v1531 = vor.u32 %v1528, %v1529
      %v1533 = vshrl.u32 %v1436, 16
      %v1535 = vrot.slane %v1533, 7
      %v1536 = vshll.u32 %v1436, 16
      %v1538 = vor.u32 %v1535, %v1536
      %v1540 = vshrl.u32 %v1437, 16
      %v1542 = vrot.slane %v1540, 7
      %v1543 = vshll.u32 %v1437, 16
      %v1545 = vor.u32 %v1542, %v1543
      %v1547 = vshrl.u32 %v1438, 16
      %v1549 = vrot.slane %v1547, 7
      %v1550 = vshll.u32 %v1438, 16
      %v1552 = vor.u32 %v1549, %v1550
      %v1554 = vshrl.u32 %v1439, 16
      %v1556 = vrot.slane %v1554, 7
      %v1557 = vshll.u32 %v1439, 16
      %v1559 = vor.u32 %v1556, %v1557
      %v1561 = vshrl.u32 %v1440, 16
      %v1563 = vrot.slane %v1561, 7
      %v1564 = vshll.u32 %v1440, 16
      %v1566 = vor.u32 %v1563, %v1564
      %vm1603 = vcmask 1040384
      %vm1604 = vsmask.f32 256
      %vm1605 = vmand %vm1603, %vm1604
      %v1606 = vsel %vm1605, 0, %v1447
      %v1607 = vsel %vm1605, 0, %v1454
      %v1608 = vsel %vm1605, 0, %v1461
      %v1609 = vsel %vm1605, 0, %v1468
      %v1610 = vsel %vm1605, 0, %v1475
      %v1611 = vsel %vm1605, 0, %v1482
      %v1612 = vsel %vm1605, 0, %v1489
      %v1613 = vsel %vm1605, 0, %v1496
      %v1614 = vsel %vm1605, 0, %v1503
      %v1615 = vsel %vm1605, 0, %v1510
      %v1616 = vsel %vm1605, 0, %v1517
      %v1617 = vsel %vm1605, 0, %v1524
      %v1618 = vsel %vm1605, 0, %v1531
      %v1619 = vsel %vm1605, 0, %v1538
      %v1620 = vsel %vm1605, 0, %v1545
      %v1621 = vsel %vm1605, 0, %v1552
      %v1622 = vsel %vm1605, 0, %v1559
      %v1623 = vsel %vm1605, 0, %v1566
      %v1624 = vsel %vm1605, %v1444, 0
      %v1625 = vsel %vm1605, %v1451, 0
      %v1626 = vsel %vm1605, %v1458, 0
      %v1627 = vsel %vm1605, %v1465, 0
      %v1628 = vsel %vm1605, %v1472, 0
      %v1629 = vsel %vm1605, %v1479, 0
      %v1630 = vsel %vm1605, %v1486, 0
      %v1631 = vsel %vm1605, %v1493, 0
      %v1632 = vsel %vm1605, %v1500, 0
      %v1633 = vsel %vm1605, %v1507, 0
      %v1634 = vsel %vm1605, %v1514, 0
      %v1635 = vsel %vm1605, %v1521, 0
      %v1636 = vsel %vm1605, %v1528, 0
      %v1637 = vsel %vm1605, %v1535, 0
      %v1638 = vsel %vm1605, %v1542, 0
      %v1639 = vsel %vm1605, %v1549, 0
      %v1640 = vsel %vm1605, %v1556, 0
      %v1641 = vsel %vm1605, %v1563, 0
      %v1642 = vld [vmem:[%s4] sm:$0xf]
      %vm1643 = vsmask.f32 7424
      %v1645 = vshrl.u32 %v1606, 16
      %v1647 = vshll.u32 %v1606, 16
      %v1649 = vrot.slane %v1647, 1
      %v1650 = vor.u32 %v1645, %v1649
      %v1652 = vshll.u32 %v1624, 16
      %v1654 = vrot.slane %v1652, 1
      %v1655 = vsel %vm1643, %v1650, %v1654
      %v1657 = vshrl.u32 %v1607, 16
      %v1659 = vshll.u32 %v1607, 16
      %v1661 = vrot.slane %v1659, 1
      %v1662 = vor.u32 %v1657, %v1661
      %v1664 = vshll.u32 %v1625, 16
      %v1666 = vrot.slane %v1664, 1
      %v1667 = vsel %vm1643, %v1662, %v1666
      %v1669 = vshrl.u32 %v1608, 16
      %v1671 = vshll.u32 %v1608, 16
      %v1673 = vrot.slane %v1671, 1
      %v1674 = vor.u32 %v1669, %v1673
      %v1676 = vshll.u32 %v1626, 16
      %v1678 = vrot.slane %v1676, 1
      %v1679 = vsel %vm1643, %v1674, %v1678
      %v1681 = vshrl.u32 %v1609, 16
      %v1683 = vshll.u32 %v1609, 16
      %v1685 = vrot.slane %v1683, 1
      %v1686 = vor.u32 %v1681, %v1685
      %v1688 = vshll.u32 %v1627, 16
      %v1690 = vrot.slane %v1688, 1
      %v1691 = vsel %vm1643, %v1686, %v1690
      %v1693 = vshrl.u32 %v1610, 16
      %v1695 = vshll.u32 %v1610, 16
      %v1697 = vrot.slane %v1695, 1
      %v1698 = vor.u32 %v1693, %v1697
      %v1700 = vshll.u32 %v1628, 16
      %v1702 = vrot.slane %v1700, 1
      %v1703 = vsel %vm1643, %v1698, %v1702
      %v1705 = vshrl.u32 %v1611, 16
      %v1707 = vshll.u32 %v1611, 16
      %v1709 = vrot.slane %v1707, 1
      %v1710 = vor.u32 %v1705, %v1709
      %v1712 = vshll.u32 %v1629, 16
      %v1714 = vrot.slane %v1712, 1
      %v1715 = vsel %vm1643, %v1710, %v1714
      %v1717 = vshrl.u32 %v1612, 16
      %v1719 = vshll.u32 %v1612, 16
      %v1721 = vrot.slane %v1719, 1
      %v1722 = vor.u32 %v1717, %v1721
      %v1724 = vshll.u32 %v1630, 16
      %v1726 = vrot.slane %v1724, 1
      %v1727 = vsel %vm1643, %v1722, %v1726
      %v1729 = vshrl.u32 %v1613, 16
      %v1731 = vshll.u32 %v1613, 16
      %v1733 = vrot.slane %v1731, 1
      %v1734 = vor.u32 %v1729, %v1733
      %v1736 = vshll.u32 %v1631, 16
      %v1738 = vrot.slane %v1736, 1
      %v1739 = vsel %vm1643, %v1734, %v1738
      %v1741 = vshrl.u32 %v1614, 16
      %v1743 = vshll.u32 %v1614, 16
      %v1745 = vrot.slane %v1743, 1
      %v1746 = vor.u32 %v1741, %v1745
      %v1748 = vshll.u32 %v1632, 16
      %v1750 = vrot.slane %v1748, 1
      %v1751 = vsel %vm1643, %v1746, %v1750
      %v1753 = vshrl.u32 %v1615, 16
      %v1755 = vshll.u32 %v1615, 16
      %v1757 = vrot.slane %v1755, 1
      %v1758 = vor.u32 %v1753, %v1757
      %v1760 = vshll.u32 %v1633, 16
      %v1762 = vrot.slane %v1760, 1
      %v1763 = vsel %vm1643, %v1758, %v1762
      %v1765 = vshrl.u32 %v1616, 16
      %v1767 = vshll.u32 %v1616, 16
      %v1769 = vrot.slane %v1767, 1
      %v1770 = vor.u32 %v1765, %v1769
      %v1772 = vshll.u32 %v1634, 16
      %v1774 = vrot.slane %v1772, 1
      %v1775 = vsel %vm1643, %v1770, %v1774
      %v1777 = vshrl.u32 %v1617, 16
      %v1779 = vshll.u32 %v1617, 16
      %v1781 = vrot.slane %v1779, 1
      %v1782 = vor.u32 %v1777, %v1781
      %v1784 = vshll.u32 %v1635, 16
      %v1786 = vrot.slane %v1784, 1
      %v1787 = vsel %vm1643, %v1782, %v1786
      %v1789 = vshrl.u32 %v1618, 16
      %v1791 = vshll.u32 %v1618, 16
      %v1793 = vrot.slane %v1791, 1
      %v1794 = vor.u32 %v1789, %v1793
      %v1796 = vshll.u32 %v1636, 16
      %v1798 = vrot.slane %v1796, 1
      %v1799 = vsel %vm1643, %v1794, %v1798
      %v1801 = vshrl.u32 %v1619, 16
      %v1803 = vshll.u32 %v1619, 16
      %v1805 = vrot.slane %v1803, 1
      %v1806 = vor.u32 %v1801, %v1805
      %v1808 = vshll.u32 %v1637, 16
      %v1810 = vrot.slane %v1808, 1
      %v1811 = vsel %vm1643, %v1806, %v1810
      %v1813 = vshrl.u32 %v1620, 16
      %v1815 = vshll.u32 %v1620, 16
      %v1817 = vrot.slane %v1815, 1
      %v1818 = vor.u32 %v1813, %v1817
      %v1820 = vshll.u32 %v1638, 16
      %v1822 = vrot.slane %v1820, 1
      %v1823 = vsel %vm1643, %v1818, %v1822
      %v1825 = vshrl.u32 %v1621, 16
      %v1827 = vshll.u32 %v1621, 16
      %v1829 = vrot.slane %v1827, 1
      %v1830 = vor.u32 %v1825, %v1829
      %v1832 = vshll.u32 %v1639, 16
      %v1834 = vrot.slane %v1832, 1
      %v1835 = vsel %vm1643, %v1830, %v1834
      %s1836 = scalar_lea.vmem %s4, 4
      %v1837 = vld [vmem:[%s1836] sm:$0xf]
      %vm1838 = vcmask 64512
      %v1840 = vsel %vm1838, %v1655, 0
      %v1843 = vsel %vm1838, %v1667, 0
      %v1846 = vsel %vm1838, %v1679, 0
      %v1849 = vsel %vm1838, %v1691, 0
      %v1852 = vsel %vm1838, %v1703, 0
      %v1855 = vsel %vm1838, %v1715, 0
      %v1858 = vsel %vm1838, %v1727, 0
      %v1861 = vsel %vm1838, %v1739, 0
      %v1864 = vsel %vm1838, %v1751, 0
      %v1867 = vsel %vm1838, %v1763, 0
      %v1870 = vsel %vm1838, %v1775, 0
      %v1873 = vsel %vm1838, %v1787, 0
      %v1876 = vsel %vm1838, %v1799, 0
      %v1879 = vsel %vm1838, %v1811, 0
      %v1882 = vsel %vm1838, %v1823, 0
      %v1885 = vsel %vm1838, %v1835, 0
      %vm1887 = vcmask 1043456
      %v1889 = vsel %vm1887, %v1837, 0
      %1891 = vmatpush.bf16.msra.mxu0 0
      %1892 = vmatpush.bf16.msra.mxu0 0
      %1893 = vmatpush.bf16.msra.mxu0 0
      %1894 = vmatpush.bf16.msra.mxu0 0
      %1895 = vmatpush.bf16.msra.mxu0 0
      %1896 = vmatpush.bf16.msra.mxu0 0
      %1897 = vmatpush.bf16.msra.mxu0 0
      %1898 = vmatpush.bf16.msra.mxu0 %v1889
      %1899 = vmatmul.bf16.gmra.mxu0 %v1840
      %v1900 = vpop.f32.mrf.mxu0
      %v1901 = vadd.f32 0.0, %v1900
      %v1902 = vpop.f32.mrf.mxu0
      %v1903 = vadd.f32 0.0, %v1902
      %1904 = vmatmul.bf16.gmra.mxu0 %v1843
      %v1905 = vpop.f32.mrf.mxu0
      %v1906 = vadd.f32 0.0, %v1905
      %v1907 = vpop.f32.mrf.mxu0
      %v1908 = vadd.f32 0.0, %v1907
      %1909 = vmatmul.bf16.gmra.mxu0 %v1846
      %v1910 = vpop.f32.mrf.mxu0
      %v1911 = vadd.f32 0.0, %v1910
      %v1912 = vpop.f32.mrf.mxu0
      %v1913 = vadd.f32 0.0, %v1912
      %1914 = vmatmul.bf16.gmra.mxu0 %v1849
      %v1915 = vpop.f32.mrf.mxu0
      %v1916 = vadd.f32 0.0, %v1915
      %v1917 = vpop.f32.mrf.mxu0
      %v1918 = vadd.f32 0.0, %v1917
      %1919 = vmatmul.bf16.gmra.mxu0 %v1852
      %v1920 = vpop.f32.mrf.mxu0
      %v1921 = vadd.f32 0.0, %v1920
      %v1922 = vpop.f32.mrf.mxu0
      %v1923 = vadd.f32 0.0, %v1922
      %1924 = vmatmul.bf16.gmra.mxu0 %v1855
      %v1925 = vpop.f32.mrf.mxu0
      %v1926 = vadd.f32 0.0, %v1925
      %v1927 = vpop.f32.mrf.mxu0
      %v1928 = vadd.f32 0.0, %v1927
      %1929 = vmatmul.bf16.gmra.mxu0 %v1858
      %v1930 = vpop.f32.mrf.mxu0
      %v1931 = vadd.f32 0.0, %v1930
      %v1932 = vpop.f32.mrf.mxu0
      %v1933 = vadd.f32 0.0, %v1932
      %1934 = vmatmul.bf16.gmra.mxu0 %v1861
      %v1935 = vpop.f32.mrf.mxu0
      %v1936 = vadd.f32 0.0, %v1935
      %v1937 = vpop.f32.mrf.mxu0
      %v1938 = vadd.f32 0.0, %v1937
      %1939 = vmatmul.bf16.gmra.mxu0 %v1864
      %v1940 = vpop.f32.mrf.mxu0
      %v1941 = vadd.f32 0.0, %v1940
      %v1942 = vpop.f32.mrf.mxu0
      %v1943 = vadd.f32 0.0, %v1942
      %1944 = vmatmul.bf16.gmra.mxu0 %v1867
      %v1945 = vpop.f32.mrf.mxu0
      %v1946 = vadd.f32 0.0, %v1945
      %v1947 = vpop.f32.mrf.mxu0
      %v1948 = vadd.f32 0.0, %v1947
      %1949 = vmatmul.bf16.gmra.mxu0 %v1870
      %v1950 = vpop.f32.mrf.mxu0
      %v1951 = vadd.f32 0.0, %v1950
      %v1952 = vpop.f32.mrf.mxu0
      %v1953 = vadd.f32 0.0, %v1952
      %1954 = vmatmul.bf16.gmra.mxu0 %v1873
      %v1955 = vpop.f32.mrf.mxu0
      %v1956 = vadd.f32 0.0, %v1955
      %v1957 = vpop.f32.mrf.mxu0
      %v1958 = vadd.f32 0.0, %v1957
      %1959 = vmatmul.bf16.gmra.mxu0 %v1876
      %v1960 = vpop.f32.mrf.mxu0
      %v1961 = vadd.f32 0.0, %v1960
      %v1962 = vpop.f32.mrf.mxu0
      %v1963 = vadd.f32 0.0, %v1962
      %1964 = vmatmul.bf16.gmra.mxu0 %v1879
      %v1965 = vpop.f32.mrf.mxu0
      %v1966 = vadd.f32 0.0, %v1965
      %v1967 = vpop.f32.mrf.mxu0
      %v1968 = vadd.f32 0.0, %v1967
      %1969 = vmatmul.bf16.gmra.mxu0 %v1882
      %v1970 = vpop.f32.mrf.mxu0
      %v1971 = vadd.f32 0.0, %v1970
      %v1972 = vpop.f32.mrf.mxu0
      %v1973 = vadd.f32 0.0, %v1972
      %1974 = vmatmul.bf16.gmra.mxu0 %v1885
      %v1975 = vpop.f32.mrf.mxu0
      %v1976 = vadd.f32 0.0, %v1975
      %v1977 = vpop.f32.mrf.mxu0
      %v1978 = vadd.f32 0.0, %v1977
      %1979 = vdwg.mxu0
      %v1980 = vsel %vm1838, %v1606, 0
      %v1982 = vsel %vm1838, %v1607, 0
      %v1984 = vsel %vm1838, %v1608, 0
      %v1986 = vsel %vm1838, %v1609, 0
      %v1988 = vsel %vm1838, %v1610, 0
      %v1990 = vsel %vm1838, %v1611, 0
      %v1992 = vsel %vm1838, %v1612, 0
      %v1994 = vsel %vm1838, %v1613, 0
      %v1996 = vsel %vm1838, %v1614, 0
      %v1998 = vsel %vm1838, %v1615, 0
      %v2000 = vsel %vm1838, %v1616, 0
      %v2002 = vsel %vm1838, %v1617, 0
      %v2004 = vsel %vm1838, %v1618, 0
      %v2006 = vsel %vm1838, %v1619, 0
      %v2008 = vsel %vm1838, %v1620, 0
      %v2010 = vsel %vm1838, %v1621, 0
      %v2013 = vsel %vm1887, %v1642, 0
      %2015 = vmatpush.bf16.msra.mxu0 0
      %2016 = vmatpush.bf16.msra.mxu0 0
      %2017 = vmatpush.bf16.msra.mxu0 0
      %2018 = vmatpush.bf16.msra.mxu0 0
      %2019 = vmatpush.bf16.msra.mxu0 0
      %2020 = vmatpush.bf16.msra.mxu0 0
      %2021 = vmatpush.bf16.msra.mxu0 0
      %2022 = vmatpush.bf16.msra.mxu0 %v2013
      %2023 = vmatmul.bf16.gmra.mxu0 %v1980
      %v2024 = vpop.f32.mrf.mxu0
      %v2025 = vadd.f32 %v1901, %v2024
      %v2026 = vpop.f32.mrf.mxu0
      %v2027 = vadd.f32 %v1903, %v2026
      %2028 = vmatmul.bf16.gmra.mxu0 %v1982
      %v2029 = vpop.f32.mrf.mxu0
      %v2030 = vadd.f32 %v1906, %v2029
      %v2031 = vpop.f32.mrf.mxu0
      %v2032 = vadd.f32 %v1908, %v2031
      %2033 = vmatmul.bf16.gmra.mxu0 %v1984
      %v2034 = vpop.f32.mrf.mxu0
      %v2035 = vadd.f32 %v1911, %v2034
      %v2036 = vpop.f32.mrf.mxu0
      %v2037 = vadd.f32 %v1913, %v2036
      %2038 = vmatmul.bf16.gmra.mxu0 %v1986
      %v2039 = vpop.f32.mrf.mxu0
      %v2040 = vadd.f32 %v1916, %v2039
      %v2041 = vpop.f32.mrf.mxu0
      %v2042 = vadd.f32 %v1918, %v2041
      %2043 = vmatmul.bf16.gmra.mxu0 %v1988
      %v2044 = vpop.f32.mrf.mxu0
      %v2045 = vadd.f32 %v1921, %v2044
      %v2046 = vpop.f32.mrf.mxu0
      %v2047 = vadd.f32 %v1923, %v2046
      %2048 = vmatmul.bf16.gmra.mxu0 %v1990
      %v2049 = vpop.f32.mrf.mxu0
      %v2050 = vadd.f32 %v1926, %v2049
      %v2051 = vpop.f32.mrf.mxu0
      %v2052 = vadd.f32 %v1928, %v2051
      %2053 = vmatmul.bf16.gmra.mxu0 %v1992
      %v2054 = vpop.f32.mrf.mxu0
      %v2055 = vadd.f32 %v1931, %v2054
      %v2056 = vpop.f32.mrf.mxu0
      %v2057 = vadd.f32 %v1933, %v2056
      %2058 = vmatmul.bf16.gmra.mxu0 %v1994
      %v2059 = vpop.f32.mrf.mxu0
      %v2060 = vadd.f32 %v1936, %v2059
      %v2061 = vpop.f32.mrf.mxu0
      %v2062 = vadd.f32 %v1938, %v2061
      %2063 = vmatmul.bf16.gmra.mxu0 %v1996
      %v2064 = vpop.f32.mrf.mxu0
      %v2065 = vadd.f32 %v1941, %v2064
      %v2066 = vpop.f32.mrf.mxu0
      %v2067 = vadd.f32 %v1943, %v2066
      %2068 = vmatmul.bf16.gmra.mxu0 %v1998
      %v2069 = vpop.f32.mrf.mxu0
      %v2070 = vadd.f32 %v1946, %v2069
      %v2071 = vpop.f32.mrf.mxu0
      %v2072 = vadd.f32 %v1948, %v2071
      %2073 = vmatmul.bf16.gmra.mxu0 %v2000
      %v2074 = vpop.f32.mrf.mxu0
      %v2075 = vadd.f32 %v1951, %v2074
      %v2076 = vpop.f32.mrf.mxu0
      %v2077 = vadd.f32 %v1953, %v2076
      %2078 = vmatmul.bf16.gmra.mxu0 %v2002
      %v2079 = vpop.f32.mrf.mxu0
      %v2080 = vadd.f32 %v1956, %v2079
      %v2081 = vpop.f32.mrf.mxu0
      %v2082 = vadd.f32 %v1958, %v2081
      %2083 = vmatmul.bf16.gmra.mxu0 %v2004
      %v2084 = vpop.f32.mrf.mxu0
      %v2085 = vadd.f32 %v1961, %v2084
      %v2086 = vpop.f32.mrf.mxu0
      %v2087 = vadd.f32 %v1963, %v2086
      %2088 = vmatmul.bf16.gmra.mxu0 %v2006
      %v2089 = vpop.f32.mrf.mxu0
      %v2090 = vadd.f32 %v1966, %v2089
      %v2091 = vpop.f32.mrf.mxu0
      %v2092 = vadd.f32 %v1968, %v2091
      %2093 = vmatmul.bf16.gmra.mxu0 %v2008
      %v2094 = vpop.f32.mrf.mxu0
      %v2095 = vadd.f32 %v1971, %v2094
      %v2096 = vpop.f32.mrf.mxu0
      %v2097 = vadd.f32 %v1973, %v2096
      %2098 = vmatmul.bf16.gmra.mxu0 %v2010
      %v2099 = vpop.f32.mrf.mxu0
      %v2100 = vadd.f32 %v1976, %v2099
      %v2101 = vpop.f32.mrf.mxu0
      %v2102 = vadd.f32 %v1978, %v2101
      %2103 = vdwg.mxu0
      %vm2136 = vcmask 1046528
      %v2137 = vrot.slane %v1606, 1
      %v2138 = vrot.slane %v1624, 1
      %v2139 = vsel %vm2136, %v2137, %v2138
      %v2140 = vrot.slane %v1607, 1
      %v2141 = vrot.slane %v1625, 1
      %v2142 = vsel %vm2136, %v2140, %v2141
      %v2143 = vrot.slane %v1608, 1
      %v2144 = vrot.slane %v1626, 1
      %v2145 = vsel %vm2136, %v2143, %v2144
      %v2146 = vrot.slane %v1609, 1
      %v2147 = vrot.slane %v1627, 1
      %v2148 = vsel %vm2136, %v2146, %v2147
      %v2149 = vrot.slane %v1610, 1
      %v2150 = vrot.slane %v1628, 1
      %v2151 = vsel %vm2136, %v2149, %v2150
      %v2152 = vrot.slane %v1611, 1
      %v2153 = vrot.slane %v1629, 1
      %v2154 = vsel %vm2136, %v2152, %v2153
      %v2155 = vrot.slane %v1612, 1
      %v2156 = vrot.slane %v1630, 1
      %v2157 = vsel %vm2136, %v2155, %v2156
      %v2158 = vrot.slane %v1613, 1
      %v2159 = vrot.slane %v1631, 1
      %v2160 = vsel %vm2136, %v2158, %v2159
      %v2161 = vrot.slane %v1614, 1
      %v2162 = vrot.slane %v1632, 1
      %v2163 = vsel %vm2136, %v2161, %v2162
      %v2164 = vrot.slane %v1615, 1
      %v2165 = vrot.slane %v1633, 1
      %v2166 = vsel %vm2136, %v2164, %v2165
      %v2167 = vrot.slane %v1616, 1
      %v2168 = vrot.slane %v1634, 1
      %v2169 = vsel %vm2136, %v2167, %v2168
      %v2170 = vrot.slane %v1617, 1
      %v2171 = vrot.slane %v1635, 1
      %v2172 = vsel %vm2136, %v2170, %v2171
      %v2173 = vrot.slane %v1618, 1
      %v2174 = vrot.slane %v1636, 1
      %v2175 = vsel %vm2136, %v2173, %v2174
      %v2176 = vrot.slane %v1619, 1
      %v2177 = vrot.slane %v1637, 1
      %v2178 = vsel %vm2136, %v2176, %v2177
      %v2179 = vrot.slane %v1620, 1
      %v2180 = vrot.slane %v1638, 1
      %v2181 = vsel %vm2136, %v2179, %v2180
      %v2182 = vrot.slane %v1621, 1
      %v2183 = vrot.slane %v1639, 1
      %v2184 = vsel %vm2136, %v2182, %v2183
      %s2185 = scalar_lea.vmem %s4, 8
      %v2186 = vld [vmem:[%s2185] sm:$0xf]
      %v2188 = vsel %vm1838, %v2139, 0
      %v2191 = vsel %vm1838, %v2142, 0
      %v2194 = vsel %vm1838, %v2145, 0
      %v2197 = vsel %vm1838, %v2148, 0
      %v2200 = vsel %vm1838, %v2151, 0
      %v2203 = vsel %vm1838, %v2154, 0
      %v2206 = vsel %vm1838, %v2157, 0
      %v2209 = vsel %vm1838, %v2160, 0
      %v2212 = vsel %vm1838, %v2163, 0
      %v2215 = vsel %vm1838, %v2166, 0
      %v2218 = vsel %vm1838, %v2169, 0
      %v2221 = vsel %vm1838, %v2172, 0
      %v2224 = vsel %vm1838, %v2175, 0
      %v2227 = vsel %vm1838, %v2178, 0
      %v2230 = vsel %vm1838, %v2181, 0
      %v2233 = vsel %vm1838, %v2184, 0
      %v2236 = vsel %vm1887, %v2186, 0
      %2238 = vmatpush.bf16.msra.mxu0 0
      %2239 = vmatpush.bf16.msra.mxu0 0
      %2240 = vmatpush.bf16.msra.mxu0 0
      %2241 = vmatpush.bf16.msra.mxu0 0
      %2242 = vmatpush.bf16.msra.mxu0 0
      %2243 = vmatpush.bf16.msra.mxu0 0
      %2244 = vmatpush.bf16.msra.mxu0 0
      %2245 = vmatpush.bf16.msra.mxu0 %v2236
      %2246 = vmatmul.bf16.gmra.mxu0 %v2188
      %v2247 = vpop.f32.mrf.mxu0
      %v2248 = vadd.f32 0.0, %v2247
      %v2249 = vpop.f32.mrf.mxu0
      %v2250 = vadd.f32 0.0, %v2249
      %2251 = vmatmul.bf16.gmra.mxu0 %v2191
      %v2252 = vpop.f32.mrf.mxu0
      %v2253 = vadd.f32 0.0, %v2252
      %v2254 = vpop.f32.mrf.mxu0
      %v2255 = vadd.f32 0.0, %v2254
      %2256 = vmatmul.bf16.gmra.mxu0 %v2194
      %v2257 = vpop.f32.mrf.mxu0
      %v2258 = vadd.f32 0.0, %v2257
      %v2259 = vpop.f32.mrf.mxu0
      %v2260 = vadd.f32 0.0, %v2259
      %2261 = vmatmul.bf16.gmra.mxu0 %v2197
      %v2262 = vpop.f32.mrf.mxu0
      %v2263 = vadd.f32 0.0, %v2262
      %v2264 = vpop.f32.mrf.mxu0
      %v2265 = vadd.f32 0.0, %v2264
      %2266 = vmatmul.bf16.gmra.mxu0 %v2200
      %v2267 = vpop.f32.mrf.mxu0
      %v2268 = vadd.f32 0.0, %v2267
      %v2269 = vpop.f32.mrf.mxu0
      %v2270 = vadd.f32 0.0, %v2269
      %2271 = vmatmul.bf16.gmra.mxu0 %v2203
      %v2272 = vpop.f32.mrf.mxu0
      %v2273 = vadd.f32 0.0, %v2272
      %v2274 = vpop.f32.mrf.mxu0
      %v2275 = vadd.f32 0.0, %v2274
      %2276 = vmatmul.bf16.gmra.mxu0 %v2206
      %v2277 = vpop.f32.mrf.mxu0
      %v2278 = vadd.f32 0.0, %v2277
      %v2279 = vpop.f32.mrf.mxu0
      %v2280 = vadd.f32 0.0, %v2279
      %2281 = vmatmul.bf16.gmra.mxu0 %v2209
      %v2282 = vpop.f32.mrf.mxu0
      %v2283 = vadd.f32 0.0, %v2282
      %v2284 = vpop.f32.mrf.mxu0
      %v2285 = vadd.f32 0.0, %v2284
      %2286 = vmatmul.bf16.gmra.mxu0 %v2212
      %v2287 = vpop.f32.mrf.mxu0
      %v2288 = vadd.f32 0.0, %v2287
      %v2289 = vpop.f32.mrf.mxu0
      %v2290 = vadd.f32 0.0, %v2289
      %2291 = vmatmul.bf16.gmra.mxu0 %v2215
      %v2292 = vpop.f32.mrf.mxu0
      %v2293 = vadd.f32 0.0, %v2292
      %v2294 = vpop.f32.mrf.mxu0
      %v2295 = vadd.f32 0.0, %v2294
      %2296 = vmatmul.bf16.gmra.mxu0 %v2218
      %v2297 = vpop.f32.mrf.mxu0
      %v2298 = vadd.f32 0.0, %v2297
      %v2299 = vpop.f32.mrf.mxu0
      %v2300 = vadd.f32 0.0, %v2299
      %2301 = vmatmul.bf16.gmra.mxu0 %v2221
      %v2302 = vpop.f32.mrf.mxu0
      %v2303 = vadd.f32 0.0, %v2302
      %v2304 = vpop.f32.mrf.mxu0
      %v2305 = vadd.f32 0.0, %v2304
      %2306 = vmatmul.bf16.gmra.mxu0 %v2224
      %v2307 = vpop.f32.mrf.mxu0
      %v2308 = vadd.f32 0.0, %v2307
      %v2309 = vpop.f32.mrf.mxu0
      %v2310 = vadd.f32 0.0, %v2309
      %2311 = vmatmul.bf16.gmra.mxu0 %v2227
      %v2312 = vpop.f32.mrf.mxu0
      %v2313 = vadd.f32 0.0, %v2312
      %v2314 = vpop.f32.mrf.mxu0
      %v2315 = vadd.f32 0.0, %v2314
      %2316 = vmatmul.bf16.gmra.mxu0 %v2230
      %v2317 = vpop.f32.mrf.mxu0
      %v2318 = vadd.f32 0.0, %v2317
      %v2319 = vpop.f32.mrf.mxu0
      %v2320 = vadd.f32 0.0, %v2319
      %2321 = vmatmul.bf16.gmra.mxu0 %v2233
      %v2322 = vpop.f32.mrf.mxu0
      %v2323 = vadd.f32 0.0, %v2322
      %v2324 = vpop.f32.mrf.mxu0
      %v2325 = vadd.f32 0.0, %v2324
      %2326 = vdwg.mxu0
      %v2327 = vadd.f32 %v2025, %v2248
      %v2328 = vadd.f32 %v2027, %v2250
      %v2329 = vadd.f32 %v2030, %v2253
      %v2330 = vadd.f32 %v2032, %v2255
      %v2331 = vadd.f32 %v2035, %v2258
      %v2332 = vadd.f32 %v2037, %v2260
      %v2333 = vadd.f32 %v2040, %v2263
      %v2334 = vadd.f32 %v2042, %v2265
      %v2335 = vadd.f32 %v2045, %v2268
      %v2336 = vadd.f32 %v2047, %v2270
      %v2337 = vadd.f32 %v2050, %v2273
      %v2338 = vadd.f32 %v2052, %v2275
      %v2339 = vadd.f32 %v2055, %v2278
      %v2340 = vadd.f32 %v2057, %v2280
      %v2341 = vadd.f32 %v2060, %v2283
      %v2342 = vadd.f32 %v2062, %v2285
      %v2343 = vadd.f32 %v2065, %v2288
      %v2344 = vadd.f32 %v2067, %v2290
      %v2345 = vadd.f32 %v2070, %v2293
      %v2346 = vadd.f32 %v2072, %v2295
      %v2347 = vadd.f32 %v2075, %v2298
      %v2348 = vadd.f32 %v2077, %v2300
      %v2349 = vadd.f32 %v2080, %v2303
      %v2350 = vadd.f32 %v2082, %v2305
      %v2351 = vadd.f32 %v2085, %v2308
      %v2352 = vadd.f32 %v2087, %v2310
      %v2353 = vadd.f32 %v2090, %v2313
      %v2354 = vadd.f32 %v2092, %v2315
      %v2355 = vadd.f32 %v2095, %v2318
      %v2356 = vadd.f32 %v2097, %v2320
      %v2357 = vadd.f32 %v2100, %v2323
      %v2358 = vadd.f32 %v2102, %v2325
      %s2359 = scalar_lea.vmem %s4, 12
      %v2360 = vld [vmem:[%s2359] sm:$0xf]
      %v2362 = vsel %vm1838, %v1622, 0
      %v2365 = vsel %vm1887, %v2360, 0
      %2367 = vmatpush.bf16.msra.mxu0 0
      %2368 = vmatpush.bf16.msra.mxu0 0
      %2369 = vmatpush.bf16.msra.mxu0 0
      %2370 = vmatpush.bf16.msra.mxu0 0
      %2371 = vmatpush.bf16.msra.mxu0 0
      %2372 = vmatpush.bf16.msra.mxu0 0
      %2373 = vmatpush.bf16.msra.mxu0 0
      %2374 = vmatpush.bf16.msra.mxu0 %v2365
      %2375 = vmatmul.bf16.gmra.mxu0 %v1982
      %v2376 = vpop.f32.mrf.mxu0
      %v2377 = vadd.f32 0.0, %v2376
      %v2378 = vpop.f32.mrf.mxu0
      %v2379 = vadd.f32 0.0, %v2378
      %2380 = vmatmul.bf16.gmra.mxu0 %v1984
      %v2381 = vpop.f32.mrf.mxu0
      %v2382 = vadd.f32 0.0, %v2381
      %v2383 = vpop.f32.mrf.mxu0
      %v2384 = vadd.f32 0.0, %v2383
      %2385 = vmatmul.bf16.gmra.mxu0 %v1986
      %v2386 = vpop.f32.mrf.mxu0
      %v2387 = vadd.f32 0.0, %v2386
      %v2388 = vpop.f32.mrf.mxu0
      %v2389 = vadd.f32 0.0, %v2388
      %2390 = vmatmul.bf16.gmra.mxu0 %v1988
      %v2391 = vpop.f32.mrf.mxu0
      %v2392 = vadd.f32 0.0, %v2391
      %v2393 = vpop.f32.mrf.mxu0
      %v2394 = vadd.f32 0.0, %v2393
      %2395 = vmatmul.bf16.gmra.mxu0 %v1990
      %v2396 = vpop.f32.mrf.mxu0
      %v2397 = vadd.f32 0.0, %v2396
      %v2398 = vpop.f32.mrf.mxu0
      %v2399 = vadd.f32 0.0, %v2398
      %2400 = vmatmul.bf16.gmra.mxu0 %v1992
      %v2401 = vpop.f32.mrf.mxu0
      %v2402 = vadd.f32 0.0, %v2401
      %v2403 = vpop.f32.mrf.mxu0
      %v2404 = vadd.f32 0.0, %v2403
      %2405 = vmatmul.bf16.gmra.mxu0 %v1994
      %v2406 = vpop.f32.mrf.mxu0
      %v2407 = vadd.f32 0.0, %v2406
      %v2408 = vpop.f32.mrf.mxu0
      %v2409 = vadd.f32 0.0, %v2408
      %2410 = vmatmul.bf16.gmra.mxu0 %v1996
      %v2411 = vpop.f32.mrf.mxu0
      %v2412 = vadd.f32 0.0, %v2411
      %v2413 = vpop.f32.mrf.mxu0
      %v2414 = vadd.f32 0.0, %v2413
      %2415 = vmatmul.bf16.gmra.mxu0 %v1998
      %v2416 = vpop.f32.mrf.mxu0
      %v2417 = vadd.f32 0.0, %v2416
      %v2418 = vpop.f32.mrf.mxu0
      %v2419 = vadd.f32 0.0, %v2418
      %2420 = vmatmul.bf16.gmra.mxu0 %v2000
      %v2421 = vpop.f32.mrf.mxu0
      %v2422 = vadd.f32 0.0, %v2421
      %v2423 = vpop.f32.mrf.mxu0
      %v2424 = vadd.f32 0.0, %v2423
      %2425 = vmatmul.bf16.gmra.mxu0 %v2002
      %v2426 = vpop.f32.mrf.mxu0
      %v2427 = vadd.f32 0.0, %v2426
      %v2428 = vpop.f32.mrf.mxu0
      %v2429 = vadd.f32 0.0, %v2428
      %2430 = vmatmul.bf16.gmra.mxu0 %v2004
      %v2431 = vpop.f32.mrf.mxu0
      %v2432 = vadd.f32 0.0, %v2431
      %v2433 = vpop.f32.mrf.mxu0
      %v2434 = vadd.f32 0.0, %v2433
      %2435 = vmatmul.bf16.gmra.mxu0 %v2006
      %v2436 = vpop.f32.mrf.mxu0
      %v2437 = vadd.f32 0.0, %v2436
      %v2438 = vpop.f32.mrf.mxu0
      %v2439 = vadd.f32 0.0, %v2438
      %2440 = vmatmul.bf16.gmra.mxu0 %v2008
      %v2441 = vpop.f32.mrf.mxu0
      %v2442 = vadd.f32 0.0, %v2441
      %v2443 = vpop.f32.mrf.mxu0
      %v2444 = vadd.f32 0.0, %v2443
      %2445 = vmatmul.bf16.gmra.mxu0 %v2010
      %v2446 = vpop.f32.mrf.mxu0
      %v2447 = vadd.f32 0.0, %v2446
      %v2448 = vpop.f32.mrf.mxu0
      %v2449 = vadd.f32 0.0, %v2448
      %2450 = vmatmul.bf16.gmra.mxu0 %v2362
      %v2451 = vpop.f32.mrf.mxu0
      %v2452 = vadd.f32 0.0, %v2451
      %v2453 = vpop.f32.mrf.mxu0
      %v2454 = vadd.f32 0.0, %v2453
      %2455 = vdwg.mxu0
      %v2456 = vadd.f32 %v2327, %v2377
      %v2457 = vadd.f32 %v2328, %v2379
      %v2458 = vadd.f32 %v2329, %v2382
      %v2459 = vadd.f32 %v2330, %v2384
      %v2460 = vadd.f32 %v2331, %v2387
      %v2461 = vadd.f32 %v2332, %v2389
      %v2462 = vadd.f32 %v2333, %v2392
      %v2463 = vadd.f32 %v2334, %v2394
      %v2464 = vadd.f32 %v2335, %v2397
      %v2465 = vadd.f32 %v2336, %v2399
      %v2466 = vadd.f32 %v2337, %v2402
      %v2467 = vadd.f32 %v2338, %v2404
      %v2468 = vadd.f32 %v2339, %v2407
      %v2469 = vadd.f32 %v2340, %v2409
      %v2470 = vadd.f32 %v2341, %v2412
      %v2471 = vadd.f32 %v2342, %v2414
      %v2472 = vadd.f32 %v2343, %v2417
      %v2473 = vadd.f32 %v2344, %v2419
      %v2474 = vadd.f32 %v2345, %v2422
      %v2475 = vadd.f32 %v2346, %v2424
      %v2476 = vadd.f32 %v2347, %v2427
      %v2477 = vadd.f32 %v2348, %v2429
      %v2478 = vadd.f32 %v2349, %v2432
      %v2479 = vadd.f32 %v2350, %v2434
      %v2480 = vadd.f32 %v2351, %v2437
      %v2481 = vadd.f32 %v2352, %v2439
      %v2482 = vadd.f32 %v2353, %v2442
      %v2483 = vadd.f32 %v2354, %v2444
      %v2484 = vadd.f32 %v2355, %v2447
      %v2485 = vadd.f32 %v2356, %v2449
      %v2486 = vadd.f32 %v2357, %v2452
      %v2487 = vadd.f32 %v2358, %v2454
      %v2488 = vshrl.u32 %v1622, 16
      %v2490 = vshll.u32 %v1622, 16
      %v2492 = vrot.slane %v2490, 1
      %v2493 = vor.u32 %v2488, %v2492
      %v2495 = vshll.u32 %v1640, 16
      %v2497 = vrot.slane %v2495, 1
      %v2498 = vsel %vm1643, %v2493, %v2497
      %s2499 = scalar_lea.vmem %s4, 16
      %v2500 = vld [vmem:[%s2499] sm:$0xf]
      %v2502 = vsel %vm1838, %v2498, 0
      %v2505 = vsel %vm1887, %v2500, 0
      %2507 = vmatpush.bf16.msra.mxu0 0
      %2508 = vmatpush.bf16.msra.mxu0 0
      %2509 = vmatpush.bf16.msra.mxu0 0
      %2510 = vmatpush.bf16.msra.mxu0 0
      %2511 = vmatpush.bf16.msra.mxu0 0
      %2512 = vmatpush.bf16.msra.mxu0 0
      %2513 = vmatpush.bf16.msra.mxu0 0
      %2514 = vmatpush.bf16.msra.mxu0 %v2505
      %2515 = vmatmul.bf16.gmra.mxu0 %v1843
      %v2516 = vpop.f32.mrf.mxu0
      %v2517 = vadd.f32 0.0, %v2516
      %v2518 = vpop.f32.mrf.mxu0
      %v2519 = vadd.f32 0.0, %v2518
      %2520 = vmatmul.bf16.gmra.mxu0 %v1846
      %v2521 = vpop.f32.mrf.mxu0
      %v2522 = vadd.f32 0.0, %v2521
      %v2523 = vpop.f32.mrf.mxu0
      %v2524 = vadd.f32 0.0, %v2523
      %2525 = vmatmul.bf16.gmra.mxu0 %v1849
      %v2526 = vpop.f32.mrf.mxu0
      %v2527 = vadd.f32 0.0, %v2526
      %v2528 = vpop.f32.mrf.mxu0
      %v2529 = vadd.f32 0.0, %v2528
      %2530 = vmatmul.bf16.gmra.mxu0 %v1852
      %v2531 = vpop.f32.mrf.mxu0
      %v2532 = vadd.f32 0.0, %v2531
      %v2533 = vpop.f32.mrf.mxu0
      %v2534 = vadd.f32 0.0, %v2533
      %2535 = vmatmul.bf16.gmra.mxu0 %v1855
      %v2536 = vpop.f32.mrf.mxu0
      %v2537 = vadd.f32 0.0, %v2536
      %v2538 = vpop.f32.mrf.mxu0
      %v2539 = vadd.f32 0.0, %v2538
      %2540 = vmatmul.bf16.gmra.mxu0 %v1858
      %v2541 = vpop.f32.mrf.mxu0
      %v2542 = vadd.f32 0.0, %v2541
      %v2543 = vpop.f32.mrf.mxu0
      %v2544 = vadd.f32 0.0, %v2543
      %2545 = vmatmul.bf16.gmra.mxu0 %v1861
      %v2546 = vpop.f32.mrf.mxu0
      %v2547 = vadd.f32 0.0, %v2546
      %v2548 = vpop.f32.mrf.mxu0
      %v2549 = vadd.f32 0.0, %v2548
      %2550 = vmatmul.bf16.gmra.mxu0 %v1864
      %v2551 = vpop.f32.mrf.mxu0
      %v2552 = vadd.f32 0.0, %v2551
      %v2553 = vpop.f32.mrf.mxu0
      %v2554 = vadd.f32 0.0, %v2553
      %2555 = vmatmul.bf16.gmra.mxu0 %v1867
      %v2556 = vpop.f32.mrf.mxu0
      %v2557 = vadd.f32 0.0, %v2556
      %v2558 = vpop.f32.mrf.mxu0
      %v2559 = vadd.f32 0.0, %v2558
      %2560 = vmatmul.bf16.gmra.mxu0 %v1870
      %v2561 = vpop.f32.mrf.mxu0
      %v2562 = vadd.f32 0.0, %v2561
      %v2563 = vpop.f32.mrf.mxu0
      %v2564 = vadd.f32 0.0, %v2563
      %2565 = vmatmul.bf16.gmra.mxu0 %v1873
      %v2566 = vpop.f32.mrf.mxu0
      %v2567 = vadd.f32 0.0, %v2566
      %v2568 = vpop.f32.mrf.mxu0
      %v2569 = vadd.f32 0.0, %v2568
      %2570 = vmatmul.bf16.gmra.mxu0 %v1876
      %v2571 = vpop.f32.mrf.mxu0
      %v2572 = vadd.f32 0.0, %v2571
      %v2573 = vpop.f32.mrf.mxu0
      %v2574 = vadd.f32 0.0, %v2573
      %2575 = vmatmul.bf16.gmra.mxu0 %v1879
      %v2576 = vpop.f32.mrf.mxu0
      %v2577 = vadd.f32 0.0, %v2576
      %v2578 = vpop.f32.mrf.mxu0
      %v2579 = vadd.f32 0.0, %v2578
      %2580 = vmatmul.bf16.gmra.mxu0 %v1882
      %v2581 = vpop.f32.mrf.mxu0
      %v2582 = vadd.f32 0.0, %v2581
      %v2583 = vpop.f32.mrf.mxu0
      %v2584 = vadd.f32 0.0, %v2583
      %2585 = vmatmul.bf16.gmra.mxu0 %v1885
      %v2586 = vpop.f32.mrf.mxu0
      %v2587 = vadd.f32 0.0, %v2586
      %v2588 = vpop.f32.mrf.mxu0
      %v2589 = vadd.f32 0.0, %v2588
      %2590 = vmatmul.bf16.gmra.mxu0 %v2502
      %v2591 = vpop.f32.mrf.mxu0
      %v2592 = vadd.f32 0.0, %v2591
      %v2593 = vpop.f32.mrf.mxu0
      %v2594 = vadd.f32 0.0, %v2593
      %2595 = vdwg.mxu0
      %v2596 = vadd.f32 %v2456, %v2517
      %v2597 = vadd.f32 %v2457, %v2519
      %v2598 = vadd.f32 %v2458, %v2522
      %v2599 = vadd.f32 %v2459, %v2524
      %v2600 = vadd.f32 %v2460, %v2527
      %v2601 = vadd.f32 %v2461, %v2529
      %v2602 = vadd.f32 %v2462, %v2532
      %v2603 = vadd.f32 %v2463, %v2534
      %v2604 = vadd.f32 %v2464, %v2537
      %v2605 = vadd.f32 %v2465, %v2539
      %v2606 = vadd.f32 %v2466, %v2542
      %v2607 = vadd.f32 %v2467, %v2544
      %v2608 = vadd.f32 %v2468, %v2547
      %v2609 = vadd.f32 %v2469, %v2549
      %v2610 = vadd.f32 %v2470, %v2552
      %v2611 = vadd.f32 %v2471, %v2554
      %v2612 = vadd.f32 %v2472, %v2557
      %v2613 = vadd.f32 %v2473, %v2559
      %v2614 = vadd.f32 %v2474, %v2562
      %v2615 = vadd.f32 %v2475, %v2564
      %v2616 = vadd.f32 %v2476, %v2567
      %v2617 = vadd.f32 %v2477, %v2569
      %v2618 = vadd.f32 %v2478, %v2572
      %v2619 = vadd.f32 %v2479, %v2574
      %v2620 = vadd.f32 %v2480, %v2577
      %v2621 = vadd.f32 %v2481, %v2579
      %v2622 = vadd.f32 %v2482, %v2582
      %v2623 = vadd.f32 %v2483, %v2584
      %v2624 = vadd.f32 %v2484, %v2587
      %v2625 = vadd.f32 %v2485, %v2589
      %v2626 = vadd.f32 %v2486, %v2592
      %v2627 = vadd.f32 %v2487, %v2594
      %v2630 = vrot.slane %v1622, 1
      %v2631 = vrot.slane %v1640, 1
      %v2632 = vsel %vm2136, %v2630, %v2631
      %s2633 = scalar_lea.vmem %s4, 20
      %v2634 = vld [vmem:[%s2633] sm:$0xf]
      %v2636 = vsel %vm1838, %v2632, 0
      %v2639 = vsel %vm1887, %v2634, 0
      %2641 = vmatpush.bf16.msra.mxu0 0
      %2642 = vmatpush.bf16.msra.mxu0 0
      %2643 = vmatpush.bf16.msra.mxu0 0
      %2644 = vmatpush.bf16.msra.mxu0 0
      %2645 = vmatpush.bf16.msra.mxu0 0
      %2646 = vmatpush.bf16.msra.mxu0 0
      %2647 = vmatpush.bf16.msra.mxu0 0
      %2648 = vmatpush.bf16.msra.mxu0 %v2639
      %2649 = vmatmul.bf16.gmra.mxu0 %v2191
      %v2650 = vpop.f32.mrf.mxu0
      %v2651 = vadd.f32 0.0, %v2650
      %v2652 = vpop.f32.mrf.mxu0
      %v2653 = vadd.f32 0.0, %v2652
      %2654 = vmatmul.bf16.gmra.mxu0 %v2194
      %v2655 = vpop.f32.mrf.mxu0
      %v2656 = vadd.f32 0.0, %v2655
      %v2657 = vpop.f32.mrf.mxu0
      %v2658 = vadd.f32 0.0, %v2657
      %2659 = vmatmul.bf16.gmra.mxu0 %v2197
      %v2660 = vpop.f32.mrf.mxu0
      %v2661 = vadd.f32 0.0, %v2660
      %v2662 = vpop.f32.mrf.mxu0
      %v2663 = vadd.f32 0.0, %v2662
      %2664 = vmatmul.bf16.gmra.mxu0 %v2200
      %v2665 = vpop.f32.mrf.mxu0
      %v2666 = vadd.f32 0.0, %v2665
      %v2667 = vpop.f32.mrf.mxu0
      %v2668 = vadd.f32 0.0, %v2667
      %2669 = vmatmul.bf16.gmra.mxu0 %v2203
      %v2670 = vpop.f32.mrf.mxu0
      %v2671 = vadd.f32 0.0, %v2670
      %v2672 = vpop.f32.mrf.mxu0
      %v2673 = vadd.f32 0.0, %v2672
      %2674 = vmatmul.bf16.gmra.mxu0 %v2206
      %v2675 = vpop.f32.mrf.mxu0
      %v2676 = vadd.f32 0.0, %v2675
      %v2677 = vpop.f32.mrf.mxu0
      %v2678 = vadd.f32 0.0, %v2677
      %2679 = vmatmul.bf16.gmra.mxu0 %v2209
      %v2680 = vpop.f32.mrf.mxu0
      %v2681 = vadd.f32 0.0, %v2680
      %v2682 = vpop.f32.mrf.mxu0
      %v2683 = vadd.f32 0.0, %v2682
      %2684 = vmatmul.bf16.gmra.mxu0 %v2212
      %v2685 = vpop.f32.mrf.mxu0
      %v2686 = vadd.f32 0.0, %v2685
      %v2687 = vpop.f32.mrf.mxu0
      %v2688 = vadd.f32 0.0, %v2687
      %2689 = vmatmul.bf16.gmra.mxu0 %v2215
      %v2690 = vpop.f32.mrf.mxu0
      %v2691 = vadd.f32 0.0, %v2690
      %v2692 = vpop.f32.mrf.mxu0
      %v2693 = vadd.f32 0.0, %v2692
      %2694 = vmatmul.bf16.gmra.mxu0 %v2218
      %v2695 = vpop.f32.mrf.mxu0
      %v2696 = vadd.f32 0.0, %v2695
      %v2697 = vpop.f32.mrf.mxu0
      %v2698 = vadd.f32 0.0, %v2697
      %2699 = vmatmul.bf16.gmra.mxu0 %v2221
      %v2700 = vpop.f32.mrf.mxu0
      %v2701 = vadd.f32 0.0, %v2700
      %v2702 = vpop.f32.mrf.mxu0
      %v2703 = vadd.f32 0.0, %v2702
      %2704 = vmatmul.bf16.gmra.mxu0 %v2224
      %v2705 = vpop.f32.mrf.mxu0
      %v2706 = vadd.f32 0.0, %v2705
      %v2707 = vpop.f32.mrf.mxu0
      %v2708 = vadd.f32 0.0, %v2707
      %2709 = vmatmul.bf16.gmra.mxu0 %v2227
      %v2710 = vpop.f32.mrf.mxu0
      %v2711 = vadd.f32 0.0, %v2710
      %v2712 = vpop.f32.mrf.mxu0
      %v2713 = vadd.f32 0.0, %v2712
      %2714 = vmatmul.bf16.gmra.mxu0 %v2230
      %v2715 = vpop.f32.mrf.mxu0
      %v2716 = vadd.f32 0.0, %v2715
      %v2717 = vpop.f32.mrf.mxu0
      %v2718 = vadd.f32 0.0, %v2717
      %2719 = vmatmul.bf16.gmra.mxu0 %v2233
      %v2720 = vpop.f32.mrf.mxu0
      %v2721 = vadd.f32 0.0, %v2720
      %v2722 = vpop.f32.mrf.mxu0
      %v2723 = vadd.f32 0.0, %v2722
      %2724 = vmatmul.bf16.gmra.mxu0 %v2636
      %v2725 = vpop.f32.mrf.mxu0
      %v2726 = vadd.f32 0.0, %v2725
      %v2727 = vpop.f32.mrf.mxu0
      %v2728 = vadd.f32 0.0, %v2727
      %2729 = vdwg.mxu0
      %v2730 = vadd.f32 %v2596, %v2651
      %v2731 = vadd.f32 %v2597, %v2653
      %v2732 = vadd.f32 %v2598, %v2656
      %v2733 = vadd.f32 %v2599, %v2658
      %v2734 = vadd.f32 %v2600, %v2661
      %v2735 = vadd.f32 %v2601, %v2663
      %v2736 = vadd.f32 %v2602, %v2666
      %v2737 = vadd.f32 %v2603, %v2668
      %v2738 = vadd.f32 %v2604, %v2671
      %v2739 = vadd.f32 %v2605, %v2673
      %v2740 = vadd.f32 %v2606, %v2676
      %v2741 = vadd.f32 %v2607, %v2678
      %v2742 = vadd.f32 %v2608, %v2681
      %v2743 = vadd.f32 %v2609, %v2683
      %v2744 = vadd.f32 %v2610, %v2686
      %v2745 = vadd.f32 %v2611, %v2688
      %v2746 = vadd.f32 %v2612, %v2691
      %v2747 = vadd.f32 %v2613, %v2693
      %v2748 = vadd.f32 %v2614, %v2696
      %v2749 = vadd.f32 %v2615, %v2698
      %v2750 = vadd.f32 %v2616, %v2701
      %v2751 = vadd.f32 %v2617, %v2703
      %v2752 = vadd.f32 %v2618, %v2706
      %v2753 = vadd.f32 %v2619, %v2708
      %v2754 = vadd.f32 %v2620, %v2711
      %v2755 = vadd.f32 %v2621, %v2713
      %v2756 = vadd.f32 %v2622, %v2716
      %v2757 = vadd.f32 %v2623, %v2718
      %v2758 = vadd.f32 %v2624, %v2721
      %v2759 = vadd.f32 %v2625, %v2723
      %v2760 = vadd.f32 %v2626, %v2726
      %v2761 = vadd.f32 %v2627, %v2728
      %s2762 = scalar_lea.vmem %s4, 24
      %v2763 = vld [vmem:[%s2762] sm:$0xf]
      %v2765 = vsel %vm1838, %v1623, 0
      %v2768 = vsel %vm1887, %v2763, 0
      %2770 = vmatpush.bf16.msra.mxu0 0
      %2771 = vmatpush.bf16.msra.mxu0 0
      %2772 = vmatpush.bf16.msra.mxu0 0
      %2773 = vmatpush.bf16.msra.mxu0 0
      %2774 = vmatpush.bf16.msra.mxu0 0
      %2775 = vmatpush.bf16.msra.mxu0 0
      %2776 = vmatpush.bf16.msra.mxu0 0
      %2777 = vmatpush.bf16.msra.mxu0 %v2768
      %2778 = vmatmul.bf16.gmra.mxu0 %v1984
      %v2779 = vpop.f32.mrf.mxu0
      %v2780 = vadd.f32 0.0, %v2779
      %v2781 = vpop.f32.mrf.mxu0
      %v2782 = vadd.f32 0.0, %v2781
      %2783 = vmatmul.bf16.gmra.mxu0 %v1986
      %v2784 = vpop.f32.mrf.mxu0
      %v2785 = vadd.f32 0.0, %v2784
      %v2786 = vpop.f32.mrf.mxu0
      %v2787 = vadd.f32 0.0, %v2786
      %2788 = vmatmul.bf16.gmra.mxu0 %v1988
      %v2789 = vpop.f32.mrf.mxu0
      %v2790 = vadd.f32 0.0, %v2789
      %v2791 = vpop.f32.mrf.mxu0
      %v2792 = vadd.f32 0.0, %v2791
      %2793 = vmatmul.bf16.gmra.mxu0 %v1990
      %v2794 = vpop.f32.mrf.mxu0
      %v2795 = vadd.f32 0.0, %v2794
      %v2796 = vpop.f32.mrf.mxu0
      %v2797 = vadd.f32 0.0, %v2796
      %2798 = vmatmul.bf16.gmra.mxu0 %v1992
      %v2799 = vpop.f32.mrf.mxu0
      %v2800 = vadd.f32 0.0, %v2799
      %v2801 = vpop.f32.mrf.mxu0
      %v2802 = vadd.f32 0.0, %v2801
      %2803 = vmatmul.bf16.gmra.mxu0 %v1994
      %v2804 = vpop.f32.mrf.mxu0
      %v2805 = vadd.f32 0.0, %v2804
      %v2806 = vpop.f32.mrf.mxu0
      %v2807 = vadd.f32 0.0, %v2806
      %2808 = vmatmul.bf16.gmra.mxu0 %v1996
      %v2809 = vpop.f32.mrf.mxu0
      %v2810 = vadd.f32 0.0, %v2809
      %v2811 = vpop.f32.mrf.mxu0
      %v2812 = vadd.f32 0.0, %v2811
      %2813 = vmatmul.bf16.gmra.mxu0 %v1998
      %v2814 = vpop.f32.mrf.mxu0
      %v2815 = vadd.f32 0.0, %v2814
      %v2816 = vpop.f32.mrf.mxu0
      %v2817 = vadd.f32 0.0, %v2816
      %2818 = vmatmul.bf16.gmra.mxu0 %v2000
      %v2819 = vpop.f32.mrf.mxu0
      %v2820 = vadd.f32 0.0, %v2819
      %v2821 = vpop.f32.mrf.mxu0
      %v2822 = vadd.f32 0.0, %v2821
      %2823 = vmatmul.bf16.gmra.mxu0 %v2002
      %v2824 = vpop.f32.mrf.mxu0
      %v2825 = vadd.f32 0.0, %v2824
      %v2826 = vpop.f32.mrf.mxu0
      %v2827 = vadd.f32 0.0, %v2826
      %2828 = vmatmul.bf16.gmra.mxu0 %v2004
      %v2829 = vpop.f32.mrf.mxu0
      %v2830 = vadd.f32 0.0, %v2829
      %v2831 = vpop.f32.mrf.mxu0
      %v2832 = vadd.f32 0.0, %v2831
      %2833 = vmatmul.bf16.gmra.mxu0 %v2006
      %v2834 = vpop.f32.mrf.mxu0
      %v2835 = vadd.f32 0.0, %v2834
      %v2836 = vpop.f32.mrf.mxu0
      %v2837 = vadd.f32 0.0, %v2836
      %2838 = vmatmul.bf16.gmra.mxu0 %v2008
      %v2839 = vpop.f32.mrf.mxu0
      %v2840 = vadd.f32 0.0, %v2839
      %v2841 = vpop.f32.mrf.mxu0
      %v2842 = vadd.f32 0.0, %v2841
      %2843 = vmatmul.bf16.gmra.mxu0 %v2010
      %v2844 = vpop.f32.mrf.mxu0
      %v2845 = vadd.f32 0.0, %v2844
      %v2846 = vpop.f32.mrf.mxu0
      %v2847 = vadd.f32 0.0, %v2846
      %2848 = vmatmul.bf16.gmra.mxu0 %v2362
      %v2849 = vpop.f32.mrf.mxu0
      %v2850 = vadd.f32 0.0, %v2849
      %v2851 = vpop.f32.mrf.mxu0
      %v2852 = vadd.f32 0.0, %v2851
      %2853 = vmatmul.bf16.gmra.mxu0 %v2765
      %v2854 = vpop.f32.mrf.mxu0
      %v2855 = vadd.f32 0.0, %v2854
      %v2856 = vpop.f32.mrf.mxu0
      %v2857 = vadd.f32 0.0, %v2856
      %2858 = vdwg.mxu0
      %v2859 = vadd.f32 %v2730, %v2780
      %v2860 = vadd.f32 %v2731, %v2782
      %v2861 = vadd.f32 %v2732, %v2785
      %v2862 = vadd.f32 %v2733, %v2787
      %v2863 = vadd.f32 %v2734, %v2790
      %v2864 = vadd.f32 %v2735, %v2792
      %v2865 = vadd.f32 %v2736, %v2795
      %v2866 = vadd.f32 %v2737, %v2797
      %v2867 = vadd.f32 %v2738, %v2800
      %v2868 = vadd.f32 %v2739, %v2802
      %v2869 = vadd.f32 %v2740, %v2805
      %v2870 = vadd.f32 %v2741, %v2807
      %v2871 = vadd.f32 %v2742, %v2810
      %v2872 = vadd.f32 %v2743, %v2812
      %v2873 = vadd.f32 %v2744, %v2815
      %v2874 = vadd.f32 %v2745, %v2817
      %v2875 = vadd.f32 %v2746, %v2820
      %v2876 = vadd.f32 %v2747, %v2822
      %v2877 = vadd.f32 %v2748, %v2825
      %v2878 = vadd.f32 %v2749, %v2827
      %v2879 = vadd.f32 %v2750, %v2830
      %v2880 = vadd.f32 %v2751, %v2832
      %v2881 = vadd.f32 %v2752, %v2835
      %v2882 = vadd.f32 %v2753, %v2837
      %v2883 = vadd.f32 %v2754, %v2840
      %v2884 = vadd.f32 %v2755, %v2842
      %v2885 = vadd.f32 %v2756, %v2845
      %v2886 = vadd.f32 %v2757, %v2847
      %v2887 = vadd.f32 %v2758, %v2850
      %v2888 = vadd.f32 %v2759, %v2852
      %v2889 = vadd.f32 %v2760, %v2855
      %v2890 = vadd.f32 %v2761, %v2857
      %v2891 = vshrl.u32 %v1623, 16
      %v2893 = vshll.u32 %v1623, 16
      %v2895 = vrot.slane %v2893, 1
      %v2896 = vor.u32 %v2891, %v2895
      %v2898 = vshll.u32 %v1641, 16
      %v2900 = vrot.slane %v2898, 1
      %v2901 = vsel %vm1643, %v2896, %v2900
      %s2902 = scalar_lea.vmem %s4, 28
      %v2903 = vld [vmem:[%s2902] sm:$0xf]
      %v2905 = vsel %vm1838, %v2901, 0
      %v2908 = vsel %vm1887, %v2903, 0
      %2910 = vmatpush.bf16.msra.mxu0 0
      %2911 = vmatpush.bf16.msra.mxu0 0
      %2912 = vmatpush.bf16.msra.mxu0 0
      %2913 = vmatpush.bf16.msra.mxu0 0
      %2914 = vmatpush.bf16.msra.mxu0 0
      %2915 = vmatpush.bf16.msra.mxu0 0
      %2916 = vmatpush.bf16.msra.mxu0 0
      %2917 = vmatpush.bf16.msra.mxu0 %v2908
      %2918 = vmatmul.bf16.gmra.mxu0 %v1846
      %v2919 = vpop.f32.mrf.mxu0
      %v2920 = vadd.f32 0.0, %v2919
      %v2921 = vpop.f32.mrf.mxu0
      %v2922 = vadd.f32 0.0, %v2921
      %2923 = vmatmul.bf16.gmra.mxu0 %v1849
      %v2924 = vpop.f32.mrf.mxu0
      %v2925 = vadd.f32 0.0, %v2924
      %v2926 = vpop.f32.mrf.mxu0
      %v2927 = vadd.f32 0.0, %v2926
      %2928 = vmatmul.bf16.gmra.mxu0 %v1852
      %v2929 = vpop.f32.mrf.mxu0
      %v2930 = vadd.f32 0.0, %v2929
      %v2931 = vpop.f32.mrf.mxu0
      %v2932 = vadd.f32 0.0, %v2931
      %2933 = vmatmul.bf16.gmra.mxu0 %v1855
      %v2934 = vpop.f32.mrf.mxu0
      %v2935 = vadd.f32 0.0, %v2934
      %v2936 = vpop.f32.mrf.mxu0
      %v2937 = vadd.f32 0.0, %v2936
      %2938 = vmatmul.bf16.gmra.mxu0 %v1858
      %v2939 = vpop.f32.mrf.mxu0
      %v2940 = vadd.f32 0.0, %v2939
      %v2941 = vpop.f32.mrf.mxu0
      %v2942 = vadd.f32 0.0, %v2941
      %2943 = vmatmul.bf16.gmra.mxu0 %v1861
      %v2944 = vpop.f32.mrf.mxu0
      %v2945 = vadd.f32 0.0, %v2944
      %v2946 = vpop.f32.mrf.mxu0
      %v2947 = vadd.f32 0.0, %v2946
      %2948 = vmatmul.bf16.gmra.mxu0 %v1864
      %v2949 = vpop.f32.mrf.mxu0
      %v2950 = vadd.f32 0.0, %v2949
      %v2951 = vpop.f32.mrf.mxu0
      %v2952 = vadd.f32 0.0, %v2951
      %2953 = vmatmul.bf16.gmra.mxu0 %v1867
      %v2954 = vpop.f32.mrf.mxu0
      %v2955 = vadd.f32 0.0, %v2954
      %v2956 = vpop.f32.mrf.mxu0
      %v2957 = vadd.f32 0.0, %v2956
      %2958 = vmatmul.bf16.gmra.mxu0 %v1870
      %v2959 = vpop.f32.mrf.mxu0
      %v2960 = vadd.f32 0.0, %v2959
      %v2961 = vpop.f32.mrf.mxu0
      %v2962 = vadd.f32 0.0, %v2961
      %2963 = vmatmul.bf16.gmra.mxu0 %v1873
      %v2964 = vpop.f32.mrf.mxu0
      %v2965 = vadd.f32 0.0, %v2964
      %v2966 = vpop.f32.mrf.mxu0
      %v2967 = vadd.f32 0.0, %v2966
      %2968 = vmatmul.bf16.gmra.mxu0 %v1876
      %v2969 = vpop.f32.mrf.mxu0
      %v2970 = vadd.f32 0.0, %v2969
      %v2971 = vpop.f32.mrf.mxu0
      %v2972 = vadd.f32 0.0, %v2971
      %2973 = vmatmul.bf16.gmra.mxu0 %v1879
      %v2974 = vpop.f32.mrf.mxu0
      %v2975 = vadd.f32 0.0, %v2974
      %v2976 = vpop.f32.mrf.mxu0
      %v2977 = vadd.f32 0.0, %v2976
      %2978 = vmatmul.bf16.gmra.mxu0 %v1882
      %v2979 = vpop.f32.mrf.mxu0
      %v2980 = vadd.f32 0.0, %v2979
      %v2981 = vpop.f32.mrf.mxu0
      %v2982 = vadd.f32 0.0, %v2981
      %2983 = vmatmul.bf16.gmra.mxu0 %v1885
      %v2984 = vpop.f32.mrf.mxu0
      %v2985 = vadd.f32 0.0, %v2984
      %v2986 = vpop.f32.mrf.mxu0
      %v2987 = vadd.f32 0.0, %v2986
      %2988 = vmatmul.bf16.gmra.mxu0 %v2502
      %v2989 = vpop.f32.mrf.mxu0
      %v2990 = vadd.f32 0.0, %v2989
      %v2991 = vpop.f32.mrf.mxu0
      %v2992 = vadd.f32 0.0, %v2991
      %2993 = vmatmul.bf16.gmra.mxu0 %v2905
      %v2994 = vpop.f32.mrf.mxu0
      %v2995 = vadd.f32 0.0, %v2994
      %v2996 = vpop.f32.mrf.mxu0
      %v2997 = vadd.f32 0.0, %v2996
      %2998 = vdwg.mxu0
      %v2999 = vadd.f32 %v2859, %v2920
      %v3000 = vadd.f32 %v2860, %v2922
      %v3001 = vadd.f32 %v2861, %v2925
      %v3002 = vadd.f32 %v2862, %v2927
      %v3003 = vadd.f32 %v2863, %v2930
      %v3004 = vadd.f32 %v2864, %v2932
      %v3005 = vadd.f32 %v2865, %v2935
      %v3006 = vadd.f32 %v2866, %v2937
      %v3007 = vadd.f32 %v2867, %v2940
      %v3008 = vadd.f32 %v2868, %v2942
      %v3009 = vadd.f32 %v2869, %v2945
      %v3010 = vadd.f32 %v2870, %v2947
      %v3011 = vadd.f32 %v2871, %v2950
      %v3012 = vadd.f32 %v2872, %v2952
      %v3013 = vadd.f32 %v2873, %v2955
      %v3014 = vadd.f32 %v2874, %v2957
      %v3015 = vadd.f32 %v2875, %v2960
      %v3016 = vadd.f32 %v2876, %v2962
      %v3017 = vadd.f32 %v2877, %v2965
      %v3018 = vadd.f32 %v2878, %v2967
      %v3019 = vadd.f32 %v2879, %v2970
      %v3020 = vadd.f32 %v2880, %v2972
      %v3021 = vadd.f32 %v2881, %v2975
      %v3022 = vadd.f32 %v2882, %v2977
      %v3023 = vadd.f32 %v2883, %v2980
      %v3024 = vadd.f32 %v2884, %v2982
      %v3025 = vadd.f32 %v2885, %v2985
      %v3026 = vadd.f32 %v2886, %v2987
      %v3027 = vadd.f32 %v2887, %v2990
      %v3028 = vadd.f32 %v2888, %v2992
      %v3029 = vadd.f32 %v2889, %v2995
      %v3030 = vadd.f32 %v2890, %v2997
      %v3033 = vrot.slane %v1623, 1
      %v3034 = vrot.slane %v1641, 1
      %v3035 = vsel %vm2136, %v3033, %v3034
      %s3036 = scalar_lea.vmem %s4, 32
      %v3037 = vld [vmem:[%s3036] sm:$0xf]
      %v3039 = vsel %vm1838, %v3035, 0
      %v3042 = vsel %vm1887, %v3037, 0
      %3044 = vmatpush.bf16.msra.mxu0 0
      %3045 = vmatpush.bf16.msra.mxu0 0
      %3046 = vmatpush.bf16.msra.mxu0 0
      %3047 = vmatpush.bf16.msra.mxu0 0
      %3048 = vmatpush.bf16.msra.mxu0 0
      %3049 = vmatpush.bf16.msra.mxu0 0
      %3050 = vmatpush.bf16.msra.mxu0 0
      %3051 = vmatpush.bf16.msra.mxu0 %v3042
      %3052 = vmatmul.bf16.gmra.mxu0 %v2194
      %v3053 = vpop.f32.mrf.mxu0
      %v3054 = vadd.f32 0.0, %v3053
      %v3055 = vpop.f32.mrf.mxu0
      %v3056 = vadd.f32 0.0, %v3055
      %3057 = vmatmul.bf16.gmra.mxu0 %v2197
      %v3058 = vpop.f32.mrf.mxu0
      %v3059 = vadd.f32 0.0, %v3058
      %v3060 = vpop.f32.mrf.mxu0
      %v3061 = vadd.f32 0.0, %v3060
      %3062 = vmatmul.bf16.gmra.mxu0 %v2200
      %v3063 = vpop.f32.mrf.mxu0
      %v3064 = vadd.f32 0.0, %v3063
      %v3065 = vpop.f32.mrf.mxu0
      %v3066 = vadd.f32 0.0, %v3065
      %3067 = vmatmul.bf16.gmra.mxu0 %v2203
      %v3068 = vpop.f32.mrf.mxu0
      %v3069 = vadd.f32 0.0, %v3068
      %v3070 = vpop.f32.mrf.mxu0
      %v3071 = vadd.f32 0.0, %v3070
      %3072 = vmatmul.bf16.gmra.mxu0 %v2206
      %v3073 = vpop.f32.mrf.mxu0
      %v3074 = vadd.f32 0.0, %v3073
      %v3075 = vpop.f32.mrf.mxu0
      %v3076 = vadd.f32 0.0, %v3075
      %3077 = vmatmul.bf16.gmra.mxu0 %v2209
      %v3078 = vpop.f32.mrf.mxu0
      %v3079 = vadd.f32 0.0, %v3078
      %v3080 = vpop.f32.mrf.mxu0
      %v3081 = vadd.f32 0.0, %v3080
      %3082 = vmatmul.bf16.gmra.mxu0 %v2212
      %v3083 = vpop.f32.mrf.mxu0
      %v3084 = vadd.f32 0.0, %v3083
      %v3085 = vpop.f32.mrf.mxu0
      %v3086 = vadd.f32 0.0, %v3085
      %3087 = vmatmul.bf16.gmra.mxu0 %v2215
      %v3088 = vpop.f32.mrf.mxu0
      %v3089 = vadd.f32 0.0, %v3088
      %v3090 = vpop.f32.mrf.mxu0
      %v3091 = vadd.f32 0.0, %v3090
      %3092 = vmatmul.bf16.gmra.mxu0 %v2218
      %v3093 = vpop.f32.mrf.mxu0
      %v3094 = vadd.f32 0.0, %v3093
      %v3095 = vpop.f32.mrf.mxu0
      %v3096 = vadd.f32 0.0, %v3095
      %3097 = vmatmul.bf16.gmra.mxu0 %v2221
      %v3098 = vpop.f32.mrf.mxu0
      %v3099 = vadd.f32 0.0, %v3098
      %v3100 = vpop.f32.mrf.mxu0
      %v3101 = vadd.f32 0.0, %v3100
      %3102 = vmatmul.bf16.gmra.mxu0 %v2224
      %v3103 = vpop.f32.mrf.mxu0
      %v3104 = vadd.f32 0.0, %v3103
      %v3105 = vpop.f32.mrf.mxu0
      %v3106 = vadd.f32 0.0, %v3105
      %3107 = vmatmul.bf16.gmra.mxu0 %v2227
      %v3108 = vpop.f32.mrf.mxu0
      %v3109 = vadd.f32 0.0, %v3108
      %v3110 = vpop.f32.mrf.mxu0
      %v3111 = vadd.f32 0.0, %v3110
      %3112 = vmatmul.bf16.gmra.mxu0 %v2230
      %v3113 = vpop.f32.mrf.mxu0
      %v3114 = vadd.f32 0.0, %v3113
      %v3115 = vpop.f32.mrf.mxu0
      %v3116 = vadd.f32 0.0, %v3115
      %3117 = vmatmul.bf16.gmra.mxu0 %v2233
      %v3118 = vpop.f32.mrf.mxu0
      %v3119 = vadd.f32 0.0, %v3118
      %v3120 = vpop.f32.mrf.mxu0
      %v3121 = vadd.f32 0.0, %v3120
      %3122 = vmatmul.bf16.gmra.mxu0 %v2636
      %v3123 = vpop.f32.mrf.mxu0
      %v3124 = vadd.f32 0.0, %v3123
      %v3125 = vpop.f32.mrf.mxu0
      %v3126 = vadd.f32 0.0, %v3125
      %3127 = vmatmul.bf16.gmra.mxu0 %v3039
      %v3128 = vpop.f32.mrf.mxu0
      %v3129 = vadd.f32 0.0, %v3128
      %v3130 = vpop.f32.mrf.mxu0
      %v3131 = vadd.f32 0.0, %v3130
      %3132 = vdwg.mxu0
      %v3133 = vadd.f32 %v2999, %v3054
      %v3134 = vadd.f32 %v3000, %v3056
      %v3135 = vadd.f32 %v3001, %v3059
      %v3136 = vadd.f32 %v3002, %v3061
      %v3137 = vadd.f32 %v3003, %v3064
      %v3138 = vadd.f32 %v3004, %v3066
      %v3139 = vadd.f32 %v3005, %v3069
      %v3140 = vadd.f32 %v3006, %v3071
      %v3141 = vadd.f32 %v3007, %v3074
      %v3142 = vadd.f32 %v3008, %v3076
      %v3143 = vadd.f32 %v3009, %v3079
      %v3144 = vadd.f32 %v3010, %v3081
      %v3145 = vadd.f32 %v3011, %v3084
      %v3146 = vadd.f32 %v3012, %v3086
      %v3147 = vadd.f32 %v3013, %v3089
      %v3148 = vadd.f32 %v3014, %v3091
      %v3149 = vadd.f32 %v3015, %v3094
      %v3150 = vadd.f32 %v3016, %v3096
      %v3151 = vadd.f32 %v3017, %v3099
      %v3152 = vadd.f32 %v3018, %v3101
      %v3153 = vadd.f32 %v3019, %v3104
      %v3154 = vadd.f32 %v3020, %v3106
      %v3155 = vadd.f32 %v3021, %v3109
      %v3156 = vadd.f32 %v3022, %v3111
      %v3157 = vadd.f32 %v3023, %v3114
      %v3158 = vadd.f32 %v3024, %v3116
      %v3159 = vadd.f32 %v3025, %v3119
      %v3160 = vadd.f32 %v3026, %v3121
      %v3161 = vadd.f32 %v3027, %v3124
      %v3162 = vadd.f32 %v3028, %v3126
      %v3163 = vadd.f32 %v3029, %v3129
      %v3164 = vadd.f32 %v3030, %v3131
      %v3165 = vld [vmem:[%s5] sm:$0x1]
      %v3167 = vperm.slane %v3165, 0
      %v3169 = vadd.f32 %v3133, %v3167
      %v3170 = vadd.f32 %v3134, %v3167
      %v3171 = vadd.f32 %v3135, %v3167
      %v3172 = vadd.f32 %v3136, %v3167
      %v3173 = vadd.f32 %v3137, %v3167
      %v3174 = vadd.f32 %v3138, %v3167
      %v3175 = vadd.f32 %v3139, %v3167
      %v3176 = vadd.f32 %v3140, %v3167
      %v3177 = vadd.f32 %v3141, %v3167
      %v3178 = vadd.f32 %v3142, %v3167
      %v3179 = vadd.f32 %v3143, %v3167
      %v3180 = vadd.f32 %v3144, %v3167
      %v3181 = vadd.f32 %v3145, %v3167
      %v3182 = vadd.f32 %v3146, %v3167
      %v3183 = vadd.f32 %v3147, %v3167
      %v3184 = vadd.f32 %v3148, %v3167
      %v3185 = vadd.f32 %v3149, %v3167
      %v3186 = vadd.f32 %v3150, %v3167
      %v3187 = vadd.f32 %v3151, %v3167
      %v3188 = vadd.f32 %v3152, %v3167
      %v3189 = vadd.f32 %v3153, %v3167
      %v3190 = vadd.f32 %v3154, %v3167
      %v3191 = vadd.f32 %v3155, %v3167
      %v3192 = vadd.f32 %v3156, %v3167
      %v3193 = vadd.f32 %v3157, %v3167
      %v3194 = vadd.f32 %v3158, %v3167
      %v3195 = vadd.f32 %v3159, %v3167
      %v3196 = vadd.f32 %v3160, %v3167
      %v3197 = vadd.f32 %v3161, %v3167
      %v3198 = vadd.f32 %v3162, %v3167
      %v3199 = vadd.f32 %v3163, %v3167
      %v3200 = vadd.f32 %v3164, %v3167
      %v3201 = vpack.c.bf16 %v3169, %v3169
      %v3202 = vpack.c.bf16 %v3170, %v3170
      %v3203 = vpack.c.bf16 %v3171, %v3171
      %v3204 = vpack.c.bf16 %v3172, %v3172
      %v3205 = vpack.c.bf16 %v3173, %v3173
      %v3206 = vpack.c.bf16 %v3174, %v3174
      %v3207 = vpack.c.bf16 %v3175, %v3175
      %v3208 = vpack.c.bf16 %v3176, %v3176
      %v3209 = vpack.c.bf16 %v3177, %v3177
      %v3210 = vpack.c.bf16 %v3178, %v3178
      %v3211 = vpack.c.bf16 %v3179, %v3179
      %v3212 = vpack.c.bf16 %v3180, %v3180
      %v3213 = vpack.c.bf16 %v3181, %v3181
      %v3214 = vpack.c.bf16 %v3182, %v3182
      %v3215 = vpack.c.bf16 %v3183, %v3183
      %v3216 = vpack.c.bf16 %v3184, %v3184
      %v3217 = vpack.c.bf16 %v3185, %v3185
      %v3218 = vpack.c.bf16 %v3186, %v3186
      %v3219 = vpack.c.bf16 %v3187, %v3187
      %v3220 = vpack.c.bf16 %v3188, %v3188
      %v3221 = vpack.c.bf16 %v3189, %v3189
      %v3222 = vpack.c.bf16 %v3190, %v3190
      %v3223 = vpack.c.bf16 %v3191, %v3191
      %v3224 = vpack.c.bf16 %v3192, %v3192
      %v3225 = vpack.c.bf16 %v3193, %v3193
      %v3226 = vpack.c.bf16 %v3194, %v3194
      %v3227 = vpack.c.bf16 %v3195, %v3195
      %v3228 = vpack.c.bf16 %v3196, %v3196
      %v3229 = vpack.c.bf16 %v3197, %v3197
      %v3230 = vpack.c.bf16 %v3198, %v3198
      %v3231 = vpack.c.bf16 %v3199, %v3199
      %v3232 = vpack.c.bf16 %v3200, %v3200
      %vm3233 = vcmask 125952
      %3234 = vst.msk [vmem:[%s469] sm:$0xf] %vm3233, %v3201
      %3235 = vst.msk [vmem:[%s469 + $0x4] sm:$0xf] %vm3233, %v3202
      %3236 = vst.msk [vmem:[%s469 + $0x8] sm:$0xf] %vm3233, %v3203
      %3237 = vst.msk [vmem:[%s469 + $0xc] sm:$0xf] %vm3233, %v3204
      %3238 = vst.msk [vmem:[%s469 + $0x10] sm:$0xf] %vm3233, %v3205
      %3239 = vst.msk [vmem:[%s469 + $0x14] sm:$0xf] %vm3233, %v3206
      %3240 = vst.msk [vmem:[%s469 + $0x18] sm:$0xf] %vm3233, %v3207
      %3241 = vst.msk [vmem:[%s469 + $0x1c] sm:$0xf] %vm3233, %v3208
      %3242 = vst.msk [vmem:[%s469 + $0x20] sm:$0xf] %vm3233, %v3209
      %3243 = vst.msk [vmem:[%s469 + $0x24] sm:$0xf] %vm3233, %v3210
      %3244 = vst.msk [vmem:[%s469 + $0x28] sm:$0xf] %vm3233, %v3211
      %3245 = vst.msk [vmem:[%s469 + $0x2c] sm:$0xf] %vm3233, %v3212
      %3246 = vst.msk [vmem:[%s469 + $0x30] sm:$0xf] %vm3233, %v3213
      %3247 = vst.msk [vmem:[%s469 + $0x34] sm:$0xf] %vm3233, %v3214
      %3248 = vst.msk [vmem:[%s469 + $0x38] sm:$0xf] %vm3233, %v3215
      %3249 = vst.msk [vmem:[%s469 + $0x3c] sm:$0xf] %vm3233, %v3216
      %3250 = vst.msk [vmem:[%s469 + $0x40] sm:$0xf] %vm3233, %v3217
      %3251 = vst.msk [vmem:[%s469 + $0x44] sm:$0xf] %vm3233, %v3218
      %3252 = vst.msk [vmem:[%s469 + $0x48] sm:$0xf] %vm3233, %v3219
      %3253 = vst.msk [vmem:[%s469 + $0x4c] sm:$0xf] %vm3233, %v3220
      %3254 = vst.msk [vmem:[%s469 + $0x50] sm:$0xf] %vm3233, %v3221
      %3255 = vst.msk [vmem:[%s469 + $0x54] sm:$0xf] %vm3233, %v3222
      %3256 = vst.msk [vmem:[%s469 + $0x58] sm:$0xf] %vm3233, %v3223
      %3257 = vst.msk [vmem:[%s469 + $0x5c] sm:$0xf] %vm3233, %v3224
      %3258 = vst.msk [vmem:[%s469 + $0x60] sm:$0xf] %vm3233, %v3225
      %3259 = vst.msk [vmem:[%s469 + $0x64] sm:$0xf] %vm3233, %v3226
      %3260 = vst.msk [vmem:[%s469 + $0x68] sm:$0xf] %vm3233, %v3227
      %3261 = vst.msk [vmem:[%s469 + $0x6c] sm:$0xf] %vm3233, %v3228
      %3262 = vst.msk [vmem:[%s469 + $0x70] sm:$0xf] %vm3233, %v3229
      %3263 = vst.msk [vmem:[%s469 + $0x74] sm:$0xf] %vm3233, %v3230
      %3264 = vst.msk [vmem:[%s469 + $0x78] sm:$0xf] %vm3233, %v3231
      %3265 = vst.msk [vmem:[%s469 + $0x7c] sm:$0xf] %vm3233, %v3232
      %v3266 = vunpack.c.l.bf16 %v3201
      %v3267 = vunpack.c.l.bf16 %v3202
      %v3268 = vunpack.c.l.bf16 %v3203
      %v3269 = vunpack.c.l.bf16 %v3204
      %v3270 = vunpack.c.l.bf16 %v3205
      %v3271 = vunpack.c.l.bf16 %v3206
      %v3272 = vunpack.c.l.bf16 %v3207
      %v3273 = vunpack.c.l.bf16 %v3208
      %v3274 = vunpack.c.l.bf16 %v3209
      %v3275 = vunpack.c.l.bf16 %v3210
      %v3276 = vunpack.c.l.bf16 %v3211
      %v3277 = vunpack.c.l.bf16 %v3212
      %v3278 = vunpack.c.l.bf16 %v3213
      %v3279 = vunpack.c.l.bf16 %v3214
      %v3280 = vunpack.c.l.bf16 %v3215
      %v3281 = vunpack.c.l.bf16 %v3216
      %v3282 = vunpack.c.l.bf16 %v3217
      %v3283 = vunpack.c.l.bf16 %v3218
      %v3284 = vunpack.c.l.bf16 %v3219
      %v3285 = vunpack.c.l.bf16 %v3220
      %v3286 = vunpack.c.l.bf16 %v3221
      %v3287 = vunpack.c.l.bf16 %v3222
      %v3288 = vunpack.c.l.bf16 %v3223
      %v3289 = vunpack.c.l.bf16 %v3224
      %v3290 = vunpack.c.l.bf16 %v3225
      %v3291 = vunpack.c.l.bf16 %v3226
      %v3292 = vunpack.c.l.bf16 %v3227
      %v3293 = vunpack.c.l.bf16 %v3228
      %v3294 = vunpack.c.l.bf16 %v3229
      %v3295 = vunpack.c.l.bf16 %v3230
      %v3296 = vunpack.c.l.bf16 %v3231
      %v3297 = vunpack.c.l.bf16 %v3232
      %vm3298 = vcmask 130048
      %v3299 = vsel %vm3298, %v3266, 0.0
      %v3300 = vsel %vm3298, %v3267, 0.0
      %v3301 = vadd.f32 %v3299, %v3300
      %v3302 = vsel %vm3298, %v3268, 0.0
      %v3303 = vadd.f32 %v3301, %v3302
      %v3304 = vsel %vm3298, %v3269, 0.0
      %v3305 = vadd.f32 %v3303, %v3304
      %v3306 = vsel %vm3298, %v3270, 0.0
      %v3307 = vadd.f32 %v3305, %v3306
      %v3308 = vsel %vm3298, %v3271, 0.0
      %v3309 = vadd.f32 %v3307, %v3308
      %v3310 = vsel %vm3298, %v3272, 0.0
      %v3311 = vadd.f32 %v3309, %v3310
      %v3312 = vsel %vm3298, %v3273, 0.0
      %v3313 = vadd.f32 %v3311, %v3312
      %v3314 = vsel %vm3298, %v3274, 0.0
      %v3315 = vadd.f32 %v3313, %v3314
      %v3316 = vsel %vm3298, %v3275, 0.0
      %v3317 = vadd.f32 %v3315, %v3316
      %v3318 = vsel %vm3298, %v3276, 0.0
      %v3319 = vadd.f32 %v3317, %v3318
      %v3320 = vsel %vm3298, %v3277, 0.0
      %v3321 = vadd.f32 %v3319, %v3320
      %v3322 = vsel %vm3298, %v3278, 0.0
      %v3323 = vadd.f32 %v3321, %v3322
      %v3324 = vsel %vm3298, %v3279, 0.0
      %v3325 = vadd.f32 %v3323, %v3324
      %v3326 = vsel %vm3298, %v3280, 0.0
      %v3327 = vadd.f32 %v3325, %v3326
      %v3328 = vsel %vm3298, %v3281, 0.0
      %v3329 = vadd.f32 %v3327, %v3328
      %v3330 = vsel %vm3298, %v3282, 0.0
      %v3331 = vadd.f32 %v3329, %v3330
      %v3332 = vsel %vm3298, %v3283, 0.0
      %v3333 = vadd.f32 %v3331, %v3332
      %v3334 = vsel %vm3298, %v3284, 0.0
      %v3335 = vadd.f32 %v3333, %v3334
      %v3336 = vsel %vm3298, %v3285, 0.0
      %v3337 = vadd.f32 %v3335, %v3336
      %v3338 = vsel %vm3298, %v3286, 0.0
      %v3339 = vadd.f32 %v3337, %v3338
      %v3340 = vsel %vm3298, %v3287, 0.0
      %v3341 = vadd.f32 %v3339, %v3340
      %v3342 = vsel %vm3298, %v3288, 0.0
      %v3343 = vadd.f32 %v3341, %v3342
      %v3344 = vsel %vm3298, %v3289, 0.0
      %v3345 = vadd.f32 %v3343, %v3344
      %v3346 = vsel %vm3298, %v3290, 0.0
      %v3347 = vadd.f32 %v3345, %v3346
      %v3348 = vsel %vm3298, %v3291, 0.0
      %v3349 = vadd.f32 %v3347, %v3348
      %v3350 = vsel %vm3298, %v3292, 0.0
      %v3351 = vadd.f32 %v3349, %v3350
      %v3352 = vsel %vm3298, %v3293, 0.0
      %v3353 = vadd.f32 %v3351, %v3352
      %v3354 = vsel %vm3298, %v3294, 0.0
      %v3355 = vadd.f32 %v3353, %v3354
      %v3356 = vsel %vm3298, %v3295, 0.0
      %v3357 = vadd.f32 %v3355, %v3356
      %v3358 = vsel %vm3298, %v3296, 0.0
      %v3359 = vadd.f32 %v3357, %v3358
      %v3360 = vsel %vm3298, %v3297, 0.0
      %v3361 = vadd.f32 %v3359, %v3360
      %v3362 = vrot.slane %v3361, 4
      %v3363 = vadd.f32 %v3361, %v3362
      %v3364 = vrot.slane %v3363, 2
      %v3365 = vadd.f32 %v3363, %v3364
      %v3366 = vrot.slane %v3365, 1
      %v3367 = vadd.f32 %v3365, %v3366
      %v3368 = vmul.f32 %v3266, %v3266
      %v3369 = vmul.f32 %v3267, %v3267
      %v3370 = vmul.f32 %v3268, %v3268
      %v3371 = vmul.f32 %v3269, %v3269
      %v3372 = vmul.f32 %v3270, %v3270
      %v3373 = vmul.f32 %v3271, %v3271
      %v3374 = vmul.f32 %v3272, %v3272
      %v3375 = vmul.f32 %v3273, %v3273
      %v3376 = vmul.f32 %v3274, %v3274
      %v3377 = vmul.f32 %v3275, %v3275
      %v3378 = vmul.f32 %v3276, %v3276
      %v3379 = vmul.f32 %v3277, %v3277
      %v3380 = vmul.f32 %v3278, %v3278
      %v3381 = vmul.f32 %v3279, %v3279
      %v3382 = vmul.f32 %v3280, %v3280
      %v3383 = vmul.f32 %v3281, %v3281
      %v3384 = vmul.f32 %v3282, %v3282
      %v3385 = vmul.f32 %v3283, %v3283
      %v3386 = vmul.f32 %v3284, %v3284
      %v3387 = vmul.f32 %v3285, %v3285
      %v3388 = vmul.f32 %v3286, %v3286
      %v3389 = vmul.f32 %v3287, %v3287
      %v3390 = vmul.f32 %v3288, %v3288
      %v3391 = vmul.f32 %v3289, %v3289
      %v3392 = vmul.f32 %v3290, %v3290
      %v3393 = vmul.f32 %v3291, %v3291
      %v3394 = vmul.f32 %v3292, %v3292
      %v3395 = vmul.f32 %v3293, %v3293
      %v3396 = vmul.f32 %v3294, %v3294
      %v3397 = vmul.f32 %v3295, %v3295
      %v3398 = vmul.f32 %v3296, %v3296
      %v3399 = vmul.f32 %v3297, %v3297
      %v3400 = vsel %vm3298, %v3368, 0.0
      %v3401 = vsel %vm3298, %v3369, 0.0
      %v3402 = vadd.f32 %v3400, %v3401
      %v3403 = vsel %vm3298, %v3370, 0.0
      %v3404 = vadd.f32 %v3402, %v3403
      %v3405 = vsel %vm3298, %v3371, 0.0
      %v3406 = vadd.f32 %v3404, %v3405
      %v3407 = vsel %vm3298, %v3372, 0.0
      %v3408 = vadd.f32 %v3406, %v3407
      %v3409 = vsel %vm3298, %v3373, 0.0
      %v3410 = vadd.f32 %v3408, %v3409
      %v3411 = vsel %vm3298, %v3374, 0.0
      %v3412 = vadd.f32 %v3410, %v3411
      %v3413 = vsel %vm3298, %v3375, 0.0
      %v3414 = vadd.f32 %v3412, %v3413
      %v3415 = vsel %vm3298, %v3376, 0.0
      %v3416 = vadd.f32 %v3414, %v3415
      %v3417 = vsel %vm3298, %v3377, 0.0
      %v3418 = vadd.f32 %v3416, %v3417
      %v3419 = vsel %vm3298, %v3378, 0.0
      %v3420 = vadd.f32 %v3418, %v3419
      %v3421 = vsel %vm3298, %v3379, 0.0
      %v3422 = vadd.f32 %v3420, %v3421
      %v3423 = vsel %vm3298, %v3380, 0.0
      %v3424 = vadd.f32 %v3422, %v3423
      %v3425 = vsel %vm3298, %v3381, 0.0
      %v3426 = vadd.f32 %v3424, %v3425
      %v3427 = vsel %vm3298, %v3382, 0.0
      %v3428 = vadd.f32 %v3426, %v3427
      %v3429 = vsel %vm3298, %v3383, 0.0
      %v3430 = vadd.f32 %v3428, %v3429
      %v3431 = vsel %vm3298, %v3384, 0.0
      %v3432 = vadd.f32 %v3430, %v3431
      %v3433 = vsel %vm3298, %v3385, 0.0
      %v3434 = vadd.f32 %v3432, %v3433
      %v3435 = vsel %vm3298, %v3386, 0.0
      %v3436 = vadd.f32 %v3434, %v3435
      %v3437 = vsel %vm3298, %v3387, 0.0
      %v3438 = vadd.f32 %v3436, %v3437
      %v3439 = vsel %vm3298, %v3388, 0.0
      %v3440 = vadd.f32 %v3438, %v3439
      %v3441 = vsel %vm3298, %v3389, 0.0
      %v3442 = vadd.f32 %v3440, %v3441
      %v3443 = vsel %vm3298, %v3390, 0.0
      %v3444 = vadd.f32 %v3442, %v3443
      %v3445 = vsel %vm3298, %v3391, 0.0
      %v3446 = vadd.f32 %v3444, %v3445
      %v3447 = vsel %vm3298, %v3392, 0.0
      %v3448 = vadd.f32 %v3446, %v3447
      %v3449 = vsel %vm3298, %v3393, 0.0
      %v3450 = vadd.f32 %v3448, %v3449
      %v3451 = vsel %vm3298, %v3394, 0.0
      %v3452 = vadd.f32 %v3450, %v3451
      %v3453 = vsel %vm3298, %v3395, 0.0
      %v3454 = vadd.f32 %v3452, %v3453
      %v3455 = vsel %vm3298, %v3396, 0.0
      %v3456 = vadd.f32 %v3454, %v3455
      %v3457 = vsel %vm3298, %v3397, 0.0
      %v3458 = vadd.f32 %v3456, %v3457
      %v3459 = vsel %vm3298, %v3398, 0.0
      %v3460 = vadd.f32 %v3458, %v3459
      %v3461 = vsel %vm3298, %v3399, 0.0
      %v3462 = vadd.f32 %v3460, %v3461
      %v3463 = vrot.slane %v3462, 4
      %v3464 = vadd.f32 %v3462, %v3463
      %v3465 = vrot.slane %v3464, 2
      %v3466 = vadd.f32 %v3464, %v3465
      %v3467 = vrot.slane %v3466, 1
      %v3468 = vadd.f32 %v3466, %v3467
      %vm3469 = vcmask 1040384
      %v3470 = vsel %vm3469, %v3367, %v3468
      // Predicated region
      $region45: #{maisi_resblock_forward.4} parent=43 // pred_check
        %p3471 = pneg %p527
      $region46: #{maisi_resblock_forward.4} parent=43 // pred_check_branch
        %3473 = sbr.rel (%p3471) target = $region48
      $region47: #{maisi_resblock_forward.4} parent=43 // pred_region
        %vm3474 = vcmask 123904
        %3475 = vst.msk [vmem:[%s474] sm:$0x3] %vm3474, 0.0
      $region48: #{maisi_resblock_forward.4} parent=43 // pred_fallthru
        _
      %v3476 = vld [vmem:[%s474] sm:$0x3]
      %v3477 = vadd.f32 %v3476, %v3470
      %vm3478 = vcmask 123904
      %3479 = vst.msk [vmem:[%s474] sm:$0x3] %vm3478, %v3477
      %s3480 = smul.u32 16, %s24
      %p3481 = scmp.lt.s32.totalorder %s23, 1
      %s3482 = scalar_select %p3481, %s23, 1
      %p3483 = scmp.lt.s32.totalorder %s3480, 15
      %s3484 = scalar_select %p3483, %s3480, 15
      %s3485 = smul.addr %s3484, 2
      %s3486 = smul.addr %s3482, 32
      %s3487 = sadd.s32 %s3485, %s3486
      %s3488 = smul.addr %s3487, 4
      %s3489 = scalar_lea.vmem %s6, %s3488
      %p3490 = scmp.lt.s32.totalorder %s23, 1
      %s3491 = scalar_select %p3490, %s23, 1
      %s3492 = smul.addr %s3491, 2
      %s3493 = scalar_lea.vmem %s7, %s3492
      // Predicated region
      $region49: #{maisi_resblock_forward.4} parent=43 // pred_check
        %p3494 = pneg %p219
      $region50: #{maisi_resblock_forward.4} parent=43 // pred_check_branch
        %3496 = sbr.rel (%p3494) target = $region52
      $region51: #{maisi_resblock_forward.4} parent=43 // pred_region
        %s3497 = smul.u32 16, %s24
      $region52: #{maisi_resblock_forward.4} parent=43 // pred_fallthru
        _
      // Predicated region
      $region53: #{maisi_resblock_forward.4} parent=43 // pred_check
        %p3498 = pneg %p245
      $region54: #{maisi_resblock_forward.4} parent=43 // pred_check_branch
        %3500 = sbr.rel (%p3498) target = $region56
      $region55: #{maisi_resblock_forward.4} parent=43 // pred_region
        _
      $region56: #{maisi_resblock_forward.4} parent=43 // pred_fallthru
        _
    $region44: #{maisi_resblock_forward.4} parent=5 // pred_fallthru
      _
    %p3501 = scmp.le.s32.totalorder 2, %s14
    // Predicated region
    $region57: #{maisi_resblock_forward.4} parent=5 // pred_check
      %p3502 = pneg %p3501
    $region58: #{maisi_resblock_forward.4} parent=5 // pred_check_branch
      %3504 = sbr.rel (%p3502) target = $region60
    $region59: #{maisi_resblock_forward.4} parent=5 // pred_region
      %s3505 = ssub.s32 %s14, 2
      // Predicated region
      $region61: #{maisi_resblock_forward.4} parent=59 // pred_check
        %p3506 = pneg %p225
      $region62: #{maisi_resblock_forward.4} parent=59 // pred_check_branch
        %3508 = sbr.rel (%p3506) target = $region64
      $region63: #{maisi_resblock_forward.4} parent=59 // pred_region
        %s3509 = smul.u32 16, %s26
        %p3510 = scmp.lt.s32.totalorder %s25, 1
        %s3511 = scalar_select %p3510, %s25, 1
        %p3512 = scmp.lt.s32.totalorder %s3509, 15
        %s3513 = scalar_select %p3512, %s3509, 15
        %s3514 = smul.addr %s3513, 2
        %s3515 = smul.addr %s3511, 32
        %s3516 = sadd.s32 %s3514, %s3515
        %s3517 = smul.addr %s3516, 4
        %s3518 = scalar_lea.vmem %s6, %s3517
      $region64: #{maisi_resblock_forward.4} parent=59 // pred_fallthru
        _
      // Predicated region
      $region65: #{maisi_resblock_forward.4} parent=59 // pred_check
        %p3519 = pneg %p251
      $region66: #{maisi_resblock_forward.4} parent=59 // pred_check_branch
        %3521 = sbr.rel (%p3519) target = $region68
      $region67: #{maisi_resblock_forward.4} parent=59 // pred_region
        %p3522 = scmp.lt.s32.totalorder %s25, 1
        %s3523 = scalar_select %p3522, %s25, 1
        %s3524 = smul.addr %s3523, 2
        %s3525 = scalar_lea.vmem %s7, %s3524
      $region68: #{maisi_resblock_forward.4} parent=59 // pred_fallthru
        _
    $region60: #{maisi_resblock_forward.4} parent=5 // pred_fallthru
      _
  $region6: #{maisi_resblock_forward.4} parent=0 // loop_footer
    %s18 = sadd.s32 1, %s14
  $region7: #{maisi_resblock_forward.4} parent=0 // loop_footer_branch
    %13 = sbr.rel target = $region3
  $region8: #{maisi_resblock_forward.4} parent=0 // loop_exit
    _

// kernel: maisi_resblock_forward.5
$region0: #{maisi_resblock_forward.5}
  #allocation0 [shape = 'u32[]', space=smem, size = 0x4, offset = 0x4, fixed_abs, tag = 'smem constant byte address 0x4 - core index']
  #allocation1 [shape = 'u32[72,128]{1,0:T(1,128)}', space=vmem, size = 0x9000, scoped, tag = 'internal scratch']
  %s0 = inlined_call_operand.vmem [shape: bf16[2,16,16,16], index: 0, kind: input, shape index: {}, may-alias: {0,1,2}]
  %s1 = inlined_call_operand.vmem [shape: bf16[2,16,16,16], index: 1, kind: input, shape index: {}, may-alias: {0,1,2}]
  %s2 = inlined_call_operand.vmem [shape: bf16[2,16,16,16], index: 2, kind: input, shape index: {}, may-alias: {0,1,2}]
  %s3 = inlined_call_operand.vmem [shape: f32[2,2,16], index: 3, kind: input, shape index: {}]
  %s4 = inlined_call_operand.vmem [shape: bf16[9,16,16], index: 4, kind: input, shape index: {}]
  %s5 = inlined_call_operand.vmem [shape: f32[1,16], index: 5, kind: input, shape index: {}]
  %s6 = inlined_call_operand.vmem [shape: f32[2,16,16,8], index: 6, kind: input, shape index: {}]
  %s7 = inlined_call_operand.vmem [shape: bf16[8,16], index: 7, kind: input, shape index: {}]
  %s8 = inlined_call_operand.vmem [shape: f32[1,16], index: 8, kind: input, shape index: {}]
  %s9 = inlined_call_operand.vmem [shape: f32[2,16,16,16], index: 9, kind: output, shape index: {}]
  %s10 = sld [smem:[#allocation0]]
  $region69: #{maisi_resblock_forward.5} parent=0
    _
  %s12 = ssub.s32 1, %s10
  %s13 = scalar_select 0, %s12, %s10
  loop: start=0, step=1, limit=4
  $region2: #{maisi_resblock_forward.5} parent=0 // loop_pre_header
    _
  $region3: #{maisi_resblock_forward.5} parent=0 // loop_header
    %s15 = sphi 0, %s19
    %p16 = scmp.ge.s32.totalorder %s15, 4
    %s22 = sphi 0, %s34
    %s23 = sphi 0, %s30
    %s24 = sphi 0, %s22
    %s25 = sphi 0, %s23
    %s26 = sphi 0, %s24
    %s27 = sphi 0, %s25
    %s47 = sphi 0, %s49
    %s50 = sphi 0, %s47
    %s51 = sphi 0, %s50
    %s67 = sphi 0, %s51
    %s75 = sphi 0, %s77
    %s78 = sphi 0, %s75
    %s79 = sphi 0, %s78
    %s95 = sphi 0, %s79
    %s111 = sphi 0, %s113
    %s114 = sphi 0, %s111
    %s115 = sphi 0, %s114
    %s131 = sphi 0, %s115
    %s137 = sphi 0, %s139
    %s140 = sphi 0, %s137
    %s141 = sphi 0, %s140
    %s157 = sphi 0, %s141
    %s161 = sphi 0, %s161
    %s163 = sphi 0, %s161
    %s164 = sphi 0, %s163
    %s178 = sphi 0, %s164
    %s182 = sphi 0, %s182
    %s184 = sphi 0, %s182
    %s185 = sphi 0, %s184
    %s199 = sphi 0, %s185
    %s207 = sphi 0, %s209
    %s210 = sphi 0, %s207
    %s211 = sphi 0, %s210
    %s227 = sphi 0, %s211
    %s231 = sphi 0, %s231
    %s233 = sphi 0, %s231
    %s234 = sphi 0, %s233
    %s248 = sphi 0, %s234
    %s252 = sphi 0, %s252
    %s254 = sphi 0, %s252
    %s255 = sphi 0, %s254
    %s269 = sphi 0, %s255
    %s277 = sphi 0, %s279
    %s280 = sphi 0, %s277
    %s281 = sphi 0, %s280
    %s297 = sphi 0, %s281
  $region4: #{maisi_resblock_forward.5} parent=0 // loop_header_branch
    %18 = sbr.rel (%p16) target = $region8
  $region5: #{maisi_resblock_forward.5} parent=0 // loop_body
    %s20 = ssub.s32 %s15, 1
    %s21 = ssub.s32 %s15, 2
    %s28 = sadd.s32 1, %s23
    %p29 = scmp.ge.s32.totalorder %s28, 1
    %s30 = scalar_select %p29, 0, %s28
    %s31 = sadd.s32 1, %s22
    %s32 = scalar_select %p29, %s31, %s22
    %p33 = scmp.ge.s32.totalorder %s32, 2
    %s34 = scalar_select %p33, 0, %s32
    %s35 = smul.u32 %s23, 16
    %s36 = ssub.s32 %s35, 1
    %p37 = scmp.gt.s32.totalorder %s36, 0
    %s38 = scalar_select %p37, %s36, 0
    %s39 = smul.u32 %s30, 16
    %s40 = ssub.s32 %s39, 1
    %p41 = scmp.gt.s32.totalorder %s40, 0
    %s42 = scalar_select %p41, %s40, 0
    %s43 = ssub.s32 %s22, %s34
    %s44 = ssub.s32 %s38, %s42
    %s45 = sor.u32 %s43, %s44
    %p46 = scmp.eq.s32.totalorder %s45, 0
    %s48 = sadd.s32 %s47, 1
    %s49 = scalar_select %p46, %s47, %s48
    %p52 = pneg %p46
    %p53 = scmp.eq.s32.totalorder %s15, 1
    %p54 = por %p52, %p53
    %p55 = scmp.ne.s32.totalorder %s47, %s50
    %p56 = scmp.eq.s32.totalorder %s15, 0
    %p57 = por %p55, %p56
    %p58 = scmp.ne.s32.totalorder %s47, %s50
    %p59 = scmp.eq.s32.totalorder %s20, 1
    %p60 = por %p58, %p59
    %p61 = scmp.ne.s32.totalorder %s50, %s51
    %p62 = scmp.eq.s32.totalorder %s20, 0
    %p63 = por %p61, %p62
    %p64 = scmp.ne.s32.totalorder %s50, %s51
    %p65 = scmp.eq.s32.totalorder %s21, 1
    %p66 = por %p64, %p65
    %p68 = scmp.ne.s32.totalorder %s51, %s67
    %p69 = scmp.eq.s32.totalorder %s21, 0
    %p70 = por %p68, %p69
    %s71 = ssub.s32 %s22, %s34
    %s72 = ssub.s32 %s23, %s30
    %s73 = sor.u32 %s71, %s72
    %p74 = scmp.eq.s32.totalorder %s73, 0
    %s76 = sadd.s32 %s75, 1
    %s77 = scalar_select %p74, %s75, %s76
    %p80 = pneg %p74
    %p81 = scmp.eq.s32.totalorder %s15, 1
    %p82 = por %p80, %p81
    %p83 = scmp.ne.s32.totalorder %s75, %s78
    %p84 = scmp.eq.s32.totalorder %s15, 0
    %p85 = por %p83, %p84
    %p86 = scmp.ne.s32.totalorder %s75, %s78
    %p87 = scmp.eq.s32.totalorder %s20, 1
    %p88 = por %p86, %p87
    %p89 = scmp.ne.s32.totalorder %s78, %s79
    %p90 = scmp.eq.s32.totalorder %s20, 0
    %p91 = por %p89, %p90
    %p92 = scmp.ne.s32.totalorder %s78, %s79
    %p93 = scmp.eq.s32.totalorder %s21, 1
    %p94 = por %p92, %p93
    %p96 = scmp.ne.s32.totalorder %s79, %s95
    %p97 = scmp.eq.s32.totalorder %s21, 0
    %p98 = por %p96, %p97
    %s99 = smul.u32 %s23, 16
    %s100 = sadd.s32 %s99, 16
    %p101 = scmp.lt.s32.totalorder %s100, 15
    %s102 = scalar_select %p101, %s100, 15
    %s103 = smul.u32 %s30, 16
    %s104 = sadd.s32 %s103, 16
    %p105 = scmp.lt.s32.totalorder %s104, 15
    %s106 = scalar_select %p105, %s104, 15
    %s107 = ssub.s32 %s22, %s34
    %s108 = ssub.s32 %s102, %s106
    %s109 = sor.u32 %s107, %s108
    %p110 = scmp.eq.s32.totalorder %s109, 0
    %s112 = sadd.s32 %s111, 1
    %s113 = scalar_select %p110, %s111, %s112
    %p116 = pneg %p110
    %p117 = scmp.eq.s32.totalorder %s15, 1
    %p118 = por %p116, %p117
    %p119 = scmp.ne.s32.totalorder %s111, %s114
    %p120 = scmp.eq.s32.totalorder %s15, 0
    %p121 = por %p119, %p120
    %p122 = scmp.ne.s32.totalorder %s111, %s114
    %p123 = scmp.eq.s32.totalorder %s20, 1
    %p124 = por %p122, %p123
    %p125 = scmp.ne.s32.totalorder %s114, %s115
    %p126 = scmp.eq.s32.totalorder %s20, 0
    %p127 = por %p125, %p126
    %p128 = scmp.ne.s32.totalorder %s114, %s115
    %p129 = scmp.eq.s32.totalorder %s21, 1
    %p130 = por %p128, %p129
    %p132 = scmp.ne.s32.totalorder %s115, %s131
    %p133 = scmp.eq.s32.totalorder %s21, 0
    %p134 = por %p132, %p133
    %s135 = ssub.s32 %s22, %s34
    %p136 = scmp.eq.s32.totalorder %s135, 0
    %s138 = sadd.s32 %s137, 1
    %s139 = scalar_select %p136, %s137, %s138
    %p142 = pneg %p136
    %p143 = scmp.eq.s32.totalorder %s15, 1
    %p144 = por %p142, %p143
    %p145 = scmp.ne.s32.totalorder %s137, %s140
    %p146 = scmp.eq.s32.totalorder %s15, 0
    %p147 = por %p145, %p146
    %p148 = scmp.ne.s32.totalorder %s137, %s140
    %p149 = scmp.eq.s32.totalorder %s20, 1
    %p150 = por %p148, %p149
    %p151 = scmp.ne.s32.totalorder %s140, %s141
    %p152 = scmp.eq.s32.totalorder %s20, 0
    %p153 = por %p151, %p152
    %p154 = scmp.ne.s32.totalorder %s140, %s141
    %p155 = scmp.eq.s32.totalorder %s21, 1
    %p156 = por %p154, %p155
    %p158 = scmp.ne.s32.totalorder %s141, %s157
    %p159 = scmp.eq.s32.totalorder %s21, 0
    %p160 = por %p158, %p159
    %s162 = sadd.s32 %s161, 1
    %p165 = scmp.eq.s32.totalorder %s15, 1
    %p166 = scmp.ne.s32.totalorder %s161, %s163
    %p167 = scmp.eq.s32.totalorder %s15, 0
    %p168 = por %p166, %p167
    %p169 = scmp.ne.s32.totalorder %s161, %s163
    %p170 = scmp.eq.s32.totalorder %s20, 1
    %p171 = por %p169, %p170
    %p172 = scmp.ne.s32.totalorder %s163, %s164
    %p173 = scmp.eq.s32.totalorder %s20, 0
    %p174 = por %p172, %p173
    %p175 = scmp.ne.s32.totalorder %s163, %s164
    %p176 = scmp.eq.s32.totalorder %s21, 1
    %p177 = por %p175, %p176
    %p179 = scmp.ne.s32.totalorder %s164, %s178
    %p180 = scmp.eq.s32.totalorder %s21, 0
    %p181 = por %p179, %p180
    %s183 = sadd.s32 %s182, 1
    %p186 = scmp.eq.s32.totalorder %s15, 1
    %p187 = scmp.ne.s32.totalorder %s182, %s184
    %p188 = scmp.eq.s32.totalorder %s15, 0
    %p189 = por %p187, %p188
    %p190 = scmp.ne.s32.totalorder %s182, %s184
    %p191 = scmp.eq.s32.totalorder %s20, 1
    %p192 = por %p190, %p191
    %p193 = scmp.ne.s32.totalorder %s184, %s185
    %p194 = scmp.eq.s32.totalorder %s20, 0
    %p195 = por %p193, %p194
    %p196 = scmp.ne.s32.totalorder %s184, %s185
    %p197 = scmp.eq.s32.totalorder %s21, 1
    %p198 = por %p196, %p197
    %p200 = scmp.ne.s32.totalorder %s185, %s199
    %p201 = scmp.eq.s32.totalorder %s21, 0
    %p202 = por %p200, %p201
    %s203 = ssub.s32 %s22, %s34
    %s204 = ssub.s32 %s23, %s30
    %s205 = sor.u32 %s203, %s204
    %p206 = scmp.eq.s32.totalorder %s205, 0
    %s208 = sadd.s32 %s207, 1
    %s209 = scalar_select %p206, %s207, %s208
    %p212 = pneg %p206
    %p213 = scmp.eq.s32.totalorder %s15, 1
    %p214 = por %p212, %p213
    %p215 = scmp.ne.s32.totalorder %s207, %s210
    %p216 = scmp.eq.s32.totalorder %s15, 0
    %p217 = por %p215, %p216
    %p218 = scmp.ne.s32.totalorder %s207, %s210
    %p219 = scmp.eq.s32.totalorder %s20, 1
    %p220 = por %p218, %p219
    %p221 = scmp.ne.s32.totalorder %s210, %s211
    %p222 = scmp.eq.s32.totalorder %s20, 0
    %p223 = por %p221, %p222
    %p224 = scmp.ne.s32.totalorder %s210, %s211
    %p225 = scmp.eq.s32.totalorder %s21, 1
    %p226 = por %p224, %p225
    %p228 = scmp.ne.s32.totalorder %s211, %s227
    %p229 = scmp.eq.s32.totalorder %s21, 0
    %p230 = por %p228, %p229
    %s232 = sadd.s32 %s231, 1
    %p235 = scmp.eq.s32.totalorder %s15, 1
    %p236 = scmp.ne.s32.totalorder %s231, %s233
    %p237 = scmp.eq.s32.totalorder %s15, 0
    %p238 = por %p236, %p237
    %p239 = scmp.ne.s32.totalorder %s231, %s233
    %p240 = scmp.eq.s32.totalorder %s20, 1
    %p241 = por %p239, %p240
    %p242 = scmp.ne.s32.totalorder %s233, %s234
    %p243 = scmp.eq.s32.totalorder %s20, 0
    %p244 = por %p242, %p243
    %p245 = scmp.ne.s32.totalorder %s233, %s234
    %p246 = scmp.eq.s32.totalorder %s21, 1
    %p247 = por %p245, %p246
    %p249 = scmp.ne.s32.totalorder %s234, %s248
    %p250 = scmp.eq.s32.totalorder %s21, 0
    %p251 = por %p249, %p250
    %s253 = sadd.s32 %s252, 1
    %p256 = scmp.eq.s32.totalorder %s15, 1
    %p257 = scmp.ne.s32.totalorder %s252, %s254
    %p258 = scmp.eq.s32.totalorder %s15, 0
    %p259 = por %p257, %p258
    %p260 = scmp.ne.s32.totalorder %s252, %s254
    %p261 = scmp.eq.s32.totalorder %s20, 1
    %p262 = por %p260, %p261
    %p263 = scmp.ne.s32.totalorder %s254, %s255
    %p264 = scmp.eq.s32.totalorder %s20, 0
    %p265 = por %p263, %p264
    %p266 = scmp.ne.s32.totalorder %s254, %s255
    %p267 = scmp.eq.s32.totalorder %s21, 1
    %p268 = por %p266, %p267
    %p270 = scmp.ne.s32.totalorder %s255, %s269
    %p271 = scmp.eq.s32.totalorder %s21, 0
    %p272 = por %p270, %p271
    %s273 = ssub.s32 %s22, %s34
    %s274 = ssub.s32 %s23, %s30
    %s275 = sor.u32 %s273, %s274
    %p276 = scmp.eq.s32.totalorder %s275, 0
    %s278 = sadd.s32 %s277, 1
    %s279 = scalar_select %p276, %s277, %s278
    %p282 = pneg %p276
    %p283 = scmp.eq.s32.totalorder %s15, 1
    %p284 = por %p282, %p283
    %p285 = scmp.ne.s32.totalorder %s277, %s280
    %p286 = scmp.eq.s32.totalorder %s15, 0
    %p287 = por %p285, %p286
    %p288 = scmp.ne.s32.totalorder %s277, %s280
    %p289 = scmp.eq.s32.totalorder %s20, 1
    %p290 = por %p288, %p289
    %p291 = scmp.ne.s32.totalorder %s280, %s281
    %p292 = scmp.eq.s32.totalorder %s20, 0
    %p293 = por %p291, %p292
    %p294 = scmp.ne.s32.totalorder %s280, %s281
    %p295 = scmp.eq.s32.totalorder %s21, 1
    %p296 = por %p294, %p295
    %p298 = scmp.ne.s32.totalorder %s281, %s297
    %p299 = scmp.eq.s32.totalorder %s21, 0
    %p300 = por %p298, %p299
    %p301 = scmp.le.s32.totalorder 1, %s15
    %p302 = scmp.lt.s32.totalorder %s15, 3
    %p303 = pnand %p301, %p302
    %p304 = pneg %p303
    // Predicated region
    $region9: #{maisi_resblock_forward.5} parent=5 // pred_check
      _
    $region10: #{maisi_resblock_forward.5} parent=5 // pred_check_branch
      %306 = sbr.rel (%p303) target = $region12
    $region11: #{maisi_resblock_forward.5} parent=5 // pred_region
      %s307 = ssub.s32 %s15, 1
      // Predicated region
      $region13: #{maisi_resblock_forward.5} parent=11 // pred_check
        %p308 = pneg %p174
      $region14: #{maisi_resblock_forward.5} parent=11 // pred_check_branch
        %310 = sbr.rel (%p308) target = $region16
      $region15: #{maisi_resblock_forward.5} parent=11 // pred_region
        _
      $region16: #{maisi_resblock_forward.5} parent=11 // pred_fallthru
        _
      // Predicated region
      $region17: #{maisi_resblock_forward.5} parent=11 // pred_check
        %p311 = pneg %p195
      $region18: #{maisi_resblock_forward.5} parent=11 // pred_check_branch
        %313 = sbr.rel (%p311) target = $region20
      $region19: #{maisi_resblock_forward.5} parent=11 // pred_region
        _
      $region20: #{maisi_resblock_forward.5} parent=11 // pred_fallthru
        _
      // Predicated region
      $region21: #{maisi_resblock_forward.5} parent=11 // pred_check
        %p314 = pneg %p244
      $region22: #{maisi_resblock_forward.5} parent=11 // pred_check_branch
        %316 = sbr.rel (%p314) target = $region24
      $region23: #{maisi_resblock_forward.5} parent=11 // pred_region
        _
      $region24: #{maisi_resblock_forward.5} parent=11 // pred_fallthru
        _
      // Predicated region
      $region25: #{maisi_resblock_forward.5} parent=11 // pred_check
        %p317 = pneg %p265
      $region26: #{maisi_resblock_forward.5} parent=11 // pred_check_branch
        %319 = sbr.rel (%p317) target = $region28
      $region27: #{maisi_resblock_forward.5} parent=11 // pred_region
        _
      $region28: #{maisi_resblock_forward.5} parent=11 // pred_fallthru
        _
    $region12: #{maisi_resblock_forward.5} parent=5 // pred_fallthru
      _
    %p320 = scmp.lt.s32.totalorder %s15, 2
    // Predicated region
    $region29: #{maisi_resblock_forward.5} parent=5 // pred_check
      %p321 = pneg %p320
    $region30: #{maisi_resblock_forward.5} parent=5 // pred_check_branch
      %323 = sbr.rel (%p321) target = $region32
    $region31: #{maisi_resblock_forward.5} parent=5 // pred_region
      // Predicated region
      $region33: #{maisi_resblock_forward.5} parent=31 // pred_check
        %p324 = pneg %p57
      $region34: #{maisi_resblock_forward.5} parent=31 // pred_check_branch
        %326 = sbr.rel (%p324) target = $region36
      $region35: #{maisi_resblock_forward.5} parent=31 // pred_region
        %s327 = smul.u32 %s23, 16
        %s328 = ssub.s32 %s327, 1
        %p329 = scmp.gt.s32.totalorder %s328, 0
        %s330 = scalar_select %p329, %s328, 0
        %p331 = scmp.lt.s32.totalorder %s22, 1
        %s332 = scalar_select %p331, %s22, 1
        %p333 = scmp.lt.s32.totalorder %s330, 15
        %s334 = scalar_select %p333, %s330, 15
        %s335 = smul.addr %s334, 2
        %s336 = smul.addr %s332, 32
        %s337 = sadd.s32 %s335, %s336
        %s338 = smul.addr %s337, 4
        %s339 = scalar_lea.vmem %s0, %s338
        %s340 = smul.u32 %s23, 16
        %s341 = ssub.s32 %s340, 1
        %p342 = scmp.gt.s32.totalorder %s341, 0
        %s343 = scalar_select %p342, %s341, 0
      $region36: #{maisi_resblock_forward.5} parent=31 // pred_fallthru
        _
      // Predicated region
      $region37: #{maisi_resblock_forward.5} parent=31 // pred_check
        %p344 = pneg %p85
      $region38: #{maisi_resblock_forward.5} parent=31 // pred_check_branch
        %346 = sbr.rel (%p344) target = $region40
      $region39: #{maisi_resblock_forward.5} parent=31 // pred_region
        %s347 = smul.u32 16, %s23
        %p348 = scmp.lt.s32.totalorder %s22, 1
        %s349 = scalar_select %p348, %s22, 1
        %p350 = scmp.lt.s32.totalorder %s347, 15
        %s351 = scalar_select %p350, %s347, 15
        %s352 = smul.addr %s351, 2
        %s353 = smul.addr %s349, 32
        %s354 = sadd.s32 %s352, %s353
        %s355 = smul.addr %s354, 4
        %s356 = scalar_lea.vmem %s1, %s355
        %s357 = smul.u32 16, %s23
      $region40: #{maisi_resblock_forward.5} parent=31 // pred_fallthru
        _
      // Predicated region
      $region41: #{maisi_resblock_forward.5} parent=31 // pred_check
        %p358 = pneg %p121
      $region42: #{maisi_resblock_forward.5} parent=31 // pred_check_branch
        %360 = sbr.rel (%p358) target = $region44
      $region43: #{maisi_resblock_forward.5} parent=31 // pred_region
        %s361 = smul.u32 %s23, 16
        %s362 = sadd.s32 %s361, 16
        %p363 = scmp.lt.s32.totalorder %s362, 15
        %s364 = scalar_select %p363, %s362, 15
        %p365 = scmp.lt.s32.totalorder %s22, 1
        %s366 = scalar_select %p365, %s22, 1
        %p367 = scmp.lt.s32.totalorder %s364, 15
        %s368 = scalar_select %p367, %s364, 15
        %s369 = smul.addr %s368, 2
        %s370 = smul.addr %s366, 32
        %s371 = sadd.s32 %s369, %s370
        %s372 = smul.addr %s371, 4
        %s373 = scalar_lea.vmem %s2, %s372
        %s374 = smul.u32 %s23, 16
        %s375 = sadd.s32 %s374, 16
        %p376 = scmp.lt.s32.totalorder %s375, 15
        %s377 = scalar_select %p376, %s375, 15
      $region44: #{maisi_resblock_forward.5} parent=31 // pred_fallthru
        _
      // Predicated region
      $region45: #{maisi_resblock_forward.5} parent=31 // pred_check
        %p378 = pneg %p147
      $region46: #{maisi_resblock_forward.5} parent=31 // pred_check_branch
        %380 = sbr.rel (%p378) target = $region48
      $region47: #{maisi_resblock_forward.5} parent=31 // pred_region
        %p381 = scmp.lt.s32.totalorder %s22, 1
        %s382 = scalar_select %p381, %s22, 1
        %s383 = smul.addr %s382, 2
        %s384 = scalar_lea.vmem %s3, %s383
      $region48: #{maisi_resblock_forward.5} parent=31 // pred_fallthru
        _
      // Predicated region
      $region49: #{maisi_resblock_forward.5} parent=31 // pred_check
        %p385 = pneg %p217
      $region50: #{maisi_resblock_forward.5} parent=31 // pred_check_branch
        %387 = sbr.rel (%p385) target = $region52
      $region51: #{maisi_resblock_forward.5} parent=31 // pred_region
        %s388 = smul.u32 16, %s23
        %p389 = scmp.lt.s32.totalorder %s22, 1
        %s390 = scalar_select %p389, %s22, 1
        %p391 = scmp.lt.s32.totalorder %s388, 15
        %s392 = scalar_select %p391, %s388, 15
        %s393 = smul.addr %s392, 2
        %s394 = smul.addr %s390, 32
        %s395 = sadd.s32 %s393, %s394
        %s396 = smul.addr %s395, 8
        %s397 = scalar_lea.vmem %s6, %s396
        %s398 = smul.u32 16, %s23
      $region52: #{maisi_resblock_forward.5} parent=31 // pred_fallthru
        _
    $region32: #{maisi_resblock_forward.5} parent=5 // pred_fallthru
      _
    %p399 = scmp.le.s32.totalorder 1, %s15
    %p400 = scmp.lt.s32.totalorder %s15, 3
    %p401 = pnand %p399, %p400
    %p402 = pneg %p401
    // Predicated region
    $region53: #{maisi_resblock_forward.5} parent=5 // pred_check
      _
    $region54: #{maisi_resblock_forward.5} parent=5 // pred_check_branch
      %404 = sbr.rel (%p401) target = $region56
    $region55: #{maisi_resblock_forward.5} parent=5 // pred_region
      %s405 = ssub.s32 %s15, 1
      %s406 = smul.u32 %s25, 16
      %s407 = ssub.s32 %s406, 1
      %p408 = scmp.gt.s32.totalorder %s407, 0
      %s409 = scalar_select %p408, %s407, 0
      %p410 = scmp.lt.s32.totalorder %s24, 1
      %s411 = scalar_select %p410, %s24, 1
      %p412 = scmp.lt.s32.totalorder %s409, 15
      %s413 = scalar_select %p412, %s409, 15
      %s414 = smul.addr %s413, 2
      %s415 = smul.addr %s411, 32
      %s416 = sadd.s32 %s414, %s415
      %s417 = smul.addr %s416, 4
      %s418 = scalar_lea.vmem %s0, %s417
      %p419 = pneg %p63
      %p420 = pneg %p60
      %s421 = smul.u32 16, %s25
      %p422 = scmp.lt.s32.totalorder %s24, 1
      %s423 = scalar_select %p422, %s24, 1
      %p424 = scmp.lt.s32.totalorder %s421, 15
      %s425 = scalar_select %p424, %s421, 15
      %s426 = smul.addr %s425, 2
      %s427 = smul.addr %s423, 32
      %s428 = sadd.s32 %s426, %s427
      %s429 = smul.addr %s428, 4
      %s430 = scalar_lea.vmem %s1, %s429
      %p431 = pneg %p91
      %p432 = pneg %p88
      %s433 = smul.u32 %s25, 16
      %s434 = sadd.s32 %s433, 16
      %p435 = scmp.lt.s32.totalorder %s434, 15
      %s436 = scalar_select %p435, %s434, 15
      %p437 = scmp.lt.s32.totalorder %s24, 1
      %s438 = scalar_select %p437, %s24, 1
      %p439 = scmp.lt.s32.totalorder %s436, 15
      %s440 = scalar_select %p439, %s436, 15
      %s441 = smul.addr %s440, 2
      %s442 = smul.addr %s438, 32
      %s443 = sadd.s32 %s441, %s442
      %s444 = smul.addr %s443, 4
      %s445 = scalar_lea.vmem %s2, %s444
      %p446 = pneg %p127
      %p447 = pneg %p124
      %p448 = scmp.lt.s32.totalorder %s24, 1
      %s449 = scalar_select %p448, %s24, 1
      %s450 = smul.addr %s449, 2
      %s451 = scalar_lea.vmem %s3, %s450
      %p452 = pneg %p153
      %p453 = pneg %p150
      %p454 = pneg %p174
      %p455 = pneg %p171
      %p456 = pneg %p195
      %p457 = pneg %p192
      %s458 = smul.u32 16, %s25
      %p459 = scmp.lt.s32.totalorder %s24, 1
      %s460 = scalar_select %p459, %s24, 1
      %p461 = scmp.lt.s32.totalorder %s458, 15
      %s462 = scalar_select %p461, %s458, 15
      %s463 = smul.addr %s462, 2
      %s464 = smul.addr %s460, 32
      %s465 = sadd.s32 %s463, %s464
      %s466 = smul.addr %s465, 8
      %s467 = scalar_lea.vmem %s6, %s466
      %p468 = pneg %p223
      %p469 = pneg %p220
      %p470 = pneg %p244
      %p471 = pneg %p241
      %p472 = pneg %p265
      %p473 = pneg %p262
      %p474 = pneg %p293
      %p475 = pneg %p290
      %s476 = smul.u32 16, %s25
      %p477 = scmp.lt.s32.totalorder %s24, 1
      %s478 = scalar_select %p477, %s24, 1
      %p479 = scmp.lt.s32.totalorder %s476, 15
      %s480 = scalar_select %p479, %s476, 15
      %s481 = smul.addr %s480, 2
      %s482 = smul.addr %s478, 32
      %s483 = sadd.s32 %s481, %s482
      %s484 = smul.addr %s483, 8
      %s485 = scalar_lea.vmem %s9, %s484
      %s486 = smul.u32 %s25, 16
      %s487 = ssub.s32 %s486, 1
      %p488 = scmp.gt.s32.totalorder %s487, 0
      %s489 = scalar_select %p488, %s487, 0
      %p490 = scmp.lt.s32.totalorder %s24, 1
      %s491 = scalar_select %p490, %s24, 1
      %p492 = scmp.lt.s32.totalorder %s489, 15
      %s493 = scalar_select %p492, %s489, 15
      %s494 = smul.addr %s493, 2
      %s495 = smul.addr %s491, 32
      %s496 = sadd.s32 %s494, %s495
      %s497 = smul.addr %s496, 4
      %s498 = scalar_lea.vmem %s0, %s497
      %s499 = smul.u32 %s25, 16
      %s500 = ssub.s32 %s499, 1
      %p501 = scmp.gt.s32.totalorder %s500, 0
      %s502 = scalar_select %p501, %s500, 0
      %s503 = smul.u32 16, %s25
      %p504 = scmp.lt.s32.totalorder %s24, 1
      %s505 = scalar_select %p504, %s24, 1
      %p506 = scmp.lt.s32.totalorder %s503, 15
      %s507 = scalar_select %p506, %s503, 15
      %s508 = smul.addr %s507, 2
      %s509 = smul.addr %s505, 32
      %s510 = sadd.s32 %s508, %s509
      %s511 = smul.addr %s510, 4
      %s512 = scalar_lea.vmem %s1, %s511
      %s513 = smul.u32 16, %s25
      %s514 = smul.u32 %s25, 16
      %s515 = sadd.s32 %s514, 16
      %p516 = scmp.lt.s32.totalorder %s515, 15
      %s517 = scalar_select %p516, %s515, 15
      %p518 = scmp.lt.s32.totalorder %s24, 1
      %s519 = scalar_select %p518, %s24, 1
      %p520 = scmp.lt.s32.totalorder %s517, 15
      %s521 = scalar_select %p520, %s517, 15
      %s522 = smul.addr %s521, 2
      %s523 = smul.addr %s519, 32
      %s524 = sadd.s32 %s522, %s523
      %s525 = smul.addr %s524, 4
      %s526 = scalar_lea.vmem %s2, %s525
      %s527 = smul.u32 %s25, 16
      %s528 = sadd.s32 %s527, 16
      %p529 = scmp.lt.s32.totalorder %s528, 15
      %s530 = scalar_select %p529, %s528, 15
      %p531 = scmp.lt.s32.totalorder %s24, 1
      %s532 = scalar_select %p531, %s24, 1
      %s533 = smul.addr %s532, 2
      %s534 = scalar_lea.vmem %s3, %s533
      %s535 = smul.u32 16, %s25
      %p536 = scmp.lt.s32.totalorder %s24, 1
      %s537 = scalar_select %p536, %s24, 1
      %p538 = scmp.lt.s32.totalorder %s535, 15
      %s539 = scalar_select %p538, %s535, 15
      %s540 = smul.addr %s539, 2
      %s541 = smul.addr %s537, 32
      %s542 = sadd.s32 %s540, %s541
      %s543 = smul.addr %s542, 8
      %s544 = scalar_lea.vmem %s6, %s543
      %s545 = smul.u32 16, %s25
      %s546 = smul.u32 16, %s25
      %p547 = scmp.lt.s32.totalorder %s24, 1
      %s548 = scalar_select %p547, %s24, 1
      %p549 = scmp.lt.s32.totalorder %s546, 15
      %s550 = scalar_select %p549, %s546, 15
      %s551 = smul.addr %s550, 2
      %s552 = smul.addr %s548, 32
      %s553 = sadd.s32 %s551, %s552
      %s554 = smul.addr %s553, 8
      %s555 = scalar_lea.vmem %s9, %s554
      %s556 = smul.u32 16, %s25
      %v558 = vld [vmem:[%s534] sm:$0x3]
      %v559 = vld [vmem:[%s498] sm:$0xf]
      %v560 = vld [vmem:[%s498 + $0x4] sm:$0xf]
      %v561 = vunpack.c.l.bf16 %v559
      %v562 = vunpack.c.l.bf16 %v560
      %v563 = vperm.slane %v558, 0
      %v564 = vmul.f32 %v561, %v563
      %v565 = vmul.f32 %v562, %v563
      %v566 = vperm.slane %v558, 1
      %v567 = vadd.f32 %v564, %v566
      %v568 = vadd.f32 %v565, %v566
      %v569 = vxor.u32 %v567, 2147483648
      %v570 = vxor.u32 %v568, 2147483648
      %v571 = vmul.f32 %v569, 1.442695
      %v572 = vpow.pop %v571
      %v573 = vmul.f32 %v570, 1.442695
      %v574 = vpow.pop %v573
      %v575 = vadd.f32 %v572, 1.0
      %v576 = vadd.f32 %v574, 1.0
      %v577 = vrcp.pop %v575
      %v578 = vmul.f32 %v575, %v577
      %v579 = vsub.f32 1.0, %v578
      %v580 = vmul.f32 %v577, %v579
      %v581 = vadd.f32 %v577, %v580
      %vm582 = vweird.f32 %v575
      %vm583 = vweird.f32 %v577
      %vm584 = vmor %vm582, %vm583
      %v585 = vsel %vm584, %v577, %v581
      %v586 = vand.u32 2147483647, %v575
      %vm587 = vcmp.eq.f32.partialorder %v586, 8.507059e+37
      %v588 = vand.u32 %v575, 2147483648
      %v589 = vor.u32 1.1754944e-38, %v588
      %v590 = vsel %vm587, %v589, %v585
      %v591 = vmul.f32 1.0, %v590
      %v592 = vrcp.pop %v576
      %v593 = vmul.f32 %v576, %v592
      %v594 = vsub.f32 1.0, %v593
      %v595 = vmul.f32 %v592, %v594
      %v596 = vadd.f32 %v592, %v595
      %vm597 = vweird.f32 %v576
      %vm598 = vweird.f32 %v592
      %vm599 = vmor %vm597, %vm598
      %v600 = vsel %vm599, %v592, %v596
      %v601 = vand.u32 2147483647, %v576
      %vm602 = vcmp.eq.f32.partialorder %v601, 8.507059e+37
      %v603 = vand.u32 %v576, 2147483648
      %v604 = vor.u32 1.1754944e-38, %v603
      %v605 = vsel %vm602, %v604, %v600
      %v606 = vmul.f32 1.0, %v605
      %v607 = vmul.f32 %v567, %v591
      %v608 = vmul.f32 %v568, %v606
      %v609 = vpack.c.bf16 %v607, %v607
      %v610 = vpack.c.bf16 %v608, %v608
      %p611 = scmp.eq.s32.totalorder %s25, 0
      %s612 = scalar_select %p611, 1, 0
      %v613 = vstv %s612
      %vm614 = vcmp.eq.s32.totalorder %v613, 1
      %v615 = vsel %vm614, 0, %v609
      %v616 = vsel %vm614, 0, %v610
      %v617 = vld [vmem:[%s526] sm:$0xf]
      %v618 = vld [vmem:[%s526 + $0x4] sm:$0xf]
      %v619 = vunpack.c.l.bf16 %v617
      %v620 = vunpack.c.l.bf16 %v618
      %v621 = vmul.f32 %v619, %v563
      %v622 = vmul.f32 %v620, %v563
      %v623 = vadd.f32 %v621, %v566
      %v624 = vadd.f32 %v622, %v566
      %v625 = vxor.u32 %v623, 2147483648
      %v626 = vxor.u32 %v624, 2147483648
      %v627 = vmul.f32 %v625, 1.442695
      %v628 = vpow.pop %v627
      %v629 = vmul.f32 %v626, 1.442695
      %v630 = vpow.pop %v629
      %v631 = vadd.f32 %v628, 1.0
      %v632 = vadd.f32 %v630, 1.0
      %v633 = vrcp.pop %v631
      %v634 = vmul.f32 %v631, %v633
      %v635 = vsub.f32 1.0, %v634
      %v636 = vmul.f32 %v633, %v635
      %v637 = vadd.f32 %v633, %v636
      %vm638 = vweird.f32 %v631
      %vm639 = vweird.f32 %v633
      %vm640 = vmor %vm638, %vm639
      %v641 = vsel %vm640, %v633, %v637
      %v642 = vand.u32 2147483647, %v631
      %vm643 = vcmp.eq.f32.partialorder %v642, 8.507059e+37
      %v644 = vand.u32 %v631, 2147483648
      %v645 = vor.u32 1.1754944e-38, %v644
      %v646 = vsel %vm643, %v645, %v641
      %v647 = vmul.f32 1.0, %v646
      %v648 = vrcp.pop %v632
      %v649 = vmul.f32 %v632, %v648
      %v650 = vsub.f32 1.0, %v649
      %v651 = vmul.f32 %v648, %v650
      %v652 = vadd.f32 %v648, %v651
      %vm653 = vweird.f32 %v632
      %vm654 = vweird.f32 %v648
      %vm655 = vmor %vm653, %vm654
      %v656 = vsel %vm655, %v648, %v652
      %v657 = vand.u32 2147483647, %v632
      %vm658 = vcmp.eq.f32.partialorder %v657, 8.507059e+37
      %v659 = vand.u32 %v632, 2147483648
      %v660 = vor.u32 1.1754944e-38, %v659
      %v661 = vsel %vm658, %v660, %v656
      %v662 = vmul.f32 1.0, %v661
      %v663 = vmul.f32 %v623, %v647
      %v664 = vmul.f32 %v624, %v662
      %v665 = vpack.c.bf16 %v663, %v663
      %v666 = vpack.c.bf16 %v664, %v664
      %v667 = vsel %vm614, 0, %v665
      %v668 = vsel %vm614, 0, %v666
      %v669 = vld [vmem:[%s512] sm:$0xf]
      %v670 = vld [vmem:[%s512 + $0x4] sm:$0xf]
      %v671 = vld [vmem:[%s512 + $0x8] sm:$0xf]
      %v672 = vld [vmem:[%s512 + $0xc] sm:$0xf]
      %v673 = vld [vmem:[%s512 + $0x10] sm:$0xf]
      %v674 = vld [vmem:[%s512 + $0x14] sm:$0xf]
      %v675 = vld [vmem:[%s512 + $0x18] sm:$0xf]
      %v676 = vld [vmem:[%s512 + $0x1c] sm:$0xf]
      %v677 = vld [vmem:[%s512 + $0x20] sm:$0xf]
      %v678 = vld [vmem:[%s512 + $0x24] sm:$0xf]
      %v679 = vld [vmem:[%s512 + $0x28] sm:$0xf]
      %v680 = vld [vmem:[%s512 + $0x2c] sm:$0xf]
      %v681 = vld [vmem:[%s512 + $0x30] sm:$0xf]
      %v682 = vld [vmem:[%s512 + $0x34] sm:$0xf]
      %v683 = vld [vmem:[%s512 + $0x38] sm:$0xf]
      %v684 = vld [vmem:[%s512 + $0x3c] sm:$0xf]
      %v685 = vld [vmem:[%s512 + $0x40] sm:$0xf]
      %v686 = vld [vmem:[%s512 + $0x44] sm:$0xf]
      %v687 = vld [vmem:[%s512 + $0x48] sm:$0xf]
      %v688 = vld [vmem:[%s512 + $0x4c] sm:$0xf]
      %v689 = vld [vmem:[%s512 + $0x50] sm:$0xf]
      %v690 = vld [vmem:[%s512 + $0x54] sm:$0xf]
      %v691 = vld [vmem:[%s512 + $0x58] sm:$0xf]
      %v692 = vld [vmem:[%s512 + $0x5c] sm:$0xf]
      %v693 = vld [vmem:[%s512 + $0x60] sm:$0xf]
      %v694 = vld [vmem:[%s512 + $0x64] sm:$0xf]
      %v695 = vld [vmem:[%s512 + $0x68] sm:$0xf]
      %v696 = vld [vmem:[%s512 + $0x6c] sm:$0xf]
      %v697 = vld [vmem:[%s512 + $0x70] sm:$0xf]
      %v698 = vld [vmem:[%s512 + $0x74] sm:$0xf]
      %v699 = vld [vmem:[%s512 + $0x78] sm:$0xf]
      %v700 = vld [vmem:[%s512 + $0x7c] sm:$0xf]
      %v701 = vunpack.c.l.bf16 %v669
      %v702 = vunpack.c.l.bf16 %v670
      %v703 = vunpack.c.l.bf16 %v671
      %v704 = vunpack.c.l.bf16 %v672
      %v705 = vunpack.c.l.bf16 %v673
      %v706 = vunpack.c.l.bf16 %v674
      %v707 = vunpack.c.l.bf16 %v675
      %v708 = vunpack.c.l.bf16 %v676
      %v709 = vunpack.c.l.bf16 %v677
      %v710 = vunpack.c.l.bf16 %v678
      %v711 = vunpack.c.l.bf16 %v679
      %v712 = vunpack.c.l.bf16 %v680
      %v713 = vunpack.c.l.bf16 %v681
      %v714 = vunpack.c.l.bf16 %v682
      %v715 = vunpack.c.l.bf16 %v683
      %v716 = vunpack.c.l.bf16 %v684
      %v717 = vunpack.c.l.bf16 %v685
      %v718 = vunpack.c.l.bf16 %v686
      %v719 = vunpack.c.l.bf16 %v687
      %v720 = vunpack.c.l.bf16 %v688
      %v721 = vunpack.c.l.bf16 %v689
      %v722 = vunpack.c.l.bf16 %v690
      %v723 = vunpack.c.l.bf16 %v691
      %v724 = vunpack.c.l.bf16 %v692
      %v725 = vunpack.c.l.bf16 %v693
      %v726 = vunpack.c.l.bf16 %v694
      %v727 = vunpack.c.l.bf16 %v695
      %v728 = vunpack.c.l.bf16 %v696
      %v729 = vunpack.c.l.bf16 %v697
      %v730 = vunpack.c.l.bf16 %v698
      %v731 = vunpack.c.l.bf16 %v699
      %v732 = vunpack.c.l.bf16 %v700
      %v733 = vmul.f32 %v701, %v563
      %v734 = vmul.f32 %v702, %v563
      %v735 = vmul.f32 %v703, %v563
      %v736 = vmul.f32 %v704, %v563
      %v737 = vmul.f32 %v705, %v563
      %v738 = vmul.f32 %v706, %v563
      %v739 = vmul.f32 %v707, %v563
      %v740 = vmul.f32 %v708, %v563
      %v741 = vmul.f32 %v709, %v563
      %v742 = vmul.f32 %v710, %v563
      %v743 = vmul.f32 %v711, %v563
      %v744 = vmul.f32 %v712, %v563
      %v745 = vmul.f32 %v713, %v563
      %v746 = vmul.f32 %v714, %v563
      %v747 = vmul.f32 %v715, %v563
      %v748 = vmul.f32 %v716, %v563
      %v749 = vmul.f32 %v717, %v563
      %v750 = vmul.f32 %v718, %v563
      %v751 = vmul.f32 %v719, %v563
      %v752 = vmul.f32 %v720, %v563
      %v753 = vmul.f32 %v721, %v563
      %v754 = vmul.f32 %v722, %v563
      %v755 = vmul.f32 %v723, %v563
      %v756 = vmul.f32 %v724, %v563
      %v757 = vmul.f32 %v725, %v563
      %v758 = vmul.f32 %v726, %v563
      %v759 = vmul.f32 %v727, %v563
      %v760 = vmul.f32 %v728, %v563
      %v761 = vmul.f32 %v729, %v563
      %v762 = vmul.f32 %v730, %v563
      %v763 = vmul.f32 %v731, %v563
      %v764 = vmul.f32 %v732, %v563
      %v765 = vadd.f32 %v733, %v566
      %v766 = vadd.f32 %v734, %v566
      %v767 = vadd.f32 %v735, %v566
      %v768 = vadd.f32 %v736, %v566
      %v769 = vadd.f32 %v737, %v566
      %v770 = vadd.f32 %v738, %v566
      %v771 = vadd.f32 %v739, %v566
      %v772 = vadd.f32 %v740, %v566
      %v773 = vadd.f32 %v741, %v566
      %v774 = vadd.f32 %v742, %v566
      %v775 = vadd.f32 %v743, %v566
      %v776 = vadd.f32 %v744, %v566
      %v777 = vadd.f32 %v745, %v566
      %v778 = vadd.f32 %v746, %v566
      %v779 = vadd.f32 %v747, %v566
      %v780 = vadd.f32 %v748, %v566
      %v781 = vadd.f32 %v749, %v566
      %v782 = vadd.f32 %v750, %v566
      %v783 = vadd.f32 %v751, %v566
      %v784 = vadd.f32 %v752, %v566
      %v785 = vadd.f32 %v753, %v566
      %v786 = vadd.f32 %v754, %v566
      %v787 = vadd.f32 %v755, %v566
      %v788 = vadd.f32 %v756, %v566
      %v789 = vadd.f32 %v757, %v566
      %v790 = vadd.f32 %v758, %v566
      %v791 = vadd.f32 %v759, %v566
      %v792 = vadd.f32 %v760, %v566
      %v793 = vadd.f32 %v761, %v566
      %v794 = vadd.f32 %v762, %v566
      %v795 = vadd.f32 %v763, %v566
      %v796 = vadd.f32 %v764, %v566
      %v797 = vxor.u32 %v765, 2147483648
      %v798 = vxor.u32 %v766, 2147483648
      %v799 = vxor.u32 %v767, 2147483648
      %v800 = vxor.u32 %v768, 2147483648
      %v801 = vxor.u32 %v769, 2147483648
      %v802 = vxor.u32 %v770, 2147483648
      %v803 = vxor.u32 %v771, 2147483648
      %v804 = vxor.u32 %v772, 2147483648
      %v805 = vxor.u32 %v773, 2147483648
      %v806 = vxor.u32 %v774, 2147483648
      %v807 = vxor.u32 %v775, 2147483648
      %v808 = vxor.u32 %v776, 2147483648
      %v809 = vxor.u32 %v777, 2147483648
      %v810 = vxor.u32 %v778, 2147483648
      %v811 = vxor.u32 %v779, 2147483648
      %v812 = vxor.u32 %v780, 2147483648
      %v813 = vxor.u32 %v781, 2147483648
      %v814 = vxor.u32 %v782, 2147483648
      %v815 = vxor.u32 %v783, 2147483648
      %v816 = vxor.u32 %v784, 2147483648
      %v817 = vxor.u32 %v785, 2147483648
      %v818 = vxor.u32 %v786, 2147483648
      %v819 = vxor.u32 %v787, 2147483648
      %v820 = vxor.u32 %v788, 2147483648
      %v821 = vxor.u32 %v789, 2147483648
      %v822 = vxor.u32 %v790, 2147483648
      %v823 = vxor.u32 %v791, 2147483648
      %v824 = vxor.u32 %v792, 2147483648
      %v825 = vxor.u32 %v793, 2147483648
      %v826 = vxor.u32 %v794, 2147483648
      %v827 = vxor.u32 %v795, 2147483648
      %v828 = vxor.u32 %v796, 2147483648
      %v829 = vmul.f32 %v797, 1.442695
      %v830 = vpow.pop %v829
      %v831 = vmul.f32 %v798, 1.442695
      %v832 = vpow.pop %v831
      %v833 = vmul.f32 %v799, 1.442695
      %v834 = vpow.pop %v833
      %v835 = vmul.f32 %v800, 1.442695
      %v836 = vpow.pop %v835
      %v837 = vmul.f32 %v801, 1.442695
      %v838 = vpow.pop %v837
      %v839 = vmul.f32 %v802, 1.442695
      %v840 = vpow.pop %v839
      %v841 = vmul.f32 %v803, 1.442695
      %v842 = vpow.pop %v841
      %v843 = vmul.f32 %v804, 1.442695
      %v844 = vpow.pop %v843
      %v845 = vmul.f32 %v805, 1.442695
      %v846 = vpow.pop %v845
      %v847 = vmul.f32 %v806, 1.442695
      %v848 = vpow.pop %v847
      %v849 = vmul.f32 %v807, 1.442695
      %v850 = vpow.pop %v849
      %v851 = vmul.f32 %v808, 1.442695
      %v852 = vpow.pop %v851
      %v853 = vmul.f32 %v809, 1.442695
      %v854 = vpow.pop %v853
      %v855 = vmul.f32 %v810, 1.442695
      %v856 = vpow.pop %v855
      %v857 = vmul.f32 %v811, 1.442695
      %v858 = vpow.pop %v857
      %v859 = vmul.f32 %v812, 1.442695
      %v860 = vpow.pop %v859
      %v861 = vmul.f32 %v813, 1.442695
      %v862 = vpow.pop %v861
      %v863 = vmul.f32 %v814, 1.442695
      %v864 = vpow.pop %v863
      %v865 = vmul.f32 %v815, 1.442695
      %v866 = vpow.pop %v865
      %v867 = vmul.f32 %v816, 1.442695
      %v868 = vpow.pop %v867
      %v869 = vmul.f32 %v817, 1.442695
      %v870 = vpow.pop %v869
      %v871 = vmul.f32 %v818, 1.442695
      %v872 = vpow.pop %v871
      %v873 = vmul.f32 %v819, 1.442695
      %v874 = vpow.pop %v873
      %v875 = vmul.f32 %v820, 1.442695
      %v876 = vpow.pop %v875
      %v877 = vmul.f32 %v821, 1.442695
      %v878 = vpow.pop %v877
      %v879 = vmul.f32 %v822, 1.442695
      %v880 = vpow.pop %v879
      %v881 = vmul.f32 %v823, 1.442695
      %v882 = vpow.pop %v881
      %v883 = vmul.f32 %v824, 1.442695
      %v884 = vpow.pop %v883
      %v885 = vmul.f32 %v825, 1.442695
      %v886 = vpow.pop %v885
      %v887 = vmul.f32 %v826, 1.442695
      %v888 = vpow.pop %v887
      %v889 = vmul.f32 %v827, 1.442695
      %v890 = vpow.pop %v889
      %v891 = vmul.f32 %v828, 1.442695
      %v892 = vpow.pop %v891
      %v893 = vadd.f32 %v830, 1.0
      %v894 = vadd.f32 %v832, 1.0
      %v895 = vadd.f32 %v834, 1.0
      %v896 = vadd.f32 %v836, 1.0
      %v897 = vadd.f32 %v838, 1.0
      %v898 = vadd.f32 %v840, 1.0
      %v899 = vadd.f32 %v842, 1.0
      %v900 = vadd.f32 %v844, 1.0
      %v901 = vadd.f32 %v846, 1.0
      %v902 = vadd.f32 %v848, 1.0
      %v903 = vadd.f32 %v850, 1.0
      %v904 = vadd.f32 %v852, 1.0
      %v905 = vadd.f32 %v854, 1.0
      %v906 = vadd.f32 %v856, 1.0
      %v907 = vadd.f32 %v858, 1.0
      %v908 = vadd.f32 %v860, 1.0
      %v909 = vadd.f32 %v862, 1.0
      %v910 = vadd.f32 %v864, 1.0
      %v911 = vadd.f32 %v866, 1.0
      %v912 = vadd.f32 %v868, 1.0
      %v913 = vadd.f32 %v870, 1.0
      %v914 = vadd.f32 %v872, 1.0
      %v915 = vadd.f32 %v874, 1.0
      %v916 = vadd.f32 %v876, 1.0
      %v917 = vadd.f32 %v878, 1.0
      %v918 = vadd.f32 %v880, 1.0
      %v919 = vadd.f32 %v882, 1.0
      %v920 = vadd.f32 %v884, 1.0
      %v921 = vadd.f32 %v886, 1.0
      %v922 = vadd.f32 %v888, 1.0
      %v923 = vadd.f32 %v890, 1.0
      %v924 = vadd.f32 %v892, 1.0
      %v925 = vrcp.pop %v893
      %v926 = vmul.f32 %v893, %v925
      %v927 = vsub.f32 1.0, %v926
      %v928 = vmul.f32 %v925, %v927
      %v929 = vadd.f32 %v925, %v928
      %vm930 = vweird.f32 %v893
      %vm931 = vweird.f32 %v925
      %vm932 = vmor %vm930, %vm931
      %v933 = vsel %vm932, %v925, %v929
      %v934 = vand.u32 2147483647, %v893
      %vm935 = vcmp.eq.f32.partialorder %v934, 8.507059e+37
      %v936 = vand.u32 %v893, 2147483648
      %v937 = vor.u32 1.1754944e-38, %v936
      %v938 = vsel %vm935, %v937, %v933
      %v939 = vmul.f32 1.0, %v938
      %v940 = vrcp.pop %v894
      %v941 = vmul.f32 %v894, %v940
      %v942 = vsub.f32 1.0, %v941
      %v943 = vmul.f32 %v940, %v942
      %v944 = vadd.f32 %v940, %v943
      %vm945 = vweird.f32 %v894
      %vm946 = vweird.f32 %v940
      %vm947 = vmor %vm945, %vm946
      %v948 = vsel %vm947, %v940, %v944
      %v949 = vand.u32 2147483647, %v894
      %vm950 = vcmp.eq.f32.partialorder %v949, 8.507059e+37
      %v951 = vand.u32 %v894, 2147483648
      %v952 = vor.u32 1.1754944e-38, %v951
      %v953 = vsel %vm950, %v952, %v948
      %v954 = vmul.f32 1.0, %v953
      %v955 = vrcp.pop %v895
      %v956 = vmul.f32 %v895, %v955
      %v957 = vsub.f32 1.0, %v956
      %v958 = vmul.f32 %v955, %v957
      %v959 = vadd.f32 %v955, %v958
      %vm960 = vweird.f32 %v895
      %vm961 = vweird.f32 %v955
      %vm962 = vmor %vm960, %vm961
      %v963 = vsel %vm962, %v955, %v959
      %v964 = vand.u32 2147483647, %v895
      %vm965 = vcmp.eq.f32.partialorder %v964, 8.507059e+37
      %v966 = vand.u32 %v895, 2147483648
      %v967 = vor.u32 1.1754944e-38, %v966
      %v968 = vsel %vm965, %v967, %v963
      %v969 = vmul.f32 1.0, %v968
      %v970 = vrcp.pop %v896
      %v971 = vmul.f32 %v896, %v970
      %v972 = vsub.f32 1.0, %v971
      %v973 = vmul.f32 %v970, %v972
      %v974 = vadd.f32 %v970, %v973
      %vm975 = vweird.f32 %v896
      %vm976 = vweird.f32 %v970
      %vm977 = vmor %vm975, %vm976
      %v978 = vsel %vm977, %v970, %v974
      %v979 = vand.u32 2147483647, %v896
      %vm980 = vcmp.eq.f32.partialorder %v979, 8.507059e+37
      %v981 = vand.u32 %v896, 2147483648
      %v982 = vor.u32 1.1754944e-38, %v981
      %v983 = vsel %vm980, %v982, %v978
      %v984 = vmul.f32 1.0, %v983
      %v985 = vrcp.pop %v897
      %v986 = vmul.f32 %v897, %v985
      %v987 = vsub.f32 1.0, %v986
      %v988 = vmul.f32 %v985, %v987
      %v989 = vadd.f32 %v985, %v988
      %vm990 = vweird.f32 %v897
      %vm991 = vweird.f32 %v985
      %vm992 = vmor %vm990, %vm991
      %v993 = vsel %vm992, %v985, %v989
      %v994 = vand.u32 2147483647, %v897
      %vm995 = vcmp.eq.f32.partialorder %v994, 8.507059e+37
      %v996 = vand.u32 %v897, 2147483648
      %v997 = vor.u32 1.1754944e-38, %v996
      %v998 = vsel %vm995, %v997, %v993
      %v999 = vmul.f32 1.0, %v998
      %v1000 = vrcp.pop %v898
      %v1001 = vmul.f32 %v898, %v1000
      %v1002 = vsub.f32 1.0, %v1001
      %v1003 = vmul.f32 %v1000, %v1002
      %v1004 = vadd.f32 %v1000, %v1003
      %vm1005 = vweird.f32 %v898
      %vm1006 = vweird.f32 %v1000
      %vm1007 = vmor %vm1005, %vm1006
      %v1008 = vsel %vm1007, %v1000, %v1004
      %v1009 = vand.u32 2147483647, %v898
      %vm1010 = vcmp.eq.f32.partialorder %v1009, 8.507059e+37
      %v1011 = vand.u32 %v898, 2147483648
      %v1012 = vor.u32 1.1754944e-38, %v1011
      %v1013 = vsel %vm1010, %v1012, %v1008
      %v1014 = vmul.f32 1.0, %v1013
      %v1015 = vrcp.pop %v899
      %v1016 = vmul.f32 %v899, %v1015
      %v1017 = vsub.f32 1.0, %v1016
      %v1018 = vmul.f32 %v1015, %v1017
      %v1019 = vadd.f32 %v1015, %v1018
      %vm1020 = vweird.f32 %v899
      %vm1021 = vweird.f32 %v1015
      %vm1022 = vmor %vm1020, %vm1021
      %v1023 = vsel %vm1022, %v1015, %v1019
      %v1024 = vand.u32 2147483647, %v899
      %vm1025 = vcmp.eq.f32.partialorder %v1024, 8.507059e+37
      %v1026 = vand.u32 %v899, 2147483648
      %v1027 = vor.u32 1.1754944e-38, %v1026
      %v1028 = vsel %vm1025, %v1027, %v1023
      %v1029 = vmul.f32 1.0, %v1028
      %v1030 = vrcp.pop %v900
      %v1031 = vmul.f32 %v900, %v1030
      %v1032 = vsub.f32 1.0, %v1031
      %v1033 = vmul.f32 %v1030, %v1032
      %v1034 = vadd.f32 %v1030, %v1033
      %vm1035 = vweird.f32 %v900
      %vm1036 = vweird.f32 %v1030
      %vm1037 = vmor %vm1035, %vm1036
      %v1038 = vsel %vm1037, %v1030, %v1034
      %v1039 = vand.u32 2147483647, %v900
      %vm1040 = vcmp.eq.f32.partialorder %v1039, 8.507059e+37
      %v1041 = vand.u32 %v900, 2147483648
      %v1042 = vor.u32 1.1754944e-38, %v1041
      %v1043 = vsel %vm1040, %v1042, %v1038
      %v1044 = vmul.f32 1.0, %v1043
      %v1045 = vrcp.pop %v901
      %v1046 = vmul.f32 %v901, %v1045
      %v1047 = vsub.f32 1.0, %v1046
      %v1048 = vmul.f32 %v1045, %v1047
      %v1049 = vadd.f32 %v1045, %v1048
      %vm1050 = vweird.f32 %v901
      %vm1051 = vweird.f32 %v1045
      %vm1052 = vmor %vm1050, %vm1051
      %v1053 = vsel %vm1052, %v1045, %v1049
      %v1054 = vand.u32 2147483647, %v901
      %vm1055 = vcmp.eq.f32.partialorder %v1054, 8.507059e+37
      %v1056 = vand.u32 %v901, 2147483648
      %v1057 = vor.u32 1.1754944e-38, %v1056
      %v1058 = vsel %vm1055, %v1057, %v1053
      %v1059 = vmul.f32 1.0, %v1058
      %v1060 = vrcp.pop %v902
      %v1061 = vmul.f32 %v902, %v1060
      %v1062 = vsub.f32 1.0, %v1061
      %v1063 = vmul.f32 %v1060, %v1062
      %v1064 = vadd.f32 %v1060, %v1063
      %vm1065 = vweird.f32 %v902
      %vm1066 = vweird.f32 %v1060
      %vm1067 = vmor %vm1065, %vm1066
      %v1068 = vsel %vm1067, %v1060, %v1064
      %v1069 = vand.u32 2147483647, %v902
      %vm1070 = vcmp.eq.f32.partialorder %v1069, 8.507059e+37
      %v1071 = vand.u32 %v902, 2147483648
      %v1072 = vor.u32 1.1754944e-38, %v1071
      %v1073 = vsel %vm1070, %v1072, %v1068
      %v1074 = vmul.f32 1.0, %v1073
      %v1075 = vrcp.pop %v903
      %v1076 = vmul.f32 %v903, %v1075
      %v1077 = vsub.f32 1.0, %v1076
      %v1078 = vmul.f32 %v1075, %v1077
      %v1079 = vadd.f32 %v1075, %v1078
      %vm1080 = vweird.f32 %v903
      %vm1081 = vweird.f32 %v1075
      %vm1082 = vmor %vm1080, %vm1081
      %v1083 = vsel %vm1082, %v1075, %v1079
      %v1084 = vand.u32 2147483647, %v903
      %vm1085 = vcmp.eq.f32.partialorder %v1084, 8.507059e+37
      %v1086 = vand.u32 %v903, 2147483648
      %v1087 = vor.u32 1.1754944e-38, %v1086
      %v1088 = vsel %vm1085, %v1087, %v1083
      %v1089 = vmul.f32 1.0, %v1088
      %v1090 = vrcp.pop %v904
      %v1091 = vmul.f32 %v904, %v1090
      %v1092 = vsub.f32 1.0, %v1091
      %v1093 = vmul.f32 %v1090, %v1092
      %v1094 = vadd.f32 %v1090, %v1093
      %vm1095 = vweird.f32 %v904
      %vm1096 = vweird.f32 %v1090
      %vm1097 = vmor %vm1095, %vm1096
      %v1098 = vsel %vm1097, %v1090, %v1094
      %v1099 = vand.u32 2147483647, %v904
      %vm1100 = vcmp.eq.f32.partialorder %v1099, 8.507059e+37
      %v1101 = vand.u32 %v904, 2147483648
      %v1102 = vor.u32 1.1754944e-38, %v1101
      %v1103 = vsel %vm1100, %v1102, %v1098
      %v1104 = vmul.f32 1.0, %v1103
      %v1105 = vrcp.pop %v905
      %v1106 = vmul.f32 %v905, %v1105
      %v1107 = vsub.f32 1.0, %v1106
      %v1108 = vmul.f32 %v1105, %v1107
      %v1109 = vadd.f32 %v1105, %v1108
      %vm1110 = vweird.f32 %v905
      %vm1111 = vweird.f32 %v1105
      %vm1112 = vmor %vm1110, %vm1111
      %v1113 = vsel %vm1112, %v1105, %v1109
      %v1114 = vand.u32 2147483647, %v905
      %vm1115 = vcmp.eq.f32.partialorder %v1114, 8.507059e+37
      %v1116 = vand.u32 %v905, 2147483648
      %v1117 = vor.u32 1.1754944e-38, %v1116
      %v1118 = vsel %vm1115, %v1117, %v1113
      %v1119 = vmul.f32 1.0, %v1118
      %v1120 = vrcp.pop %v906
      %v1121 = vmul.f32 %v906, %v1120
      %v1122 = vsub.f32 1.0, %v1121
      %v1123 = vmul.f32 %v1120, %v1122
      %v1124 = vadd.f32 %v1120, %v1123
      %vm1125 = vweird.f32 %v906
      %vm1126 = vweird.f32 %v1120
      %vm1127 = vmor %vm1125, %vm1126
      %v1128 = vsel %vm1127, %v1120, %v1124
      %v1129 = vand.u32 2147483647, %v906
      %vm1130 = vcmp.eq.f32.partialorder %v1129, 8.507059e+37
      %v1131 = vand.u32 %v906, 2147483648
      %v1132 = vor.u32 1.1754944e-38, %v1131
      %v1133 = vsel %vm1130, %v1132, %v1128
      %v1134 = vmul.f32 1.0, %v1133
      %v1135 = vrcp.pop %v907
      %v1136 = vmul.f32 %v907, %v1135
      %v1137 = vsub.f32 1.0, %v1136
      %v1138 = vmul.f32 %v1135, %v1137
      %v1139 = vadd.f32 %v1135, %v1138
      %vm1140 = vweird.f32 %v907
      %vm1141 = vweird.f32 %v1135
      %vm1142 = vmor %vm1140, %vm1141
      %v1143 = vsel %vm1142, %v1135, %v1139
      %v1144 = vand.u32 2147483647, %v907
      %vm1145 = vcmp.eq.f32.partialorder %v1144, 8.507059e+37
      %v1146 = vand.u32 %v907, 2147483648
      %v1147 = vor.u32 1.1754944e-38, %v1146
      %v1148 = vsel %vm1145, %v1147, %v1143
      %v1149 = vmul.f32 1.0, %v1148
      %v1150 = vrcp.pop %v908
      %v1151 = vmul.f32 %v908, %v1150
      %v1152 = vsub.f32 1.0, %v1151
      %v1153 = vmul.f32 %v1150, %v1152
      %v1154 = vadd.f32 %v1150, %v1153
      %vm1155 = vweird.f32 %v908
      %vm1156 = vweird.f32 %v1150
      %vm1157 = vmor %vm1155, %vm1156
      %v1158 = vsel %vm1157, %v1150, %v1154
      %v1159 = vand.u32 2147483647, %v908
      %vm1160 = vcmp.eq.f32.partialorder %v1159, 8.507059e+37
      %v1161 = vand.u32 %v908, 2147483648
      %v1162 = vor.u32 1.1754944e-38, %v1161
      %v1163 = vsel %vm1160, %v1162, %v1158
      %v1164 = vmul.f32 1.0, %v1163
      %v1165 = vrcp.pop %v909
      %v1166 = vmul.f32 %v909, %v1165
      %v1167 = vsub.f32 1.0, %v1166
      %v1168 = vmul.f32 %v1165, %v1167
      %v1169 = vadd.f32 %v1165, %v1168
      %vm1170 = vweird.f32 %v909
      %vm1171 = vweird.f32 %v1165
      %vm1172 = vmor %vm1170, %vm1171
      %v1173 = vsel %vm1172, %v1165, %v1169
      %v1174 = vand.u32 2147483647, %v909
      %vm1175 = vcmp.eq.f32.partialorder %v1174, 8.507059e+37
      %v1176 = vand.u32 %v909, 2147483648
      %v1177 = vor.u32 1.1754944e-38, %v1176
      %v1178 = vsel %vm1175, %v1177, %v1173
      %v1179 = vmul.f32 1.0, %v1178
      %v1180 = vrcp.pop %v910
      %v1181 = vmul.f32 %v910, %v1180
      %v1182 = vsub.f32 1.0, %v1181
      %v1183 = vmul.f32 %v1180, %v1182
      %v1184 = vadd.f32 %v1180, %v1183
      %vm1185 = vweird.f32 %v910
      %vm1186 = vweird.f32 %v1180
      %vm1187 = vmor %vm1185, %vm1186
      %v1188 = vsel %vm1187, %v1180, %v1184
      %v1189 = vand.u32 2147483647, %v910
      %vm1190 = vcmp.eq.f32.partialorder %v1189, 8.507059e+37
      %v1191 = vand.u32 %v910, 2147483648
      %v1192 = vor.u32 1.1754944e-38, %v1191
      %v1193 = vsel %vm1190, %v1192, %v1188
      %v1194 = vmul.f32 1.0, %v1193
      %v1195 = vrcp.pop %v911
      %v1196 = vmul.f32 %v911, %v1195
      %v1197 = vsub.f32 1.0, %v1196
      %v1198 = vmul.f32 %v1195, %v1197
      %v1199 = vadd.f32 %v1195, %v1198
      %vm1200 = vweird.f32 %v911
      %vm1201 = vweird.f32 %v1195
      %vm1202 = vmor %vm1200, %vm1201
      %v1203 = vsel %vm1202, %v1195, %v1199
      %v1204 = vand.u32 2147483647, %v911
      %vm1205 = vcmp.eq.f32.partialorder %v1204, 8.507059e+37
      %v1206 = vand.u32 %v911, 2147483648
      %v1207 = vor.u32 1.1754944e-38, %v1206
      %v1208 = vsel %vm1205, %v1207, %v1203
      %v1209 = vmul.f32 1.0, %v1208
      %v1210 = vrcp.pop %v912
      %v1211 = vmul.f32 %v912, %v1210
      %v1212 = vsub.f32 1.0, %v1211
      %v1213 = vmul.f32 %v1210, %v1212
      %v1214 = vadd.f32 %v1210, %v1213
      %vm1215 = vweird.f32 %v912
      %vm1216 = vweird.f32 %v1210
      %vm1217 = vmor %vm1215, %vm1216
      %v1218 = vsel %vm1217, %v1210, %v1214
      %v1219 = vand.u32 2147483647, %v912
      %vm1220 = vcmp.eq.f32.partialorder %v1219, 8.507059e+37
      %v1221 = vand.u32 %v912, 2147483648
      %v1222 = vor.u32 1.1754944e-38, %v1221
      %v1223 = vsel %vm1220, %v1222, %v1218
      %v1224 = vmul.f32 1.0, %v1223
      %v1225 = vrcp.pop %v913
      %v1226 = vmul.f32 %v913, %v1225
      %v1227 = vsub.f32 1.0, %v1226
      %v1228 = vmul.f32 %v1225, %v1227
      %v1229 = vadd.f32 %v1225, %v1228
      %vm1230 = vweird.f32 %v913
      %vm1231 = vweird.f32 %v1225
      %vm1232 = vmor %vm1230, %vm1231
      %v1233 = vsel %vm1232, %v1225, %v1229
      %v1234 = vand.u32 2147483647, %v913
      %vm1235 = vcmp.eq.f32.partialorder %v1234, 8.507059e+37
      %v1236 = vand.u32 %v913, 2147483648
      %v1237 = vor.u32 1.1754944e-38, %v1236
      %v1238 = vsel %vm1235, %v1237, %v1233
      %v1239 = vmul.f32 1.0, %v1238
      %v1240 = vrcp.pop %v914
      %v1241 = vmul.f32 %v914, %v1240
      %v1242 = vsub.f32 1.0, %v1241
      %v1243 = vmul.f32 %v1240, %v1242
      %v1244 = vadd.f32 %v1240, %v1243
      %vm1245 = vweird.f32 %v914
      %vm1246 = vweird.f32 %v1240
      %vm1247 = vmor %vm1245, %vm1246
      %v1248 = vsel %vm1247, %v1240, %v1244
      %v1249 = vand.u32 2147483647, %v914
      %vm1250 = vcmp.eq.f32.partialorder %v1249, 8.507059e+37
      %v1251 = vand.u32 %v914, 2147483648
      %v1252 = vor.u32 1.1754944e-38, %v1251
      %v1253 = vsel %vm1250, %v1252, %v1248
      %v1254 = vmul.f32 1.0, %v1253
      %v1255 = vrcp.pop %v915
      %v1256 = vmul.f32 %v915, %v1255
      %v1257 = vsub.f32 1.0, %v1256
      %v1258 = vmul.f32 %v1255, %v1257
      %v1259 = vadd.f32 %v1255, %v1258
      %vm1260 = vweird.f32 %v915
      %vm1261 = vweird.f32 %v1255
      %vm1262 = vmor %vm1260, %vm1261
      %v1263 = vsel %vm1262, %v1255, %v1259
      %v1264 = vand.u32 2147483647, %v915
      %vm1265 = vcmp.eq.f32.partialorder %v1264, 8.507059e+37
      %v1266 = vand.u32 %v915, 2147483648
      %v1267 = vor.u32 1.1754944e-38, %v1266
      %v1268 = vsel %vm1265, %v1267, %v1263
      %v1269 = vmul.f32 1.0, %v1268
      %v1270 = vrcp.pop %v916
      %v1271 = vmul.f32 %v916, %v1270
      %v1272 = vsub.f32 1.0, %v1271
      %v1273 = vmul.f32 %v1270, %v1272
      %v1274 = vadd.f32 %v1270, %v1273
      %vm1275 = vweird.f32 %v916
      %vm1276 = vweird.f32 %v1270
      %vm1277 = vmor %vm1275, %vm1276
      %v1278 = vsel %vm1277, %v1270, %v1274
      %v1279 = vand.u32 2147483647, %v916
      %vm1280 = vcmp.eq.f32.partialorder %v1279, 8.507059e+37
      %v1281 = vand.u32 %v916, 2147483648
      %v1282 = vor.u32 1.1754944e-38, %v1281
      %v1283 = vsel %vm1280, %v1282, %v1278
      %v1284 = vmul.f32 1.0, %v1283
      %v1285 = vrcp.pop %v917
      %v1286 = vmul.f32 %v917, %v1285
      %v1287 = vsub.f32 1.0, %v1286
      %v1288 = vmul.f32 %v1285, %v1287
      %v1289 = vadd.f32 %v1285, %v1288
      %vm1290 = vweird.f32 %v917
      %vm1291 = vweird.f32 %v1285
      %vm1292 = vmor %vm1290, %vm1291
      %v1293 = vsel %vm1292, %v1285, %v1289
      %v1294 = vand.u32 2147483647, %v917
      %vm1295 = vcmp.eq.f32.partialorder %v1294, 8.507059e+37
      %v1296 = vand.u32 %v917, 2147483648
      %v1297 = vor.u32 1.1754944e-38, %v1296
      %v1298 = vsel %vm1295, %v1297, %v1293
      %v1299 = vmul.f32 1.0, %v1298
      %v1300 = vrcp.pop %v918
      %v1301 = vmul.f32 %v918, %v1300
      %v1302 = vsub.f32 1.0, %v1301
      %v1303 = vmul.f32 %v1300, %v1302
      %v1304 = vadd.f32 %v1300, %v1303
      %vm1305 = vweird.f32 %v918
      %vm1306 = vweird.f32 %v1300
      %vm1307 = vmor %vm1305, %vm1306
      %v1308 = vsel %vm1307, %v1300, %v1304
      %v1309 = vand.u32 2147483647, %v918
      %vm1310 = vcmp.eq.f32.partialorder %v1309, 8.507059e+37
      %v1311 = vand.u32 %v918, 2147483648
      %v1312 = vor.u32 1.1754944e-38, %v1311
      %v1313 = vsel %vm1310, %v1312, %v1308
      %v1314 = vmul.f32 1.0, %v1313
      %v1315 = vrcp.pop %v919
      %v1316 = vmul.f32 %v919, %v1315
      %v1317 = vsub.f32 1.0, %v1316
      %v1318 = vmul.f32 %v1315, %v1317
      %v1319 = vadd.f32 %v1315, %v1318
      %vm1320 = vweird.f32 %v919
      %vm1321 = vweird.f32 %v1315
      %vm1322 = vmor %vm1320, %vm1321
      %v1323 = vsel %vm1322, %v1315, %v1319
      %v1324 = vand.u32 2147483647, %v919
      %vm1325 = vcmp.eq.f32.partialorder %v1324, 8.507059e+37
      %v1326 = vand.u32 %v919, 2147483648
      %v1327 = vor.u32 1.1754944e-38, %v1326
      %v1328 = vsel %vm1325, %v1327, %v1323
      %v1329 = vmul.f32 1.0, %v1328
      %v1330 = vrcp.pop %v920
      %v1331 = vmul.f32 %v920, %v1330
      %v1332 = vsub.f32 1.0, %v1331
      %v1333 = vmul.f32 %v1330, %v1332
      %v1334 = vadd.f32 %v1330, %v1333
      %vm1335 = vweird.f32 %v920
      %vm1336 = vweird.f32 %v1330
      %vm1337 = vmor %vm1335, %vm1336
      %v1338 = vsel %vm1337, %v1330, %v1334
      %v1339 = vand.u32 2147483647, %v920
      %vm1340 = vcmp.eq.f32.partialorder %v1339, 8.507059e+37
      %v1341 = vand.u32 %v920, 2147483648
      %v1342 = vor.u32 1.1754944e-38, %v1341
      %v1343 = vsel %vm1340, %v1342, %v1338
      %v1344 = vmul.f32 1.0, %v1343
      %v1345 = vrcp.pop %v921
      %v1346 = vmul.f32 %v921, %v1345
      %v1347 = vsub.f32 1.0, %v1346
      %v1348 = vmul.f32 %v1345, %v1347
      %v1349 = vadd.f32 %v1345, %v1348
      %vm1350 = vweird.f32 %v921
      %vm1351 = vweird.f32 %v1345
      %vm1352 = vmor %vm1350, %vm1351
      %v1353 = vsel %vm1352, %v1345, %v1349
      %v1354 = vand.u32 2147483647, %v921
      %vm1355 = vcmp.eq.f32.partialorder %v1354, 8.507059e+37
      %v1356 = vand.u32 %v921, 2147483648
      %v1357 = vor.u32 1.1754944e-38, %v1356
      %v1358 = vsel %vm1355, %v1357, %v1353
      %v1359 = vmul.f32 1.0, %v1358
      %v1360 = vrcp.pop %v922
      %v1361 = vmul.f32 %v922, %v1360
      %v1362 = vsub.f32 1.0, %v1361
      %v1363 = vmul.f32 %v1360, %v1362
      %v1364 = vadd.f32 %v1360, %v1363
      %vm1365 = vweird.f32 %v922
      %vm1366 = vweird.f32 %v1360
      %vm1367 = vmor %vm1365, %vm1366
      %v1368 = vsel %vm1367, %v1360, %v1364
      %v1369 = vand.u32 2147483647, %v922
      %vm1370 = vcmp.eq.f32.partialorder %v1369, 8.507059e+37
      %v1371 = vand.u32 %v922, 2147483648
      %v1372 = vor.u32 1.1754944e-38, %v1371
      %v1373 = vsel %vm1370, %v1372, %v1368
      %v1374 = vmul.f32 1.0, %v1373
      %v1375 = vrcp.pop %v923
      %v1376 = vmul.f32 %v923, %v1375
      %v1377 = vsub.f32 1.0, %v1376
      %v1378 = vmul.f32 %v1375, %v1377
      %v1379 = vadd.f32 %v1375, %v1378
      %vm1380 = vweird.f32 %v923
      %vm1381 = vweird.f32 %v1375
      %vm1382 = vmor %vm1380, %vm1381
      %v1383 = vsel %vm1382, %v1375, %v1379
      %v1384 = vand.u32 2147483647, %v923
      %vm1385 = vcmp.eq.f32.partialorder %v1384, 8.507059e+37
      %v1386 = vand.u32 %v923, 2147483648
      %v1387 = vor.u32 1.1754944e-38, %v1386
      %v1388 = vsel %vm1385, %v1387, %v1383
      %v1389 = vmul.f32 1.0, %v1388
      %v1390 = vrcp.pop %v924
      %v1391 = vmul.f32 %v924, %v1390
      %v1392 = vsub.f32 1.0, %v1391
      %v1393 = vmul.f32 %v1390, %v1392
      %v1394 = vadd.f32 %v1390, %v1393
      %vm1395 = vweird.f32 %v924
      %vm1396 = vweird.f32 %v1390
      %vm1397 = vmor %vm1395, %vm1396
      %v1398 = vsel %vm1397, %v1390, %v1394
      %v1399 = vand.u32 2147483647, %v924
      %vm1400 = vcmp.eq.f32.partialorder %v1399, 8.507059e+37
      %v1401 = vand.u32 %v924, 2147483648
      %v1402 = vor.u32 1.1754944e-38, %v1401
      %v1403 = vsel %vm1400, %v1402, %v1398
      %v1404 = vmul.f32 1.0, %v1403
      %v1405 = vmul.f32 %v765, %v939
      %v1406 = vmul.f32 %v766, %v954
      %v1407 = vmul.f32 %v767, %v969
      %v1408 = vmul.f32 %v768, %v984
      %v1409 = vmul.f32 %v769, %v999
      %v1410 = vmul.f32 %v770, %v1014
      %v1411 = vmul.f32 %v771, %v1029
      %v1412 = vmul.f32 %v772, %v1044
      %v1413 = vmul.f32 %v773, %v1059
      %v1414 = vmul.f32 %v774, %v1074
      %v1415 = vmul.f32 %v775, %v1089
      %v1416 = vmul.f32 %v776, %v1104
      %v1417 = vmul.f32 %v777, %v1119
      %v1418 = vmul.f32 %v778, %v1134
      %v1419 = vmul.f32 %v779, %v1149
      %v1420 = vmul.f32 %v780, %v1164
      %v1421 = vmul.f32 %v781, %v1179
      %v1422 = vmul.f32 %v782, %v1194
      %v1423 = vmul.f32 %v783, %v1209
      %v1424 = vmul.f32 %v784, %v1224
      %v1425 = vmul.f32 %v785, %v1239
      %v1426 = vmul.f32 %v786, %v1254
      %v1427 = vmul.f32 %v787, %v1269
      %v1428 = vmul.f32 %v788, %v1284
      %v1429 = vmul.f32 %v789, %v1299
      %v1430 = vmul.f32 %v790, %v1314
      %v1431 = vmul.f32 %v791, %v1329
      %v1432 = vmul.f32 %v792, %v1344
      %v1433 = vmul.f32 %v793, %v1359
      %v1434 = vmul.f32 %v794, %v1374
      %v1435 = vmul.f32 %v795, %v1389
      %v1436 = vmul.f32 %v796, %v1404
      %v1437 = vpack.c.bf16 %v1405, %v1405
      %v1438 = vpack.c.bf16 %v1406, %v1406
      %v1439 = vpack.c.bf16 %v1407, %v1407
      %v1440 = vpack.c.bf16 %v1408, %v1408
      %v1441 = vpack.c.bf16 %v1409, %v1409
      %v1442 = vpack.c.bf16 %v1410, %v1410
      %v1443 = vpack.c.bf16 %v1411, %v1411
      %v1444 = vpack.c.bf16 %v1412, %v1412
      %v1445 = vpack.c.bf16 %v1413, %v1413
      %v1446 = vpack.c.bf16 %v1414, %v1414
      %v1447 = vpack.c.bf16 %v1415, %v1415
      %v1448 = vpack.c.bf16 %v1416, %v1416
      %v1449 = vpack.c.bf16 %v1417, %v1417
      %v1450 = vpack.c.bf16 %v1418, %v1418
      %v1451 = vpack.c.bf16 %v1419, %v1419
      %v1452 = vpack.c.bf16 %v1420, %v1420
      %v1453 = vpack.c.bf16 %v1421, %v1421
      %v1454 = vpack.c.bf16 %v1422, %v1422
      %v1455 = vpack.c.bf16 %v1423, %v1423
      %v1456 = vpack.c.bf16 %v1424, %v1424
      %v1457 = vpack.c.bf16 %v1425, %v1425
      %v1458 = vpack.c.bf16 %v1426, %v1426
      %v1459 = vpack.c.bf16 %v1427, %v1427
      %v1460 = vpack.c.bf16 %v1428, %v1428
      %v1461 = vpack.c.bf16 %v1429, %v1429
      %v1462 = vpack.c.bf16 %v1430, %v1430
      %v1463 = vpack.c.bf16 %v1431, %v1431
      %v1464 = vpack.c.bf16 %v1432, %v1432
      %v1465 = vpack.c.bf16 %v1433, %v1433
      %v1466 = vpack.c.bf16 %v1434, %v1434
      %v1467 = vpack.c.bf16 %v1435, %v1435
      %v1468 = vpack.c.bf16 %v1436, %v1436
      %v1505 = vunpack.c.l.b16 %v615
      %v1506 = vunpack.c.l.b16 %v616
      %v1507 = vunpack.c.l.b16 %v1437
      %v1508 = vunpack.c.l.b16 %v1438
      %v1509 = vunpack.c.l.b16 %v1439
      %v1510 = vunpack.c.l.b16 %v1440
      %v1511 = vunpack.c.l.b16 %v1441
      %v1512 = vunpack.c.l.b16 %v1442
      %v1513 = vunpack.c.l.b16 %v1443
      %v1514 = vunpack.c.l.b16 %v1444
      %v1515 = vunpack.c.l.b16 %v1445
      %v1516 = vunpack.c.l.b16 %v1446
      %v1517 = vunpack.c.l.b16 %v1447
      %v1518 = vunpack.c.l.b16 %v1448
      %v1519 = vunpack.c.l.b16 %v1449
      %v1520 = vunpack.c.l.b16 %v1450
      %v1521 = vunpack.c.l.b16 %v1451
      %v1522 = vunpack.c.l.b16 %v1452
      %v1523 = vunpack.c.l.b16 %v1453
      %v1524 = vunpack.c.l.b16 %v1454
      %v1525 = vunpack.c.l.b16 %v1455
      %v1526 = vunpack.c.l.b16 %v1456
      %v1527 = vunpack.c.l.b16 %v1457
      %v1528 = vunpack.c.l.b16 %v1458
      %v1529 = vunpack.c.l.b16 %v1459
      %v1530 = vunpack.c.l.b16 %v1460
      %v1531 = vunpack.c.l.b16 %v1461
      %v1532 = vunpack.c.l.b16 %v1462
      %v1533 = vunpack.c.l.b16 %v1463
      %v1534 = vunpack.c.l.b16 %v1464
      %v1535 = vunpack.c.l.b16 %v1465
      %v1536 = vunpack.c.l.b16 %v1466
      %v1537 = vunpack.c.l.b16 %v1467
      %v1538 = vunpack.c.l.b16 %v1468
      %v1539 = vunpack.c.l.b16 %v667
      %v1540 = vunpack.c.l.b16 %v668
      %v1541 = vpack.c.b16 %v1506, %v1505
      %v1542 = vpack.c.b16 %v1508, %v1507
      %v1543 = vpack.c.b16 %v1510, %v1509
      %v1544 = vpack.c.b16 %v1512, %v1511
      %v1545 = vpack.c.b16 %v1514, %v1513
      %v1546 = vpack.c.b16 %v1516, %v1515
      %v1547 = vpack.c.b16 %v1518, %v1517
      %v1548 = vpack.c.b16 %v1520, %v1519
      %v1549 = vpack.c.b16 %v1522, %v1521
      %v1550 = vpack.c.b16 %v1524, %v1523
      %v1551 = vpack.c.b16 %v1526, %v1525
      %v1552 = vpack.c.b16 %v1528, %v1527
      %v1553 = vpack.c.b16 %v1530, %v1529
      %v1554 = vpack.c.b16 %v1532, %v1531
      %v1555 = vpack.c.b16 %v1534, %v1533
      %v1556 = vpack.c.b16 %v1536, %v1535
      %v1557 = vpack.c.b16 %v1538, %v1537
      %v1558 = vpack.c.b16 %v1540, %v1539
      %v1560 = vshrl.u32 %v1541, 16
      %v1562 = vrot.slane %v1560, 7
      %v1563 = vshll.u32 %v1541, 16
      %v1565 = vor.u32 %v1562, %v1563
      %v1567 = vshrl.u32 %v1542, 16
      %v1569 = vrot.slane %v1567, 7
      %v1570 = vshll.u32 %v1542, 16
      %v1572 = vor.u32 %v1569, %v1570
      %v1574 = vshrl.u32 %v1543, 16
      %v1576 = vrot.slane %v1574, 7
      %v1577 = vshll.u32 %v1543, 16
      %v1579 = vor.u32 %v1576, %v1577
      %v1581 = vshrl.u32 %v1544, 16
      %v1583 = vrot.slane %v1581, 7
      %v1584 = vshll.u32 %v1544, 16
      %v1586 = vor.u32 %v1583, %v1584
      %v1588 = vshrl.u32 %v1545, 16
      %v1590 = vrot.slane %v1588, 7
      %v1591 = vshll.u32 %v1545, 16
      %v1593 = vor.u32 %v1590, %v1591
      %v1595 = vshrl.u32 %v1546, 16
      %v1597 = vrot.slane %v1595, 7
      %v1598 = vshll.u32 %v1546, 16
      %v1600 = vor.u32 %v1597, %v1598
      %v1602 = vshrl.u32 %v1547, 16
      %v1604 = vrot.slane %v1602, 7
      %v1605 = vshll.u32 %v1547, 16
      %v1607 = vor.u32 %v1604, %v1605
      %v1609 = vshrl.u32 %v1548, 16
      %v1611 = vrot.slane %v1609, 7
      %v1612 = vshll.u32 %v1548, 16
      %v1614 = vor.u32 %v1611, %v1612
      %v1616 = vshrl.u32 %v1549, 16
      %v1618 = vrot.slane %v1616, 7
      %v1619 = vshll.u32 %v1549, 16
      %v1621 = vor.u32 %v1618, %v1619
      %v1623 = vshrl.u32 %v1550, 16
      %v1625 = vrot.slane %v1623, 7
      %v1626 = vshll.u32 %v1550, 16
      %v1628 = vor.u32 %v1625, %v1626
      %v1630 = vshrl.u32 %v1551, 16
      %v1632 = vrot.slane %v1630, 7
      %v1633 = vshll.u32 %v1551, 16
      %v1635 = vor.u32 %v1632, %v1633
      %v1637 = vshrl.u32 %v1552, 16
      %v1639 = vrot.slane %v1637, 7
      %v1640 = vshll.u32 %v1552, 16
      %v1642 = vor.u32 %v1639, %v1640
      %v1644 = vshrl.u32 %v1553, 16
      %v1646 = vrot.slane %v1644, 7
      %v1647 = vshll.u32 %v1553, 16
      %v1649 = vor.u32 %v1646, %v1647
      %v1651 = vshrl.u32 %v1554, 16
      %v1653 = vrot.slane %v1651, 7
      %v1654 = vshll.u32 %v1554, 16
      %v1656 = vor.u32 %v1653, %v1654
      %v1658 = vshrl.u32 %v1555, 16
      %v1660 = vrot.slane %v1658, 7
      %v1661 = vshll.u32 %v1555, 16
      %v1663 = vor.u32 %v1660, %v1661
      %v1665 = vshrl.u32 %v1556, 16
      %v1667 = vrot.slane %v1665, 7
      %v1668 = vshll.u32 %v1556, 16
      %v1670 = vor.u32 %v1667, %v1668
      %v1672 = vshrl.u32 %v1557, 16
      %v1674 = vrot.slane %v1672, 7
      %v1675 = vshll.u32 %v1557, 16
      %v1677 = vor.u32 %v1674, %v1675
      %v1679 = vshrl.u32 %v1558, 16
      %v1681 = vrot.slane %v1679, 7
      %v1682 = vshll.u32 %v1558, 16
      %v1684 = vor.u32 %v1681, %v1682
      %vm1721 = vcmask 1040384
      %vm1722 = vsmask.f32 256
      %vm1723 = vmand %vm1721, %vm1722
      %v1724 = vsel %vm1723, 0, %v1565
      %v1725 = vsel %vm1723, 0, %v1572
      %v1726 = vsel %vm1723, 0, %v1579
      %v1727 = vsel %vm1723, 0, %v1586
      %v1728 = vsel %vm1723, 0, %v1593
      %v1729 = vsel %vm1723, 0, %v1600
      %v1730 = vsel %vm1723, 0, %v1607
      %v1731 = vsel %vm1723, 0, %v1614
      %v1732 = vsel %vm1723, 0, %v1621
      %v1733 = vsel %vm1723, 0, %v1628
      %v1734 = vsel %vm1723, 0, %v1635
      %v1735 = vsel %vm1723, 0, %v1642
      %v1736 = vsel %vm1723, 0, %v1649
      %v1737 = vsel %vm1723, 0, %v1656
      %v1738 = vsel %vm1723, 0, %v1663
      %v1739 = vsel %vm1723, 0, %v1670
      %v1740 = vsel %vm1723, 0, %v1677
      %v1741 = vsel %vm1723, 0, %v1684
      %v1742 = vsel %vm1723, %v1562, 0
      %v1743 = vsel %vm1723, %v1569, 0
      %v1744 = vsel %vm1723, %v1576, 0
      %v1745 = vsel %vm1723, %v1583, 0
      %v1746 = vsel %vm1723, %v1590, 0
      %v1747 = vsel %vm1723, %v1597, 0
      %v1748 = vsel %vm1723, %v1604, 0
      %v1749 = vsel %vm1723, %v1611, 0
      %v1750 = vsel %vm1723, %v1618, 0
      %v1751 = vsel %vm1723, %v1625, 0
      %v1752 = vsel %vm1723, %v1632, 0
      %v1753 = vsel %vm1723, %v1639, 0
      %v1754 = vsel %vm1723, %v1646, 0
      %v1755 = vsel %vm1723, %v1653, 0
      %v1756 = vsel %vm1723, %v1660, 0
      %v1757 = vsel %vm1723, %v1667, 0
      %v1758 = vsel %vm1723, %v1674, 0
      %v1759 = vsel %vm1723, %v1681, 0
      %v1760 = vld [vmem:[%s4] sm:$0xf]
      %v1761 = vld [vmem:[%s4 + $0x4] sm:$0xf]
      %vm1762 = vsmask.f32 7424
      %v1764 = vshrl.u32 %v1724, 16
      %v1766 = vshll.u32 %v1724, 16
      %v1768 = vrot.slane %v1766, 1
      %v1769 = vor.u32 %v1764, %v1768
      %v1771 = vshll.u32 %v1742, 16
      %v1773 = vrot.slane %v1771, 1
      %v1774 = vsel %vm1762, %v1769, %v1773
      %v1776 = vshrl.u32 %v1725, 16
      %v1778 = vshll.u32 %v1725, 16
      %v1780 = vrot.slane %v1778, 1
      %v1781 = vor.u32 %v1776, %v1780
      %v1783 = vshll.u32 %v1743, 16
      %v1785 = vrot.slane %v1783, 1
      %v1786 = vsel %vm1762, %v1781, %v1785
      %v1788 = vshrl.u32 %v1726, 16
      %v1790 = vshll.u32 %v1726, 16
      %v1792 = vrot.slane %v1790, 1
      %v1793 = vor.u32 %v1788, %v1792
      %v1795 = vshll.u32 %v1744, 16
      %v1797 = vrot.slane %v1795, 1
      %v1798 = vsel %vm1762, %v1793, %v1797
      %v1800 = vshrl.u32 %v1727, 16
      %v1802 = vshll.u32 %v1727, 16
      %v1804 = vrot.slane %v1802, 1
      %v1805 = vor.u32 %v1800, %v1804
      %v1807 = vshll.u32 %v1745, 16
      %v1809 = vrot.slane %v1807, 1
      %v1810 = vsel %vm1762, %v1805, %v1809
      %v1812 = vshrl.u32 %v1728, 16
      %v1814 = vshll.u32 %v1728, 16
      %v1816 = vrot.slane %v1814, 1
      %v1817 = vor.u32 %v1812, %v1816
      %v1819 = vshll.u32 %v1746, 16
      %v1821 = vrot.slane %v1819, 1
      %v1822 = vsel %vm1762, %v1817, %v1821
      %v1824 = vshrl.u32 %v1729, 16
      %v1826 = vshll.u32 %v1729, 16
      %v1828 = vrot.slane %v1826, 1
      %v1829 = vor.u32 %v1824, %v1828
      %v1831 = vshll.u32 %v1747, 16
      %v1833 = vrot.slane %v1831, 1
      %v1834 = vsel %vm1762, %v1829, %v1833
      %v1836 = vshrl.u32 %v1730, 16
      %v1838 = vshll.u32 %v1730, 16
      %v1840 = vrot.slane %v1838, 1
      %v1841 = vor.u32 %v1836, %v1840
      %v1843 = vshll.u32 %v1748, 16
      %v1845 = vrot.slane %v1843, 1
      %v1846 = vsel %vm1762, %v1841, %v1845
      %v1848 = vshrl.u32 %v1731, 16
      %v1850 = vshll.u32 %v1731, 16
      %v1852 = vrot.slane %v1850, 1
      %v1853 = vor.u32 %v1848, %v1852
      %v1855 = vshll.u32 %v1749, 16
      %v1857 = vrot.slane %v1855, 1
      %v1858 = vsel %vm1762, %v1853, %v1857
      %v1860 = vshrl.u32 %v1732, 16
      %v1862 = vshll.u32 %v1732, 16
      %v1864 = vrot.slane %v1862, 1
      %v1865 = vor.u32 %v1860, %v1864
      %v1867 = vshll.u32 %v1750, 16
      %v1869 = vrot.slane %v1867, 1
      %v1870 = vsel %vm1762, %v1865, %v1869
      %v1872 = vshrl.u32 %v1733, 16
      %v1874 = vshll.u32 %v1733, 16
      %v1876 = vrot.slane %v1874, 1
      %v1877 = vor.u32 %v1872, %v1876
      %v1879 = vshll.u32 %v1751, 16
      %v1881 = vrot.slane %v1879, 1
      %v1882 = vsel %vm1762, %v1877, %v1881
      %v1884 = vshrl.u32 %v1734, 16
      %v1886 = vshll.u32 %v1734, 16
      %v1888 = vrot.slane %v1886, 1
      %v1889 = vor.u32 %v1884, %v1888
      %v1891 = vshll.u32 %v1752, 16
      %v1893 = vrot.slane %v1891, 1
      %v1894 = vsel %vm1762, %v1889, %v1893
      %v1896 = vshrl.u32 %v1735, 16
      %v1898 = vshll.u32 %v1735, 16
      %v1900 = vrot.slane %v1898, 1
      %v1901 = vor.u32 %v1896, %v1900
      %v1903 = vshll.u32 %v1753, 16
      %v1905 = vrot.slane %v1903, 1
      %v1906 = vsel %vm1762, %v1901, %v1905
      %v1908 = vshrl.u32 %v1736, 16
      %v1910 = vshll.u32 %v1736, 16
      %v1912 = vrot.slane %v1910, 1
      %v1913 = vor.u32 %v1908, %v1912
      %v1915 = vshll.u32 %v1754, 16
      %v1917 = vrot.slane %v1915, 1
      %v1918 = vsel %vm1762, %v1913, %v1917
      %v1920 = vshrl.u32 %v1737, 16
      %v1922 = vshll.u32 %v1737, 16
      %v1924 = vrot.slane %v1922, 1
      %v1925 = vor.u32 %v1920, %v1924
      %v1927 = vshll.u32 %v1755, 16
      %v1929 = vrot.slane %v1927, 1
      %v1930 = vsel %vm1762, %v1925, %v1929
      %v1932 = vshrl.u32 %v1738, 16
      %v1934 = vshll.u32 %v1738, 16
      %v1936 = vrot.slane %v1934, 1
      %v1937 = vor.u32 %v1932, %v1936
      %v1939 = vshll.u32 %v1756, 16
      %v1941 = vrot.slane %v1939, 1
      %v1942 = vsel %vm1762, %v1937, %v1941
      %v1944 = vshrl.u32 %v1739, 16
      %v1946 = vshll.u32 %v1739, 16
      %v1948 = vrot.slane %v1946, 1
      %v1949 = vor.u32 %v1944, %v1948
      %v1951 = vshll.u32 %v1757, 16
      %v1953 = vrot.slane %v1951, 1
      %v1954 = vsel %vm1762, %v1949, %v1953
      %s1955 = scalar_lea.vmem %s4, 8
      %v1956 = vld [vmem:[%s1955] sm:$0xf]
      %v1957 = vld [vmem:[%s1955 + $0x4] sm:$0xf]
      %v1960 = vunpack.c.l.b16 %v1956
      %v1961 = vunpack.c.l.b16 %v1957
      %v1962 = vpack.c.b16 %v1961, %v1960
      %vm1964 = vcmask 130048
      %v1966 = vsel %vm1964, %v1774, 0
      %v1969 = vsel %vm1964, %v1786, 0
      %v1972 = vsel %vm1964, %v1798, 0
      %v1975 = vsel %vm1964, %v1810, 0
      %v1978 = vsel %vm1964, %v1822, 0
      %v1981 = vsel %vm1964, %v1834, 0
      %v1984 = vsel %vm1964, %v1846, 0
      %v1987 = vsel %vm1964, %v1858, 0
      %v1990 = vsel %vm1964, %v1870, 0
      %v1993 = vsel %vm1964, %v1882, 0
      %v1996 = vsel %vm1964, %v1894, 0
      %v1999 = vsel %vm1964, %v1906, 0
      %v2002 = vsel %vm1964, %v1918, 0
      %v2005 = vsel %vm1964, %v1930, 0
      %v2008 = vsel %vm1964, %v1942, 0
      %v2011 = vsel %vm1964, %v1954, 0
      %2013 = vmatpush.bf16.msra.mxu0 0
      %2014 = vmatpush.bf16.msra.mxu0 0
      %2015 = vmatpush.bf16.msra.mxu0 0
      %2016 = vmatpush.bf16.msra.mxu0 0
      %2017 = vmatpush.bf16.msra.mxu0 0
      %2018 = vmatpush.bf16.msra.mxu0 0
      %2019 = vmatpush.bf16.msra.mxu0 0
      %2020 = vmatpush.bf16.msra.mxu0 %v1962
      %2021 = vmatmul.bf16.gmra.mxu0 %v1966
      %v2022 = vpop.f32.mrf.mxu0
      %v2023 = vadd.f32 0.0, %v2022
      %v2024 = vpop.f32.mrf.mxu0
      %v2025 = vadd.f32 0.0, %v2024
      %2026 = vmatmul.bf16.gmra.mxu0 %v1969
      %v2027 = vpop.f32.mrf.mxu0
      %v2028 = vadd.f32 0.0, %v2027
      %v2029 = vpop.f32.mrf.mxu0
      %v2030 = vadd.f32 0.0, %v2029
      %2031 = vmatmul.bf16.gmra.mxu0 %v1972
      %v2032 = vpop.f32.mrf.mxu0
      %v2033 = vadd.f32 0.0, %v2032
      %v2034 = vpop.f32.mrf.mxu0
      %v2035 = vadd.f32 0.0, %v2034
      %2036 = vmatmul.bf16.gmra.mxu0 %v1975
      %v2037 = vpop.f32.mrf.mxu0
      %v2038 = vadd.f32 0.0, %v2037
      %v2039 = vpop.f32.mrf.mxu0
      %v2040 = vadd.f32 0.0, %v2039
      %2041 = vmatmul.bf16.gmra.mxu0 %v1978
      %v2042 = vpop.f32.mrf.mxu0
      %v2043 = vadd.f32 0.0, %v2042
      %v2044 = vpop.f32.mrf.mxu0
      %v2045 = vadd.f32 0.0, %v2044
      %2046 = vmatmul.bf16.gmra.mxu0 %v1981
      %v2047 = vpop.f32.mrf.mxu0
      %v2048 = vadd.f32 0.0, %v2047
      %v2049 = vpop.f32.mrf.mxu0
      %v2050 = vadd.f32 0.0, %v2049
      %2051 = vmatmul.bf16.gmra.mxu0 %v1984
      %v2052 = vpop.f32.mrf.mxu0
      %v2053 = vadd.f32 0.0, %v2052
      %v2054 = vpop.f32.mrf.mxu0
      %v2055 = vadd.f32 0.0, %v2054
      %2056 = vmatmul.bf16.gmra.mxu0 %v1987
      %v2057 = vpop.f32.mrf.mxu0
      %v2058 = vadd.f32 0.0, %v2057
      %v2059 = vpop.f32.mrf.mxu0
      %v2060 = vadd.f32 0.0, %v2059
      %2061 = vmatmul.bf16.gmra.mxu0 %v1990
      %v2062 = vpop.f32.mrf.mxu0
      %v2063 = vadd.f32 0.0, %v2062
      %v2064 = vpop.f32.mrf.mxu0
      %v2065 = vadd.f32 0.0, %v2064
      %2066 = vmatmul.bf16.gmra.mxu0 %v1993
      %v2067 = vpop.f32.mrf.mxu0
      %v2068 = vadd.f32 0.0, %v2067
      %v2069 = vpop.f32.mrf.mxu0
      %v2070 = vadd.f32 0.0, %v2069
      %2071 = vmatmul.bf16.gmra.mxu0 %v1996
      %v2072 = vpop.f32.mrf.mxu0
      %v2073 = vadd.f32 0.0, %v2072
      %v2074 = vpop.f32.mrf.mxu0
      %v2075 = vadd.f32 0.0, %v2074
      %2076 = vmatmul.bf16.gmra.mxu0 %v1999
      %v2077 = vpop.f32.mrf.mxu0
      %v2078 = vadd.f32 0.0, %v2077
      %v2079 = vpop.f32.mrf.mxu0
      %v2080 = vadd.f32 0.0, %v2079
      %2081 = vmatmul.bf16.gmra.mxu0 %v2002
      %v2082 = vpop.f32.mrf.mxu0
      %v2083 = vadd.f32 0.0, %v2082
      %v2084 = vpop.f32.mrf.mxu0
      %v2085 = vadd.f32 0.0, %v2084
      %2086 = vmatmul.bf16.gmra.mxu0 %v2005
      %v2087 = vpop.f32.mrf.mxu0
      %v2088 = vadd.f32 0.0, %v2087
      %v2089 = vpop.f32.mrf.mxu0
      %v2090 = vadd.f32 0.0, %v2089
      %2091 = vmatmul.bf16.gmra.mxu0 %v2008
      %v2092 = vpop.f32.mrf.mxu0
      %v2093 = vadd.f32 0.0, %v2092
      %v2094 = vpop.f32.mrf.mxu0
      %v2095 = vadd.f32 0.0, %v2094
      %2096 = vmatmul.bf16.gmra.mxu0 %v2011
      %v2097 = vpop.f32.mrf.mxu0
      %v2098 = vadd.f32 0.0, %v2097
      %v2099 = vpop.f32.mrf.mxu0
      %v2100 = vadd.f32 0.0, %v2099
      %2101 = vdwg.mxu0
      %v2104 = vunpack.c.l.b16 %v1760
      %v2105 = vunpack.c.l.b16 %v1761
      %v2106 = vpack.c.b16 %v2105, %v2104
      %v2108 = vsel %vm1964, %v1724, 0
      %v2110 = vsel %vm1964, %v1725, 0
      %v2112 = vsel %vm1964, %v1726, 0
      %v2114 = vsel %vm1964, %v1727, 0
      %v2116 = vsel %vm1964, %v1728, 0
      %v2118 = vsel %vm1964, %v1729, 0
      %v2120 = vsel %vm1964, %v1730, 0
      %v2122 = vsel %vm1964, %v1731, 0
      %v2124 = vsel %vm1964, %v1732, 0
      %v2126 = vsel %vm1964, %v1733, 0
      %v2128 = vsel %vm1964, %v1734, 0
      %v2130 = vsel %vm1964, %v1735, 0
      %v2132 = vsel %vm1964, %v1736, 0
      %v2134 = vsel %vm1964, %v1737, 0
      %v2136 = vsel %vm1964, %v1738, 0
      %v2138 = vsel %vm1964, %v1739, 0
      %2140 = vmatpush.bf16.msra.mxu0 0
      %2141 = vmatpush.bf16.msra.mxu0 0
      %2142 = vmatpush.bf16.msra.mxu0 0
      %2143 = vmatpush.bf16.msra.mxu0 0
      %2144 = vmatpush.bf16.msra.mxu0 0
      %2145 = vmatpush.bf16.msra.mxu0 0
      %2146 = vmatpush.bf16.msra.mxu0 0
      %2147 = vmatpush.bf16.msra.mxu0 %v2106
      %2148 = vmatmul.bf16.gmra.mxu0 %v2108
      %v2149 = vpop.f32.mrf.mxu0
      %v2150 = vadd.f32 %v2023, %v2149
      %v2151 = vpop.f32.mrf.mxu0
      %v2152 = vadd.f32 %v2025, %v2151
      %2153 = vmatmul.bf16.gmra.mxu0 %v2110
      %v2154 = vpop.f32.mrf.mxu0
      %v2155 = vadd.f32 %v2028, %v2154
      %v2156 = vpop.f32.mrf.mxu0
      %v2157 = vadd.f32 %v2030, %v2156
      %2158 = vmatmul.bf16.gmra.mxu0 %v2112
      %v2159 = vpop.f32.mrf.mxu0
      %v2160 = vadd.f32 %v2033, %v2159
      %v2161 = vpop.f32.mrf.mxu0
      %v2162 = vadd.f32 %v2035, %v2161
      %2163 = vmatmul.bf16.gmra.mxu0 %v2114
      %v2164 = vpop.f32.mrf.mxu0
      %v2165 = vadd.f32 %v2038, %v2164
      %v2166 = vpop.f32.mrf.mxu0
      %v2167 = vadd.f32 %v2040, %v2166
      %2168 = vmatmul.bf16.gmra.mxu0 %v2116
      %v2169 = vpop.f32.mrf.mxu0
      %v2170 = vadd.f32 %v2043, %v2169
      %v2171 = vpop.f32.mrf.mxu0
      %v2172 = vadd.f32 %v2045, %v2171
      %2173 = vmatmul.bf16.gmra.mxu0 %v2118
      %v2174 = vpop.f32.mrf.mxu0
      %v2175 = vadd.f32 %v2048, %v2174
      %v2176 = vpop.f32.mrf.mxu0
      %v2177 = vadd.f32 %v2050, %v2176
      %2178 = vmatmul.bf16.gmra.mxu0 %v2120
      %v2179 = vpop.f32.mrf.mxu0
      %v2180 = vadd.f32 %v2053, %v2179
      %v2181 = vpop.f32.mrf.mxu0
      %v2182 = vadd.f32 %v2055, %v2181
      %2183 = vmatmul.bf16.gmra.mxu0 %v2122
      %v2184 = vpop.f32.mrf.mxu0
      %v2185 = vadd.f32 %v2058, %v2184
      %v2186 = vpop.f32.mrf.mxu0
      %v2187 = vadd.f32 %v2060, %v2186
      %2188 = vmatmul.bf16.gmra.mxu0 %v2124
      %v2189 = vpop.f32.mrf.mxu0
      %v2190 = vadd.f32 %v2063, %v2189
      %v2191 = vpop.f32.mrf.mxu0
      %v2192 = vadd.f32 %v2065, %v2191
      %2193 = vmatmul.bf16.gmra.mxu0 %v2126
      %v2194 = vpop.f32.mrf.mxu0
      %v2195 = vadd.f32 %v2068, %v2194
      %v2196 = vpop.f32.mrf.mxu0
      %v2197 = vadd.f32 %v2070, %v2196
      %2198 = vmatmul.bf16.gmra.mxu0 %v2128
      %v2199 = vpop.f32.mrf.mxu0
      %v2200 = vadd.f32 %v2073, %v2199
      %v2201 = vpop.f32.mrf.mxu0
      %v2202 = vadd.f32 %v2075, %v2201
      %2203 = vmatmul.bf16.gmra.mxu0 %v2130
      %v2204 = vpop.f32.mrf.mxu0
      %v2205 = vadd.f32 %v2078, %v2204
      %v2206 = vpop.f32.mrf.mxu0
      %v2207 = vadd.f32 %v2080, %v2206
      %2208 = vmatmul.bf16.gmra.mxu0 %v2132
      %v2209 = vpop.f32.mrf.mxu0
      %v2210 = vadd.f32 %v2083, %v2209
      %v2211 = vpop.f32.mrf.mxu0
      %v2212 = vadd.f32 %v2085, %v2211
      %2213 = vmatmul.bf16.gmra.mxu0 %v2134
      %v2214 = vpop.f32.mrf.mxu0
      %v2215 = vadd.f32 %v2088, %v2214
      %v2216 = vpop.f32.mrf.mxu0
      %v2217 = vadd.f32 %v2090, %v2216
      %2218 = vmatmul.bf16.gmra.mxu0 %v2136
      %v2219 = vpop.f32.mrf.mxu0
      %v2220 = vadd.f32 %v2093, %v2219
      %v2221 = vpop.f32.mrf.mxu0
      %v2222 = vadd.f32 %v2095, %v2221
      %2223 = vmatmul.bf16.gmra.mxu0 %v2138
      %v2224 = vpop.f32.mrf.mxu0
      %v2225 = vadd.f32 %v2098, %v2224
      %v2226 = vpop.f32.mrf.mxu0
      %v2227 = vadd.f32 %v2100, %v2226
      %2228 = vdwg.mxu0
      %vm2261 = vcmask 1046528
      %v2262 = vrot.slane %v1724, 1
      %v2263 = vrot.slane %v1742, 1
      %v2264 = vsel %vm2261, %v2262, %v2263
      %v2265 = vrot.slane %v1725, 1
      %v2266 = vrot.slane %v1743, 1
      %v2267 = vsel %vm2261, %v2265, %v2266
      %v2268 = vrot.slane %v1726, 1
      %v2269 = vrot.slane %v1744, 1
      %v2270 = vsel %vm2261, %v2268, %v2269
      %v2271 = vrot.slane %v1727, 1
      %v2272 = vrot.slane %v1745, 1
      %v2273 = vsel %vm2261, %v2271, %v2272
      %v2274 = vrot.slane %v1728, 1
      %v2275 = vrot.slane %v1746, 1
      %v2276 = vsel %vm2261, %v2274, %v2275
      %v2277 = vrot.slane %v1729, 1
      %v2278 = vrot.slane %v1747, 1
      %v2279 = vsel %vm2261, %v2277, %v2278
      %v2280 = vrot.slane %v1730, 1
      %v2281 = vrot.slane %v1748, 1
      %v2282 = vsel %vm2261, %v2280, %v2281
      %v2283 = vrot.slane %v1731, 1
      %v2284 = vrot.slane %v1749, 1
      %v2285 = vsel %vm2261, %v2283, %v2284
      %v2286 = vrot.slane %v1732, 1
      %v2287 = vrot.slane %v1750, 1
      %v2288 = vsel %vm2261, %v2286, %v2287
      %v2289 = vrot.slane %v1733, 1
      %v2290 = vrot.slane %v1751, 1
      %v2291 = vsel %vm2261, %v2289, %v2290
      %v2292 = vrot.slane %v1734, 1
      %v2293 = vrot.slane %v1752, 1
      %v2294 = vsel %vm2261, %v2292, %v2293
      %v2295 = vrot.slane %v1735, 1
      %v2296 = vrot.slane %v1753, 1
      %v2297 = vsel %vm2261, %v2295, %v2296
      %v2298 = vrot.slane %v1736, 1
      %v2299 = vrot.slane %v1754, 1
      %v2300 = vsel %vm2261, %v2298, %v2299
      %v2301 = vrot.slane %v1737, 1
      %v2302 = vrot.slane %v1755, 1
      %v2303 = vsel %vm2261, %v2301, %v2302
      %v2304 = vrot.slane %v1738, 1
      %v2305 = vrot.slane %v1756, 1
      %v2306 = vsel %vm2261, %v2304, %v2305
      %v2307 = vrot.slane %v1739, 1
      %v2308 = vrot.slane %v1757, 1
      %v2309 = vsel %vm2261, %v2307, %v2308
      %s2310 = scalar_lea.vmem %s4, 16
      %v2311 = vld [vmem:[%s2310] sm:$0xf]
      %v2312 = vld [vmem:[%s2310 + $0x4] sm:$0xf]
      %v2315 = vunpack.c.l.b16 %v2311
      %v2316 = vunpack.c.l.b16 %v2312
      %v2317 = vpack.c.b16 %v2316, %v2315
      %v2320 = vsel %vm1964, %v2264, 0
      %v2323 = vsel %vm1964, %v2267, 0
      %v2326 = vsel %vm1964, %v2270, 0
      %v2329 = vsel %vm1964, %v2273, 0
      %v2332 = vsel %vm1964, %v2276, 0
      %v2335 = vsel %vm1964, %v2279, 0
      %v2338 = vsel %vm1964, %v2282, 0
      %v2341 = vsel %vm1964, %v2285, 0
      %v2344 = vsel %vm1964, %v2288, 0
      %v2347 = vsel %vm1964, %v2291, 0
      %v2350 = vsel %vm1964, %v2294, 0
      %v2353 = vsel %vm1964, %v2297, 0
      %v2356 = vsel %vm1964, %v2300, 0
      %v2359 = vsel %vm1964, %v2303, 0
      %v2362 = vsel %vm1964, %v2306, 0
      %v2365 = vsel %vm1964, %v2309, 0
      %2367 = vmatpush.bf16.msra.mxu0 0
      %2368 = vmatpush.bf16.msra.mxu0 0
      %2369 = vmatpush.bf16.msra.mxu0 0
      %2370 = vmatpush.bf16.msra.mxu0 0
      %2371 = vmatpush.bf16.msra.mxu0 0
      %2372 = vmatpush.bf16.msra.mxu0 0
      %2373 = vmatpush.bf16.msra.mxu0 0
      %2374 = vmatpush.bf16.msra.mxu0 %v2317
      %2375 = vmatmul.bf16.gmra.mxu0 %v2320
      %v2376 = vpop.f32.mrf.mxu0
      %v2377 = vadd.f32 0.0, %v2376
      %v2378 = vpop.f32.mrf.mxu0
      %v2379 = vadd.f32 0.0, %v2378
      %2380 = vmatmul.bf16.gmra.mxu0 %v2323
      %v2381 = vpop.f32.mrf.mxu0
      %v2382 = vadd.f32 0.0, %v2381
      %v2383 = vpop.f32.mrf.mxu0
      %v2384 = vadd.f32 0.0, %v2383
      %2385 = vmatmul.bf16.gmra.mxu0 %v2326
      %v2386 = vpop.f32.mrf.mxu0
      %v2387 = vadd.f32 0.0, %v2386
      %v2388 = vpop.f32.mrf.mxu0
      %v2389 = vadd.f32 0.0, %v2388
      %2390 = vmatmul.bf16.gmra.mxu0 %v2329
      %v2391 = vpop.f32.mrf.mxu0
      %v2392 = vadd.f32 0.0, %v2391
      %v2393 = vpop.f32.mrf.mxu0
      %v2394 = vadd.f32 0.0, %v2393
      %2395 = vmatmul.bf16.gmra.mxu0 %v2332
      %v2396 = vpop.f32.mrf.mxu0
      %v2397 = vadd.f32 0.0, %v2396
      %v2398 = vpop.f32.mrf.mxu0
      %v2399 = vadd.f32 0.0, %v2398
      %2400 = vmatmul.bf16.gmra.mxu0 %v2335
      %v2401 = vpop.f32.mrf.mxu0
      %v2402 = vadd.f32 0.0, %v2401
      %v2403 = vpop.f32.mrf.mxu0
      %v2404 = vadd.f32 0.0, %v2403
      %2405 = vmatmul.bf16.gmra.mxu0 %v2338
      %v2406 = vpop.f32.mrf.mxu0
      %v2407 = vadd.f32 0.0, %v2406
      %v2408 = vpop.f32.mrf.mxu0
      %v2409 = vadd.f32 0.0, %v2408
      %2410 = vmatmul.bf16.gmra.mxu0 %v2341
      %v2411 = vpop.f32.mrf.mxu0
      %v2412 = vadd.f32 0.0, %v2411
      %v2413 = vpop.f32.mrf.mxu0
      %v2414 = vadd.f32 0.0, %v2413
      %2415 = vmatmul.bf16.gmra.mxu0 %v2344
      %v2416 = vpop.f32.mrf.mxu0
      %v2417 = vadd.f32 0.0, %v2416
      %v2418 = vpop.f32.mrf.mxu0
      %v2419 = vadd.f32 0.0, %v2418
      %2420 = vmatmul.bf16.gmra.mxu0 %v2347
      %v2421 = vpop.f32.mrf.mxu0
      %v2422 = vadd.f32 0.0, %v2421
      %v2423 = vpop.f32.mrf.mxu0
      %v2424 = vadd.f32 0.0, %v2423
      %2425 = vmatmul.bf16.gmra.mxu0 %v2350
      %v2426 = vpop.f32.mrf.mxu0
      %v2427 = vadd.f32 0.0, %v2426
      %v2428 = vpop.f32.mrf.mxu0
      %v2429 = vadd.f32 0.0, %v2428
      %2430 = vmatmul.bf16.gmra.mxu0 %v2353
      %v2431 = vpop.f32.mrf.mxu0
      %v2432 = vadd.f32 0.0, %v2431
      %v2433 = vpop.f32.mrf.mxu0
      %v2434 = vadd.f32 0.0, %v2433
      %2435 = vmatmul.bf16.gmra.mxu0 %v2356
      %v2436 = vpop.f32.mrf.mxu0
      %v2437 = vadd.f32 0.0, %v2436
      %v2438 = vpop.f32.mrf.mxu0
      %v2439 = vadd.f32 0.0, %v2438
      %2440 = vmatmul.bf16.gmra.mxu0 %v2359
      %v2441 = vpop.f32.mrf.mxu0
      %v2442 = vadd.f32 0.0, %v2441
      %v2443 = vpop.f32.mrf.mxu0
      %v2444 = vadd.f32 0.0, %v2443
      %2445 = vmatmul.bf16.gmra.mxu0 %v2362
      %v2446 = vpop.f32.mrf.mxu0
      %v2447 = vadd.f32 0.0, %v2446
      %v2448 = vpop.f32.mrf.mxu0
      %v2449 = vadd.f32 0.0, %v2448
      %2450 = vmatmul.bf16.gmra.mxu0 %v2365
      %v2451 = vpop.f32.mrf.mxu0
      %v2452 = vadd.f32 0.0, %v2451
      %v2453 = vpop.f32.mrf.mxu0
      %v2454 = vadd.f32 0.0, %v2453
      %2455 = vdwg.mxu0
      %v2456 = vadd.f32 %v2150, %v2377
      %v2457 = vadd.f32 %v2152, %v2379
      %v2458 = vadd.f32 %v2155, %v2382
      %v2459 = vadd.f32 %v2157, %v2384
      %v2460 = vadd.f32 %v2160, %v2387
      %v2461 = vadd.f32 %v2162, %v2389
      %v2462 = vadd.f32 %v2165, %v2392
      %v2463 = vadd.f32 %v2167, %v2394
      %v2464 = vadd.f32 %v2170, %v2397
      %v2465 = vadd.f32 %v2172, %v2399
      %v2466 = vadd.f32 %v2175, %v2402
      %v2467 = vadd.f32 %v2177, %v2404
      %v2468 = vadd.f32 %v2180, %v2407
      %v2469 = vadd.f32 %v2182, %v2409
      %v2470 = vadd.f32 %v2185, %v2412
      %v2471 = vadd.f32 %v2187, %v2414
      %v2472 = vadd.f32 %v2190, %v2417
      %v2473 = vadd.f32 %v2192, %v2419
      %v2474 = vadd.f32 %v2195, %v2422
      %v2475 = vadd.f32 %v2197, %v2424
      %v2476 = vadd.f32 %v2200, %v2427
      %v2477 = vadd.f32 %v2202, %v2429
      %v2478 = vadd.f32 %v2205, %v2432
      %v2479 = vadd.f32 %v2207, %v2434
      %v2480 = vadd.f32 %v2210, %v2437
      %v2481 = vadd.f32 %v2212, %v2439
      %v2482 = vadd.f32 %v2215, %v2442
      %v2483 = vadd.f32 %v2217, %v2444
      %v2484 = vadd.f32 %v2220, %v2447
      %v2485 = vadd.f32 %v2222, %v2449
      %v2486 = vadd.f32 %v2225, %v2452
      %v2487 = vadd.f32 %v2227, %v2454
      %s2488 = scalar_lea.vmem %s4, 24
      %v2489 = vld [vmem:[%s2488] sm:$0xf]
      %v2490 = vld [vmem:[%s2488 + $0x4] sm:$0xf]
      %v2493 = vunpack.c.l.b16 %v2489
      %v2494 = vunpack.c.l.b16 %v2490
      %v2495 = vpack.c.b16 %v2494, %v2493
      %v2498 = vsel %vm1964, %v1740, 0
      %2500 = vmatpush.bf16.msra.mxu0 0
      %2501 = vmatpush.bf16.msra.mxu0 0
      %2502 = vmatpush.bf16.msra.mxu0 0
      %2503 = vmatpush.bf16.msra.mxu0 0
      %2504 = vmatpush.bf16.msra.mxu0 0
      %2505 = vmatpush.bf16.msra.mxu0 0
      %2506 = vmatpush.bf16.msra.mxu0 0
      %2507 = vmatpush.bf16.msra.mxu0 %v2495
      %2508 = vmatmul.bf16.gmra.mxu0 %v2110
      %v2509 = vpop.f32.mrf.mxu0
      %v2510 = vadd.f32 0.0, %v2509
      %v2511 = vpop.f32.mrf.mxu0
      %v2512 = vadd.f32 0.0, %v2511
      %2513 = vmatmul.bf16.gmra.mxu0 %v2112
      %v2514 = vpop.f32.mrf.mxu0
      %v2515 = vadd.f32 0.0, %v2514
      %v2516 = vpop.f32.mrf.mxu0
      %v2517 = vadd.f32 0.0, %v2516
      %2518 = vmatmul.bf16.gmra.mxu0 %v2114
      %v2519 = vpop.f32.mrf.mxu0
      %v2520 = vadd.f32 0.0, %v2519
      %v2521 = vpop.f32.mrf.mxu0
      %v2522 = vadd.f32 0.0, %v2521
      %2523 = vmatmul.bf16.gmra.mxu0 %v2116
      %v2524 = vpop.f32.mrf.mxu0
      %v2525 = vadd.f32 0.0, %v2524
      %v2526 = vpop.f32.mrf.mxu0
      %v2527 = vadd.f32 0.0, %v2526
      %2528 = vmatmul.bf16.gmra.mxu0 %v2118
      %v2529 = vpop.f32.mrf.mxu0
      %v2530 = vadd.f32 0.0, %v2529
      %v2531 = vpop.f32.mrf.mxu0
      %v2532 = vadd.f32 0.0, %v2531
      %2533 = vmatmul.bf16.gmra.mxu0 %v2120
      %v2534 = vpop.f32.mrf.mxu0
      %v2535 = vadd.f32 0.0, %v2534
      %v2536 = vpop.f32.mrf.mxu0
      %v2537 = vadd.f32 0.0, %v2536
      %2538 = vmatmul.bf16.gmra.mxu0 %v2122
      %v2539 = vpop.f32.mrf.mxu0
      %v2540 = vadd.f32 0.0, %v2539
      %v2541 = vpop.f32.mrf.mxu0
      %v2542 = vadd.f32 0.0, %v2541
      %2543 = vmatmul.bf16.gmra.mxu0 %v2124
      %v2544 = vpop.f32.mrf.mxu0
      %v2545 = vadd.f32 0.0, %v2544
      %v2546 = vpop.f32.mrf.mxu0
      %v2547 = vadd.f32 0.0, %v2546
      %2548 = vmatmul.bf16.gmra.mxu0 %v2126
      %v2549 = vpop.f32.mrf.mxu0
      %v2550 = vadd.f32 0.0, %v2549
      %v2551 = vpop.f32.mrf.mxu0
      %v2552 = vadd.f32 0.0, %v2551
      %2553 = vmatmul.bf16.gmra.mxu0 %v2128
      %v2554 = vpop.f32.mrf.mxu0
      %v2555 = vadd.f32 0.0, %v2554
      %v2556 = vpop.f32.mrf.mxu0
      %v2557 = vadd.f32 0.0, %v2556
      %2558 = vmatmul.bf16.gmra.mxu0 %v2130
      %v2559 = vpop.f32.mrf.mxu0
      %v2560 = vadd.f32 0.0, %v2559
      %v2561 = vpop.f32.mrf.mxu0
      %v2562 = vadd.f32 0.0, %v2561
      %2563 = vmatmul.bf16.gmra.mxu0 %v2132
      %v2564 = vpop.f32.mrf.mxu0
      %v2565 = vadd.f32 0.0, %v2564
      %v2566 = vpop.f32.mrf.mxu0
      %v2567 = vadd.f32 0.0, %v2566
      %2568 = vmatmul.bf16.gmra.mxu0 %v2134
      %v2569 = vpop.f32.mrf.mxu0
      %v2570 = vadd.f32 0.0, %v2569
      %v2571 = vpop.f32.mrf.mxu0
      %v2572 = vadd.f32 0.0, %v2571
      %2573 = vmatmul.bf16.gmra.mxu0 %v2136
      %v2574 = vpop.f32.mrf.mxu0
      %v2575 = vadd.f32 0.0, %v2574
      %v2576 = vpop.f32.mrf.mxu0
      %v2577 = vadd.f32 0.0, %v2576
      %2578 = vmatmul.bf16.gmra.mxu0 %v2138
      %v2579 = vpop.f32.mrf.mxu0
      %v2580 = vadd.f32 0.0, %v2579
      %v2581 = vpop.f32.mrf.mxu0
      %v2582 = vadd.f32 0.0, %v2581
      %2583 = vmatmul.bf16.gmra.mxu0 %v2498
      %v2584 = vpop.f32.mrf.mxu0
      %v2585 = vadd.f32 0.0, %v2584
      %v2586 = vpop.f32.mrf.mxu0
      %v2587 = vadd.f32 0.0, %v2586
      %2588 = vdwg.mxu0
      %v2589 = vadd.f32 %v2456, %v2510
      %v2590 = vadd.f32 %v2457, %v2512
      %v2591 = vadd.f32 %v2458, %v2515
      %v2592 = vadd.f32 %v2459, %v2517
      %v2593 = vadd.f32 %v2460, %v2520
      %v2594 = vadd.f32 %v2461, %v2522
      %v2595 = vadd.f32 %v2462, %v2525
      %v2596 = vadd.f32 %v2463, %v2527
      %v2597 = vadd.f32 %v2464, %v2530
      %v2598 = vadd.f32 %v2465, %v2532
      %v2599 = vadd.f32 %v2466, %v2535
      %v2600 = vadd.f32 %v2467, %v2537
      %v2601 = vadd.f32 %v2468, %v2540
      %v2602 = vadd.f32 %v2469, %v2542
      %v2603 = vadd.f32 %v2470, %v2545
      %v2604 = vadd.f32 %v2471, %v2547
      %v2605 = vadd.f32 %v2472, %v2550
      %v2606 = vadd.f32 %v2473, %v2552
      %v2607 = vadd.f32 %v2474, %v2555
      %v2608 = vadd.f32 %v2475, %v2557
      %v2609 = vadd.f32 %v2476, %v2560
      %v2610 = vadd.f32 %v2477, %v2562
      %v2611 = vadd.f32 %v2478, %v2565
      %v2612 = vadd.f32 %v2479, %v2567
      %v2613 = vadd.f32 %v2480, %v2570
      %v2614 = vadd.f32 %v2481, %v2572
      %v2615 = vadd.f32 %v2482, %v2575
      %v2616 = vadd.f32 %v2483, %v2577
      %v2617 = vadd.f32 %v2484, %v2580
      %v2618 = vadd.f32 %v2485, %v2582
      %v2619 = vadd.f32 %v2486, %v2585
      %v2620 = vadd.f32 %v2487, %v2587
      %v2621 = vshrl.u32 %v1740, 16
      %v2623 = vshll.u32 %v1740, 16
      %v2625 = vrot.slane %v2623, 1
      %v2626 = vor.u32 %v2621, %v2625
      %v2628 = vshll.u32 %v1758, 16
      %v2630 = vrot.slane %v2628, 1
      %v2631 = vsel %vm1762, %v2626, %v2630
      %s2632 = scalar_lea.vmem %s4, 32
      %v2633 = vld [vmem:[%s2632] sm:$0xf]
      %v2634 = vld [vmem:[%s2632 + $0x4] sm:$0xf]
      %v2637 = vunpack.c.l.b16 %v2633
      %v2638 = vunpack.c.l.b16 %v2634
      %v2639 = vpack.c.b16 %v2638, %v2637
      %v2642 = vsel %vm1964, %v2631, 0
      %2644 = vmatpush.bf16.msra.mxu0 0
      %2645 = vmatpush.bf16.msra.mxu0 0
      %2646 = vmatpush.bf16.msra.mxu0 0
      %2647 = vmatpush.bf16.msra.mxu0 0
      %2648 = vmatpush.bf16.msra.mxu0 0
      %2649 = vmatpush.bf16.msra.mxu0 0
      %2650 = vmatpush.bf16.msra.mxu0 0
      %2651 = vmatpush.bf16.msra.mxu0 %v2639
      %2652 = vmatmul.bf16.gmra.mxu0 %v1969
      %v2653 = vpop.f32.mrf.mxu0
      %v2654 = vadd.f32 0.0, %v2653
      %v2655 = vpop.f32.mrf.mxu0
      %v2656 = vadd.f32 0.0, %v2655
      %2657 = vmatmul.bf16.gmra.mxu0 %v1972
      %v2658 = vpop.f32.mrf.mxu0
      %v2659 = vadd.f32 0.0, %v2658
      %v2660 = vpop.f32.mrf.mxu0
      %v2661 = vadd.f32 0.0, %v2660
      %2662 = vmatmul.bf16.gmra.mxu0 %v1975
      %v2663 = vpop.f32.mrf.mxu0
      %v2664 = vadd.f32 0.0, %v2663
      %v2665 = vpop.f32.mrf.mxu0
      %v2666 = vadd.f32 0.0, %v2665
      %2667 = vmatmul.bf16.gmra.mxu0 %v1978
      %v2668 = vpop.f32.mrf.mxu0
      %v2669 = vadd.f32 0.0, %v2668
      %v2670 = vpop.f32.mrf.mxu0
      %v2671 = vadd.f32 0.0, %v2670
      %2672 = vmatmul.bf16.gmra.mxu0 %v1981
      %v2673 = vpop.f32.mrf.mxu0
      %v2674 = vadd.f32 0.0, %v2673
      %v2675 = vpop.f32.mrf.mxu0
      %v2676 = vadd.f32 0.0, %v2675
      %2677 = vmatmul.bf16.gmra.mxu0 %v1984
      %v2678 = vpop.f32.mrf.mxu0
      %v2679 = vadd.f32 0.0, %v2678
      %v2680 = vpop.f32.mrf.mxu0
      %v2681 = vadd.f32 0.0, %v2680
      %2682 = vmatmul.bf16.gmra.mxu0 %v1987
      %v2683 = vpop.f32.mrf.mxu0
      %v2684 = vadd.f32 0.0, %v2683
      %v2685 = vpop.f32.mrf.mxu0
      %v2686 = vadd.f32 0.0, %v2685
      %2687 = vmatmul.bf16.gmra.mxu0 %v1990
      %v2688 = vpop.f32.mrf.mxu0
      %v2689 = vadd.f32 0.0, %v2688
      %v2690 = vpop.f32.mrf.mxu0
      %v2691 = vadd.f32 0.0, %v2690
      %2692 = vmatmul.bf16.gmra.mxu0 %v1993
      %v2693 = vpop.f32.mrf.mxu0
      %v2694 = vadd.f32 0.0, %v2693
      %v2695 = vpop.f32.mrf.mxu0
      %v2696 = vadd.f32 0.0, %v2695
      %2697 = vmatmul.bf16.gmra.mxu0 %v1996
      %v2698 = vpop.f32.mrf.mxu0
      %v2699 = vadd.f32 0.0, %v2698
      %v2700 = vpop.f32.mrf.mxu0
      %v2701 = vadd.f32 0.0, %v2700
      %2702 = vmatmul.bf16.gmra.mxu0 %v1999
      %v2703 = vpop.f32.mrf.mxu0
      %v2704 = vadd.f32 0.0, %v2703
      %v2705 = vpop.f32.mrf.mxu0
      %v2706 = vadd.f32 0.0, %v2705
      %2707 = vmatmul.bf16.gmra.mxu0 %v2002
      %v2708 = vpop.f32.mrf.mxu0
      %v2709 = vadd.f32 0.0, %v2708
      %v2710 = vpop.f32.mrf.mxu0
      %v2711 = vadd.f32 0.0, %v2710
      %2712 = vmatmul.bf16.gmra.mxu0 %v2005
      %v2713 = vpop.f32.mrf.mxu0
      %v2714 = vadd.f32 0.0, %v2713
      %v2715 = vpop.f32.mrf.mxu0
      %v2716 = vadd.f32 0.0, %v2715
      %2717 = vmatmul.bf16.gmra.mxu0 %v2008
      %v2718 = vpop.f32.mrf.mxu0
      %v2719 = vadd.f32 0.0, %v2718
      %v2720 = vpop.f32.mrf.mxu0
      %v2721 = vadd.f32 0.0, %v2720
      %2722 = vmatmul.bf16.gmra.mxu0 %v2011
      %v2723 = vpop.f32.mrf.mxu0
      %v2724 = vadd.f32 0.0, %v2723
      %v2725 = vpop.f32.mrf.mxu0
      %v2726 = vadd.f32 0.0, %v2725
      %2727 = vmatmul.bf16.gmra.mxu0 %v2642
      %v2728 = vpop.f32.mrf.mxu0
      %v2729 = vadd.f32 0.0, %v2728
      %v2730 = vpop.f32.mrf.mxu0
      %v2731 = vadd.f32 0.0, %v2730
      %2732 = vdwg.mxu0
      %v2733 = vadd.f32 %v2589, %v2654
      %v2734 = vadd.f32 %v2590, %v2656
      %v2735 = vadd.f32 %v2591, %v2659
      %v2736 = vadd.f32 %v2592, %v2661
      %v2737 = vadd.f32 %v2593, %v2664
      %v2738 = vadd.f32 %v2594, %v2666
      %v2739 = vadd.f32 %v2595, %v2669
      %v2740 = vadd.f32 %v2596, %v2671
      %v2741 = vadd.f32 %v2597, %v2674
      %v2742 = vadd.f32 %v2598, %v2676
      %v2743 = vadd.f32 %v2599, %v2679
      %v2744 = vadd.f32 %v2600, %v2681
      %v2745 = vadd.f32 %v2601, %v2684
      %v2746 = vadd.f32 %v2602, %v2686
      %v2747 = vadd.f32 %v2603, %v2689
      %v2748 = vadd.f32 %v2604, %v2691
      %v2749 = vadd.f32 %v2605, %v2694
      %v2750 = vadd.f32 %v2606, %v2696
      %v2751 = vadd.f32 %v2607, %v2699
      %v2752 = vadd.f32 %v2608, %v2701
      %v2753 = vadd.f32 %v2609, %v2704
      %v2754 = vadd.f32 %v2610, %v2706
      %v2755 = vadd.f32 %v2611, %v2709
      %v2756 = vadd.f32 %v2612, %v2711
      %v2757 = vadd.f32 %v2613, %v2714
      %v2758 = vadd.f32 %v2614, %v2716
      %v2759 = vadd.f32 %v2615, %v2719
      %v2760 = vadd.f32 %v2616, %v2721
      %v2761 = vadd.f32 %v2617, %v2724
      %v2762 = vadd.f32 %v2618, %v2726
      %v2763 = vadd.f32 %v2619, %v2729
      %v2764 = vadd.f32 %v2620, %v2731
      %v2767 = vrot.slane %v1740, 1
      %v2768 = vrot.slane %v1758, 1
      %v2769 = vsel %vm2261, %v2767, %v2768
      %s2770 = scalar_lea.vmem %s4, 40
      %v2771 = vld [vmem:[%s2770] sm:$0xf]
      %v2772 = vld [vmem:[%s2770 + $0x4] sm:$0xf]
      %v2775 = vunpack.c.l.b16 %v2771
      %v2776 = vunpack.c.l.b16 %v2772
      %v2777 = vpack.c.b16 %v2776, %v2775
      %v2780 = vsel %vm1964, %v2769, 0
      %2782 = vmatpush.bf16.msra.mxu0 0
      %2783 = vmatpush.bf16.msra.mxu0 0
      %2784 = vmatpush.bf16.msra.mxu0 0
      %2785 = vmatpush.bf16.msra.mxu0 0
      %2786 = vmatpush.bf16.msra.mxu0 0
      %2787 = vmatpush.bf16.msra.mxu0 0
      %2788 = vmatpush.bf16.msra.mxu0 0
      %2789 = vmatpush.bf16.msra.mxu0 %v2777
      %2790 = vmatmul.bf16.gmra.mxu0 %v2323
      %v2791 = vpop.f32.mrf.mxu0
      %v2792 = vadd.f32 0.0, %v2791
      %v2793 = vpop.f32.mrf.mxu0
      %v2794 = vadd.f32 0.0, %v2793
      %2795 = vmatmul.bf16.gmra.mxu0 %v2326
      %v2796 = vpop.f32.mrf.mxu0
      %v2797 = vadd.f32 0.0, %v2796
      %v2798 = vpop.f32.mrf.mxu0
      %v2799 = vadd.f32 0.0, %v2798
      %2800 = vmatmul.bf16.gmra.mxu0 %v2329
      %v2801 = vpop.f32.mrf.mxu0
      %v2802 = vadd.f32 0.0, %v2801
      %v2803 = vpop.f32.mrf.mxu0
      %v2804 = vadd.f32 0.0, %v2803
      %2805 = vmatmul.bf16.gmra.mxu0 %v2332
      %v2806 = vpop.f32.mrf.mxu0
      %v2807 = vadd.f32 0.0, %v2806
      %v2808 = vpop.f32.mrf.mxu0
      %v2809 = vadd.f32 0.0, %v2808
      %2810 = vmatmul.bf16.gmra.mxu0 %v2335
      %v2811 = vpop.f32.mrf.mxu0
      %v2812 = vadd.f32 0.0, %v2811
      %v2813 = vpop.f32.mrf.mxu0
      %v2814 = vadd.f32 0.0, %v2813
      %2815 = vmatmul.bf16.gmra.mxu0 %v2338
      %v2816 = vpop.f32.mrf.mxu0
      %v2817 = vadd.f32 0.0, %v2816
      %v2818 = vpop.f32.mrf.mxu0
      %v2819 = vadd.f32 0.0, %v2818
      %2820 = vmatmul.bf16.gmra.mxu0 %v2341
      %v2821 = vpop.f32.mrf.mxu0
      %v2822 = vadd.f32 0.0, %v2821
      %v2823 = vpop.f32.mrf.mxu0
      %v2824 = vadd.f32 0.0, %v2823
      %2825 = vmatmul.bf16.gmra.mxu0 %v2344
      %v2826 = vpop.f32.mrf.mxu0
      %v2827 = vadd.f32 0.0, %v2826
      %v2828 = vpop.f32.mrf.mxu0
      %v2829 = vadd.f32 0.0, %v2828
      %2830 = vmatmul.bf16.gmra.mxu0 %v2347
      %v2831 = vpop.f32.mrf.mxu0
      %v2832 = vadd.f32 0.0, %v2831
      %v2833 = vpop.f32.mrf.mxu0
      %v2834 = vadd.f32 0.0, %v2833
      %2835 = vmatmul.bf16.gmra.mxu0 %v2350
      %v2836 = vpop.f32.mrf.mxu0
      %v2837 = vadd.f32 0.0, %v2836
      %v2838 = vpop.f32.mrf.mxu0
      %v2839 = vadd.f32 0.0, %v2838
      %2840 = vmatmul.bf16.gmra.mxu0 %v2353
      %v2841 = vpop.f32.mrf.mxu0
      %v2842 = vadd.f32 0.0, %v2841
      %v2843 = vpop.f32.mrf.mxu0
      %v2844 = vadd.f32 0.0, %v2843
      %2845 = vmatmul.bf16.gmra.mxu0 %v2356
      %v2846 = vpop.f32.mrf.mxu0
      %v2847 = vadd.f32 0.0, %v2846
      %v2848 = vpop.f32.mrf.mxu0
      %v2849 = vadd.f32 0.0, %v2848
      %2850 = vmatmul.bf16.gmra.mxu0 %v2359
      %v2851 = vpop.f32.mrf.mxu0
      %v2852 = vadd.f32 0.0, %v2851
      %v2853 = vpop.f32.mrf.mxu0
      %v2854 = vadd.f32 0.0, %v2853
      %2855 = vmatmul.bf16.gmra.mxu0 %v2362
      %v2856 = vpop.f32.mrf.mxu0
      %v2857 = vadd.f32 0.0, %v2856
      %v2858 = vpop.f32.mrf.mxu0
      %v2859 = vadd.f32 0.0, %v2858
      %2860 = vmatmul.bf16.gmra.mxu0 %v2365
      %v2861 = vpop.f32.mrf.mxu0
      %v2862 = vadd.f32 0.0, %v2861
      %v2863 = vpop.f32.mrf.mxu0
      %v2864 = vadd.f32 0.0, %v2863
      %2865 = vmatmul.bf16.gmra.mxu0 %v2780
      %v2866 = vpop.f32.mrf.mxu0
      %v2867 = vadd.f32 0.0, %v2866
      %v2868 = vpop.f32.mrf.mxu0
      %v2869 = vadd.f32 0.0, %v2868
      %2870 = vdwg.mxu0
      %v2871 = vadd.f32 %v2733, %v2792
      %v2872 = vadd.f32 %v2734, %v2794
      %v2873 = vadd.f32 %v2735, %v2797
      %v2874 = vadd.f32 %v2736, %v2799
      %v2875 = vadd.f32 %v2737, %v2802
      %v2876 = vadd.f32 %v2738, %v2804
      %v2877 = vadd.f32 %v2739, %v2807
      %v2878 = vadd.f32 %v2740, %v2809
      %v2879 = vadd.f32 %v2741, %v2812
      %v2880 = vadd.f32 %v2742, %v2814
      %v2881 = vadd.f32 %v2743, %v2817
      %v2882 = vadd.f32 %v2744, %v2819
      %v2883 = vadd.f32 %v2745, %v2822
      %v2884 = vadd.f32 %v2746, %v2824
      %v2885 = vadd.f32 %v2747, %v2827
      %v2886 = vadd.f32 %v2748, %v2829
      %v2887 = vadd.f32 %v2749, %v2832
      %v2888 = vadd.f32 %v2750, %v2834
      %v2889 = vadd.f32 %v2751, %v2837
      %v2890 = vadd.f32 %v2752, %v2839
      %v2891 = vadd.f32 %v2753, %v2842
      %v2892 = vadd.f32 %v2754, %v2844
      %v2893 = vadd.f32 %v2755, %v2847
      %v2894 = vadd.f32 %v2756, %v2849
      %v2895 = vadd.f32 %v2757, %v2852
      %v2896 = vadd.f32 %v2758, %v2854
      %v2897 = vadd.f32 %v2759, %v2857
      %v2898 = vadd.f32 %v2760, %v2859
      %v2899 = vadd.f32 %v2761, %v2862
      %v2900 = vadd.f32 %v2762, %v2864
      %v2901 = vadd.f32 %v2763, %v2867
      %v2902 = vadd.f32 %v2764, %v2869
      %s2903 = scalar_lea.vmem %s4, 48
      %v2904 = vld [vmem:[%s2903] sm:$0xf]
      %v2905 = vld [vmem:[%s2903 + $0x4] sm:$0xf]
      %v2908 = vunpack.c.l.b16 %v2904
      %v2909 = vunpack.c.l.b16 %v2905
      %v2910 = vpack.c.b16 %v2909, %v2908
      %v2913 = vsel %vm1964, %v1741, 0
      %2915 = vmatpush.bf16.msra.mxu0 0
      %2916 = vmatpush.bf16.msra.mxu0 0
      %2917 = vmatpush.bf16.msra.mxu0 0
      %2918 = vmatpush.bf16.msra.mxu0 0
      %2919 = vmatpush.bf16.msra.mxu0 0
      %2920 = vmatpush.bf16.msra.mxu0 0
      %2921 = vmatpush.bf16.msra.mxu0 0
      %2922 = vmatpush.bf16.msra.mxu0 %v2910
      %2923 = vmatmul.bf16.gmra.mxu0 %v2112
      %v2924 = vpop.f32.mrf.mxu0
      %v2925 = vadd.f32 0.0, %v2924
      %v2926 = vpop.f32.mrf.mxu0
      %v2927 = vadd.f32 0.0, %v2926
      %2928 = vmatmul.bf16.gmra.mxu0 %v2114
      %v2929 = vpop.f32.mrf.mxu0
      %v2930 = vadd.f32 0.0, %v2929
      %v2931 = vpop.f32.mrf.mxu0
      %v2932 = vadd.f32 0.0, %v2931
      %2933 = vmatmul.bf16.gmra.mxu0 %v2116
      %v2934 = vpop.f32.mrf.mxu0
      %v2935 = vadd.f32 0.0, %v2934
      %v2936 = vpop.f32.mrf.mxu0
      %v2937 = vadd.f32 0.0, %v2936
      %2938 = vmatmul.bf16.gmra.mxu0 %v2118
      %v2939 = vpop.f32.mrf.mxu0
      %v2940 = vadd.f32 0.0, %v2939
      %v2941 = vpop.f32.mrf.mxu0
      %v2942 = vadd.f32 0.0, %v2941
      %2943 = vmatmul.bf16.gmra.mxu0 %v2120
      %v2944 = vpop.f32.mrf.mxu0
      %v2945 = vadd.f32 0.0, %v2944
      %v2946 = vpop.f32.mrf.mxu0
      %v2947 = vadd.f32 0.0, %v2946
      %2948 = vmatmul.bf16.gmra.mxu0 %v2122
      %v2949 = vpop.f32.mrf.mxu0
      %v2950 = vadd.f32 0.0, %v2949
      %v2951 = vpop.f32.mrf.mxu0
      %v2952 = vadd.f32 0.0, %v2951
      %2953 = vmatmul.bf16.gmra.mxu0 %v2124
      %v2954 = vpop.f32.mrf.mxu0
      %v2955 = vadd.f32 0.0, %v2954
      %v2956 = vpop.f32.mrf.mxu0
      %v2957 = vadd.f32 0.0, %v2956
      %2958 = vmatmul.bf16.gmra.mxu0 %v2126
      %v2959 = vpop.f32.mrf.mxu0
      %v2960 = vadd.f32 0.0, %v2959
      %v2961 = vpop.f32.mrf.mxu0
      %v2962 = vadd.f32 0.0, %v2961
      %2963 = vmatmul.bf16.gmra.mxu0 %v2128
      %v2964 = vpop.f32.mrf.mxu0
      %v2965 = vadd.f32 0.0, %v2964
      %v2966 = vpop.f32.mrf.mxu0
      %v2967 = vadd.f32 0.0, %v2966
      %2968 = vmatmul.bf16.gmra.mxu0 %v2130
      %v2969 = vpop.f32.mrf.mxu0
      %v2970 = vadd.f32 0.0, %v2969
      %v2971 = vpop.f32.mrf.mxu0
      %v2972 = vadd.f32 0.0, %v2971
      %2973 = vmatmul.bf16.gmra.mxu0 %v2132
      %v2974 = vpop.f32.mrf.mxu0
      %v2975 = vadd.f32 0.0, %v2974
      %v2976 = vpop.f32.mrf.mxu0
      %v2977 = vadd.f32 0.0, %v2976
      %2978 = vmatmul.bf16.gmra.mxu0 %v2134
      %v2979 = vpop.f32.mrf.mxu0
      %v2980 = vadd.f32 0.0, %v2979
      %v2981 = vpop.f32.mrf.mxu0
      %v2982 = vadd.f32 0.0, %v2981
      %2983 = vmatmul.bf16.gmra.mxu0 %v2136
      %v2984 = vpop.f32.mrf.mxu0
      %v2985 = vadd.f32 0.0, %v2984
      %v2986 = vpop.f32.mrf.mxu0
      %v2987 = vadd.f32 0.0, %v2986
      %2988 = vmatmul.bf16.gmra.mxu0 %v2138
      %v2989 = vpop.f32.mrf.mxu0
      %v2990 = vadd.f32 0.0, %v2989
      %v2991 = vpop.f32.mrf.mxu0
      %v2992 = vadd.f32 0.0, %v2991
      %2993 = vmatmul.bf16.gmra.mxu0 %v2498
      %v2994 = vpop.f32.mrf.mxu0
      %v2995 = vadd.f32 0.0, %v2994
      %v2996 = vpop.f32.mrf.mxu0
      %v2997 = vadd.f32 0.0, %v2996
      %2998 = vmatmul.bf16.gmra.mxu0 %v2913
      %v2999 = vpop.f32.mrf.mxu0
      %v3000 = vadd.f32 0.0, %v2999
      %v3001 = vpop.f32.mrf.mxu0
      %v3002 = vadd.f32 0.0, %v3001
      %3003 = vdwg.mxu0
      %v3004 = vadd.f32 %v2871, %v2925
      %v3005 = vadd.f32 %v2872, %v2927
      %v3006 = vadd.f32 %v2873, %v2930
      %v3007 = vadd.f32 %v2874, %v2932
      %v3008 = vadd.f32 %v2875, %v2935
      %v3009 = vadd.f32 %v2876, %v2937
      %v3010 = vadd.f32 %v2877, %v2940
      %v3011 = vadd.f32 %v2878, %v2942
      %v3012 = vadd.f32 %v2879, %v2945
      %v3013 = vadd.f32 %v2880, %v2947
      %v3014 = vadd.f32 %v2881, %v2950
      %v3015 = vadd.f32 %v2882, %v2952
      %v3016 = vadd.f32 %v2883, %v2955
      %v3017 = vadd.f32 %v2884, %v2957
      %v3018 = vadd.f32 %v2885, %v2960
      %v3019 = vadd.f32 %v2886, %v2962
      %v3020 = vadd.f32 %v2887, %v2965
      %v3021 = vadd.f32 %v2888, %v2967
      %v3022 = vadd.f32 %v2889, %v2970
      %v3023 = vadd.f32 %v2890, %v2972
      %v3024 = vadd.f32 %v2891, %v2975
      %v3025 = vadd.f32 %v2892, %v2977
      %v3026 = vadd.f32 %v2893, %v2980
      %v3027 = vadd.f32 %v2894, %v2982
      %v3028 = vadd.f32 %v2895, %v2985
      %v3029 = vadd.f32 %v2896, %v2987
      %v3030 = vadd.f32 %v2897, %v2990
      %v3031 = vadd.f32 %v2898, %v2992
      %v3032 = vadd.f32 %v2899, %v2995
      %v3033 = vadd.f32 %v2900, %v2997
      %v3034 = vadd.f32 %v2901, %v3000
      %v3035 = vadd.f32 %v2902, %v3002
      %v3036 = vshrl.u32 %v1741, 16
      %v3038 = vshll.u32 %v1741, 16
      %v3040 = vrot.slane %v3038, 1
      %v3041 = vor.u32 %v3036, %v3040
      %v3043 = vshll.u32 %v1759, 16
      %v3045 = vrot.slane %v3043, 1
      %v3046 = vsel %vm1762, %v3041, %v3045
      %s3047 = scalar_lea.vmem %s4, 56
      %v3048 = vld [vmem:[%s3047] sm:$0xf]
      %v3049 = vld [vmem:[%s3047 + $0x4] sm:$0xf]
      %v3052 = vunpack.c.l.b16 %v3048
      %v3053 = vunpack.c.l.b16 %v3049
      %v3054 = vpack.c.b16 %v3053, %v3052
      %v3057 = vsel %vm1964, %v3046, 0
      %3059 = vmatpush.bf16.msra.mxu0 0
      %3060 = vmatpush.bf16.msra.mxu0 0
      %3061 = vmatpush.bf16.msra.mxu0 0
      %3062 = vmatpush.bf16.msra.mxu0 0
      %3063 = vmatpush.bf16.msra.mxu0 0
      %3064 = vmatpush.bf16.msra.mxu0 0
      %3065 = vmatpush.bf16.msra.mxu0 0
      %3066 = vmatpush.bf16.msra.mxu0 %v3054
      %3067 = vmatmul.bf16.gmra.mxu0 %v1972
      %v3068 = vpop.f32.mrf.mxu0
      %v3069 = vadd.f32 0.0, %v3068
      %v3070 = vpop.f32.mrf.mxu0
      %v3071 = vadd.f32 0.0, %v3070
      %3072 = vmatmul.bf16.gmra.mxu0 %v1975
      %v3073 = vpop.f32.mrf.mxu0
      %v3074 = vadd.f32 0.0, %v3073
      %v3075 = vpop.f32.mrf.mxu0
      %v3076 = vadd.f32 0.0, %v3075
      %3077 = vmatmul.bf16.gmra.mxu0 %v1978
      %v3078 = vpop.f32.mrf.mxu0
      %v3079 = vadd.f32 0.0, %v3078
      %v3080 = vpop.f32.mrf.mxu0
      %v3081 = vadd.f32 0.0, %v3080
      %3082 = vmatmul.bf16.gmra.mxu0 %v1981
      %v3083 = vpop.f32.mrf.mxu0
      %v3084 = vadd.f32 0.0, %v3083
      %v3085 = vpop.f32.mrf.mxu0
      %v3086 = vadd.f32 0.0, %v3085
      %3087 = vmatmul.bf16.gmra.mxu0 %v1984
      %v3088 = vpop.f32.mrf.mxu0
      %v3089 = vadd.f32 0.0, %v3088
      %v3090 = vpop.f32.mrf.mxu0
      %v3091 = vadd.f32 0.0, %v3090
      %3092 = vmatmul.bf16.gmra.mxu0 %v1987
      %v3093 = vpop.f32.mrf.mxu0
      %v3094 = vadd.f32 0.0, %v3093
      %v3095 = vpop.f32.mrf.mxu0
      %v3096 = vadd.f32 0.0, %v3095
      %3097 = vmatmul.bf16.gmra.mxu0 %v1990
      %v3098 = vpop.f32.mrf.mxu0
      %v3099 = vadd.f32 0.0, %v3098
      %v3100 = vpop.f32.mrf.mxu0
      %v3101 = vadd.f32 0.0, %v3100
      %3102 = vmatmul.bf16.gmra.mxu0 %v1993
      %v3103 = vpop.f32.mrf.mxu0
      %v3104 = vadd.f32 0.0, %v3103
      %v3105 = vpop.f32.mrf.mxu0
      %v3106 = vadd.f32 0.0, %v3105
      %3107 = vmatmul.bf16.gmra.mxu0 %v1996
      %v3108 = vpop.f32.mrf.mxu0
      %v3109 = vadd.f32 0.0, %v3108
      %v3110 = vpop.f32.mrf.mxu0
      %v3111 = vadd.f32 0.0, %v3110
      %3112 = vmatmul.bf16.gmra.mxu0 %v1999
      %v3113 = vpop.f32.mrf.mxu0
      %v3114 = vadd.f32 0.0, %v3113
      %v3115 = vpop.f32.mrf.mxu0
      %v3116 = vadd.f32 0.0, %v3115
      %3117 = vmatmul.bf16.gmra.mxu0 %v2002
      %v3118 = vpop.f32.mrf.mxu0
      %v3119 = vadd.f32 0.0, %v3118
      %v3120 = vpop.f32.mrf.mxu0
      %v3121 = vadd.f32 0.0, %v3120
      %3122 = vmatmul.bf16.gmra.mxu0 %v2005
      %v3123 = vpop.f32.mrf.mxu0
      %v3124 = vadd.f32 0.0, %v3123
      %v3125 = vpop.f32.mrf.mxu0
      %v3126 = vadd.f32 0.0, %v3125
      %3127 = vmatmul.bf16.gmra.mxu0 %v2008
      %v3128 = vpop.f32.mrf.mxu0
      %v3129 = vadd.f32 0.0, %v3128
      %v3130 = vpop.f32.mrf.mxu0
      %v3131 = vadd.f32 0.0, %v3130
      %3132 = vmatmul.bf16.gmra.mxu0 %v2011
      %v3133 = vpop.f32.mrf.mxu0
      %v3134 = vadd.f32 0.0, %v3133
      %v3135 = vpop.f32.mrf.mxu0
      %v3136 = vadd.f32 0.0, %v3135
      %3137 = vmatmul.bf16.gmra.mxu0 %v2642
      %v3138 = vpop.f32.mrf.mxu0
      %v3139 = vadd.f32 0.0, %v3138
      %v3140 = vpop.f32.mrf.mxu0
      %v3141 = vadd.f32 0.0, %v3140
      %3142 = vmatmul.bf16.gmra.mxu0 %v3057
      %v3143 = vpop.f32.mrf.mxu0
      %v3144 = vadd.f32 0.0, %v3143
      %v3145 = vpop.f32.mrf.mxu0
      %v3146 = vadd.f32 0.0, %v3145
      %3147 = vdwg.mxu0
      %v3148 = vadd.f32 %v3004, %v3069
      %v3149 = vadd.f32 %v3005, %v3071
      %v3150 = vadd.f32 %v3006, %v3074
      %v3151 = vadd.f32 %v3007, %v3076
      %v3152 = vadd.f32 %v3008, %v3079
      %v3153 = vadd.f32 %v3009, %v3081
      %v3154 = vadd.f32 %v3010, %v3084
      %v3155 = vadd.f32 %v3011, %v3086
      %v3156 = vadd.f32 %v3012, %v3089
      %v3157 = vadd.f32 %v3013, %v3091
      %v3158 = vadd.f32 %v3014, %v3094
      %v3159 = vadd.f32 %v3015, %v3096
      %v3160 = vadd.f32 %v3016, %v3099
      %v3161 = vadd.f32 %v3017, %v3101
      %v3162 = vadd.f32 %v3018, %v3104
      %v3163 = vadd.f32 %v3019, %v3106
      %v3164 = vadd.f32 %v3020, %v3109
      %v3165 = vadd.f32 %v3021, %v3111
      %v3166 = vadd.f32 %v3022, %v3114
      %v3167 = vadd.f32 %v3023, %v3116
      %v3168 = vadd.f32 %v3024, %v3119
      %v3169 = vadd.f32 %v3025, %v3121
      %v3170 = vadd.f32 %v3026, %v3124
      %v3171 = vadd.f32 %v3027, %v3126
      %v3172 = vadd.f32 %v3028, %v3129
      %v3173 = vadd.f32 %v3029, %v3131
      %v3174 = vadd.f32 %v3030, %v3134
      %v3175 = vadd.f32 %v3031, %v3136
      %v3176 = vadd.f32 %v3032, %v3139
      %v3177 = vadd.f32 %v3033, %v3141
      %v3178 = vadd.f32 %v3034, %v3144
      %v3179 = vadd.f32 %v3035, %v3146
      %v3182 = vrot.slane %v1741, 1
      %v3183 = vrot.slane %v1759, 1
      %v3184 = vsel %vm2261, %v3182, %v3183
      %s3185 = scalar_lea.vmem %s4, 64
      %v3186 = vld [vmem:[%s3185] sm:$0xf]
      %v3187 = vld [vmem:[%s3185 + $0x4] sm:$0xf]
      %v3190 = vunpack.c.l.b16 %v3186
      %v3191 = vunpack.c.l.b16 %v3187
      %v3192 = vpack.c.b16 %v3191, %v3190
      %v3195 = vsel %vm1964, %v3184, 0
      %3197 = vmatpush.bf16.msra.mxu0 0
      %3198 = vmatpush.bf16.msra.mxu0 0
      %3199 = vmatpush.bf16.msra.mxu0 0
      %3200 = vmatpush.bf16.msra.mxu0 0
      %3201 = vmatpush.bf16.msra.mxu0 0
      %3202 = vmatpush.bf16.msra.mxu0 0
      %3203 = vmatpush.bf16.msra.mxu0 0
      %3204 = vmatpush.bf16.msra.mxu0 %v3192
      %3205 = vmatmul.bf16.gmra.mxu0 %v2326
      %v3206 = vpop.f32.mrf.mxu0
      %v3207 = vadd.f32 0.0, %v3206
      %v3208 = vpop.f32.mrf.mxu0
      %v3209 = vadd.f32 0.0, %v3208
      %3210 = vmatmul.bf16.gmra.mxu0 %v2329
      %v3211 = vpop.f32.mrf.mxu0
      %v3212 = vadd.f32 0.0, %v3211
      %v3213 = vpop.f32.mrf.mxu0
      %v3214 = vadd.f32 0.0, %v3213
      %3215 = vmatmul.bf16.gmra.mxu0 %v2332
      %v3216 = vpop.f32.mrf.mxu0
      %v3217 = vadd.f32 0.0, %v3216
      %v3218 = vpop.f32.mrf.mxu0
      %v3219 = vadd.f32 0.0, %v3218
      %3220 = vmatmul.bf16.gmra.mxu0 %v2335
      %v3221 = vpop.f32.mrf.mxu0
      %v3222 = vadd.f32 0.0, %v3221
      %v3223 = vpop.f32.mrf.mxu0
      %v3224 = vadd.f32 0.0, %v3223
      %3225 = vmatmul.bf16.gmra.mxu0 %v2338
      %v3226 = vpop.f32.mrf.mxu0
      %v3227 = vadd.f32 0.0, %v3226
      %v3228 = vpop.f32.mrf.mxu0
      %v3229 = vadd.f32 0.0, %v3228
      %3230 = vmatmul.bf16.gmra.mxu0 %v2341
      %v3231 = vpop.f32.mrf.mxu0
      %v3232 = vadd.f32 0.0, %v3231
      %v3233 = vpop.f32.mrf.mxu0
      %v3234 = vadd.f32 0.0, %v3233
      %3235 = vmatmul.bf16.gmra.mxu0 %v2344
      %v3236 = vpop.f32.mrf.mxu0
      %v3237 = vadd.f32 0.0, %v3236
      %v3238 = vpop.f32.mrf.mxu0
      %v3239 = vadd.f32 0.0, %v3238
      %3240 = vmatmul.bf16.gmra.mxu0 %v2347
      %v3241 = vpop.f32.mrf.mxu0
      %v3242 = vadd.f32 0.0, %v3241
      %v3243 = vpop.f32.mrf.mxu0
      %v3244 = vadd.f32 0.0, %v3243
      %3245 = vmatmul.bf16.gmra.mxu0 %v2350
      %v3246 = vpop.f32.mrf.mxu0
      %v3247 = vadd.f32 0.0, %v3246
      %v3248 = vpop.f32.mrf.mxu0
      %v3249 = vadd.f32 0.0, %v3248
      %3250 = vmatmul.bf16.gmra.mxu0 %v2353
      %v3251 = vpop.f32.mrf.mxu0
      %v3252 = vadd.f32 0.0, %v3251
      %v3253 = vpop.f32.mrf.mxu0
      %v3254 = vadd.f32 0.0, %v3253
      %3255 = vmatmul.bf16.gmra.mxu0 %v2356
      %v3256 = vpop.f32.mrf.mxu0
      %v3257 = vadd.f32 0.0, %v3256
      %v3258 = vpop.f32.mrf.mxu0
      %v3259 = vadd.f32 0.0, %v3258
      %3260 = vmatmul.bf16.gmra.mxu0 %v2359
      %v3261 = vpop.f32.mrf.mxu0
      %v3262 = vadd.f32 0.0, %v3261
      %v3263 = vpop.f32.mrf.mxu0
      %v3264 = vadd.f32 0.0, %v3263
      %3265 = vmatmul.bf16.gmra.mxu0 %v2362
      %v3266 = vpop.f32.mrf.mxu0
      %v3267 = vadd.f32 0.0, %v3266
      %v3268 = vpop.f32.mrf.mxu0
      %v3269 = vadd.f32 0.0, %v3268
      %3270 = vmatmul.bf16.gmra.mxu0 %v2365
      %v3271 = vpop.f32.mrf.mxu0
      %v3272 = vadd.f32 0.0, %v3271
      %v3273 = vpop.f32.mrf.mxu0
      %v3274 = vadd.f32 0.0, %v3273
      %3275 = vmatmul.bf16.gmra.mxu0 %v2780
      %v3276 = vpop.f32.mrf.mxu0
      %v3277 = vadd.f32 0.0, %v3276
      %v3278 = vpop.f32.mrf.mxu0
      %v3279 = vadd.f32 0.0, %v3278
      %3280 = vmatmul.bf16.gmra.mxu0 %v3195
      %v3281 = vpop.f32.mrf.mxu0
      %v3282 = vadd.f32 0.0, %v3281
      %v3283 = vpop.f32.mrf.mxu0
      %v3284 = vadd.f32 0.0, %v3283
      %3285 = vdwg.mxu0
      %v3286 = vadd.f32 %v3148, %v3207
      %v3287 = vadd.f32 %v3149, %v3209
      %v3288 = vadd.f32 %v3150, %v3212
      %v3289 = vadd.f32 %v3151, %v3214
      %v3290 = vadd.f32 %v3152, %v3217
      %v3291 = vadd.f32 %v3153, %v3219
      %v3292 = vadd.f32 %v3154, %v3222
      %v3293 = vadd.f32 %v3155, %v3224
      %v3294 = vadd.f32 %v3156, %v3227
      %v3295 = vadd.f32 %v3157, %v3229
      %v3296 = vadd.f32 %v3158, %v3232
      %v3297 = vadd.f32 %v3159, %v3234
      %v3298 = vadd.f32 %v3160, %v3237
      %v3299 = vadd.f32 %v3161, %v3239
      %v3300 = vadd.f32 %v3162, %v3242
      %v3301 = vadd.f32 %v3163, %v3244
      %v3302 = vadd.f32 %v3164, %v3247
      %v3303 = vadd.f32 %v3165, %v3249
      %v3304 = vadd.f32 %v3166, %v3252
      %v3305 = vadd.f32 %v3167, %v3254
      %v3306 = vadd.f32 %v3168, %v3257
      %v3307 = vadd.f32 %v3169, %v3259
      %v3308 = vadd.f32 %v3170, %v3262
      %v3309 = vadd.f32 %v3171, %v3264
      %v3310 = vadd.f32 %v3172, %v3267
      %v3311 = vadd.f32 %v3173, %v3269
      %v3312 = vadd.f32 %v3174, %v3272
      %v3313 = vadd.f32 %v3175, %v3274
      %v3314 = vadd.f32 %v3176, %v3277
      %v3315 = vadd.f32 %v3177, %v3279
      %v3316 = vadd.f32 %v3178, %v3282
      %v3317 = vadd.f32 %v3179, %v3284
      %v3318 = vld [vmem:[%s5] sm:$0x1]
      %v3320 = vperm.slane %v3318, 0
      %v3322 = vadd.f32 %v3286, %v3320
      %v3323 = vadd.f32 %v3287, %v3320
      %v3324 = vadd.f32 %v3288, %v3320
      %v3325 = vadd.f32 %v3289, %v3320
      %v3326 = vadd.f32 %v3290, %v3320
      %v3327 = vadd.f32 %v3291, %v3320
      %v3328 = vadd.f32 %v3292, %v3320
      %v3329 = vadd.f32 %v3293, %v3320
      %v3330 = vadd.f32 %v3294, %v3320
      %v3331 = vadd.f32 %v3295, %v3320
      %v3332 = vadd.f32 %v3296, %v3320
      %v3333 = vadd.f32 %v3297, %v3320
      %v3334 = vadd.f32 %v3298, %v3320
      %v3335 = vadd.f32 %v3299, %v3320
      %v3336 = vadd.f32 %v3300, %v3320
      %v3337 = vadd.f32 %v3301, %v3320
      %v3338 = vadd.f32 %v3302, %v3320
      %v3339 = vadd.f32 %v3303, %v3320
      %v3340 = vadd.f32 %v3304, %v3320
      %v3341 = vadd.f32 %v3305, %v3320
      %v3342 = vadd.f32 %v3306, %v3320
      %v3343 = vadd.f32 %v3307, %v3320
      %v3344 = vadd.f32 %v3308, %v3320
      %v3345 = vadd.f32 %v3309, %v3320
      %v3346 = vadd.f32 %v3310, %v3320
      %v3347 = vadd.f32 %v3311, %v3320
      %v3348 = vadd.f32 %v3312, %v3320
      %v3349 = vadd.f32 %v3313, %v3320
      %v3350 = vadd.f32 %v3314, %v3320
      %v3351 = vadd.f32 %v3315, %v3320
      %v3352 = vadd.f32 %v3316, %v3320
      %v3353 = vadd.f32 %v3317, %v3320
      %v3354 = vld [vmem:[%s544] sm:$0xff]
      %v3355 = vld [vmem:[%s544 + $0x8] sm:$0xff]
      %v3356 = vld [vmem:[%s544 + $0x10] sm:$0xff]
      %v3357 = vld [vmem:[%s544 + $0x18] sm:$0xff]
      %v3358 = vld [vmem:[%s544 + $0x20] sm:$0xff]
      %v3359 = vld [vmem:[%s544 + $0x28] sm:$0xff]
      %v3360 = vld [vmem:[%s544 + $0x30] sm:$0xff]
      %v3361 = vld [vmem:[%s544 + $0x38] sm:$0xff]
      %v3362 = vld [vmem:[%s544 + $0x40] sm:$0xff]
      %v3363 = vld [vmem:[%s544 + $0x48] sm:$0xff]
      %v3364 = vld [vmem:[%s544 + $0x50] sm:$0xff]
      %v3365 = vld [vmem:[%s544 + $0x58] sm:$0xff]
      %v3366 = vld [vmem:[%s544 + $0x60] sm:$0xff]
      %v3367 = vld [vmem:[%s544 + $0x68] sm:$0xff]
      %v3368 = vld [vmem:[%s544 + $0x70] sm:$0xff]
      %v3369 = vld [vmem:[%s544 + $0x78] sm:$0xff]
      %v3370 = vld [vmem:[%s544 + $0x80] sm:$0xff]
      %v3371 = vld [vmem:[%s544 + $0x88] sm:$0xff]
      %v3372 = vld [vmem:[%s544 + $0x90] sm:$0xff]
      %v3373 = vld [vmem:[%s544 + $0x98] sm:$0xff]
      %v3374 = vld [vmem:[%s544 + $0xa0] sm:$0xff]
      %v3375 = vld [vmem:[%s544 + $0xa8] sm:$0xff]
      %v3376 = vld [vmem:[%s544 + $0xb0] sm:$0xff]
      %v3377 = vld [vmem:[%s544 + $0xb8] sm:$0xff]
      %v3378 = vld [vmem:[%s544 + $0xc0] sm:$0xff]
      %v3379 = vld [vmem:[%s544 + $0xc8] sm:$0xff]
      %v3380 = vld [vmem:[%s544 + $0xd0] sm:$0xff]
      %v3381 = vld [vmem:[%s544 + $0xd8] sm:$0xff]
      %v3382 = vld [vmem:[%s544 + $0xe0] sm:$0xff]
      %v3383 = vld [vmem:[%s544 + $0xe8] sm:$0xff]
      %v3384 = vld [vmem:[%s544 + $0xf0] sm:$0xff]
      %v3385 = vld [vmem:[%s544 + $0xf8] sm:$0xff]
      %v3386 = vpack.c.bf16 %v3355, %v3354
      %v3387 = vpack.c.bf16 %v3357, %v3356
      %v3388 = vpack.c.bf16 %v3359, %v3358
      %v3389 = vpack.c.bf16 %v3361, %v3360
      %v3390 = vpack.c.bf16 %v3363, %v3362
      %v3391 = vpack.c.bf16 %v3365, %v3364
      %v3392 = vpack.c.bf16 %v3367, %v3366
      %v3393 = vpack.c.bf16 %v3369, %v3368
      %v3394 = vpack.c.bf16 %v3371, %v3370
      %v3395 = vpack.c.bf16 %v3373, %v3372
      %v3396 = vpack.c.bf16 %v3375, %v3374
      %v3397 = vpack.c.bf16 %v3377, %v3376
      %v3398 = vpack.c.bf16 %v3379, %v3378
      %v3399 = vpack.c.bf16 %v3381, %v3380
      %v3400 = vpack.c.bf16 %v3383, %v3382
      %v3401 = vpack.c.bf16 %v3385, %v3384
      %v3402 = vld [vmem:[%s7] sm:$0xf]
      %v3403 = vld [vmem:[%s8] sm:$0x1]
      %v3405 = vperm.slane %v3403, 0
      %vm3407 = vcmask 64512
      %v3409 = vsel %vm3407, %v3386, 0
      %v3412 = vsel %vm3407, %v3387, 0
      %v3415 = vsel %vm3407, %v3388, 0
      %v3418 = vsel %vm3407, %v3389, 0
      %v3421 = vsel %vm3407, %v3390, 0
      %v3424 = vsel %vm3407, %v3391, 0
      %v3427 = vsel %vm3407, %v3392, 0
      %v3430 = vsel %vm3407, %v3393, 0
      %v3433 = vsel %vm3407, %v3394, 0
      %v3436 = vsel %vm3407, %v3395, 0
      %v3439 = vsel %vm3407, %v3396, 0
      %v3442 = vsel %vm3407, %v3397, 0
      %v3445 = vsel %vm3407, %v3398, 0
      %v3448 = vsel %vm3407, %v3399, 0
      %v3451 = vsel %vm3407, %v3400, 0
      %v3454 = vsel %vm3407, %v3401, 0
      %vm3456 = vcmask 1043456
      %v3458 = vsel %vm3456, %v3402, 0
      %3460 = vmatpush.bf16.msra.mxu0 0
      %3461 = vmatpush.bf16.msra.mxu0 0
      %3462 = vmatpush.bf16.msra.mxu0 0
      %3463 = vmatpush.bf16.msra.mxu0 0
      %3464 = vmatpush.bf16.msra.mxu0 0
      %3465 = vmatpush.bf16.msra.mxu0 0
      %3466 = vmatpush.bf16.msra.mxu0 0
      %3467 = vmatpush.bf16.msra.mxu0 %v3458
      %3468 = vmatmul.bf16.gmra.mxu0 %v3409
      %v3469 = vpop.f32.mrf.mxu0
      %v3470 = vadd.f32 %v3405, %v3469
      %v3471 = vpop.f32.mrf.mxu0
      %v3472 = vadd.f32 %v3405, %v3471
      %3473 = vmatmul.bf16.gmra.mxu0 %v3412
      %v3474 = vpop.f32.mrf.mxu0
      %v3475 = vadd.f32 %v3405, %v3474
      %v3476 = vpop.f32.mrf.mxu0
      %v3477 = vadd.f32 %v3405, %v3476
      %3478 = vmatmul.bf16.gmra.mxu0 %v3415
      %v3479 = vpop.f32.mrf.mxu0
      %v3480 = vadd.f32 %v3405, %v3479
      %v3481 = vpop.f32.mrf.mxu0
      %v3482 = vadd.f32 %v3405, %v3481
      %3483 = vmatmul.bf16.gmra.mxu0 %v3418
      %v3484 = vpop.f32.mrf.mxu0
      %v3485 = vadd.f32 %v3405, %v3484
      %v3486 = vpop.f32.mrf.mxu0
      %v3487 = vadd.f32 %v3405, %v3486
      %3488 = vmatmul.bf16.gmra.mxu0 %v3421
      %v3489 = vpop.f32.mrf.mxu0
      %v3490 = vadd.f32 %v3405, %v3489
      %v3491 = vpop.f32.mrf.mxu0
      %v3492 = vadd.f32 %v3405, %v3491
      %3493 = vmatmul.bf16.gmra.mxu0 %v3424
      %v3494 = vpop.f32.mrf.mxu0
      %v3495 = vadd.f32 %v3405, %v3494
      %v3496 = vpop.f32.mrf.mxu0
      %v3497 = vadd.f32 %v3405, %v3496
      %3498 = vmatmul.bf16.gmra.mxu0 %v3427
      %v3499 = vpop.f32.mrf.mxu0
      %v3500 = vadd.f32 %v3405, %v3499
      %v3501 = vpop.f32.mrf.mxu0
      %v3502 = vadd.f32 %v3405, %v3501
      %3503 = vmatmul.bf16.gmra.mxu0 %v3430
      %v3504 = vpop.f32.mrf.mxu0
      %v3505 = vadd.f32 %v3405, %v3504
      %v3506 = vpop.f32.mrf.mxu0
      %v3507 = vadd.f32 %v3405, %v3506
      %3508 = vmatmul.bf16.gmra.mxu0 %v3433
      %v3509 = vpop.f32.mrf.mxu0
      %v3510 = vadd.f32 %v3405, %v3509
      %v3511 = vpop.f32.mrf.mxu0
      %v3512 = vadd.f32 %v3405, %v3511
      %3513 = vmatmul.bf16.gmra.mxu0 %v3436
      %v3514 = vpop.f32.mrf.mxu0
      %v3515 = vadd.f32 %v3405, %v3514
      %v3516 = vpop.f32.mrf.mxu0
      %v3517 = vadd.f32 %v3405, %v3516
      %3518 = vmatmul.bf16.gmra.mxu0 %v3439
      %v3519 = vpop.f32.mrf.mxu0
      %v3520 = vadd.f32 %v3405, %v3519
      %v3521 = vpop.f32.mrf.mxu0
      %v3522 = vadd.f32 %v3405, %v3521
      %3523 = vmatmul.bf16.gmra.mxu0 %v3442
      %v3524 = vpop.f32.mrf.mxu0
      %v3525 = vadd.f32 %v3405, %v3524
      %v3526 = vpop.f32.mrf.mxu0
      %v3527 = vadd.f32 %v3405, %v3526
      %3528 = vmatmul.bf16.gmra.mxu0 %v3445
      %v3529 = vpop.f32.mrf.mxu0
      %v3530 = vadd.f32 %v3405, %v3529
      %v3531 = vpop.f32.mrf.mxu0
      %v3532 = vadd.f32 %v3405, %v3531
      %3533 = vmatmul.bf16.gmra.mxu0 %v3448
      %v3534 = vpop.f32.mrf.mxu0
      %v3535 = vadd.f32 %v3405, %v3534
      %v3536 = vpop.f32.mrf.mxu0
      %v3537 = vadd.f32 %v3405, %v3536
      %3538 = vmatmul.bf16.gmra.mxu0 %v3451
      %v3539 = vpop.f32.mrf.mxu0
      %v3540 = vadd.f32 %v3405, %v3539
      %v3541 = vpop.f32.mrf.mxu0
      %v3542 = vadd.f32 %v3405, %v3541
      %3543 = vmatmul.bf16.gmra.mxu0 %v3454
      %v3544 = vpop.f32.mrf.mxu0
      %v3545 = vadd.f32 %v3405, %v3544
      %v3546 = vpop.f32.mrf.mxu0
      %v3547 = vadd.f32 %v3405, %v3546
      %3548 = vdwg.mxu0
      %v3549 = vadd.f32 %v3322, %v3470
      %v3550 = vadd.f32 %v3323, %v3472
      %v3551 = vadd.f32 %v3324, %v3475
      %v3552 = vadd.f32 %v3325, %v3477
      %v3553 = vadd.f32 %v3326, %v3480
      %v3554 = vadd.f32 %v3327, %v3482
      %v3555 = vadd.f32 %v3328, %v3485
      %v3556 = vadd.f32 %v3329, %v3487
      %v3557 = vadd.f32 %v3330, %v3490
      %v3558 = vadd.f32 %v3331, %v3492
      %v3559 = vadd.f32 %v3332, %v3495
      %v3560 = vadd.f32 %v3333, %v3497
      %v3561 = vadd.f32 %v3334, %v3500
      %v3562 = vadd.f32 %v3335, %v3502
      %v3563 = vadd.f32 %v3336, %v3505
      %v3564 = vadd.f32 %v3337, %v3507
      %v3565 = vadd.f32 %v3338, %v3510
      %v3566 = vadd.f32 %v3339, %v3512
      %v3567 = vadd.f32 %v3340, %v3515
      %v3568 = vadd.f32 %v3341, %v3517
      %v3569 = vadd.f32 %v3342, %v3520
      %v3570 = vadd.f32 %v3343, %v3522
      %v3571 = vadd.f32 %v3344, %v3525
      %v3572 = vadd.f32 %v3345, %v3527
      %v3573 = vadd.f32 %v3346, %v3530
      %v3574 = vadd.f32 %v3347, %v3532
      %v3575 = vadd.f32 %v3348, %v3535
      %v3576 = vadd.f32 %v3349, %v3537
      %v3577 = vadd.f32 %v3350, %v3540
      %v3578 = vadd.f32 %v3351, %v3542
      %v3579 = vadd.f32 %v3352, %v3545
      %v3580 = vadd.f32 %v3353, %v3547
      %3581 = vst.msk [vmem:[%s555] sm:$0xff] %vm1964, %v3549
      %3582 = vst.msk [vmem:[%s555 + $0x8] sm:$0xff] %vm1964, %v3550
      %3583 = vst.msk [vmem:[%s555 + $0x10] sm:$0xff] %vm1964, %v3551
      %3584 = vst.msk [vmem:[%s555 + $0x18] sm:$0xff] %vm1964, %v3552
      %3585 = vst.msk [vmem:[%s555 + $0x20] sm:$0xff] %vm1964, %v3553
      %3586 = vst.msk [vmem:[%s555 + $0x28] sm:$0xff] %vm1964, %v3554
      %3587 = vst.msk [vmem:[%s555 + $0x30] sm:$0xff] %vm1964, %v3555
      %3588 = vst.msk [vmem:[%s555 + $0x38] sm:$0xff] %vm1964, %v3556
      %3589 = vst.msk [vmem:[%s555 + $0x40] sm:$0xff] %vm1964, %v3557
      %3590 = vst.msk [vmem:[%s555 + $0x48] sm:$0xff] %vm1964, %v3558
      %3591 = vst.msk [vmem:[%s555 + $0x50] sm:$0xff] %vm1964, %v3559
      %3592 = vst.msk [vmem:[%s555 + $0x58] sm:$0xff] %vm1964, %v3560
      %3593 = vst.msk [vmem:[%s555 + $0x60] sm:$0xff] %vm1964, %v3561
      %3594 = vst.msk [vmem:[%s555 + $0x68] sm:$0xff] %vm1964, %v3562
      %3595 = vst.msk [vmem:[%s555 + $0x70] sm:$0xff] %vm1964, %v3563
      %3596 = vst.msk [vmem:[%s555 + $0x78] sm:$0xff] %vm1964, %v3564
      %3597 = vst.msk [vmem:[%s555 + $0x80] sm:$0xff] %vm1964, %v3565
      %3598 = vst.msk [vmem:[%s555 + $0x88] sm:$0xff] %vm1964, %v3566
      %3599 = vst.msk [vmem:[%s555 + $0x90] sm:$0xff] %vm1964, %v3567
      %3600 = vst.msk [vmem:[%s555 + $0x98] sm:$0xff] %vm1964, %v3568
      %3601 = vst.msk [vmem:[%s555 + $0xa0] sm:$0xff] %vm1964, %v3569
      %3602 = vst.msk [vmem:[%s555 + $0xa8] sm:$0xff] %vm1964, %v3570
      %3603 = vst.msk [vmem:[%s555 + $0xb0] sm:$0xff] %vm1964, %v3571
      %3604 = vst.msk [vmem:[%s555 + $0xb8] sm:$0xff] %vm1964, %v3572
      %3605 = vst.msk [vmem:[%s555 + $0xc0] sm:$0xff] %vm1964, %v3573
      %3606 = vst.msk [vmem:[%s555 + $0xc8] sm:$0xff] %vm1964, %v3574
      %3607 = vst.msk [vmem:[%s555 + $0xd0] sm:$0xff] %vm1964, %v3575
      %3608 = vst.msk [vmem:[%s555 + $0xd8] sm:$0xff] %vm1964, %v3576
      %3609 = vst.msk [vmem:[%s555 + $0xe0] sm:$0xff] %vm1964, %v3577
      %3610 = vst.msk [vmem:[%s555 + $0xe8] sm:$0xff] %vm1964, %v3578
      %3611 = vst.msk [vmem:[%s555 + $0xf0] sm:$0xff] %vm1964, %v3579
      %3612 = vst.msk [vmem:[%s555 + $0xf8] sm:$0xff] %vm1964, %v3580
      %s3613 = smul.u32 16, %s25
      %p3614 = scmp.lt.s32.totalorder %s24, 1
      %s3615 = scalar_select %p3614, %s24, 1
      %p3616 = scmp.lt.s32.totalorder %s3613, 15
      %s3617 = scalar_select %p3616, %s3613, 15
      %s3618 = smul.addr %s3617, 2
      %s3619 = smul.addr %s3615, 32
      %s3620 = sadd.s32 %s3618, %s3619
      %s3621 = smul.addr %s3620, 8
      %s3622 = scalar_lea.vmem %s9, %s3621
      // Predicated region
      $region57: #{maisi_resblock_forward.5} parent=55 // pred_check
        %p3623 = pneg %p290
      $region58: #{maisi_resblock_forward.5} parent=55 // pred_check_branch
        %3625 = sbr.rel (%p3623) target = $region60
      $region59: #{maisi_resblock_forward.5} parent=55 // pred_region
        %s3626 = smul.u32 16, %s25
      $region60: #{maisi_resblock_forward.5} parent=55 // pred_fallthru
        _
    $region56: #{maisi_resblock_forward.5} parent=5 // pred_fallthru
      _
    %p3627 = scmp.le.s32.totalorder 2, %s15
    // Predicated region
    $region61: #{maisi_resblock_forward.5} parent=5 // pred_check
      %p3628 = pneg %p3627
    $region62: #{maisi_resblock_forward.5} parent=5 // pred_check_branch
      %3630 = sbr.rel (%p3628) target = $region64
    $region63: #{maisi_resblock_forward.5} parent=5 // pred_region
      %s3631 = ssub.s32 %s15, 2
      // Predicated region
      $region65: #{maisi_resblock_forward.5} parent=63 // pred_check
        %p3632 = pneg %p296
      $region66: #{maisi_resblock_forward.5} parent=63 // pred_check_branch
        %3634 = sbr.rel (%p3632) target = $region68
      $region67: #{maisi_resblock_forward.5} parent=63 // pred_region
        %s3635 = smul.u32 16, %s27
        %p3636 = scmp.lt.s32.totalorder %s26, 1
        %s3637 = scalar_select %p3636, %s26, 1
        %p3638 = scmp.lt.s32.totalorder %s3635, 15
        %s3639 = scalar_select %p3638, %s3635, 15
        %s3640 = smul.addr %s3639, 2
        %s3641 = smul.addr %s3637, 32
        %s3642 = sadd.s32 %s3640, %s3641
        %s3643 = smul.addr %s3642, 8
        %s3644 = scalar_lea.vmem %s9, %s3643
      $region68: #{maisi_resblock_forward.5} parent=63 // pred_fallthru
        _
    $region64: #{maisi_resblock_forward.5} parent=5 // pred_fallthru
      _
  $region6: #{maisi_resblock_forward.5} parent=0 // loop_footer
    %s19 = sadd.s32 1, %s15
  $region7: #{maisi_resblock_forward.5} parent=0 // loop_footer_branch
    %14 = sbr.rel target = $region3
  $region8: #{maisi_resblock_forward.5} parent=0 // loop_exit
    _

</llo_original>
